<compile_context>
chip_gen: v7x
topology: tpu7x:2x2x1
jax: 0.10.0
libtpu: 0.0.40
codegen_flags: <defaults>
</compile_context>

<pallas_src>
import jax
import jax.numpy as jnp
from jax.experimental import pallas as pl
from jax.experimental.pallas import tpu as pltpu


def _round_up(x, m):
    return ((x + m - 1) // m) * m


# ---------------------------------------------------------------------------
# Kernel 1: fused (three 1x1 convs as ONE matmul) + folded-BN + ReLU,
#           emitting three separate outputs (branch1, reduce2, reduce3).
# ---------------------------------------------------------------------------
def matmul_bn_relu_split(x2d, w2d, scale, bias, splits, *, tm_max=1024):
    """x2d: (M, K) bf16, w2d: (K, Ctot) bf16, scale/bias: (1, Ctot) f32."""
    M, K = x2d.shape
    Ctot = w2d.shape[1]
    c1, c2, c3 = splits
    assert c1 + c2 + c3 == Ctot

    # Big M-tiles amortize per-step overhead; keep >= 2 grid steps so both
    # v7x TensorCores (megacore) get work.  bf16 => tm % 16 == 0.
    tm = int(min(tm_max, _round_up(max(M // 2, 16), 16)))
    Mp = _round_up(M, tm)
    xb = x2d if Mp == M else jnp.pad(x2d, ((0, Mp - M), (0, 0)))

    def kernel(x_ref, w_ref, s_ref, b_ref, o1_ref, o2_ref, o3_ref):
        acc = jnp.dot(x_ref[...], w_ref[...], preferred_element_type=jnp.float32)
        y = jnp.maximum(acc * s_ref[...] + b_ref[...], 0.0)
        o1_ref[...] = y[:, :c1].astype(o1_ref.dtype)
        o2_ref[...] = y[:, c1:c1 + c2].astype(o2_ref.dtype)
        o3_ref[...] = y[:, c1 + c2:].astype(o3_ref.dtype)

    outs = pl.pallas_call(
        kernel,
        out_shape=(jax.ShapeDtypeStruct((Mp, c1), jnp.bfloat16),
                   jax.ShapeDtypeStruct((Mp, c2), jnp.bfloat16),
                   jax.ShapeDtypeStruct((Mp, c3), jnp.bfloat16)),
        grid_spec=pltpu.PrefetchScalarGridSpec(
            num_scalar_prefetch=0,
            grid=(Mp // tm,),
            in_specs=[
                pl.BlockSpec((tm, K), lambda i: (i, 0)),
                pl.BlockSpec((K, Ctot), lambda i: (0, 0)),
                pl.BlockSpec((1, Ctot), lambda i: (0, 0)),
                pl.BlockSpec((1, Ctot), lambda i: (0, 0)),
            ],
            out_specs=(pl.BlockSpec((tm, c1), lambda i: (i, 0)),
                       pl.BlockSpec((tm, c2), lambda i: (i, 0)),
                       pl.BlockSpec((tm, c3), lambda i: (i, 0))),
        ),
        compiler_params=pltpu.CompilerParams(
            dimension_semantics=("parallel",)),
    )(xb, w2d, scale, bias)
    if Mp != M:
        outs = tuple(o[:M] for o in outs)
    return outs


# ---------------------------------------------------------------------------
# Kernel 2: 3x3 / stride-1 / pad-1 conv + folded BN + ReLU.
#   - zero halo built in VMEM (no HBM pad pass)
#   - in-VMEM im2col into (B, 9*Cin), single K = 9*Cin matmul
#   - junk columns stripped in-kernel (clean (N,H,W,Cout) bf16 output)
# ---------------------------------------------------------------------------
def conv3x3_bn_relu(x_nhwc, w9, scale, bias):
    """x_nhwc: (N,H,W,Cin) bf16; w9: (9*Cin, Cout) bf16, tap-major (kh*3+kw)."""
    N, H, W, Cin = x_nhwc.shape
    Cout = w9.shape[1]
    rsp = _round_up(W + 2, 8)      # sublane-aligned row stride of the padded image
    B = H * rsp                    # flattened output rows (incl. junk columns)
    P = (H + 3) * rsp              # padded rows + slack so every tap slice is in range

    def kernel(x_ref, w_ref, s_ref, b_ref, o_ref, pad_ref, xk_ref):
        # Zero-padded, row-flattened image in VMEM (re-built every grid step so
        # the 'parallel' axis stays dependency-free across cores).
        pad_ref[...] = jnp.zeros(pad_ref.shape, pad_ref.dtype)
        for h in range(H):
            pad_ref[pl.ds((h + 1) * rsp + 1, W), :] = x_ref[0, h]
        # In-VMEM im2col: tap t = kh*3+kw fills lane block [t*Cin, (t+1)*Cin).
        for dh in range(3):
            for dw in range(3):
                t = dh * 3 + dw
                xk_ref[:, t * Cin:(t + 1) * Cin] = pad_ref[pl.ds(dh * rsp + dw, B), :]
        acc = jnp.dot(xk_ref[...], w_ref[...], preferred_element_type=jnp.float32)
        y = jnp.maximum(acc * s_ref[...] + b_ref[...], 0.0).astype(o_ref.dtype)
        # Strip the junk columns in-kernel: store only the W real columns per row.
        for h in range(H):
            o_ref[0, h] = y[h * rsp:h * rsp + W, :]

    # TODO(synk): for N == 1 (v7x), add a second 'parallel' grid axis over
    # H-tiles (needs halo-overlapping input blocks) so both TensorCores are fed.
    return pl.pallas_call(
        kernel,
        out_shape=jax.ShapeDtypeStruct((N, H, W, Cout), jnp.bfloat16),
        grid_spec=pltpu.PrefetchScalarGridSpec(
            num_scalar_prefetch=0,
            grid=(N,),
            in_specs=[
                pl.BlockSpec((1, H, W, Cin), lambda n: (n, 0, 0, 0)),
                pl.BlockSpec((9 * Cin, Cout), lambda n: (0, 0)),
                pl.BlockSpec((1, Cout), lambda n: (0, 0)),
                pl.BlockSpec((1, Cout), lambda n: (0, 0)),
            ],
            out_specs=pl.BlockSpec((1, H, W, Cout), lambda n: (n, 0, 0, 0)),
            scratch_shapes=[pltpu.VMEM((P, Cin), jnp.bfloat16),
                            pltpu.VMEM((B, 9 * Cin), jnp.bfloat16)],
        ),
        compiler_params=pltpu.CompilerParams(
            dimension_semantics=("parallel",)),
    )(x_nhwc, w9, scale, bias)


# ---------------------------------------------------------------------------
# Kernel 3: MaxPool2d(3, stride=1, pad=1) fused with 1x1 conv + BN + ReLU.
#   - halo built in VMEM with a large-negative pad (acts as -inf for the max)
#   - separable max (2 + 2 maxima), junk columns clamped to 0 before the matmul
# ---------------------------------------------------------------------------
def maxpool3x3_conv1x1_bn_relu(x_nhwc, w2d, scale, bias):
    N, H, W, Cin = x_nhwc.shape
    Cout = w2d.shape[1]
    rsp = _round_up(W + 2, 8)
    B = H * rsp
    P = (H + 3) * rsp
    Q = B + 2 * rsp
    NEG = -1e30  # finite in bf16; never wins a max over real data

    def kernel(x_ref, w_ref, s_ref, b_ref, o_ref, pad_ref):
        pad_ref[...] = jnp.full(pad_ref.shape, NEG, pad_ref.dtype)
        for h in range(H):
            pad_ref[pl.ds((h + 1) * rsp + 1, W), :] = x_ref[0, h]
        # Separable 3x3 max: row-max over dw, then max over dh of the row-max.
        rm = jnp.maximum(jnp.maximum(pad_ref[pl.ds(0, Q), :],
                                     pad_ref[pl.ds(1, Q), :]),
                         pad_ref[pl.ds(2, Q), :])
        m = jnp.maximum(jnp.maximum(rm[0:B], rm[rsp:rsp + B]),
                        rm[2 * rsp:2 * rsp + B])
        # Junk columns pooled to NEG: clamp to 0 so the matmul stays finite.
        m = jnp.where(m < 0.5 * NEG, jnp.zeros_like(m), m)
        acc = jnp.dot(m, w_ref[...], preferred_element_type=jnp.float32)
        y = jnp.maximum(acc * s_ref[...] + b_ref[...], 0.0).astype(o_ref.dtype)
        for h in range(H):
            o_ref[0, h] = y[h * rsp:h * rsp + W, :]

    return pl.pallas_call(
        kernel,
        out_shape=jax.ShapeDtypeStruct((N, H, W, Cout), jnp.bfloat16),
        grid_spec=pltpu.PrefetchScalarGridSpec(
            num_scalar_prefetch=0,
            grid=(N,),
            in_specs=[
                pl.BlockSpec((1, H, W, Cin), lambda n: (n, 0, 0, 0)),
                pl.BlockSpec((Cin, Cout), lambda n: (0, 0)),
                pl.BlockSpec((1, Cout), lambda n: (0, 0)),
                pl.BlockSpec((1, Cout), lambda n: (0, 0)),
            ],
            out_specs=pl.BlockSpec((1, H, W, Cout), lambda n: (n, 0, 0, 0)),
            scratch_shapes=[pltpu.VMEM((P, Cin), jnp.bfloat16)],
        ),
        compiler_params=pltpu.CompilerParams(
            dimension_semantics=("parallel",)),
    )(x_nhwc, w2d, scale, bias)


# ---------------------------------------------------------------------------
# Parameter init (Conv2d bias=False + BatchNorm2d eps=1e-3, BN folded).
# Weights are pre-packed / pre-cast to their kernel dtypes here (no per-call
# casts or reshapes in the forward pass).
# ---------------------------------------------------------------------------
def init_basic_conv(key, in_ch, out_ch, ksize):
    kw_, kg, kb, km, kv = jax.random.split(key, 5)
    w = 0.1 * jax.random.normal(kw_, (out_ch, in_ch, ksize, ksize), jnp.float32)
    gamma = 1.0 + 0.1 * jax.random.normal(kg, (out_ch,), jnp.float32)
    beta = 0.1 * jax.random.normal(kb, (out_ch,), jnp.float32)
    mean = 0.1 * jax.random.normal(km, (out_ch,), jnp.float32)
    var = 0.9 + 0.2 * jax.random.uniform(kv, (out_ch,), jnp.float32)
    eps = 1e-3
    scale = gamma / jnp.sqrt(var + eps)     # inference-mode (running-stats) BN
    bias = beta - mean * scale
    scale = scale.reshape(1, out_ch).astype(jnp.float32)
    bias = bias.reshape(1, out_ch).astype(jnp.float32)
    if ksize == 1:
        w_packed = w.reshape(out_ch, in_ch).T.astype(jnp.bfloat16)         # (Cin, Cout)
    else:
        # (Cout,Cin,kh,kw) -> (kh,kw,Cin,Cout) -> (9*Cin, Cout); tap index = kh*3+kw
        w_packed = jnp.transpose(w, (2, 3, 1, 0)).reshape(
            ksize * ksize * in_ch, out_ch).astype(jnp.bfloat16)
    return w_packed, scale, bias


def init_inception(key, in_channels, ch1x1, ch3x3red, ch3x3, ch5x5red, ch5x5, pool_proj):
    keys = jax.random.split(key, 6)
    b1 = init_basic_conv(keys[0], in_channels, ch1x1, 1)
    b2r = init_basic_conv(keys[1], in_channels, ch3x3red, 1)
    b2 = init_basic_conv(keys[2], ch3x3red, ch3x3, 3)
    b3r = init_basic_conv(keys[3], in_channels, ch5x5red, 1)
    b3 = init_basic_conv(keys[4], ch5x5red, ch5x5, 3)    # 3x3, per the reference
    b4 = init_basic_conv(keys[5], in_channels, pool_proj, 1)
    # Fuse the three 1x1 convs that all read x into one matmul (weights / folded
    # BN concatenated along Cout).
    fused_w = jnp.concatenate([b1[0], b2r[0], b3r[0]], axis=1)
    fused_scale = jnp.concatenate([b1[1], b2r[1], b3r[1]], axis=1)
    fused_bias = jnp.concatenate([b1[2], b2r[2], b3r[2]], axis=1)
    return {"fused1x1": (fused_w, fused_scale, fused_bias),
            "b2": b2, "b3": b3, "b4": b4}


def inception_forward(x_nchw, params):
    N, Cin, H, W = x_nchw.shape
    # Single fused HBM pass: NCHW -> NHWC transpose + f32 -> bf16 cast.
    x_nhwc = jnp.transpose(x_nchw, (0, 2, 3, 1)).astype(jnp.bfloat16)

    fw, fs, fb = params["fused1x1"]
    c2r = params["b2"][0].shape[0] // 9        # static: packed weight is (9*Cin, Cout)
    c3r = params["b3"][0].shape[0] // 9
    c1 = fw.shape[1] - c2r - c3r

    # branch1 + both reduce convs: one fused matmul with three split outputs,
    # so x is read once and no wrapper channel-slice copies are needed.
    b1f, r2f, r3f = matmul_bn_relu_split(
        x_nhwc.reshape(N * H * W, Cin), fw, fs, fb, (c1, c2r, c3r))
    branch1 = b1f.reshape(N, H, W, c1)
    red2 = r2f.reshape(N, H, W, c2r)
    red3 = r3f.reshape(N, H, W, c3r)

    branch2 = conv3x3_bn_relu(red2, *params["b2"])
    branch3 = conv3x3_bn_relu(red3, *params["b3"])
    branch4 = maxpool3x3_conv1x1_bn_relu(x_nhwc, *params["b4"])

    # TODO(synk): write each branch straight into channel slices of one shared
    # NHWC buffer via out BlockSpecs (needs per-branch Cout padded to 128 lanes
    # for a legal block); for now one fused XLA concat+transpose+upcast pass.
    out_nhwc = jnp.concatenate([branch1, branch2, branch3, branch4], axis=-1)
    return jnp.transpose(out_nhwc, (0, 3, 1, 2)).astype(jnp.float32)   # NCHW f32


if __name__ == "__main__":
    key = jax.random.PRNGKey(0)
    kx, kp = jax.random.split(key)

    # Small shapes: batch=2, in_channels=4, spatial=16x16.
    N, Cin, H, W = 2, 4, 16, 16
    ch1x1, ch3x3red, ch3x3, ch5x5red, ch5x5, pool_proj = 8, 4, 8, 4, 8, 8

    x = jax.random.normal(kx, (N, Cin, H, W), jnp.float32)
    params = init_inception(kp, Cin, ch1x1, ch3x3red, ch3x3, ch5x5red, ch5x5, pool_proj)

    out = jax.jit(inception_forward)(x, params)
    out = jax.block_until_ready(out)

    expected_channels = ch1x1 + ch3x3 + ch5x5 + pool_proj
    assert out.shape == (N, expected_channels, H, W), out.shape
    assert out.dtype == jnp.float32
    assert bool(jnp.all(jnp.isfinite(out))) and bool(jnp.all(out >= 0.0))

    print("KERNEL_OK")
</pallas_src>

<mosaic_0001>
module attributes {stable_mosaic.version = 11 : i64} {
  func.func @kernel(%arg0: i32, %arg1: memref<1x16x16x4xbf16, #tpu.memory_space<vmem>>, %arg2: memref<4x8xbf16, #tpu.memory_space<vmem>>, %arg3: memref<1x8xf32, #tpu.memory_space<vmem>>, %arg4: memref<1x8xf32, #tpu.memory_space<vmem>>, %arg5: memref<1x16x16x8xbf16, #tpu.memory_space<vmem>>, %arg6: memref<456x4xbf16, #tpu.memory_space<vmem>>) attributes {dimension_semantics = [#tpu.dimension_semantics<parallel>], iteration_bounds = array<i64: 2>, scalar_prefetch = 0 : i64, scratch_operands = 1 : i64, tpu.core_type = #tpu.core_type<tc>, window_params = [{transform_indices = @transform_0, window_bounds = array<i64: 1, 16, 16, 4>}, {pipeline_mode = #tpu.pipeline_mode<synchronous>, transform_indices = @transform_1, window_bounds = array<i64: 4, 8>}, {pipeline_mode = #tpu.pipeline_mode<synchronous>, transform_indices = @transform_2, window_bounds = array<i64: 1, 8>}, {pipeline_mode = #tpu.pipeline_mode<synchronous>, transform_indices = @transform_3, window_bounds = array<i64: 1, 8>}, {transform_indices = @transform_4, window_bounds = array<i64: 1, 16, 16, 8>}]} {
    %cst = arith.constant -1.000260e+30 : bf16
    %0 = vector.broadcast %cst : bf16 to vector<456x4xbf16>
    %c0 = arith.constant 0 : index
    %c0_0 = arith.constant 0 : index
    %1 = vector.load %arg6[%c0, %c0_0] : memref<456x4xbf16, #tpu.memory_space<vmem>>, vector<456x4xbf16>
    tpu.vector_store %arg6[%c0, %c0_0], %0 {strides = array<i32>} : memref<456x4xbf16, #tpu.memory_space<vmem>>, vector<456x4xbf16>,
    %c0_1 = arith.constant 0 : index
    %c0_2 = arith.constant 0 : index
    %c0_3 = arith.constant 0 : index
    %c0_4 = arith.constant 0 : index
    %2 = vector.load %arg1[%c0_1, %c0_2, %c0_3, %c0_4] : memref<1x16x16x4xbf16, #tpu.memory_space<vmem>>, vector<1x1x16x4xbf16>
    %3 = vector.shape_cast %2 : vector<1x1x16x4xbf16> to vector<16x4xbf16>
    %c25 = arith.constant 25 : index
    %c0_5 = arith.constant 0 : index
    %4 = vector.load %arg6[%c25, %c0_5] : memref<456x4xbf16, #tpu.memory_space<vmem>>, vector<16x4xbf16>
    tpu.vector_store %arg6[%c25, %c0_5], %3 {strides = array<i32>} : memref<456x4xbf16, #tpu.memory_space<vmem>>, vector<16x4xbf16>,
    %c0_6 = arith.constant 0 : index
    %c1 = arith.constant 1 : index
    %c0_7 = arith.constant 0 : index
    %c0_8 = arith.constant 0 : index
    %5 = vector.load %arg1[%c0_6, %c1, %c0_7, %c0_8] : memref<1x16x16x4xbf16, #tpu.memory_space<vmem>>, vector<1x1x16x4xbf16>
    %6 = vector.shape_cast %5 : vector<1x1x16x4xbf16> to vector<16x4xbf16>
    %c49 = arith.constant 49 : index
    %c0_9 = arith.constant 0 : index
    %7 = vector.load %arg6[%c49, %c0_9] : memref<456x4xbf16, #tpu.memory_space<vmem>>, vector<16x4xbf16>
    tpu.vector_store %arg6[%c49, %c0_9], %6 {strides = array<i32>} : memref<456x4xbf16, #tpu.memory_space<vmem>>, vector<16x4xbf16>,
    %c0_10 = arith.constant 0 : index
    %c2 = arith.constant 2 : index
    %c0_11 = arith.constant 0 : index
    %c0_12 = arith.constant 0 : index
    %8 = vector.load %arg1[%c0_10, %c2, %c0_11, %c0_12] : memref<1x16x16x4xbf16, #tpu.memory_space<vmem>>, vector<1x1x16x4xbf16>
    %9 = vector.shape_cast %8 : vector<1x1x16x4xbf16> to vector<16x4xbf16>
    %c73 = arith.constant 73 : index
    %c0_13 = arith.constant 0 : index
    %10 = vector.load %arg6[%c73, %c0_13] : memref<456x4xbf16, #tpu.memory_space<vmem>>, vector<16x4xbf16>
    tpu.vector_store %arg6[%c73, %c0_13], %9 {strides = array<i32>} : memref<456x4xbf16, #tpu.memory_space<vmem>>, vector<16x4xbf16>,
    %c0_14 = arith.constant 0 : index
    %c3 = arith.constant 3 : index
    %c0_15 = arith.constant 0 : index
    %c0_16 = arith.constant 0 : index
    %11 = vector.load %arg1[%c0_14, %c3, %c0_15, %c0_16] : memref<1x16x16x4xbf16, #tpu.memory_space<vmem>>, vector<1x1x16x4xbf16>
    %12 = vector.shape_cast %11 : vector<1x1x16x4xbf16> to vector<16x4xbf16>
    %c97 = arith.constant 97 : index
    %c0_17 = arith.constant 0 : index
    %13 = vector.load %arg6[%c97, %c0_17] : memref<456x4xbf16, #tpu.memory_space<vmem>>, vector<16x4xbf16>
    tpu.vector_store %arg6[%c97, %c0_17], %12 {strides = array<i32>} : memref<456x4xbf16, #tpu.memory_space<vmem>>, vector<16x4xbf16>,
    %c0_18 = arith.constant 0 : index
    %c4 = arith.constant 4 : index
    %c0_19 = arith.constant 0 : index
    %c0_20 = arith.constant 0 : index
    %14 = vector.load %arg1[%c0_18, %c4, %c0_19, %c0_20] : memref<1x16x16x4xbf16, #tpu.memory_space<vmem>>, vector<1x1x16x4xbf16>
    %15 = vector.shape_cast %14 : vector<1x1x16x4xbf16> to vector<16x4xbf16>
    %c121 = arith.constant 121 : index
    %c0_21 = arith.constant 0 : index
    %16 = vector.load %arg6[%c121, %c0_21] : memref<456x4xbf16, #tpu.memory_space<vmem>>, vector<16x4xbf16>
    tpu.vector_store %arg6[%c121, %c0_21], %15 {strides = array<i32>} : memref<456x4xbf16, #tpu.memory_space<vmem>>, vector<16x4xbf16>,
    %c0_22 = arith.constant 0 : index
    %c5 = arith.constant 5 : index
    %c0_23 = arith.constant 0 : index
    %c0_24 = arith.constant 0 : index
    %17 = vector.load %arg1[%c0_22, %c5, %c0_23, %c0_24] : memref<1x16x16x4xbf16, #tpu.memory_space<vmem>>, vector<1x1x16x4xbf16>
    %18 = vector.shape_cast %17 : vector<1x1x16x4xbf16> to vector<16x4xbf16>
    %c145 = arith.constant 145 : index
    %c0_25 = arith.constant 0 : index
    %19 = vector.load %arg6[%c145, %c0_25] : memref<456x4xbf16, #tpu.memory_space<vmem>>, vector<16x4xbf16>
    tpu.vector_store %arg6[%c145, %c0_25], %18 {strides = array<i32>} : memref<456x4xbf16, #tpu.memory_space<vmem>>, vector<16x4xbf16>,
    %c0_26 = arith.constant 0 : index
    %c6 = arith.constant 6 : index
    %c0_27 = arith.constant 0 : index
    %c0_28 = arith.constant 0 : index
    %20 = vector.load %arg1[%c0_26, %c6, %c0_27, %c0_28] : memref<1x16x16x4xbf16, #tpu.memory_space<vmem>>, vector<1x1x16x4xbf16>
    %21 = vector.shape_cast %20 : vector<1x1x16x4xbf16> to vector<16x4xbf16>
    %c169 = arith.constant 169 : index
    %c0_29 = arith.constant 0 : index
    %22 = vector.load %arg6[%c169, %c0_29] : memref<456x4xbf16, #tpu.memory_space<vmem>>, vector<16x4xbf16>
    tpu.vector_store %arg6[%c169, %c0_29], %21 {strides = array<i32>} : memref<456x4xbf16, #tpu.memory_space<vmem>>, vector<16x4xbf16>,
    %c0_30 = arith.constant 0 : index
    %c7 = arith.constant 7 : index
    %c0_31 = arith.constant 0 : index
    %c0_32 = arith.constant 0 : index
    %23 = vector.load %arg1[%c0_30, %c7, %c0_31, %c0_32] : memref<1x16x16x4xbf16, #tpu.memory_space<vmem>>, vector<1x1x16x4xbf16>
    %24 = vector.shape_cast %23 : vector<1x1x16x4xbf16> to vector<16x4xbf16>
    %c193 = arith.constant 193 : index
    %c0_33 = arith.constant 0 : index
    %25 = vector.load %arg6[%c193, %c0_33] : memref<456x4xbf16, #tpu.memory_space<vmem>>, vector<16x4xbf16>
    tpu.vector_store %arg6[%c193, %c0_33], %24 {strides = array<i32>} : memref<456x4xbf16, #tpu.memory_space<vmem>>, vector<16x4xbf16>,
    %c0_34 = arith.constant 0 : index
    %c8 = arith.constant 8 : index
    %c0_35 = arith.constant 0 : index
    %c0_36 = arith.constant 0 : index
    %26 = vector.load %arg1[%c0_34, %c8, %c0_35, %c0_36] : memref<1x16x16x4xbf16, #tpu.memory_space<vmem>>, vector<1x1x16x4xbf16>
    %27 = vector.shape_cast %26 : vector<1x1x16x4xbf16> to vector<16x4xbf16>
    %c217 = arith.constant 217 : index
    %c0_37 = arith.constant 0 : index
    %28 = vector.load %arg6[%c217, %c0_37] : memref<456x4xbf16, #tpu.memory_space<vmem>>, vector<16x4xbf16>
    tpu.vector_store %arg6[%c217, %c0_37], %27 {strides = array<i32>} : memref<456x4xbf16, #tpu.memory_space<vmem>>, vector<16x4xbf16>,
    %c0_38 = arith.constant 0 : index
    %c9 = arith.constant 9 : index
    %c0_39 = arith.constant 0 : index
    %c0_40 = arith.constant 0 : index
    %29 = vector.load %arg1[%c0_38, %c9, %c0_39, %c0_40] : memref<1x16x16x4xbf16, #tpu.memory_space<vmem>>, vector<1x1x16x4xbf16>
    %30 = vector.shape_cast %29 : vector<1x1x16x4xbf16> to vector<16x4xbf16>
    %c241 = arith.constant 241 : index
    %c0_41 = arith.constant 0 : index
    %31 = vector.load %arg6[%c241, %c0_41] : memref<456x4xbf16, #tpu.memory_space<vmem>>, vector<16x4xbf16>
    tpu.vector_store %arg6[%c241, %c0_41], %30 {strides = array<i32>} : memref<456x4xbf16, #tpu.memory_space<vmem>>, vector<16x4xbf16>,
    %c0_42 = arith.constant 0 : index
    %c10 = arith.constant 10 : index
    %c0_43 = arith.constant 0 : index
    %c0_44 = arith.constant 0 : index
    %32 = vector.load %arg1[%c0_42, %c10, %c0_43, %c0_44] : memref<1x16x16x4xbf16, #tpu.memory_space<vmem>>, vector<1x1x16x4xbf16>
    %33 = vector.shape_cast %32 : vector<1x1x16x4xbf16> to vector<16x4xbf16>
    %c265 = arith.constant 265 : index
    %c0_45 = arith.constant 0 : index
    %34 = vector.load %arg6[%c265, %c0_45] : memref<456x4xbf16, #tpu.memory_space<vmem>>, vector<16x4xbf16>
    tpu.vector_store %arg6[%c265, %c0_45], %33 {strides = array<i32>} : memref<456x4xbf16, #tpu.memory_space<vmem>>, vector<16x4xbf16>,
    %c0_46 = arith.constant 0 : index
    %c11 = arith.constant 11 : index
    %c0_47 = arith.constant 0 : index
    %c0_48 = arith.constant 0 : index
    %35 = vector.load %arg1[%c0_46, %c11, %c0_47, %c0_48] : memref<1x16x16x4xbf16, #tpu.memory_space<vmem>>, vector<1x1x16x4xbf16>
    %36 = vector.shape_cast %35 : vector<1x1x16x4xbf16> to vector<16x4xbf16>
    %c289 = arith.constant 289 : index
    %c0_49 = arith.constant 0 : index
    %37 = vector.load %arg6[%c289, %c0_49] : memref<456x4xbf16, #tpu.memory_space<vmem>>, vector<16x4xbf16>
    tpu.vector_store %arg6[%c289, %c0_49], %36 {strides = array<i32>} : memref<456x4xbf16, #tpu.memory_space<vmem>>, vector<16x4xbf16>,
    %c0_50 = arith.constant 0 : index
    %c12 = arith.constant 12 : index
    %c0_51 = arith.constant 0 : index
    %c0_52 = arith.constant 0 : index
    %38 = vector.load %arg1[%c0_50, %c12, %c0_51, %c0_52] : memref<1x16x16x4xbf16, #tpu.memory_space<vmem>>, vector<1x1x16x4xbf16>
    %39 = vector.shape_cast %38 : vector<1x1x16x4xbf16> to vector<16x4xbf16>
    %c313 = arith.constant 313 : index
    %c0_53 = arith.constant 0 : index
    %40 = vector.load %arg6[%c313, %c0_53] : memref<456x4xbf16, #tpu.memory_space<vmem>>, vector<16x4xbf16>
    tpu.vector_store %arg6[%c313, %c0_53], %39 {strides = array<i32>} : memref<456x4xbf16, #tpu.memory_space<vmem>>, vector<16x4xbf16>,
    %c0_54 = arith.constant 0 : index
    %c13 = arith.constant 13 : index
    %c0_55 = arith.constant 0 : index
    %c0_56 = arith.constant 0 : index
    %41 = vector.load %arg1[%c0_54, %c13, %c0_55, %c0_56] : memref<1x16x16x4xbf16, #tpu.memory_space<vmem>>, vector<1x1x16x4xbf16>
    %42 = vector.shape_cast %41 : vector<1x1x16x4xbf16> to vector<16x4xbf16>
    %c337 = arith.constant 337 : index
    %c0_57 = arith.constant 0 : index
    %43 = vector.load %arg6[%c337, %c0_57] : memref<456x4xbf16, #tpu.memory_space<vmem>>, vector<16x4xbf16>
    tpu.vector_store %arg6[%c337, %c0_57], %42 {strides = array<i32>} : memref<456x4xbf16, #tpu.memory_space<vmem>>, vector<16x4xbf16>,
    %c0_58 = arith.constant 0 : index
    %c14 = arith.constant 14 : index
    %c0_59 = arith.constant 0 : index
    %c0_60 = arith.constant 0 : index
    %44 = vector.load %arg1[%c0_58, %c14, %c0_59, %c0_60] : memref<1x16x16x4xbf16, #tpu.memory_space<vmem>>, vector<1x1x16x4xbf16>
    %45 = vector.shape_cast %44 : vector<1x1x16x4xbf16> to vector<16x4xbf16>
    %c361 = arith.constant 361 : index
    %c0_61 = arith.constant 0 : index
    %46 = vector.load %arg6[%c361, %c0_61] : memref<456x4xbf16, #tpu.memory_space<vmem>>, vector<16x4xbf16>
    tpu.vector_store %arg6[%c361, %c0_61], %45 {strides = array<i32>} : memref<456x4xbf16, #tpu.memory_space<vmem>>, vector<16x4xbf16>,
    %c0_62 = arith.constant 0 : index
    %c15 = arith.constant 15 : index
    %c0_63 = arith.constant 0 : index
    %c0_64 = arith.constant 0 : index
    %47 = vector.load %arg1[%c0_62, %c15, %c0_63, %c0_64] : memref<1x16x16x4xbf16, #tpu.memory_space<vmem>>, vector<1x1x16x4xbf16>
    %48 = vector.shape_cast %47 : vector<1x1x16x4xbf16> to vector<16x4xbf16>
    %c385 = arith.constant 385 : index
    %c0_65 = arith.constant 0 : index
    %49 = vector.load %arg6[%c385, %c0_65] : memref<456x4xbf16, #tpu.memory_space<vmem>>, vector<16x4xbf16>
    tpu.vector_store %arg6[%c385, %c0_65], %48 {strides = array<i32>} : memref<456x4xbf16, #tpu.memory_space<vmem>>, vector<16x4xbf16>,
    %c0_66 = arith.constant 0 : index
    %c0_67 = arith.constant 0 : index
    %50 = vector.load %arg6[%c0_66, %c0_67] : memref<456x4xbf16, #tpu.memory_space<vmem>>, vector<432x4xbf16>
    %c1_68 = arith.constant 1 : index
    %c0_69 = arith.constant 0 : index
    %51 = vector.load %arg6[%c1_68, %c0_69] : memref<456x4xbf16, #tpu.memory_space<vmem>>, vector<432x4xbf16>
    %52 = arith.maximumf %50, %51 : vector<432x4xbf16>
    %c2_70 = arith.constant 2 : index
    %c0_71 = arith.constant 0 : index
    %53 = vector.load %arg6[%c2_70, %c0_71] : memref<456x4xbf16, #tpu.memory_space<vmem>>, vector<432x4xbf16>
    %54 = arith.maximumf %52, %53 : vector<432x4xbf16>
    %55 = vector.extract_strided_slice %54 {offsets = [0, 0], sizes = [384, 4], strides = [1, 1]} : vector<432x4xbf16> to vector<384x4xbf16>
    %56 = vector.extract_strided_slice %54 {offsets = [24, 0], sizes = [384, 4], strides = [1, 1]} : vector<432x4xbf16> to vector<384x4xbf16>
    %57 = arith.maximumf %55, %56 : vector<384x4xbf16>
    %58 = vector.extract_strided_slice %54 {offsets = [48, 0], sizes = [384, 4], strides = [1, 1]} : vector<432x4xbf16> to vector<384x4xbf16>
    %59 = arith.maximumf %57, %58 : vector<384x4xbf16>
    %cst_72 = arith.constant -5.001280e+29 : bf16
    %60 = vector.broadcast %cst_72 : bf16 to vector<384x4xbf16>
    %61 = arith.cmpf olt, %59, %60 : vector<384x4xbf16>
    %cst_73 = arith.constant 0.000000e+00 : bf16
    %62 = vector.broadcast %cst_73 : bf16 to vector<384x4xbf16>
    %63 = arith.select %61, %62, %59 : vector<384x4xi1>, vector<384x4xbf16>
    %c0_74 = arith.constant 0 : index
    %c0_75 = arith.constant 0 : index
    %64 = vector.load %arg2[%c0_74, %c0_75] : memref<4x8xbf16, #tpu.memory_space<vmem>>, vector<4x8xbf16>
    %cst_76 = arith.constant dense<0.000000e+00> : vector<384x8xf32>
    %65 = tpu.matmul %63, %64, %cst_76 {dimension_numbers = #tpu.dot_dimension_numbers<[1], [0], [0], [1], [0, 0, 1, 1], [], []>} : vector<384x4xbf16>, vector<4x8xbf16>, vector<384x8xf32> -> vector<384x8xf32>
    %c0_77 = arith.constant 0 : index
    %c0_78 = arith.constant 0 : index
    %66 = vector.load %arg3[%c0_77, %c0_78] : memref<1x8xf32, #tpu.memory_space<vmem>>, vector<1x8xf32>
    %67 = vector.broadcast %66 : vector<1x8xf32> to vector<384x8xf32>
    %68 = arith.mulf %65, %67 : vector<384x8xf32>
    %c0_79 = arith.constant 0 : index
    %c0_80 = arith.constant 0 : index
    %69 = vector.load %arg4[%c0_79, %c0_80] : memref<1x8xf32, #tpu.memory_space<vmem>>, vector<1x8xf32>
    %70 = vector.broadcast %69 : vector<1x8xf32> to vector<384x8xf32>
    %71 = arith.addf %68, %70 : vector<384x8xf32>
    %cst_81 = arith.constant 0.000000e+00 : f32
    %72 = vector.broadcast %cst_81 : f32 to vector<384x8xf32>
    %73 = arith.maximumf %71, %72 : vector<384x8xf32>
    %74 = arith.truncf %73 : vector<384x8xf32> to vector<384x8xbf16>
    %75 = vector.extract_strided_slice %74 {offsets = [0, 0], sizes = [16, 8], strides = [1, 1]} : vector<384x8xbf16> to vector<16x8xbf16>
    %c0_82 = arith.constant 0 : index
    %c0_83 = arith.constant 0 : index
    %c0_84 = arith.constant 0 : index
    %c0_85 = arith.constant 0 : index
    %76 = vector.load %arg5[%c0_82, %c0_83, %c0_84, %c0_85] : memref<1x16x16x8xbf16, #tpu.memory_space<vmem>>, vector<1x1x16x8xbf16>
    %77 = vector.shape_cast %76 : vector<1x1x16x8xbf16> to vector<16x8xbf16>
    %78 = vector.shape_cast %75 : vector<16x8xbf16> to vector<1x1x16x8xbf16>
    tpu.vector_store %arg5[%c0_82, %c0_83, %c0_84, %c0_85], %78 {strides = array<i32>} : memref<1x16x16x8xbf16, #tpu.memory_space<vmem>>, vector<1x1x16x8xbf16>,
    %79 = vector.extract_strided_slice %74 {offsets = [24, 0], sizes = [16, 8], strides = [1, 1]} : vector<384x8xbf16> to vector<16x8xbf16>
    %c0_86 = arith.constant 0 : index
    %c1_87 = arith.constant 1 : index
    %c0_88 = arith.constant 0 : index
    %c0_89 = arith.constant 0 : index
    %80 = vector.load %arg5[%c0_86, %c1_87, %c0_88, %c0_89] : memref<1x16x16x8xbf16, #tpu.memory_space<vmem>>, vector<1x1x16x8xbf16>
    %81 = vector.shape_cast %80 : vector<1x1x16x8xbf16> to vector<16x8xbf16>
    %82 = vector.shape_cast %79 : vector<16x8xbf16> to vector<1x1x16x8xbf16>
    tpu.vector_store %arg5[%c0_86, %c1_87, %c0_88, %c0_89], %82 {strides = array<i32>} : memref<1x16x16x8xbf16, #tpu.memory_space<vmem>>, vector<1x1x16x8xbf16>,
    %83 = vector.extract_strided_slice %74 {offsets = [48, 0], sizes = [16, 8], strides = [1, 1]} : vector<384x8xbf16> to vector<16x8xbf16>
    %c0_90 = arith.constant 0 : index
    %c2_91 = arith.constant 2 : index
    %c0_92 = arith.constant 0 : index
    %c0_93 = arith.constant 0 : index
    %84 = vector.load %arg5[%c0_90, %c2_91, %c0_92, %c0_93] : memref<1x16x16x8xbf16, #tpu.memory_space<vmem>>, vector<1x1x16x8xbf16>
    %85 = vector.shape_cast %84 : vector<1x1x16x8xbf16> to vector<16x8xbf16>
    %86 = vector.shape_cast %83 : vector<16x8xbf16> to vector<1x1x16x8xbf16>
    tpu.vector_store %arg5[%c0_90, %c2_91, %c0_92, %c0_93], %86 {strides = array<i32>} : memref<1x16x16x8xbf16, #tpu.memory_space<vmem>>, vector<1x1x16x8xbf16>,
    %87 = vector.extract_strided_slice %74 {offsets = [72, 0], sizes = [16, 8], strides = [1, 1]} : vector<384x8xbf16> to vector<16x8xbf16>
    %c0_94 = arith.constant 0 : index
    %c3_95 = arith.constant 3 : index
    %c0_96 = arith.constant 0 : index
    %c0_97 = arith.constant 0 : index
    %88 = vector.load %arg5[%c0_94, %c3_95, %c0_96, %c0_97] : memref<1x16x16x8xbf16, #tpu.memory_space<vmem>>, vector<1x1x16x8xbf16>
    %89 = vector.shape_cast %88 : vector<1x1x16x8xbf16> to vector<16x8xbf16>
    %90 = vector.shape_cast %87 : vector<16x8xbf16> to vector<1x1x16x8xbf16>
    tpu.vector_store %arg5[%c0_94, %c3_95, %c0_96, %c0_97], %90 {strides = array<i32>} : memref<1x16x16x8xbf16, #tpu.memory_space<vmem>>, vector<1x1x16x8xbf16>,
    %91 = vector.extract_strided_slice %74 {offsets = [96, 0], sizes = [16, 8], strides = [1, 1]} : vector<384x8xbf16> to vector<16x8xbf16>
    %c0_98 = arith.constant 0 : index
    %c4_99 = arith.constant 4 : index
    %c0_100 = arith.constant 0 : index
    %c0_101 = arith.constant 0 : index
    %92 = vector.load %arg5[%c0_98, %c4_99, %c0_100, %c0_101] : memref<1x16x16x8xbf16, #tpu.memory_space<vmem>>, vector<1x1x16x8xbf16>
    %93 = vector.shape_cast %92 : vector<1x1x16x8xbf16> to vector<16x8xbf16>
    %94 = vector.shape_cast %91 : vector<16x8xbf16> to vector<1x1x16x8xbf16>
    tpu.vector_store %arg5[%c0_98, %c4_99, %c0_100, %c0_101], %94 {strides = array<i32>} : memref<1x16x16x8xbf16, #tpu.memory_space<vmem>>, vector<1x1x16x8xbf16>,
    %95 = vector.extract_strided_slice %74 {offsets = [120, 0], sizes = [16, 8], strides = [1, 1]} : vector<384x8xbf16> to vector<16x8xbf16>
    %c0_102 = arith.constant 0 : index
    %c5_103 = arith.constant 5 : index
    %c0_104 = arith.constant 0 : index
    %c0_105 = arith.constant 0 : index
    %96 = vector.load %arg5[%c0_102, %c5_103, %c0_104, %c0_105] : memref<1x16x16x8xbf16, #tpu.memory_space<vmem>>, vector<1x1x16x8xbf16>
    %97 = vector.shape_cast %96 : vector<1x1x16x8xbf16> to vector<16x8xbf16>
    %98 = vector.shape_cast %95 : vector<16x8xbf16> to vector<1x1x16x8xbf16>
    tpu.vector_store %arg5[%c0_102, %c5_103, %c0_104, %c0_105], %98 {strides = array<i32>} : memref<1x16x16x8xbf16, #tpu.memory_space<vmem>>, vector<1x1x16x8xbf16>,
    %99 = vector.extract_strided_slice %74 {offsets = [144, 0], sizes = [16, 8], strides = [1, 1]} : vector<384x8xbf16> to vector<16x8xbf16>
    %c0_106 = arith.constant 0 : index
    %c6_107 = arith.constant 6 : index
    %c0_108 = arith.constant 0 : index
    %c0_109 = arith.constant 0 : index
    %100 = vector.load %arg5[%c0_106, %c6_107, %c0_108, %c0_109] : memref<1x16x16x8xbf16, #tpu.memory_space<vmem>>, vector<1x1x16x8xbf16>
    %101 = vector.shape_cast %100 : vector<1x1x16x8xbf16> to vector<16x8xbf16>
    %102 = vector.shape_cast %99 : vector<16x8xbf16> to vector<1x1x16x8xbf16>
    tpu.vector_store %arg5[%c0_106, %c6_107, %c0_108, %c0_109], %102 {strides = array<i32>} : memref<1x16x16x8xbf16, #tpu.memory_space<vmem>>, vector<1x1x16x8xbf16>,
    %103 = vector.extract_strided_slice %74 {offsets = [168, 0], sizes = [16, 8], strides = [1, 1]} : vector<384x8xbf16> to vector<16x8xbf16>
    %c0_110 = arith.constant 0 : index
    %c7_111 = arith.constant 7 : index
    %c0_112 = arith.constant 0 : index
    %c0_113 = arith.constant 0 : index
    %104 = vector.load %arg5[%c0_110, %c7_111, %c0_112, %c0_113] : memref<1x16x16x8xbf16, #tpu.memory_space<vmem>>, vector<1x1x16x8xbf16>
    %105 = vector.shape_cast %104 : vector<1x1x16x8xbf16> to vector<16x8xbf16>
    %106 = vector.shape_cast %103 : vector<16x8xbf16> to vector<1x1x16x8xbf16>
    tpu.vector_store %arg5[%c0_110, %c7_111, %c0_112, %c0_113], %106 {strides = array<i32>} : memref<1x16x16x8xbf16, #tpu.memory_space<vmem>>, vector<1x1x16x8xbf16>,
    %107 = vector.extract_strided_slice %74 {offsets = [192, 0], sizes = [16, 8], strides = [1, 1]} : vector<384x8xbf16> to vector<16x8xbf16>
    %c0_114 = arith.constant 0 : index
    %c8_115 = arith.constant 8 : index
    %c0_116 = arith.constant 0 : index
    %c0_117 = arith.constant 0 : index
    %108 = vector.load %arg5[%c0_114, %c8_115, %c0_116, %c0_117] : memref<1x16x16x8xbf16, #tpu.memory_space<vmem>>, vector<1x1x16x8xbf16>
    %109 = vector.shape_cast %108 : vector<1x1x16x8xbf16> to vector<16x8xbf16>
    %110 = vector.shape_cast %107 : vector<16x8xbf16> to vector<1x1x16x8xbf16>
    tpu.vector_store %arg5[%c0_114, %c8_115, %c0_116, %c0_117], %110 {strides = array<i32>} : memref<1x16x16x8xbf16, #tpu.memory_space<vmem>>, vector<1x1x16x8xbf16>,
    %111 = vector.extract_strided_slice %74 {offsets = [216, 0], sizes = [16, 8], strides = [1, 1]} : vector<384x8xbf16> to vector<16x8xbf16>
    %c0_118 = arith.constant 0 : index
    %c9_119 = arith.constant 9 : index
    %c0_120 = arith.constant 0 : index
    %c0_121 = arith.constant 0 : index
    %112 = vector.load %arg5[%c0_118, %c9_119, %c0_120, %c0_121] : memref<1x16x16x8xbf16, #tpu.memory_space<vmem>>, vector<1x1x16x8xbf16>
    %113 = vector.shape_cast %112 : vector<1x1x16x8xbf16> to vector<16x8xbf16>
    %114 = vector.shape_cast %111 : vector<16x8xbf16> to vector<1x1x16x8xbf16>
    tpu.vector_store %arg5[%c0_118, %c9_119, %c0_120, %c0_121], %114 {strides = array<i32>} : memref<1x16x16x8xbf16, #tpu.memory_space<vmem>>, vector<1x1x16x8xbf16>,
    %115 = vector.extract_strided_slice %74 {offsets = [240, 0], sizes = [16, 8], strides = [1, 1]} : vector<384x8xbf16> to vector<16x8xbf16>
    %c0_122 = arith.constant 0 : index
    %c10_123 = arith.constant 10 : index
    %c0_124 = arith.constant 0 : index
    %c0_125 = arith.constant 0 : index
    %116 = vector.load %arg5[%c0_122, %c10_123, %c0_124, %c0_125] : memref<1x16x16x8xbf16, #tpu.memory_space<vmem>>, vector<1x1x16x8xbf16>
    %117 = vector.shape_cast %116 : vector<1x1x16x8xbf16> to vector<16x8xbf16>
    %118 = vector.shape_cast %115 : vector<16x8xbf16> to vector<1x1x16x8xbf16>
    tpu.vector_store %arg5[%c0_122, %c10_123, %c0_124, %c0_125], %118 {strides = array<i32>} : memref<1x16x16x8xbf16, #tpu.memory_space<vmem>>, vector<1x1x16x8xbf16>,
    %119 = vector.extract_strided_slice %74 {offsets = [264, 0], sizes = [16, 8], strides = [1, 1]} : vector<384x8xbf16> to vector<16x8xbf16>
    %c0_126 = arith.constant 0 : index
    %c11_127 = arith.constant 11 : index
    %c0_128 = arith.constant 0 : index
    %c0_129 = arith.constant 0 : index
    %120 = vector.load %arg5[%c0_126, %c11_127, %c0_128, %c0_129] : memref<1x16x16x8xbf16, #tpu.memory_space<vmem>>, vector<1x1x16x8xbf16>
    %121 = vector.shape_cast %120 : vector<1x1x16x8xbf16> to vector<16x8xbf16>
    %122 = vector.shape_cast %119 : vector<16x8xbf16> to vector<1x1x16x8xbf16>
    tpu.vector_store %arg5[%c0_126, %c11_127, %c0_128, %c0_129], %122 {strides = array<i32>} : memref<1x16x16x8xbf16, #tpu.memory_space<vmem>>, vector<1x1x16x8xbf16>,
    %123 = vector.extract_strided_slice %74 {offsets = [288, 0], sizes = [16, 8], strides = [1, 1]} : vector<384x8xbf16> to vector<16x8xbf16>
    %c0_130 = arith.constant 0 : index
    %c12_131 = arith.constant 12 : index
    %c0_132 = arith.constant 0 : index
    %c0_133 = arith.constant 0 : index
    %124 = vector.load %arg5[%c0_130, %c12_131, %c0_132, %c0_133] : memref<1x16x16x8xbf16, #tpu.memory_space<vmem>>, vector<1x1x16x8xbf16>
    %125 = vector.shape_cast %124 : vector<1x1x16x8xbf16> to vector<16x8xbf16>
    %126 = vector.shape_cast %123 : vector<16x8xbf16> to vector<1x1x16x8xbf16>
    tpu.vector_store %arg5[%c0_130, %c12_131, %c0_132, %c0_133], %126 {strides = array<i32>} : memref<1x16x16x8xbf16, #tpu.memory_space<vmem>>, vector<1x1x16x8xbf16>,
    %127 = vector.extract_strided_slice %74 {offsets = [312, 0], sizes = [16, 8], strides = [1, 1]} : vector<384x8xbf16> to vector<16x8xbf16>
    %c0_134 = arith.constant 0 : index
    %c13_135 = arith.constant 13 : index
    %c0_136 = arith.constant 0 : index
    %c0_137 = arith.constant 0 : index
    %128 = vector.load %arg5[%c0_134, %c13_135, %c0_136, %c0_137] : memref<1x16x16x8xbf16, #tpu.memory_space<vmem>>, vector<1x1x16x8xbf16>
    %129 = vector.shape_cast %128 : vector<1x1x16x8xbf16> to vector<16x8xbf16>
    %130 = vector.shape_cast %127 : vector<16x8xbf16> to vector<1x1x16x8xbf16>
    tpu.vector_store %arg5[%c0_134, %c13_135, %c0_136, %c0_137], %130 {strides = array<i32>} : memref<1x16x16x8xbf16, #tpu.memory_space<vmem>>, vector<1x1x16x8xbf16>,
    %131 = vector.extract_strided_slice %74 {offsets = [336, 0], sizes = [16, 8], strides = [1, 1]} : vector<384x8xbf16> to vector<16x8xbf16>
    %c0_138 = arith.constant 0 : index
    %c14_139 = arith.constant 14 : index
    %c0_140 = arith.constant 0 : index
    %c0_141 = arith.constant 0 : index
    %132 = vector.load %arg5[%c0_138, %c14_139, %c0_140, %c0_141] : memref<1x16x16x8xbf16, #tpu.memory_space<vmem>>, vector<1x1x16x8xbf16>
    %133 = vector.shape_cast %132 : vector<1x1x16x8xbf16> to vector<16x8xbf16>
    %134 = vector.shape_cast %131 : vector<16x8xbf16> to vector<1x1x16x8xbf16>
    tpu.vector_store %arg5[%c0_138, %c14_139, %c0_140, %c0_141], %134 {strides = array<i32>} : memref<1x16x16x8xbf16, #tpu.memory_space<vmem>>, vector<1x1x16x8xbf16>,
    %135 = vector.extract_strided_slice %74 {offsets = [360, 0], sizes = [16, 8], strides = [1, 1]} : vector<384x8xbf16> to vector<16x8xbf16>
    %c0_142 = arith.constant 0 : index
    %c15_143 = arith.constant 15 : index
    %c0_144 = arith.constant 0 : index
    %c0_145 = arith.constant 0 : index
    %136 = vector.load %arg5[%c0_142, %c15_143, %c0_144, %c0_145] : memref<1x16x16x8xbf16, #tpu.memory_space<vmem>>, vector<1x1x16x8xbf16>
    %137 = vector.shape_cast %136 : vector<1x1x16x8xbf16> to vector<16x8xbf16>
    %138 = vector.shape_cast %135 : vector<16x8xbf16> to vector<1x1x16x8xbf16>
    tpu.vector_store %arg5[%c0_142, %c15_143, %c0_144, %c0_145], %138 {strides = array<i32>} : memref<1x16x16x8xbf16, #tpu.memory_space<vmem>>, vector<1x1x16x8xbf16>,
    return
  }
  func.func @transform_0(%arg0: i32) -> (i32, i32, i32, i32) {
    %c0_i32 = arith.constant 0 : i32
    %c0_i32_0 = arith.constant 0 : i32
    %c0_i32_1 = arith.constant 0 : i32
    %c0_i32_2 = arith.constant 0 : i32
    return %arg0, %c0_i32, %c0_i32_0, %c0_i32_1 : i32, i32, i32, i32
  }
  func.func @transform_1(%arg0: i32) -> (i32, i32) {
    %c0_i32 = arith.constant 0 : i32
    %c0_i32_0 = arith.constant 0 : i32
    %c0_i32_1 = arith.constant 0 : i32
    return %c0_i32, %c0_i32_0 : i32, i32
  }
  func.func @transform_2(%arg0: i32) -> (i32, i32) {
    %c0_i32 = arith.constant 0 : i32
    %c0_i32_0 = arith.constant 0 : i32
    %c0_i32_1 = arith.constant 0 : i32
    return %c0_i32, %c0_i32_0 : i32, i32
  }
  func.func @transform_3(%arg0: i32) -> (i32, i32) {
    %c0_i32 = arith.constant 0 : i32
    %c0_i32_0 = arith.constant 0 : i32
    %c0_i32_1 = arith.constant 0 : i32
    return %c0_i32, %c0_i32_0 : i32, i32
  }
  func.func @transform_4(%arg0: i32) -> (i32, i32, i32, i32) {
    %c0_i32 = arith.constant 0 : i32
    %c0_i32_0 = arith.constant 0 : i32
    %c0_i32_1 = arith.constant 0 : i32
    %c0_i32_2 = arith.constant 0 : i32
    return %arg0, %c0_i32, %c0_i32_0, %c0_i32_1 : i32, i32, i32, i32
  }
}

module attributes {stable_mosaic.version = 11 : i64} {
  func.func @kernel(%arg0: i32, %arg1: memref<256x4xbf16, #tpu.memory_space<vmem>>, %arg2: memref<4x16xbf16, #tpu.memory_space<vmem>>, %arg3: memref<1x16xf32, #tpu.memory_space<vmem>>, %arg4: memref<1x16xf32, #tpu.memory_space<vmem>>, %arg5: memref<256x8xbf16, #tpu.memory_space<vmem>>, %arg6: memref<256x4xbf16, #tpu.memory_space<vmem>>, %arg7: memref<256x4xbf16, #tpu.memory_space<vmem>>) attributes {dimension_semantics = [#tpu.dimension_semantics<parallel>], iteration_bounds = array<i64: 2>, scalar_prefetch = 0 : i64, scratch_operands = 0 : i64, tpu.core_type = #tpu.core_type<tc>, window_params = [{transform_indices = @transform_0, window_bounds = array<i64: 256, 4>}, {pipeline_mode = #tpu.pipeline_mode<synchronous>, transform_indices = @transform_1, window_bounds = array<i64: 4, 16>}, {pipeline_mode = #tpu.pipeline_mode<synchronous>, transform_indices = @transform_2, window_bounds = array<i64: 1, 16>}, {pipeline_mode = #tpu.pipeline_mode<synchronous>, transform_indices = @transform_3, window_bounds = array<i64: 1, 16>}, {transform_indices = @transform_4, window_bounds = array<i64: 256, 8>}, {transform_indices = @transform_5, window_bounds = array<i64: 256, 4>}, {transform_indices = @transform_6, window_bounds = array<i64: 256, 4>}]} {
    %c0 = arith.constant 0 : index
    %c0_0 = arith.constant 0 : index
    %0 = vector.load %arg1[%c0, %c0_0] : memref<256x4xbf16, #tpu.memory_space<vmem>>, vector<256x4xbf16>
    %c0_1 = arith.constant 0 : index
    %c0_2 = arith.constant 0 : index
    %1 = vector.load %arg2[%c0_1, %c0_2] : memref<4x16xbf16, #tpu.memory_space<vmem>>, vector<4x16xbf16>
    %cst = arith.constant dense<0.000000e+00> : vector<256x16xf32>
    %2 = tpu.matmul %0, %1, %cst {dimension_numbers = #tpu.dot_dimension_numbers<[1], [0], [0], [1], [0, 0, 1, 1], [], []>} : vector<256x4xbf16>, vector<4x16xbf16>, vector<256x16xf32> -> vector<256x16xf32>
    %c0_3 = arith.constant 0 : index
    %c0_4 = arith.constant 0 : index
    %3 = vector.load %arg3[%c0_3, %c0_4] : memref<1x16xf32, #tpu.memory_space<vmem>>, vector<1x16xf32>
    %4 = vector.broadcast %3 : vector<1x16xf32> to vector<256x16xf32>
    %5 = arith.mulf %2, %4 : vector<256x16xf32>
    %c0_5 = arith.constant 0 : index
    %c0_6 = arith.constant 0 : index
    %6 = vector.load %arg4[%c0_5, %c0_6] : memref<1x16xf32, #tpu.memory_space<vmem>>, vector<1x16xf32>
    %7 = vector.broadcast %6 : vector<1x16xf32> to vector<256x16xf32>
    %8 = arith.addf %5, %7 : vector<256x16xf32>
    %cst_7 = arith.constant 0.000000e+00 : f32
    %9 = vector.broadcast %cst_7 : f32 to vector<256x16xf32>
    %10 = arith.maximumf %8, %9 : vector<256x16xf32>
    %11 = vector.extract_strided_slice %10 {offsets = [0, 0], sizes = [256, 8], strides = [1, 1]} : vector<256x16xf32> to vector<256x8xf32>
    %12 = arith.truncf %11 : vector<256x8xf32> to vector<256x8xbf16>
    %c0_8 = arith.constant 0 : index
    %c0_9 = arith.constant 0 : index
    %13 = vector.load %arg5[%c0_8, %c0_9] : memref<256x8xbf16, #tpu.memory_space<vmem>>, vector<256x8xbf16>
    tpu.vector_store %arg5[%c0_8, %c0_9], %12 {strides = array<i32>} : memref<256x8xbf16, #tpu.memory_space<vmem>>, vector<256x8xbf16>,
    %14 = vector.extract_strided_slice %10 {offsets = [0, 8], sizes = [256, 4], strides = [1, 1]} : vector<256x16xf32> to vector<256x4xf32>
    %15 = arith.truncf %14 : vector<256x4xf32> to vector<256x4xbf16>
    %c0_10 = arith.constant 0 : index
    %c0_11 = arith.constant 0 : index
    %16 = vector.load %arg6[%c0_10, %c0_11] : memref<256x4xbf16, #tpu.memory_space<vmem>>, vector<256x4xbf16>
    tpu.vector_store %arg6[%c0_10, %c0_11], %15 {strides = array<i32>} : memref<256x4xbf16, #tpu.memory_space<vmem>>, vector<256x4xbf16>,
    %17 = vector.extract_strided_slice %10 {offsets = [0, 12], sizes = [256, 4], strides = [1, 1]} : vector<256x16xf32> to vector<256x4xf32>
    %18 = arith.truncf %17 : vector<256x4xf32> to vector<256x4xbf16>
    %c0_12 = arith.constant 0 : index
    %c0_13 = arith.constant 0 : index
    %19 = vector.load %arg7[%c0_12, %c0_13] : memref<256x4xbf16, #tpu.memory_space<vmem>>, vector<256x4xbf16>
    tpu.vector_store %arg7[%c0_12, %c0_13], %18 {strides = array<i32>} : memref<256x4xbf16, #tpu.memory_space<vmem>>, vector<256x4xbf16>,
    return
  }
  func.func @transform_0(%arg0: i32) -> (i32, i32) {
    %c0_i32 = arith.constant 0 : i32
    %c0_i32_0 = arith.constant 0 : i32
    return %arg0, %c0_i32 : i32, i32
  }
  func.func @transform_1(%arg0: i32) -> (i32, i32) {
    %c0_i32 = arith.constant 0 : i32
    %c0_i32_0 = arith.constant 0 : i32
    %c0_i32_1 = arith.constant 0 : i32
    return %c0_i32, %c0_i32_0 : i32, i32
  }
  func.func @transform_2(%arg0: i32) -> (i32, i32) {
    %c0_i32 = arith.constant 0 : i32
    %c0_i32_0 = arith.constant 0 : i32
    %c0_i32_1 = arith.constant 0 : i32
    return %c0_i32, %c0_i32_0 : i32, i32
  }
  func.func @transform_3(%arg0: i32) -> (i32, i32) {
    %c0_i32 = arith.constant 0 : i32
    %c0_i32_0 = arith.constant 0 : i32
    %c0_i32_1 = arith.constant 0 : i32
    return %c0_i32, %c0_i32_0 : i32, i32
  }
  func.func @transform_4(%arg0: i32) -> (i32, i32) {
    %c0_i32 = arith.constant 0 : i32
    %c0_i32_0 = arith.constant 0 : i32
    return %arg0, %c0_i32 : i32, i32
  }
  func.func @transform_5(%arg0: i32) -> (i32, i32) {
    %c0_i32 = arith.constant 0 : i32
    %c0_i32_0 = arith.constant 0 : i32
    return %arg0, %c0_i32 : i32, i32
  }
  func.func @transform_6(%arg0: i32) -> (i32, i32) {
    %c0_i32 = arith.constant 0 : i32
    %c0_i32_0 = arith.constant 0 : i32
    return %arg0, %c0_i32 : i32, i32
  }
}

module attributes {stable_mosaic.version = 11 : i64} {
  func.func @kernel(%arg0: i32, %arg1: memref<1x16x16x4xbf16, #tpu.memory_space<vmem>>, %arg2: memref<36x8xbf16, #tpu.memory_space<vmem>>, %arg3: memref<1x8xf32, #tpu.memory_space<vmem>>, %arg4: memref<1x8xf32, #tpu.memory_space<vmem>>, %arg5: memref<1x16x16x8xbf16, #tpu.memory_space<vmem>>, %arg6: memref<456x4xbf16, #tpu.memory_space<vmem>>, %arg7: memref<384x36xbf16, #tpu.memory_space<vmem>>) attributes {dimension_semantics = [#tpu.dimension_semantics<parallel>], iteration_bounds = array<i64: 2>, scalar_prefetch = 0 : i64, scratch_operands = 2 : i64, tpu.core_type = #tpu.core_type<tc>, window_params = [{transform_indices = @transform_0, window_bounds = array<i64: 1, 16, 16, 4>}, {pipeline_mode = #tpu.pipeline_mode<synchronous>, transform_indices = @transform_1, window_bounds = array<i64: 36, 8>}, {pipeline_mode = #tpu.pipeline_mode<synchronous>, transform_indices = @transform_2, window_bounds = array<i64: 1, 8>}, {pipeline_mode = #tpu.pipeline_mode<synchronous>, transform_indices = @transform_3, window_bounds = array<i64: 1, 8>}, {transform_indices = @transform_4, window_bounds = array<i64: 1, 16, 16, 8>}]} {
    %cst = arith.constant 0.000000e+00 : bf16
    %0 = vector.broadcast %cst : bf16 to vector<456x4xbf16>
    %c0 = arith.constant 0 : index
    %c0_0 = arith.constant 0 : index
    %1 = vector.load %arg6[%c0, %c0_0] : memref<456x4xbf16, #tpu.memory_space<vmem>>, vector<456x4xbf16>
    tpu.vector_store %arg6[%c0, %c0_0], %0 {strides = array<i32>} : memref<456x4xbf16, #tpu.memory_space<vmem>>, vector<456x4xbf16>,
    %c0_1 = arith.constant 0 : index
    %c0_2 = arith.constant 0 : index
    %c0_3 = arith.constant 0 : index
    %c0_4 = arith.constant 0 : index
    %2 = vector.load %arg1[%c0_1, %c0_2, %c0_3, %c0_4] : memref<1x16x16x4xbf16, #tpu.memory_space<vmem>>, vector<1x1x16x4xbf16>
    %3 = vector.shape_cast %2 : vector<1x1x16x4xbf16> to vector<16x4xbf16>
    %c25 = arith.constant 25 : index
    %c0_5 = arith.constant 0 : index
    %4 = vector.load %arg6[%c25, %c0_5] : memref<456x4xbf16, #tpu.memory_space<vmem>>, vector<16x4xbf16>
    tpu.vector_store %arg6[%c25, %c0_5], %3 {strides = array<i32>} : memref<456x4xbf16, #tpu.memory_space<vmem>>, vector<16x4xbf16>,
    %c0_6 = arith.constant 0 : index
    %c1 = arith.constant 1 : index
    %c0_7 = arith.constant 0 : index
    %c0_8 = arith.constant 0 : index
    %5 = vector.load %arg1[%c0_6, %c1, %c0_7, %c0_8] : memref<1x16x16x4xbf16, #tpu.memory_space<vmem>>, vector<1x1x16x4xbf16>
    %6 = vector.shape_cast %5 : vector<1x1x16x4xbf16> to vector<16x4xbf16>
    %c49 = arith.constant 49 : index
    %c0_9 = arith.constant 0 : index
    %7 = vector.load %arg6[%c49, %c0_9] : memref<456x4xbf16, #tpu.memory_space<vmem>>, vector<16x4xbf16>
    tpu.vector_store %arg6[%c49, %c0_9], %6 {strides = array<i32>} : memref<456x4xbf16, #tpu.memory_space<vmem>>, vector<16x4xbf16>,
    %c0_10 = arith.constant 0 : index
    %c2 = arith.constant 2 : index
    %c0_11 = arith.constant 0 : index
    %c0_12 = arith.constant 0 : index
    %8 = vector.load %arg1[%c0_10, %c2, %c0_11, %c0_12] : memref<1x16x16x4xbf16, #tpu.memory_space<vmem>>, vector<1x1x16x4xbf16>
    %9 = vector.shape_cast %8 : vector<1x1x16x4xbf16> to vector<16x4xbf16>
    %c73 = arith.constant 73 : index
    %c0_13 = arith.constant 0 : index
    %10 = vector.load %arg6[%c73, %c0_13] : memref<456x4xbf16, #tpu.memory_space<vmem>>, vector<16x4xbf16>
    tpu.vector_store %arg6[%c73, %c0_13], %9 {strides = array<i32>} : memref<456x4xbf16, #tpu.memory_space<vmem>>, vector<16x4xbf16>,
    %c0_14 = arith.constant 0 : index
    %c3 = arith.constant 3 : index
    %c0_15 = arith.constant 0 : index
    %c0_16 = arith.constant 0 : index
    %11 = vector.load %arg1[%c0_14, %c3, %c0_15, %c0_16] : memref<1x16x16x4xbf16, #tpu.memory_space<vmem>>, vector<1x1x16x4xbf16>
    %12 = vector.shape_cast %11 : vector<1x1x16x4xbf16> to vector<16x4xbf16>
    %c97 = arith.constant 97 : index
    %c0_17 = arith.constant 0 : index
    %13 = vector.load %arg6[%c97, %c0_17] : memref<456x4xbf16, #tpu.memory_space<vmem>>, vector<16x4xbf16>
    tpu.vector_store %arg6[%c97, %c0_17], %12 {strides = array<i32>} : memref<456x4xbf16, #tpu.memory_space<vmem>>, vector<16x4xbf16>,
    %c0_18 = arith.constant 0 : index
    %c4 = arith.constant 4 : index
    %c0_19 = arith.constant 0 : index
    %c0_20 = arith.constant 0 : index
    %14 = vector.load %arg1[%c0_18, %c4, %c0_19, %c0_20] : memref<1x16x16x4xbf16, #tpu.memory_space<vmem>>, vector<1x1x16x4xbf16>
    %15 = vector.shape_cast %14 : vector<1x1x16x4xbf16> to vector<16x4xbf16>
    %c121 = arith.constant 121 : index
    %c0_21 = arith.constant 0 : index
    %16 = vector.load %arg6[%c121, %c0_21] : memref<456x4xbf16, #tpu.memory_space<vmem>>, vector<16x4xbf16>
    tpu.vector_store %arg6[%c121, %c0_21], %15 {strides = array<i32>} : memref<456x4xbf16, #tpu.memory_space<vmem>>, vector<16x4xbf16>,
    %c0_22 = arith.constant 0 : index
    %c5 = arith.constant 5 : index
    %c0_23 = arith.constant 0 : index
    %c0_24 = arith.constant 0 : index
    %17 = vector.load %arg1[%c0_22, %c5, %c0_23, %c0_24] : memref<1x16x16x4xbf16, #tpu.memory_space<vmem>>, vector<1x1x16x4xbf16>
    %18 = vector.shape_cast %17 : vector<1x1x16x4xbf16> to vector<16x4xbf16>
    %c145 = arith.constant 145 : index
    %c0_25 = arith.constant 0 : index
    %19 = vector.load %arg6[%c145, %c0_25] : memref<456x4xbf16, #tpu.memory_space<vmem>>, vector<16x4xbf16>
    tpu.vector_store %arg6[%c145, %c0_25], %18 {strides = array<i32>} : memref<456x4xbf16, #tpu.memory_space<vmem>>, vector<16x4xbf16>,
    %c0_26 = arith.constant 0 : index
    %c6 = arith.constant 6 : index
    %c0_27 = arith.constant 0 : index
    %c0_28 = arith.constant 0 : index
    %20 = vector.load %arg1[%c0_26, %c6, %c0_27, %c0_28] : memref<1x16x16x4xbf16, #tpu.memory_space<vmem>>, vector<1x1x16x4xbf16>
    %21 = vector.shape_cast %20 : vector<1x1x16x4xbf16> to vector<16x4xbf16>
    %c169 = arith.constant 169 : index
    %c0_29 = arith.constant 0 : index
    %22 = vector.load %arg6[%c169, %c0_29] : memref<456x4xbf16, #tpu.memory_space<vmem>>, vector<16x4xbf16>
    tpu.vector_store %arg6[%c169, %c0_29], %21 {strides = array<i32>} : memref<456x4xbf16, #tpu.memory_space<vmem>>, vector<16x4xbf16>,
    %c0_30 = arith.constant 0 : index
    %c7 = arith.constant 7 : index
    %c0_31 = arith.constant 0 : index
    %c0_32 = arith.constant 0 : index
    %23 = vector.load %arg1[%c0_30, %c7, %c0_31, %c0_32] : memref<1x16x16x4xbf16, #tpu.memory_space<vmem>>, vector<1x1x16x4xbf16>
    %24 = vector.shape_cast %23 : vector<1x1x16x4xbf16> to vector<16x4xbf16>
    %c193 = arith.constant 193 : index
    %c0_33 = arith.constant 0 : index
    %25 = vector.load %arg6[%c193, %c0_33] : memref<456x4xbf16, #tpu.memory_space<vmem>>, vector<16x4xbf16>
    tpu.vector_store %arg6[%c193, %c0_33], %24 {strides = array<i32>} : memref<456x4xbf16, #tpu.memory_space<vmem>>, vector<16x4xbf16>,
    %c0_34 = arith.constant 0 : index
    %c8 = arith.constant 8 : index
    %c0_35 = arith.constant 0 : index
    %c0_36 = arith.constant 0 : index
    %26 = vector.load %arg1[%c0_34, %c8, %c0_35, %c0_36] : memref<1x16x16x4xbf16, #tpu.memory_space<vmem>>, vector<1x1x16x4xbf16>
    %27 = vector.shape_cast %26 : vector<1x1x16x4xbf16> to vector<16x4xbf16>
    %c217 = arith.constant 217 : index
    %c0_37 = arith.constant 0 : index
    %28 = vector.load %arg6[%c217, %c0_37] : memref<456x4xbf16, #tpu.memory_space<vmem>>, vector<16x4xbf16>
    tpu.vector_store %arg6[%c217, %c0_37], %27 {strides = array<i32>} : memref<456x4xbf16, #tpu.memory_space<vmem>>, vector<16x4xbf16>,
    %c0_38 = arith.constant 0 : index
    %c9 = arith.constant 9 : index
    %c0_39 = arith.constant 0 : index
    %c0_40 = arith.constant 0 : index
    %29 = vector.load %arg1[%c0_38, %c9, %c0_39, %c0_40] : memref<1x16x16x4xbf16, #tpu.memory_space<vmem>>, vector<1x1x16x4xbf16>
    %30 = vector.shape_cast %29 : vector<1x1x16x4xbf16> to vector<16x4xbf16>
    %c241 = arith.constant 241 : index
    %c0_41 = arith.constant 0 : index
    %31 = vector.load %arg6[%c241, %c0_41] : memref<456x4xbf16, #tpu.memory_space<vmem>>, vector<16x4xbf16>
    tpu.vector_store %arg6[%c241, %c0_41], %30 {strides = array<i32>} : memref<456x4xbf16, #tpu.memory_space<vmem>>, vector<16x4xbf16>,
    %c0_42 = arith.constant 0 : index
    %c10 = arith.constant 10 : index
    %c0_43 = arith.constant 0 : index
    %c0_44 = arith.constant 0 : index
    %32 = vector.load %arg1[%c0_42, %c10, %c0_43, %c0_44] : memref<1x16x16x4xbf16, #tpu.memory_space<vmem>>, vector<1x1x16x4xbf16>
    %33 = vector.shape_cast %32 : vector<1x1x16x4xbf16> to vector<16x4xbf16>
    %c265 = arith.constant 265 : index
    %c0_45 = arith.constant 0 : index
    %34 = vector.load %arg6[%c265, %c0_45] : memref<456x4xbf16, #tpu.memory_space<vmem>>, vector<16x4xbf16>
    tpu.vector_store %arg6[%c265, %c0_45], %33 {strides = array<i32>} : memref<456x4xbf16, #tpu.memory_space<vmem>>, vector<16x4xbf16>,
    %c0_46 = arith.constant 0 : index
    %c11 = arith.constant 11 : index
    %c0_47 = arith.constant 0 : index
    %c0_48 = arith.constant 0 : index
    %35 = vector.load %arg1[%c0_46, %c11, %c0_47, %c0_48] : memref<1x16x16x4xbf16, #tpu.memory_space<vmem>>, vector<1x1x16x4xbf16>
    %36 = vector.shape_cast %35 : vector<1x1x16x4xbf16> to vector<16x4xbf16>
    %c289 = arith.constant 289 : index
    %c0_49 = arith.constant 0 : index
    %37 = vector.load %arg6[%c289, %c0_49] : memref<456x4xbf16, #tpu.memory_space<vmem>>, vector<16x4xbf16>
    tpu.vector_store %arg6[%c289, %c0_49], %36 {strides = array<i32>} : memref<456x4xbf16, #tpu.memory_space<vmem>>, vector<16x4xbf16>,
    %c0_50 = arith.constant 0 : index
    %c12 = arith.constant 12 : index
    %c0_51 = arith.constant 0 : index
    %c0_52 = arith.constant 0 : index
    %38 = vector.load %arg1[%c0_50, %c12, %c0_51, %c0_52] : memref<1x16x16x4xbf16, #tpu.memory_space<vmem>>, vector<1x1x16x4xbf16>
    %39 = vector.shape_cast %38 : vector<1x1x16x4xbf16> to vector<16x4xbf16>
    %c313 = arith.constant 313 : index
    %c0_53 = arith.constant 0 : index
    %40 = vector.load %arg6[%c313, %c0_53] : memref<456x4xbf16, #tpu.memory_space<vmem>>, vector<16x4xbf16>
    tpu.vector_store %arg6[%c313, %c0_53], %39 {strides = array<i32>} : memref<456x4xbf16, #tpu.memory_space<vmem>>, vector<16x4xbf16>,
    %c0_54 = arith.constant 0 : index
    %c13 = arith.constant 13 : index
    %c0_55 = arith.constant 0 : index
    %c0_56 = arith.constant 0 : index
    %41 = vector.load %arg1[%c0_54, %c13, %c0_55, %c0_56] : memref<1x16x16x4xbf16, #tpu.memory_space<vmem>>, vector<1x1x16x4xbf16>
    %42 = vector.shape_cast %41 : vector<1x1x16x4xbf16> to vector<16x4xbf16>
    %c337 = arith.constant 337 : index
    %c0_57 = arith.constant 0 : index
    %43 = vector.load %arg6[%c337, %c0_57] : memref<456x4xbf16, #tpu.memory_space<vmem>>, vector<16x4xbf16>
    tpu.vector_store %arg6[%c337, %c0_57], %42 {strides = array<i32>} : memref<456x4xbf16, #tpu.memory_space<vmem>>, vector<16x4xbf16>,
    %c0_58 = arith.constant 0 : index
    %c14 = arith.constant 14 : index
    %c0_59 = arith.constant 0 : index
    %c0_60 = arith.constant 0 : index
    %44 = vector.load %arg1[%c0_58, %c14, %c0_59, %c0_60] : memref<1x16x16x4xbf16, #tpu.memory_space<vmem>>, vector<1x1x16x4xbf16>
    %45 = vector.shape_cast %44 : vector<1x1x16x4xbf16> to vector<16x4xbf16>
    %c361 = arith.constant 361 : index
    %c0_61 = arith.constant 0 : index
    %46 = vector.load %arg6[%c361, %c0_61] : memref<456x4xbf16, #tpu.memory_space<vmem>>, vector<16x4xbf16>
    tpu.vector_store %arg6[%c361, %c0_61], %45 {strides = array<i32>} : memref<456x4xbf16, #tpu.memory_space<vmem>>, vector<16x4xbf16>,
    %c0_62 = arith.constant 0 : index
    %c15 = arith.constant 15 : index
    %c0_63 = arith.constant 0 : index
    %c0_64 = arith.constant 0 : index
    %47 = vector.load %arg1[%c0_62, %c15, %c0_63, %c0_64] : memref<1x16x16x4xbf16, #tpu.memory_space<vmem>>, vector<1x1x16x4xbf16>
    %48 = vector.shape_cast %47 : vector<1x1x16x4xbf16> to vector<16x4xbf16>
    %c385 = arith.constant 385 : index
    %c0_65 = arith.constant 0 : index
    %49 = vector.load %arg6[%c385, %c0_65] : memref<456x4xbf16, #tpu.memory_space<vmem>>, vector<16x4xbf16>
    tpu.vector_store %arg6[%c385, %c0_65], %48 {strides = array<i32>} : memref<456x4xbf16, #tpu.memory_space<vmem>>, vector<16x4xbf16>,
    %c0_66 = arith.constant 0 : index
    %c0_67 = arith.constant 0 : index
    %50 = vector.load %arg6[%c0_66, %c0_67] : memref<456x4xbf16, #tpu.memory_space<vmem>>, vector<384x4xbf16>
    %c0_68 = arith.constant 0 : index
    %c0_69 = arith.constant 0 : index
    %51 = vector.load %arg7[%c0_68, %c0_69] : memref<384x36xbf16, #tpu.memory_space<vmem>>, vector<384x4xbf16>
    tpu.vector_store %arg7[%c0_68, %c0_69], %50 {strides = array<i32>} : memref<384x36xbf16, #tpu.memory_space<vmem>>, vector<384x4xbf16>,
    %c1_70 = arith.constant 1 : index
    %c0_71 = arith.constant 0 : index
    %52 = vector.load %arg6[%c1_70, %c0_71] : memref<456x4xbf16, #tpu.memory_space<vmem>>, vector<384x4xbf16>
    %c0_72 = arith.constant 0 : index
    %c4_73 = arith.constant 4 : index
    %53 = vector.load %arg7[%c0_72, %c4_73] : memref<384x36xbf16, #tpu.memory_space<vmem>>, vector<384x4xbf16>
    tpu.vector_store %arg7[%c0_72, %c4_73], %52 {strides = array<i32>} : memref<384x36xbf16, #tpu.memory_space<vmem>>, vector<384x4xbf16>,
    %c2_74 = arith.constant 2 : index
    %c0_75 = arith.constant 0 : index
    %54 = vector.load %arg6[%c2_74, %c0_75] : memref<456x4xbf16, #tpu.memory_space<vmem>>, vector<384x4xbf16>
    %c0_76 = arith.constant 0 : index
    %c8_77 = arith.constant 8 : index
    %55 = vector.load %arg7[%c0_76, %c8_77] : memref<384x36xbf16, #tpu.memory_space<vmem>>, vector<384x4xbf16>
    tpu.vector_store %arg7[%c0_76, %c8_77], %54 {strides = array<i32>} : memref<384x36xbf16, #tpu.memory_space<vmem>>, vector<384x4xbf16>,
    %c24 = arith.constant 24 : index
    %c0_78 = arith.constant 0 : index
    %56 = vector.load %arg6[%c24, %c0_78] : memref<456x4xbf16, #tpu.memory_space<vmem>>, vector<384x4xbf16>
    %c0_79 = arith.constant 0 : index
    %c12_80 = arith.constant 12 : index
    %57 = vector.load %arg7[%c0_79, %c12_80] : memref<384x36xbf16, #tpu.memory_space<vmem>>, vector<384x4xbf16>
    tpu.vector_store %arg7[%c0_79, %c12_80], %56 {strides = array<i32>} : memref<384x36xbf16, #tpu.memory_space<vmem>>, vector<384x4xbf16>,
    %c25_81 = arith.constant 25 : index
    %c0_82 = arith.constant 0 : index
    %58 = vector.load %arg6[%c25_81, %c0_82] : memref<456x4xbf16, #tpu.memory_space<vmem>>, vector<384x4xbf16>
    %c0_83 = arith.constant 0 : index
    %c16 = arith.constant 16 : index
    %59 = vector.load %arg7[%c0_83, %c16] : memref<384x36xbf16, #tpu.memory_space<vmem>>, vector<384x4xbf16>
    tpu.vector_store %arg7[%c0_83, %c16], %58 {strides = array<i32>} : memref<384x36xbf16, #tpu.memory_space<vmem>>, vector<384x4xbf16>,
    %c26 = arith.constant 26 : index
    %c0_84 = arith.constant 0 : index
    %60 = vector.load %arg6[%c26, %c0_84] : memref<456x4xbf16, #tpu.memory_space<vmem>>, vector<384x4xbf16>
    %c0_85 = arith.constant 0 : index
    %c20 = arith.constant 20 : index
    %61 = vector.load %arg7[%c0_85, %c20] : memref<384x36xbf16, #tpu.memory_space<vmem>>, vector<384x4xbf16>
    tpu.vector_store %arg7[%c0_85, %c20], %60 {strides = array<i32>} : memref<384x36xbf16, #tpu.memory_space<vmem>>, vector<384x4xbf16>,
    %c48 = arith.constant 48 : index
    %c0_86 = arith.constant 0 : index
    %62 = vector.load %arg6[%c48, %c0_86] : memref<456x4xbf16, #tpu.memory_space<vmem>>, vector<384x4xbf16>
    %c0_87 = arith.constant 0 : index
    %c24_88 = arith.constant 24 : index
    %63 = vector.load %arg7[%c0_87, %c24_88] : memref<384x36xbf16, #tpu.memory_space<vmem>>, vector<384x4xbf16>
    tpu.vector_store %arg7[%c0_87, %c24_88], %62 {strides = array<i32>} : memref<384x36xbf16, #tpu.memory_space<vmem>>, vector<384x4xbf16>,
    %c49_89 = arith.constant 49 : index
    %c0_90 = arith.constant 0 : index
    %64 = vector.load %arg6[%c49_89, %c0_90] : memref<456x4xbf16, #tpu.memory_space<vmem>>, vector<384x4xbf16>
    %c0_91 = arith.constant 0 : index
    %c28 = arith.constant 28 : index
    %65 = vector.load %arg7[%c0_91, %c28] : memref<384x36xbf16, #tpu.memory_space<vmem>>, vector<384x4xbf16>
    tpu.vector_store %arg7[%c0_91, %c28], %64 {strides = array<i32>} : memref<384x36xbf16, #tpu.memory_space<vmem>>, vector<384x4xbf16>,
    %c50 = arith.constant 50 : index
    %c0_92 = arith.constant 0 : index
    %66 = vector.load %arg6[%c50, %c0_92] : memref<456x4xbf16, #tpu.memory_space<vmem>>, vector<384x4xbf16>
    %c0_93 = arith.constant 0 : index
    %c32 = arith.constant 32 : index
    %67 = vector.load %arg7[%c0_93, %c32] : memref<384x36xbf16, #tpu.memory_space<vmem>>, vector<384x4xbf16>
    tpu.vector_store %arg7[%c0_93, %c32], %66 {strides = array<i32>} : memref<384x36xbf16, #tpu.memory_space<vmem>>, vector<384x4xbf16>,
    %c0_94 = arith.constant 0 : index
    %c0_95 = arith.constant 0 : index
    %68 = vector.load %arg7[%c0_94, %c0_95] : memref<384x36xbf16, #tpu.memory_space<vmem>>, vector<384x36xbf16>
    %c0_96 = arith.constant 0 : index
    %c0_97 = arith.constant 0 : index
    %69 = vector.load %arg2[%c0_96, %c0_97] : memref<36x8xbf16, #tpu.memory_space<vmem>>, vector<36x8xbf16>
    %cst_98 = arith.constant dense<0.000000e+00> : vector<384x8xf32>
    %70 = tpu.matmul %68, %69, %cst_98 {dimension_numbers = #tpu.dot_dimension_numbers<[1], [0], [0], [1], [0, 0, 1, 1], [], []>} : vector<384x36xbf16>, vector<36x8xbf16>, vector<384x8xf32> -> vector<384x8xf32>
    %c0_99 = arith.constant 0 : index
    %c0_100 = arith.constant 0 : index
    %71 = vector.load %arg3[%c0_99, %c0_100] : memref<1x8xf32, #tpu.memory_space<vmem>>, vector<1x8xf32>
    %72 = vector.broadcast %71 : vector<1x8xf32> to vector<384x8xf32>
    %73 = arith.mulf %70, %72 : vector<384x8xf32>
    %c0_101 = arith.constant 0 : index
    %c0_102 = arith.constant 0 : index
    %74 = vector.load %arg4[%c0_101, %c0_102] : memref<1x8xf32, #tpu.memory_space<vmem>>, vector<1x8xf32>
    %75 = vector.broadcast %74 : vector<1x8xf32> to vector<384x8xf32>
    %76 = arith.addf %73, %75 : vector<384x8xf32>
    %cst_103 = arith.constant 0.000000e+00 : f32
    %77 = vector.broadcast %cst_103 : f32 to vector<384x8xf32>
    %78 = arith.maximumf %76, %77 : vector<384x8xf32>
    %79 = arith.truncf %78 : vector<384x8xf32> to vector<384x8xbf16>
    %80 = vector.extract_strided_slice %79 {offsets = [0, 0], sizes = [16, 8], strides = [1, 1]} : vector<384x8xbf16> to vector<16x8xbf16>
    %c0_104 = arith.constant 0 : index
    %c0_105 = arith.constant 0 : index
    %c0_106 = arith.constant 0 : index
    %c0_107 = arith.constant 0 : index
    %81 = vector.load %arg5[%c0_104, %c0_105, %c0_106, %c0_107] : memref<1x16x16x8xbf16, #tpu.memory_space<vmem>>, vector<1x1x16x8xbf16>
    %82 = vector.shape_cast %81 : vector<1x1x16x8xbf16> to vector<16x8xbf16>
    %83 = vector.shape_cast %80 : vector<16x8xbf16> to vector<1x1x16x8xbf16>
    tpu.vector_store %arg5[%c0_104, %c0_105, %c0_106, %c0_107], %83 {strides = array<i32>} : memref<1x16x16x8xbf16, #tpu.memory_space<vmem>>, vector<1x1x16x8xbf16>,
    %84 = vector.extract_strided_slice %79 {offsets = [24, 0], sizes = [16, 8], strides = [1, 1]} : vector<384x8xbf16> to vector<16x8xbf16>
    %c0_108 = arith.constant 0 : index
    %c1_109 = arith.constant 1 : index
    %c0_110 = arith.constant 0 : index
    %c0_111 = arith.constant 0 : index
    %85 = vector.load %arg5[%c0_108, %c1_109, %c0_110, %c0_111] : memref<1x16x16x8xbf16, #tpu.memory_space<vmem>>, vector<1x1x16x8xbf16>
    %86 = vector.shape_cast %85 : vector<1x1x16x8xbf16> to vector<16x8xbf16>
    %87 = vector.shape_cast %84 : vector<16x8xbf16> to vector<1x1x16x8xbf16>
    tpu.vector_store %arg5[%c0_108, %c1_109, %c0_110, %c0_111], %87 {strides = array<i32>} : memref<1x16x16x8xbf16, #tpu.memory_space<vmem>>, vector<1x1x16x8xbf16>,
    %88 = vector.extract_strided_slice %79 {offsets = [48, 0], sizes = [16, 8], strides = [1, 1]} : vector<384x8xbf16> to vector<16x8xbf16>
    %c0_112 = arith.constant 0 : index
    %c2_113 = arith.constant 2 : index
    %c0_114 = arith.constant 0 : index
    %c0_115 = arith.constant 0 : index
    %89 = vector.load %arg5[%c0_112, %c2_113, %c0_114, %c0_115] : memref<1x16x16x8xbf16, #tpu.memory_space<vmem>>, vector<1x1x16x8xbf16>
    %90 = vector.shape_cast %89 : vector<1x1x16x8xbf16> to vector<16x8xbf16>
    %91 = vector.shape_cast %88 : vector<16x8xbf16> to vector<1x1x16x8xbf16>
    tpu.vector_store %arg5[%c0_112, %c2_113, %c0_114, %c0_115], %91 {strides = array<i32>} : memref<1x16x16x8xbf16, #tpu.memory_space<vmem>>, vector<1x1x16x8xbf16>,
    %92 = vector.extract_strided_slice %79 {offsets = [72, 0], sizes = [16, 8], strides = [1, 1]} : vector<384x8xbf16> to vector<16x8xbf16>
    %c0_116 = arith.constant 0 : index
    %c3_117 = arith.constant 3 : index
    %c0_118 = arith.constant 0 : index
    %c0_119 = arith.constant 0 : index
    %93 = vector.load %arg5[%c0_116, %c3_117, %c0_118, %c0_119] : memref<1x16x16x8xbf16, #tpu.memory_space<vmem>>, vector<1x1x16x8xbf16>
    %94 = vector.shape_cast %93 : vector<1x1x16x8xbf16> to vector<16x8xbf16>
    %95 = vector.shape_cast %92 : vector<16x8xbf16> to vector<1x1x16x8xbf16>
    tpu.vector_store %arg5[%c0_116, %c3_117, %c0_118, %c0_119], %95 {strides = array<i32>} : memref<1x16x16x8xbf16, #tpu.memory_space<vmem>>, vector<1x1x16x8xbf16>,
    %96 = vector.extract_strided_slice %79 {offsets = [96, 0], sizes = [16, 8], strides = [1, 1]} : vector<384x8xbf16> to vector<16x8xbf16>
    %c0_120 = arith.constant 0 : index
    %c4_121 = arith.constant 4 : index
    %c0_122 = arith.constant 0 : index
    %c0_123 = arith.constant 0 : index
    %97 = vector.load %arg5[%c0_120, %c4_121, %c0_122, %c0_123] : memref<1x16x16x8xbf16, #tpu.memory_space<vmem>>, vector<1x1x16x8xbf16>
    %98 = vector.shape_cast %97 : vector<1x1x16x8xbf16> to vector<16x8xbf16>
    %99 = vector.shape_cast %96 : vector<16x8xbf16> to vector<1x1x16x8xbf16>
    tpu.vector_store %arg5[%c0_120, %c4_121, %c0_122, %c0_123], %99 {strides = array<i32>} : memref<1x16x16x8xbf16, #tpu.memory_space<vmem>>, vector<1x1x16x8xbf16>,
    %100 = vector.extract_strided_slice %79 {offsets = [120, 0], sizes = [16, 8], strides = [1, 1]} : vector<384x8xbf16> to vector<16x8xbf16>
    %c0_124 = arith.constant 0 : index
    %c5_125 = arith.constant 5 : index
    %c0_126 = arith.constant 0 : index
    %c0_127 = arith.constant 0 : index
    %101 = vector.load %arg5[%c0_124, %c5_125, %c0_126, %c0_127] : memref<1x16x16x8xbf16, #tpu.memory_space<vmem>>, vector<1x1x16x8xbf16>
    %102 = vector.shape_cast %101 : vector<1x1x16x8xbf16> to vector<16x8xbf16>
    %103 = vector.shape_cast %100 : vector<16x8xbf16> to vector<1x1x16x8xbf16>
    tpu.vector_store %arg5[%c0_124, %c5_125, %c0_126, %c0_127], %103 {strides = array<i32>} : memref<1x16x16x8xbf16, #tpu.memory_space<vmem>>, vector<1x1x16x8xbf16>,
    %104 = vector.extract_strided_slice %79 {offsets = [144, 0], sizes = [16, 8], strides = [1, 1]} : vector<384x8xbf16> to vector<16x8xbf16>
    %c0_128 = arith.constant 0 : index
    %c6_129 = arith.constant 6 : index
    %c0_130 = arith.constant 0 : index
    %c0_131 = arith.constant 0 : index
    %105 = vector.load %arg5[%c0_128, %c6_129, %c0_130, %c0_131] : memref<1x16x16x8xbf16, #tpu.memory_space<vmem>>, vector<1x1x16x8xbf16>
    %106 = vector.shape_cast %105 : vector<1x1x16x8xbf16> to vector<16x8xbf16>
    %107 = vector.shape_cast %104 : vector<16x8xbf16> to vector<1x1x16x8xbf16>
    tpu.vector_store %arg5[%c0_128, %c6_129, %c0_130, %c0_131], %107 {strides = array<i32>} : memref<1x16x16x8xbf16, #tpu.memory_space<vmem>>, vector<1x1x16x8xbf16>,
    %108 = vector.extract_strided_slice %79 {offsets = [168, 0], sizes = [16, 8], strides = [1, 1]} : vector<384x8xbf16> to vector<16x8xbf16>
    %c0_132 = arith.constant 0 : index
    %c7_133 = arith.constant 7 : index
    %c0_134 = arith.constant 0 : index
    %c0_135 = arith.constant 0 : index
    %109 = vector.load %arg5[%c0_132, %c7_133, %c0_134, %c0_135] : memref<1x16x16x8xbf16, #tpu.memory_space<vmem>>, vector<1x1x16x8xbf16>
    %110 = vector.shape_cast %109 : vector<1x1x16x8xbf16> to vector<16x8xbf16>
    %111 = vector.shape_cast %108 : vector<16x8xbf16> to vector<1x1x16x8xbf16>
    tpu.vector_store %arg5[%c0_132, %c7_133, %c0_134, %c0_135], %111 {strides = array<i32>} : memref<1x16x16x8xbf16, #tpu.memory_space<vmem>>, vector<1x1x16x8xbf16>,
    %112 = vector.extract_strided_slice %79 {offsets = [192, 0], sizes = [16, 8], strides = [1, 1]} : vector<384x8xbf16> to vector<16x8xbf16>
    %c0_136 = arith.constant 0 : index
    %c8_137 = arith.constant 8 : index
    %c0_138 = arith.constant 0 : index
    %c0_139 = arith.constant 0 : index
    %113 = vector.load %arg5[%c0_136, %c8_137, %c0_138, %c0_139] : memref<1x16x16x8xbf16, #tpu.memory_space<vmem>>, vector<1x1x16x8xbf16>
    %114 = vector.shape_cast %113 : vector<1x1x16x8xbf16> to vector<16x8xbf16>
    %115 = vector.shape_cast %112 : vector<16x8xbf16> to vector<1x1x16x8xbf16>
    tpu.vector_store %arg5[%c0_136, %c8_137, %c0_138, %c0_139], %115 {strides = array<i32>} : memref<1x16x16x8xbf16, #tpu.memory_space<vmem>>, vector<1x1x16x8xbf16>,
    %116 = vector.extract_strided_slice %79 {offsets = [216, 0], sizes = [16, 8], strides = [1, 1]} : vector<384x8xbf16> to vector<16x8xbf16>
    %c0_140 = arith.constant 0 : index
    %c9_141 = arith.constant 9 : index
    %c0_142 = arith.constant 0 : index
    %c0_143 = arith.constant 0 : index
    %117 = vector.load %arg5[%c0_140, %c9_141, %c0_142, %c0_143] : memref<1x16x16x8xbf16, #tpu.memory_space<vmem>>, vector<1x1x16x8xbf16>
    %118 = vector.shape_cast %117 : vector<1x1x16x8xbf16> to vector<16x8xbf16>
    %119 = vector.shape_cast %116 : vector<16x8xbf16> to vector<1x1x16x8xbf16>
    tpu.vector_store %arg5[%c0_140, %c9_141, %c0_142, %c0_143], %119 {strides = array<i32>} : memref<1x16x16x8xbf16, #tpu.memory_space<vmem>>, vector<1x1x16x8xbf16>,
    %120 = vector.extract_strided_slice %79 {offsets = [240, 0], sizes = [16, 8], strides = [1, 1]} : vector<384x8xbf16> to vector<16x8xbf16>
    %c0_144 = arith.constant 0 : index
    %c10_145 = arith.constant 10 : index
    %c0_146 = arith.constant 0 : index
    %c0_147 = arith.constant 0 : index
    %121 = vector.load %arg5[%c0_144, %c10_145, %c0_146, %c0_147] : memref<1x16x16x8xbf16, #tpu.memory_space<vmem>>, vector<1x1x16x8xbf16>
    %122 = vector.shape_cast %121 : vector<1x1x16x8xbf16> to vector<16x8xbf16>
    %123 = vector.shape_cast %120 : vector<16x8xbf16> to vector<1x1x16x8xbf16>
    tpu.vector_store %arg5[%c0_144, %c10_145, %c0_146, %c0_147], %123 {strides = array<i32>} : memref<1x16x16x8xbf16, #tpu.memory_space<vmem>>, vector<1x1x16x8xbf16>,
    %124 = vector.extract_strided_slice %79 {offsets = [264, 0], sizes = [16, 8], strides = [1, 1]} : vector<384x8xbf16> to vector<16x8xbf16>
    %c0_148 = arith.constant 0 : index
    %c11_149 = arith.constant 11 : index
    %c0_150 = arith.constant 0 : index
    %c0_151 = arith.constant 0 : index
    %125 = vector.load %arg5[%c0_148, %c11_149, %c0_150, %c0_151] : memref<1x16x16x8xbf16, #tpu.memory_space<vmem>>, vector<1x1x16x8xbf16>
    %126 = vector.shape_cast %125 : vector<1x1x16x8xbf16> to vector<16x8xbf16>
    %127 = vector.shape_cast %124 : vector<16x8xbf16> to vector<1x1x16x8xbf16>
    tpu.vector_store %arg5[%c0_148, %c11_149, %c0_150, %c0_151], %127 {strides = array<i32>} : memref<1x16x16x8xbf16, #tpu.memory_space<vmem>>, vector<1x1x16x8xbf16>,
    %128 = vector.extract_strided_slice %79 {offsets = [288, 0], sizes = [16, 8], strides = [1, 1]} : vector<384x8xbf16> to vector<16x8xbf16>
    %c0_152 = arith.constant 0 : index
    %c12_153 = arith.constant 12 : index
    %c0_154 = arith.constant 0 : index
    %c0_155 = arith.constant 0 : index
    %129 = vector.load %arg5[%c0_152, %c12_153, %c0_154, %c0_155] : memref<1x16x16x8xbf16, #tpu.memory_space<vmem>>, vector<1x1x16x8xbf16>
    %130 = vector.shape_cast %129 : vector<1x1x16x8xbf16> to vector<16x8xbf16>
    %131 = vector.shape_cast %128 : vector<16x8xbf16> to vector<1x1x16x8xbf16>
    tpu.vector_store %arg5[%c0_152, %c12_153, %c0_154, %c0_155], %131 {strides = array<i32>} : memref<1x16x16x8xbf16, #tpu.memory_space<vmem>>, vector<1x1x16x8xbf16>,
    %132 = vector.extract_strided_slice %79 {offsets = [312, 0], sizes = [16, 8], strides = [1, 1]} : vector<384x8xbf16> to vector<16x8xbf16>
    %c0_156 = arith.constant 0 : index
    %c13_157 = arith.constant 13 : index
    %c0_158 = arith.constant 0 : index
    %c0_159 = arith.constant 0 : index
    %133 = vector.load %arg5[%c0_156, %c13_157, %c0_158, %c0_159] : memref<1x16x16x8xbf16, #tpu.memory_space<vmem>>, vector<1x1x16x8xbf16>
    %134 = vector.shape_cast %133 : vector<1x1x16x8xbf16> to vector<16x8xbf16>
    %135 = vector.shape_cast %132 : vector<16x8xbf16> to vector<1x1x16x8xbf16>
    tpu.vector_store %arg5[%c0_156, %c13_157, %c0_158, %c0_159], %135 {strides = array<i32>} : memref<1x16x16x8xbf16, #tpu.memory_space<vmem>>, vector<1x1x16x8xbf16>,
    %136 = vector.extract_strided_slice %79 {offsets = [336, 0], sizes = [16, 8], strides = [1, 1]} : vector<384x8xbf16> to vector<16x8xbf16>
    %c0_160 = arith.constant 0 : index
    %c14_161 = arith.constant 14 : index
    %c0_162 = arith.constant 0 : index
    %c0_163 = arith.constant 0 : index
    %137 = vector.load %arg5[%c0_160, %c14_161, %c0_162, %c0_163] : memref<1x16x16x8xbf16, #tpu.memory_space<vmem>>, vector<1x1x16x8xbf16>
    %138 = vector.shape_cast %137 : vector<1x1x16x8xbf16> to vector<16x8xbf16>
    %139 = vector.shape_cast %136 : vector<16x8xbf16> to vector<1x1x16x8xbf16>
    tpu.vector_store %arg5[%c0_160, %c14_161, %c0_162, %c0_163], %139 {strides = array<i32>} : memref<1x16x16x8xbf16, #tpu.memory_space<vmem>>, vector<1x1x16x8xbf16>,
    %140 = vector.extract_strided_slice %79 {offsets = [360, 0], sizes = [16, 8], strides = [1, 1]} : vector<384x8xbf16> to vector<16x8xbf16>
    %c0_164 = arith.constant 0 : index
    %c15_165 = arith.constant 15 : index
    %c0_166 = arith.constant 0 : index
    %c0_167 = arith.constant 0 : index
    %141 = vector.load %arg5[%c0_164, %c15_165, %c0_166, %c0_167] : memref<1x16x16x8xbf16, #tpu.memory_space<vmem>>, vector<1x1x16x8xbf16>
    %142 = vector.shape_cast %141 : vector<1x1x16x8xbf16> to vector<16x8xbf16>
    %143 = vector.shape_cast %140 : vector<16x8xbf16> to vector<1x1x16x8xbf16>
    tpu.vector_store %arg5[%c0_164, %c15_165, %c0_166, %c0_167], %143 {strides = array<i32>} : memref<1x16x16x8xbf16, #tpu.memory_space<vmem>>, vector<1x1x16x8xbf16>,
    return
  }
  func.func @transform_0(%arg0: i32) -> (i32, i32, i32, i32) {
    %c0_i32 = arith.constant 0 : i32
    %c0_i32_0 = arith.constant 0 : i32
    %c0_i32_1 = arith.constant 0 : i32
    %c0_i32_2 = arith.constant 0 : i32
    return %arg0, %c0_i32, %c0_i32_0, %c0_i32_1 : i32, i32, i32, i32
  }
  func.func @transform_1(%arg0: i32) -> (i32, i32) {
    %c0_i32 = arith.constant 0 : i32
    %c0_i32_0 = arith.constant 0 : i32
    %c0_i32_1 = arith.constant 0 : i32
    return %c0_i32, %c0_i32_0 : i32, i32
  }
  func.func @transform_2(%arg0: i32) -> (i32, i32) {
    %c0_i32 = arith.constant 0 : i32
    %c0_i32_0 = arith.constant 0 : i32
    %c0_i32_1 = arith.constant 0 : i32
    return %c0_i32, %c0_i32_0 : i32, i32
  }
  func.func @transform_3(%arg0: i32) -> (i32, i32) {
    %c0_i32 = arith.constant 0 : i32
    %c0_i32_0 = arith.constant 0 : i32
    %c0_i32_1 = arith.constant 0 : i32
    return %c0_i32, %c0_i32_0 : i32, i32
  }
  func.func @transform_4(%arg0: i32) -> (i32, i32, i32, i32) {
    %c0_i32 = arith.constant 0 : i32
    %c0_i32_0 = arith.constant 0 : i32
    %c0_i32_1 = arith.constant 0 : i32
    %c0_i32_2 = arith.constant 0 : i32
    return %arg0, %c0_i32, %c0_i32_0, %c0_i32_1 : i32, i32, i32, i32
  }
}

</mosaic_0001>

<llo_original>
// kernel: inception_forward.4
$region0: #{inception_forward.4}
  #allocation0 [shape = 'u32[]', space=smem, size = 0x4, offset = 0x4, fixed_abs, tag = 'smem constant byte address 0x4 - core index']
  #allocation1 [shape = 'u32[144,128]{1,0:T(1,128)}', space=vmem, size = 0x12000, scoped, tag = 'internal scratch']
  %s0 = inlined_call_operand.vmem [shape: bf16[512,4], index: 0, kind: input, shape index: {}]
  %s1 = inlined_call_operand.vmem [shape: bf16[4,16], index: 1, kind: input, shape index: {}]
  %s2 = inlined_call_operand.vmem [shape: f32[1,16], index: 2, kind: input, shape index: {}]
  %s3 = inlined_call_operand.vmem [shape: f32[1,16], index: 3, kind: input, shape index: {}]
  %s4 = inlined_call_operand.vmem [shape: bf16[512,8], index: 4, kind: output, shape index: {0}]
  %s5 = inlined_call_operand.vmem [shape: bf16[512,4], index: 5, kind: output, shape index: {1}]
  %s6 = inlined_call_operand.vmem [shape: bf16[512,4], index: 6, kind: output, shape index: {2}]
  %7 = xla_tuple %s4, %s5, %s6
  %s8 = sld [smem:[#allocation0]]
  $region65: #{inception_forward.4} parent=0
    _
  %s10 = ssub.s32 1, %s8
  %s11 = scalar_select 0, %s10, %s8
  loop: start=0, step=1, limit=4
  $region2: #{inception_forward.4} parent=0 // loop_pre_header
    _
  $region3: #{inception_forward.4} parent=0 // loop_header
    %s13 = sphi 0, %s17
    %p14 = scmp.ge.s32.totalorder %s13, 4
    %s23 = sphi 0, %s25
    %s26 = sphi 0, %s23
    %s27 = sphi 0, %s26
    %s43 = sphi 0, %s27
    %s47 = sphi 0, %s47
    %s49 = sphi 0, %s47
    %s50 = sphi 0, %s49
    %s64 = sphi 0, %s50
    %s68 = sphi 0, %s68
    %s70 = sphi 0, %s68
    %s71 = sphi 0, %s70
    %s85 = sphi 0, %s71
    %s89 = sphi 0, %s89
    %s91 = sphi 0, %s89
    %s92 = sphi 0, %s91
    %s106 = sphi 0, %s92
    %s112 = sphi 0, %s114
    %s115 = sphi 0, %s112
    %s116 = sphi 0, %s115
    %s132 = sphi 0, %s116
    %s138 = sphi 0, %s140
    %s141 = sphi 0, %s138
    %s142 = sphi 0, %s141
    %s158 = sphi 0, %s142
    %s164 = sphi 0, %s166
    %s167 = sphi 0, %s164
    %s168 = sphi 0, %s167
    %s184 = sphi 0, %s168
  $region4: #{inception_forward.4} parent=0 // loop_header_branch
    %16 = sbr.rel (%p14) target = $region8
  $region5: #{inception_forward.4} parent=0 // loop_body
    %s18 = ssub.s32 %s13, 1
    %s19 = ssub.s32 %s13, 2
    %s20 = sadd.s32 %s13, 1
    %s21 = ssub.s32 %s13, %s20
    %p22 = scmp.eq.s32.totalorder %s21, 0
    %s24 = sadd.s32 %s23, 1
    %s25 = scalar_select %p22, %s23, %s24
    %p28 = pneg %p22
    %p29 = scmp.eq.s32.totalorder %s13, 1
    %p30 = por %p28, %p29
    %p31 = scmp.ne.s32.totalorder %s23, %s26
    %p32 = scmp.eq.s32.totalorder %s13, 0
    %p33 = por %p31, %p32
    %p34 = scmp.ne.s32.totalorder %s23, %s26
    %p35 = scmp.eq.s32.totalorder %s18, 1
    %p36 = por %p34, %p35
    %p37 = scmp.ne.s32.totalorder %s26, %s27
    %p38 = scmp.eq.s32.totalorder %s18, 0
    %p39 = por %p37, %p38
    %p40 = scmp.ne.s32.totalorder %s26, %s27
    %p41 = scmp.eq.s32.totalorder %s19, 1
    %p42 = por %p40, %p41
    %p44 = scmp.ne.s32.totalorder %s27, %s43
    %p45 = scmp.eq.s32.totalorder %s19, 0
    %p46 = por %p44, %p45
    %s48 = sadd.s32 %s47, 1
    %p51 = scmp.eq.s32.totalorder %s13, 1
    %p52 = scmp.ne.s32.totalorder %s47, %s49
    %p53 = scmp.eq.s32.totalorder %s13, 0
    %p54 = por %p52, %p53
    %p55 = scmp.ne.s32.totalorder %s47, %s49
    %p56 = scmp.eq.s32.totalorder %s18, 1
    %p57 = por %p55, %p56
    %p58 = scmp.ne.s32.totalorder %s49, %s50
    %p59 = scmp.eq.s32.totalorder %s18, 0
    %p60 = por %p58, %p59
    %p61 = scmp.ne.s32.totalorder %s49, %s50
    %p62 = scmp.eq.s32.totalorder %s19, 1
    %p63 = por %p61, %p62
    %p65 = scmp.ne.s32.totalorder %s50, %s64
    %p66 = scmp.eq.s32.totalorder %s19, 0
    %p67 = por %p65, %p66
    %s69 = sadd.s32 %s68, 1
    %p72 = scmp.eq.s32.totalorder %s13, 1
    %p73 = scmp.ne.s32.totalorder %s68, %s70
    %p74 = scmp.eq.s32.totalorder %s13, 0
    %p75 = por %p73, %p74
    %p76 = scmp.ne.s32.totalorder %s68, %s70
    %p77 = scmp.eq.s32.totalorder %s18, 1
    %p78 = por %p76, %p77
    %p79 = scmp.ne.s32.totalorder %s70, %s71
    %p80 = scmp.eq.s32.totalorder %s18, 0
    %p81 = por %p79, %p80
    %p82 = scmp.ne.s32.totalorder %s70, %s71
    %p83 = scmp.eq.s32.totalorder %s19, 1
    %p84 = por %p82, %p83
    %p86 = scmp.ne.s32.totalorder %s71, %s85
    %p87 = scmp.eq.s32.totalorder %s19, 0
    %p88 = por %p86, %p87
    %s90 = sadd.s32 %s89, 1
    %p93 = scmp.eq.s32.totalorder %s13, 1
    %p94 = scmp.ne.s32.totalorder %s89, %s91
    %p95 = scmp.eq.s32.totalorder %s13, 0
    %p96 = por %p94, %p95
    %p97 = scmp.ne.s32.totalorder %s89, %s91
    %p98 = scmp.eq.s32.totalorder %s18, 1
    %p99 = por %p97, %p98
    %p100 = scmp.ne.s32.totalorder %s91, %s92
    %p101 = scmp.eq.s32.totalorder %s18, 0
    %p102 = por %p100, %p101
    %p103 = scmp.ne.s32.totalorder %s91, %s92
    %p104 = scmp.eq.s32.totalorder %s19, 1
    %p105 = por %p103, %p104
    %p107 = scmp.ne.s32.totalorder %s92, %s106
    %p108 = scmp.eq.s32.totalorder %s19, 0
    %p109 = por %p107, %p108
    %s110 = ssub.s32 %s13, %s20
    %p111 = scmp.eq.s32.totalorder %s110, 0
    %s113 = sadd.s32 %s112, 1
    %s114 = scalar_select %p111, %s112, %s113
    %p117 = pneg %p111
    %p118 = scmp.eq.s32.totalorder %s13, 1
    %p119 = por %p117, %p118
    %p120 = scmp.ne.s32.totalorder %s112, %s115
    %p121 = scmp.eq.s32.totalorder %s13, 0
    %p122 = por %p120, %p121
    %p123 = scmp.ne.s32.totalorder %s112, %s115
    %p124 = scmp.eq.s32.totalorder %s18, 1
    %p125 = por %p123, %p124
    %p126 = scmp.ne.s32.totalorder %s115, %s116
    %p127 = scmp.eq.s32.totalorder %s18, 0
    %p128 = por %p126, %p127
    %p129 = scmp.ne.s32.totalorder %s115, %s116
    %p130 = scmp.eq.s32.totalorder %s19, 1
    %p131 = por %p129, %p130
    %p133 = scmp.ne.s32.totalorder %s116, %s132
    %p134 = scmp.eq.s32.totalorder %s19, 0
    %p135 = por %p133, %p134
    %s136 = ssub.s32 %s13, %s20
    %p137 = scmp.eq.s32.totalorder %s136, 0
    %s139 = sadd.s32 %s138, 1
    %s140 = scalar_select %p137, %s138, %s139
    %p143 = pneg %p137
    %p144 = scmp.eq.s32.totalorder %s13, 1
    %p145 = por %p143, %p144
    %p146 = scmp.ne.s32.totalorder %s138, %s141
    %p147 = scmp.eq.s32.totalorder %s13, 0
    %p148 = por %p146, %p147
    %p149 = scmp.ne.s32.totalorder %s138, %s141
    %p150 = scmp.eq.s32.totalorder %s18, 1
    %p151 = por %p149, %p150
    %p152 = scmp.ne.s32.totalorder %s141, %s142
    %p153 = scmp.eq.s32.totalorder %s18, 0
    %p154 = por %p152, %p153
    %p155 = scmp.ne.s32.totalorder %s141, %s142
    %p156 = scmp.eq.s32.totalorder %s19, 1
    %p157 = por %p155, %p156
    %p159 = scmp.ne.s32.totalorder %s142, %s158
    %p160 = scmp.eq.s32.totalorder %s19, 0
    %p161 = por %p159, %p160
    %s162 = ssub.s32 %s13, %s20
    %p163 = scmp.eq.s32.totalorder %s162, 0
    %s165 = sadd.s32 %s164, 1
    %s166 = scalar_select %p163, %s164, %s165
    %p169 = pneg %p163
    %p170 = scmp.eq.s32.totalorder %s13, 1
    %p171 = por %p169, %p170
    %p172 = scmp.ne.s32.totalorder %s164, %s167
    %p173 = scmp.eq.s32.totalorder %s13, 0
    %p174 = por %p172, %p173
    %p175 = scmp.ne.s32.totalorder %s164, %s167
    %p176 = scmp.eq.s32.totalorder %s18, 1
    %p177 = por %p175, %p176
    %p178 = scmp.ne.s32.totalorder %s167, %s168
    %p179 = scmp.eq.s32.totalorder %s18, 0
    %p180 = por %p178, %p179
    %p181 = scmp.ne.s32.totalorder %s167, %s168
    %p182 = scmp.eq.s32.totalorder %s19, 1
    %p183 = por %p181, %p182
    %p185 = scmp.ne.s32.totalorder %s168, %s184
    %p186 = scmp.eq.s32.totalorder %s19, 0
    %p187 = por %p185, %p186
    %p188 = scmp.le.s32.totalorder 1, %s13
    %p189 = scmp.lt.s32.totalorder %s13, 3
    %p190 = pnand %p188, %p189
    %p191 = pneg %p190
    // Predicated region
    $region9: #{inception_forward.4} parent=5 // pred_check
      _
    $region10: #{inception_forward.4} parent=5 // pred_check_branch
      %193 = sbr.rel (%p190) target = $region12
    $region11: #{inception_forward.4} parent=5 // pred_region
      %s194 = ssub.s32 %s13, 1
      // Predicated region
      $region13: #{inception_forward.4} parent=11 // pred_check
        %p195 = pneg %p60
      $region14: #{inception_forward.4} parent=11 // pred_check_branch
        %197 = sbr.rel (%p195) target = $region16
      $region15: #{inception_forward.4} parent=11 // pred_region
        _
      $region16: #{inception_forward.4} parent=11 // pred_fallthru
        _
      // Predicated region
      $region17: #{inception_forward.4} parent=11 // pred_check
        %p198 = pneg %p81
      $region18: #{inception_forward.4} parent=11 // pred_check_branch
        %200 = sbr.rel (%p198) target = $region20
      $region19: #{inception_forward.4} parent=11 // pred_region
        _
      $region20: #{inception_forward.4} parent=11 // pred_fallthru
        _
      // Predicated region
      $region21: #{inception_forward.4} parent=11 // pred_check
        %p201 = pneg %p102
      $region22: #{inception_forward.4} parent=11 // pred_check_branch
        %203 = sbr.rel (%p201) target = $region24
      $region23: #{inception_forward.4} parent=11 // pred_region
        _
      $region24: #{inception_forward.4} parent=11 // pred_fallthru
        _
    $region12: #{inception_forward.4} parent=5 // pred_fallthru
      _
    %p204 = scmp.lt.s32.totalorder %s13, 2
    // Predicated region
    $region25: #{inception_forward.4} parent=5 // pred_check
      %p205 = pneg %p204
    $region26: #{inception_forward.4} parent=5 // pred_check_branch
      %207 = sbr.rel (%p205) target = $region28
    $region27: #{inception_forward.4} parent=5 // pred_region
      // Predicated region
      $region29: #{inception_forward.4} parent=27 // pred_check
        %p208 = pneg %p33
      $region30: #{inception_forward.4} parent=27 // pred_check_branch
        %210 = sbr.rel (%p208) target = $region32
      $region31: #{inception_forward.4} parent=27 // pred_region
        %s211 = smul.u32 32, %s13
        %p212 = scmp.lt.s32.totalorder %s211, 63
        %s213 = scalar_select %p212, %s211, 63
        %s214 = smul.addr %s213, 4
        %s215 = scalar_lea.vmem %s0, %s214
        %s216 = smul.u32 32, %s13
      $region32: #{inception_forward.4} parent=27 // pred_fallthru
        _
    $region28: #{inception_forward.4} parent=5 // pred_fallthru
      _
    %p217 = scmp.le.s32.totalorder 1, %s13
    %p218 = scmp.lt.s32.totalorder %s13, 3
    %p219 = pnand %p217, %p218
    %p220 = pneg %p219
    // Predicated region
    $region33: #{inception_forward.4} parent=5 // pred_check
      _
    $region34: #{inception_forward.4} parent=5 // pred_check_branch
      %222 = sbr.rel (%p219) target = $region36
    $region35: #{inception_forward.4} parent=5 // pred_region
      %s223 = ssub.s32 %s13, 1
      %s224 = smul.u32 32, %s18
      %p225 = scmp.lt.s32.totalorder %s224, 63
      %s226 = scalar_select %p225, %s224, 63
      %s227 = smul.addr %s226, 4
      %s228 = scalar_lea.vmem %s0, %s227
      %p229 = pneg %p39
      %p230 = pneg %p36
      %p231 = pneg %p60
      %p232 = pneg %p57
      %p233 = pneg %p81
      %p234 = pneg %p78
      %p235 = pneg %p102
      %p236 = pneg %p99
      %p237 = pneg %p128
      %p238 = pneg %p125
      %s239 = smul.u32 32, %s18
      %p240 = scmp.lt.s32.totalorder %s239, 63
      %s241 = scalar_select %p240, %s239, 63
      %s242 = smul.addr %s241, 4
      %s243 = scalar_lea.vmem %s4, %s242
      %p244 = pneg %p154
      %p245 = pneg %p151
      %s246 = smul.u32 32, %s18
      %p247 = scmp.lt.s32.totalorder %s246, 63
      %s248 = scalar_select %p247, %s246, 63
      %s249 = smul.addr %s248, 4
      %s250 = scalar_lea.vmem %s5, %s249
      %p251 = pneg %p180
      %p252 = pneg %p177
      %s253 = smul.u32 32, %s18
      %p254 = scmp.lt.s32.totalorder %s253, 63
      %s255 = scalar_select %p254, %s253, 63
      %s256 = smul.addr %s255, 4
      %s257 = scalar_lea.vmem %s6, %s256
      %s258 = smul.u32 32, %s18
      %p259 = scmp.lt.s32.totalorder %s258, 63
      %s260 = scalar_select %p259, %s258, 63
      %s261 = smul.addr %s260, 4
      %s262 = scalar_lea.vmem %s0, %s261
      %s263 = smul.u32 32, %s18
      %s264 = smul.u32 32, %s18
      %p265 = scmp.lt.s32.totalorder %s264, 63
      %s266 = scalar_select %p265, %s264, 63
      %s267 = smul.addr %s266, 4
      %s268 = scalar_lea.vmem %s4, %s267
      %s269 = smul.u32 32, %s18
      %s270 = smul.u32 32, %s18
      %p271 = scmp.lt.s32.totalorder %s270, 63
      %s272 = scalar_select %p271, %s270, 63
      %s273 = smul.addr %s272, 4
      %s274 = scalar_lea.vmem %s5, %s273
      %s275 = smul.u32 32, %s18
      %s276 = smul.u32 32, %s18
      %p277 = scmp.lt.s32.totalorder %s276, 63
      %s278 = scalar_select %p277, %s276, 63
      %s279 = smul.addr %s278, 4
      %s280 = scalar_lea.vmem %s6, %s279
      %s281 = smul.u32 32, %s18
      %v283 = vld [vmem:[%s262] sm:$0xf]
      %v284 = vld [vmem:[%s262 + $0x4] sm:$0xf]
      %v285 = vld [vmem:[%s262 + $0x8] sm:$0xf]
      %v286 = vld [vmem:[%s262 + $0xc] sm:$0xf]
      %v287 = vld [vmem:[%s262 + $0x10] sm:$0xf]
      %v288 = vld [vmem:[%s262 + $0x14] sm:$0xf]
      %v289 = vld [vmem:[%s262 + $0x18] sm:$0xf]
      %v290 = vld [vmem:[%s262 + $0x1c] sm:$0xf]
      %v291 = vld [vmem:[%s262 + $0x20] sm:$0xf]
      %v292 = vld [vmem:[%s262 + $0x24] sm:$0xf]
      %v293 = vld [vmem:[%s262 + $0x28] sm:$0xf]
      %v294 = vld [vmem:[%s262 + $0x2c] sm:$0xf]
      %v295 = vld [vmem:[%s262 + $0x30] sm:$0xf]
      %v296 = vld [vmem:[%s262 + $0x34] sm:$0xf]
      %v297 = vld [vmem:[%s262 + $0x38] sm:$0xf]
      %v298 = vld [vmem:[%s262 + $0x3c] sm:$0xf]
      %v299 = vld [vmem:[%s262 + $0x40] sm:$0xf]
      %v300 = vld [vmem:[%s262 + $0x44] sm:$0xf]
      %v301 = vld [vmem:[%s262 + $0x48] sm:$0xf]
      %v302 = vld [vmem:[%s262 + $0x4c] sm:$0xf]
      %v303 = vld [vmem:[%s262 + $0x50] sm:$0xf]
      %v304 = vld [vmem:[%s262 + $0x54] sm:$0xf]
      %v305 = vld [vmem:[%s262 + $0x58] sm:$0xf]
      %v306 = vld [vmem:[%s262 + $0x5c] sm:$0xf]
      %v307 = vld [vmem:[%s262 + $0x60] sm:$0xf]
      %v308 = vld [vmem:[%s262 + $0x64] sm:$0xf]
      %v309 = vld [vmem:[%s262 + $0x68] sm:$0xf]
      %v310 = vld [vmem:[%s262 + $0x6c] sm:$0xf]
      %v311 = vld [vmem:[%s262 + $0x70] sm:$0xf]
      %v312 = vld [vmem:[%s262 + $0x74] sm:$0xf]
      %v313 = vld [vmem:[%s262 + $0x78] sm:$0xf]
      %v314 = vld [vmem:[%s262 + $0x7c] sm:$0xf]
      %v315 = vld [vmem:[%s1] sm:$0x3]
      %v348 = vunpack.c.l.b16 %v283
      %v349 = vunpack.c.l.b16 %v284
      %v350 = vunpack.c.l.b16 %v285
      %v351 = vunpack.c.l.b16 %v286
      %v352 = vunpack.c.l.b16 %v287
      %v353 = vunpack.c.l.b16 %v288
      %v354 = vunpack.c.l.b16 %v289
      %v355 = vunpack.c.l.b16 %v290
      %v356 = vunpack.c.l.b16 %v291
      %v357 = vunpack.c.l.b16 %v292
      %v358 = vunpack.c.l.b16 %v293
      %v359 = vunpack.c.l.b16 %v294
      %v360 = vunpack.c.l.b16 %v295
      %v361 = vunpack.c.l.b16 %v296
      %v362 = vunpack.c.l.b16 %v297
      %v363 = vunpack.c.l.b16 %v298
      %v364 = vunpack.c.l.b16 %v299
      %v365 = vunpack.c.l.b16 %v300
      %v366 = vunpack.c.l.b16 %v301
      %v367 = vunpack.c.l.b16 %v302
      %v368 = vunpack.c.l.b16 %v303
      %v369 = vunpack.c.l.b16 %v304
      %v370 = vunpack.c.l.b16 %v305
      %v371 = vunpack.c.l.b16 %v306
      %v372 = vunpack.c.l.b16 %v307
      %v373 = vunpack.c.l.b16 %v308
      %v374 = vunpack.c.l.b16 %v309
      %v375 = vunpack.c.l.b16 %v310
      %v376 = vunpack.c.l.b16 %v311
      %v377 = vunpack.c.l.b16 %v312
      %v378 = vunpack.c.l.b16 %v313
      %v379 = vunpack.c.l.b16 %v314
      %v380 = vpack.c.b16 %v349, %v348
      %v381 = vpack.c.b16 %v351, %v350
      %v382 = vpack.c.b16 %v353, %v352
      %v383 = vpack.c.b16 %v355, %v354
      %v384 = vpack.c.b16 %v357, %v356
      %v385 = vpack.c.b16 %v359, %v358
      %v386 = vpack.c.b16 %v361, %v360
      %v387 = vpack.c.b16 %v363, %v362
      %v388 = vpack.c.b16 %v365, %v364
      %v389 = vpack.c.b16 %v367, %v366
      %v390 = vpack.c.b16 %v369, %v368
      %v391 = vpack.c.b16 %v371, %v370
      %v392 = vpack.c.b16 %v373, %v372
      %v393 = vpack.c.b16 %v375, %v374
      %v394 = vpack.c.b16 %v377, %v376
      %v395 = vpack.c.b16 %v379, %v378
      %vm396 = vcmask 31744
      %v398 = vsel %vm396, %v380, 0
      %v401 = vsel %vm396, %v381, 0
      %v404 = vsel %vm396, %v382, 0
      %v407 = vsel %vm396, %v383, 0
      %v410 = vsel %vm396, %v384, 0
      %v413 = vsel %vm396, %v385, 0
      %v416 = vsel %vm396, %v386, 0
      %v419 = vsel %vm396, %v387, 0
      %v422 = vsel %vm396, %v388, 0
      %v425 = vsel %vm396, %v389, 0
      %v428 = vsel %vm396, %v390, 0
      %v431 = vsel %vm396, %v391, 0
      %v434 = vsel %vm396, %v392, 0
      %v437 = vsel %vm396, %v393, 0
      %v440 = vsel %vm396, %v394, 0
      %v443 = vsel %vm396, %v395, 0
      %vm445 = vcmask 1041408
      %v447 = vsel %vm445, %v315, 0
      %449 = vmatprep.subr.bf16.mxu0 0
      %450 = vmatpush1.bf16.msra.mxu0 %v447
      %451 = vmatprep.subr.bf16.mxu0 0
      %452 = vmatpush1.bf16.msra.mxu0 0
      %453 = vmatprep.subr.bf16.mxu0 0
      %454 = vmatpush1.bf16.msra.mxu0 0
      %455 = vmatprep.subr.bf16.mxu0 0
      %456 = vmatpush1.bf16.msra.mxu0 0
      %457 = vmatprep.subr.bf16.mxu0 0
      %458 = vmatpush1.bf16.msra.mxu0 0
      %459 = vmatprep.subr.bf16.mxu0 0
      %460 = vmatpush1.bf16.msra.mxu0 0
      %461 = vmatprep.subr.bf16.mxu0 0
      %462 = vmatpush1.bf16.msra.mxu0 0
      %463 = vmatprep.subr.bf16.mxu0 0
      %464 = vmatpush1.bf16.msra.mxu0 0
      %465 = vmatprep.subr.bf16.mxu0 0
      %466 = vmatpush1.bf16.msra.mxu0 0
      %467 = vmatprep.subr.bf16.mxu0 0
      %468 = vmatpush1.bf16.msra.mxu0 0
      %469 = vmatprep.subr.bf16.mxu0 0
      %470 = vmatpush1.bf16.msra.mxu0 0
      %471 = vmatprep.subr.bf16.mxu0 0
      %472 = vmatpush1.bf16.msra.mxu0 0
      %473 = vmatprep.subr.bf16.mxu0 0
      %474 = vmatpush1.bf16.msra.mxu0 0
      %475 = vmatprep.subr.bf16.mxu0 0
      %476 = vmatpush1.bf16.msra.mxu0 0
      %477 = vmatprep.subr.bf16.mxu0 0
      %478 = vmatpush1.bf16.msra.mxu0 0
      %479 = vmatprep.subr.bf16.mxu0 0
      %480 = vmatpush1.bf16.msra.mxu0 0
      %481 = vmatprep.mubr.bf16.mxu0 0
      %482 = vmatmul.mubr.bf16.gmra.mrb[0].mxu0 %v398
      %v483 = vpop.f32.mrb[0].mxu0
      %v484 = vadd.f32 0.0, %v483
      %v485 = vpop.f32.mrb[0].mxu0
      %v486 = vpop.f32.mrb[0].mxu0
      %v487 = vadd.f32 0.0, %v486
      %v488 = vpop.f32.mrb[0].mxu0
      %489 = vmatprep.mubr.bf16.mxu0 0
      %490 = vmatmul.mubr.bf16.gmra.mrb[0].mxu0 %v401
      %v491 = vpop.f32.mrb[0].mxu0
      %v492 = vadd.f32 0.0, %v491
      %v493 = vpop.f32.mrb[0].mxu0
      %v494 = vpop.f32.mrb[0].mxu0
      %v495 = vadd.f32 0.0, %v494
      %v496 = vpop.f32.mrb[0].mxu0
      %497 = vmatprep.mubr.bf16.mxu0 0
      %498 = vmatmul.mubr.bf16.gmra.mrb[0].mxu0 %v404
      %v499 = vpop.f32.mrb[0].mxu0
      %v500 = vadd.f32 0.0, %v499
      %v501 = vpop.f32.mrb[0].mxu0
      %v502 = vpop.f32.mrb[0].mxu0
      %v503 = vadd.f32 0.0, %v502
      %v504 = vpop.f32.mrb[0].mxu0
      %505 = vmatprep.mubr.bf16.mxu0 0
      %506 = vmatmul.mubr.bf16.gmra.mrb[0].mxu0 %v407
      %v507 = vpop.f32.mrb[0].mxu0
      %v508 = vadd.f32 0.0, %v507
      %v509 = vpop.f32.mrb[0].mxu0
      %v510 = vpop.f32.mrb[0].mxu0
      %v511 = vadd.f32 0.0, %v510
      %v512 = vpop.f32.mrb[0].mxu0
      %513 = vmatprep.mubr.bf16.mxu0 0
      %514 = vmatmul.mubr.bf16.gmra.mrb[0].mxu0 %v410
      %v515 = vpop.f32.mrb[0].mxu0
      %v516 = vadd.f32 0.0, %v515
      %v517 = vpop.f32.mrb[0].mxu0
      %v518 = vpop.f32.mrb[0].mxu0
      %v519 = vadd.f32 0.0, %v518
      %v520 = vpop.f32.mrb[0].mxu0
      %521 = vmatprep.mubr.bf16.mxu0 0
      %522 = vmatmul.mubr.bf16.gmra.mrb[0].mxu0 %v413
      %v523 = vpop.f32.mrb[0].mxu0
      %v524 = vadd.f32 0.0, %v523
      %v525 = vpop.f32.mrb[0].mxu0
      %v526 = vpop.f32.mrb[0].mxu0
      %v527 = vadd.f32 0.0, %v526
      %v528 = vpop.f32.mrb[0].mxu0
      %529 = vmatprep.mubr.bf16.mxu0 0
      %530 = vmatmul.mubr.bf16.gmra.mrb[0].mxu0 %v416
      %v531 = vpop.f32.mrb[0].mxu0
      %v532 = vadd.f32 0.0, %v531
      %v533 = vpop.f32.mrb[0].mxu0
      %v534 = vpop.f32.mrb[0].mxu0
      %v535 = vadd.f32 0.0, %v534
      %v536 = vpop.f32.mrb[0].mxu0
      %537 = vmatprep.mubr.bf16.mxu0 0
      %538 = vmatmul.mubr.bf16.gmra.mrb[0].mxu0 %v419
      %v539 = vpop.f32.mrb[0].mxu0
      %v540 = vadd.f32 0.0, %v539
      %v541 = vpop.f32.mrb[0].mxu0
      %v542 = vpop.f32.mrb[0].mxu0
      %v543 = vadd.f32 0.0, %v542
      %v544 = vpop.f32.mrb[0].mxu0
      %545 = vmatprep.mubr.bf16.mxu0 0
      %546 = vmatmul.mubr.bf16.gmra.mrb[0].mxu0 %v422
      %v547 = vpop.f32.mrb[0].mxu0
      %v548 = vadd.f32 0.0, %v547
      %v549 = vpop.f32.mrb[0].mxu0
      %v550 = vpop.f32.mrb[0].mxu0
      %v551 = vadd.f32 0.0, %v550
      %v552 = vpop.f32.mrb[0].mxu0
      %553 = vmatprep.mubr.bf16.mxu0 0
      %554 = vmatmul.mubr.bf16.gmra.mrb[0].mxu0 %v425
      %v555 = vpop.f32.mrb[0].mxu0
      %v556 = vadd.f32 0.0, %v555
      %v557 = vpop.f32.mrb[0].mxu0
      %v558 = vpop.f32.mrb[0].mxu0
      %v559 = vadd.f32 0.0, %v558
      %v560 = vpop.f32.mrb[0].mxu0
      %561 = vmatprep.mubr.bf16.mxu0 0
      %562 = vmatmul.mubr.bf16.gmra.mrb[0].mxu0 %v428
      %v563 = vpop.f32.mrb[0].mxu0
      %v564 = vadd.f32 0.0, %v563
      %v565 = vpop.f32.mrb[0].mxu0
      %v566 = vpop.f32.mrb[0].mxu0
      %v567 = vadd.f32 0.0, %v566
      %v568 = vpop.f32.mrb[0].mxu0
      %569 = vmatprep.mubr.bf16.mxu0 0
      %570 = vmatmul.mubr.bf16.gmra.mrb[0].mxu0 %v431
      %v571 = vpop.f32.mrb[0].mxu0
      %v572 = vadd.f32 0.0, %v571
      %v573 = vpop.f32.mrb[0].mxu0
      %v574 = vpop.f32.mrb[0].mxu0
      %v575 = vadd.f32 0.0, %v574
      %v576 = vpop.f32.mrb[0].mxu0
      %577 = vmatprep.mubr.bf16.mxu0 0
      %578 = vmatmul.mubr.bf16.gmra.mrb[0].mxu0 %v434
      %v579 = vpop.f32.mrb[0].mxu0
      %v580 = vadd.f32 0.0, %v579
      %v581 = vpop.f32.mrb[0].mxu0
      %v582 = vpop.f32.mrb[0].mxu0
      %v583 = vadd.f32 0.0, %v582
      %v584 = vpop.f32.mrb[0].mxu0
      %585 = vmatprep.mubr.bf16.mxu0 0
      %586 = vmatmul.mubr.bf16.gmra.mrb[0].mxu0 %v437
      %v587 = vpop.f32.mrb[0].mxu0
      %v588 = vadd.f32 0.0, %v587
      %v589 = vpop.f32.mrb[0].mxu0
      %v590 = vpop.f32.mrb[0].mxu0
      %v591 = vadd.f32 0.0, %v590
      %v592 = vpop.f32.mrb[0].mxu0
      %593 = vmatprep.mubr.bf16.mxu0 0
      %594 = vmatmul.mubr.bf16.gmra.mrb[0].mxu0 %v440
      %v595 = vpop.f32.mrb[0].mxu0
      %v596 = vadd.f32 0.0, %v595
      %v597 = vpop.f32.mrb[0].mxu0
      %v598 = vpop.f32.mrb[0].mxu0
      %v599 = vadd.f32 0.0, %v598
      %v600 = vpop.f32.mrb[0].mxu0
      %601 = vmatprep.mubr.bf16.mxu0 0
      %602 = vmatmul.mubr.bf16.gmra.mrb[0].mxu0 %v443
      %v603 = vpop.f32.mrb[0].mxu0
      %v604 = vadd.f32 0.0, %v603
      %v605 = vpop.f32.mrb[0].mxu0
      %v606 = vpop.f32.mrb[0].mxu0
      %v607 = vadd.f32 0.0, %v606
      %v608 = vpop.f32.mrb[0].mxu0
      %609 = vdwg.mxu0
      %v610 = vld [vmem:[%s2] sm:$0x1]
      %v612 = vlaneseq
      %v613 = vshrl.u32 %v612, 7
      %v614 = vsub.s32 0, %v613
      %v615 = vrot.slane %v610, %v614
      %v617 = vmul.f32 %v484, %v615
      %v618 = vmul.f32 %v487, %v615
      %v619 = vmul.f32 %v492, %v615
      %v620 = vmul.f32 %v495, %v615
      %v621 = vmul.f32 %v500, %v615
      %v622 = vmul.f32 %v503, %v615
      %v623 = vmul.f32 %v508, %v615
      %v624 = vmul.f32 %v511, %v615
      %v625 = vmul.f32 %v516, %v615
      %v626 = vmul.f32 %v519, %v615
      %v627 = vmul.f32 %v524, %v615
      %v628 = vmul.f32 %v527, %v615
      %v629 = vmul.f32 %v532, %v615
      %v630 = vmul.f32 %v535, %v615
      %v631 = vmul.f32 %v540, %v615
      %v632 = vmul.f32 %v543, %v615
      %v633 = vmul.f32 %v548, %v615
      %v634 = vmul.f32 %v551, %v615
      %v635 = vmul.f32 %v556, %v615
      %v636 = vmul.f32 %v559, %v615
      %v637 = vmul.f32 %v564, %v615
      %v638 = vmul.f32 %v567, %v615
      %v639 = vmul.f32 %v572, %v615
      %v640 = vmul.f32 %v575, %v615
      %v641 = vmul.f32 %v580, %v615
      %v642 = vmul.f32 %v583, %v615
      %v643 = vmul.f32 %v588, %v615
      %v644 = vmul.f32 %v591, %v615
      %v645 = vmul.f32 %v596, %v615
      %v646 = vmul.f32 %v599, %v615
      %v647 = vmul.f32 %v604, %v615
      %v648 = vmul.f32 %v607, %v615
      %v649 = vld [vmem:[%s3] sm:$0x1]
      %v651 = vlaneseq
      %v652 = vshrl.u32 %v651, 7
      %v653 = vsub.s32 0, %v652
      %v654 = vrot.slane %v649, %v653
      %v656 = vadd.f32 %v617, %v654
      %v657 = vadd.f32 %v618, %v654
      %v658 = vadd.f32 %v619, %v654
      %v659 = vadd.f32 %v620, %v654
      %v660 = vadd.f32 %v621, %v654
      %v661 = vadd.f32 %v622, %v654
      %v662 = vadd.f32 %v623, %v654
      %v663 = vadd.f32 %v624, %v654
      %v664 = vadd.f32 %v625, %v654
      %v665 = vadd.f32 %v626, %v654
      %v666 = vadd.f32 %v627, %v654
      %v667 = vadd.f32 %v628, %v654
      %v668 = vadd.f32 %v629, %v654
      %v669 = vadd.f32 %v630, %v654
      %v670 = vadd.f32 %v631, %v654
      %v671 = vadd.f32 %v632, %v654
      %v672 = vadd.f32 %v633, %v654
      %v673 = vadd.f32 %v634, %v654
      %v674 = vadd.f32 %v635, %v654
      %v675 = vadd.f32 %v636, %v654
      %v676 = vadd.f32 %v637, %v654
      %v677 = vadd.f32 %v638, %v654
      %v678 = vadd.f32 %v639, %v654
      %v679 = vadd.f32 %v640, %v654
      %v680 = vadd.f32 %v641, %v654
      %v681 = vadd.f32 %v642, %v654
      %v682 = vadd.f32 %v643, %v654
      %v683 = vadd.f32 %v644, %v654
      %v684 = vadd.f32 %v645, %v654
      %v685 = vadd.f32 %v646, %v654
      %v686 = vadd.f32 %v647, %v654
      %v687 = vadd.f32 %v648, %v654
      %v688 = vmax.f32 %v656, 0.0
      %v689 = vmax.f32 %v657, 0.0
      %v690 = vmax.f32 %v658, 0.0
      %v691 = vmax.f32 %v659, 0.0
      %v692 = vmax.f32 %v660, 0.0
      %v693 = vmax.f32 %v661, 0.0
      %v694 = vmax.f32 %v662, 0.0
      %v695 = vmax.f32 %v663, 0.0
      %v696 = vmax.f32 %v664, 0.0
      %v697 = vmax.f32 %v665, 0.0
      %v698 = vmax.f32 %v666, 0.0
      %v699 = vmax.f32 %v667, 0.0
      %v700 = vmax.f32 %v668, 0.0
      %v701 = vmax.f32 %v669, 0.0
      %v702 = vmax.f32 %v670, 0.0
      %v703 = vmax.f32 %v671, 0.0
      %v704 = vmax.f32 %v672, 0.0
      %v705 = vmax.f32 %v673, 0.0
      %v706 = vmax.f32 %v674, 0.0
      %v707 = vmax.f32 %v675, 0.0
      %v708 = vmax.f32 %v676, 0.0
      %v709 = vmax.f32 %v677, 0.0
      %v710 = vmax.f32 %v678, 0.0
      %v711 = vmax.f32 %v679, 0.0
      %v712 = vmax.f32 %v680, 0.0
      %v713 = vmax.f32 %v681, 0.0
      %v714 = vmax.f32 %v682, 0.0
      %v715 = vmax.f32 %v683, 0.0
      %v716 = vmax.f32 %v684, 0.0
      %v717 = vmax.f32 %v685, 0.0
      %v718 = vmax.f32 %v686, 0.0
      %v719 = vmax.f32 %v687, 0.0
      %v720 = vpack.c.bf16 %v689, %v688
      %v721 = vpack.c.bf16 %v691, %v690
      %v722 = vpack.c.bf16 %v693, %v692
      %v723 = vpack.c.bf16 %v695, %v694
      %v724 = vpack.c.bf16 %v697, %v696
      %v725 = vpack.c.bf16 %v699, %v698
      %v726 = vpack.c.bf16 %v701, %v700
      %v727 = vpack.c.bf16 %v703, %v702
      %v728 = vpack.c.bf16 %v705, %v704
      %v729 = vpack.c.bf16 %v707, %v706
      %v730 = vpack.c.bf16 %v709, %v708
      %v731 = vpack.c.bf16 %v711, %v710
      %v732 = vpack.c.bf16 %v713, %v712
      %v733 = vpack.c.bf16 %v715, %v714
      %v734 = vpack.c.bf16 %v717, %v716
      %v735 = vpack.c.bf16 %v719, %v718
      %v752 = vunpack.c.l.b16 %v720
      %v753 = vunpack.c.h.b16 %v720
      %v754 = vunpack.c.l.b16 %v721
      %v755 = vunpack.c.h.b16 %v721
      %v756 = vunpack.c.l.b16 %v722
      %v757 = vunpack.c.h.b16 %v722
      %v758 = vunpack.c.l.b16 %v723
      %v759 = vunpack.c.h.b16 %v723
      %v760 = vunpack.c.l.b16 %v724
      %v761 = vunpack.c.h.b16 %v724
      %v762 = vunpack.c.l.b16 %v725
      %v763 = vunpack.c.h.b16 %v725
      %v764 = vunpack.c.l.b16 %v726
      %v765 = vunpack.c.h.b16 %v726
      %v766 = vunpack.c.l.b16 %v727
      %v767 = vunpack.c.h.b16 %v727
      %v768 = vunpack.c.l.b16 %v728
      %v769 = vunpack.c.h.b16 %v728
      %v770 = vunpack.c.l.b16 %v729
      %v771 = vunpack.c.h.b16 %v729
      %v772 = vunpack.c.l.b16 %v730
      %v773 = vunpack.c.h.b16 %v730
      %v774 = vunpack.c.l.b16 %v731
      %v775 = vunpack.c.h.b16 %v731
      %v776 = vunpack.c.l.b16 %v732
      %v777 = vunpack.c.h.b16 %v732
      %v778 = vunpack.c.l.b16 %v733
      %v779 = vunpack.c.h.b16 %v733
      %v780 = vunpack.c.l.b16 %v734
      %v781 = vunpack.c.h.b16 %v734
      %v782 = vunpack.c.l.b16 %v735
      %v783 = vunpack.c.h.b16 %v735
      %v784 = vpack.c.b16 %v752, %v752
      %v785 = vpack.c.b16 %v753, %v753
      %v786 = vpack.c.b16 %v754, %v754
      %v787 = vpack.c.b16 %v755, %v755
      %v788 = vpack.c.b16 %v756, %v756
      %v789 = vpack.c.b16 %v757, %v757
      %v790 = vpack.c.b16 %v758, %v758
      %v791 = vpack.c.b16 %v759, %v759
      %v792 = vpack.c.b16 %v760, %v760
      %v793 = vpack.c.b16 %v761, %v761
      %v794 = vpack.c.b16 %v762, %v762
      %v795 = vpack.c.b16 %v763, %v763
      %v796 = vpack.c.b16 %v764, %v764
      %v797 = vpack.c.b16 %v765, %v765
      %v798 = vpack.c.b16 %v766, %v766
      %v799 = vpack.c.b16 %v767, %v767
      %v800 = vpack.c.b16 %v768, %v768
      %v801 = vpack.c.b16 %v769, %v769
      %v802 = vpack.c.b16 %v770, %v770
      %v803 = vpack.c.b16 %v771, %v771
      %v804 = vpack.c.b16 %v772, %v772
      %v805 = vpack.c.b16 %v773, %v773
      %v806 = vpack.c.b16 %v774, %v774
      %v807 = vpack.c.b16 %v775, %v775
      %v808 = vpack.c.b16 %v776, %v776
      %v809 = vpack.c.b16 %v777, %v777
      %v810 = vpack.c.b16 %v778, %v778
      %v811 = vpack.c.b16 %v779, %v779
      %v812 = vpack.c.b16 %v780, %v780
      %v813 = vpack.c.b16 %v781, %v781
      %v814 = vpack.c.b16 %v782, %v782
      %v815 = vpack.c.b16 %v783, %v783
      %vm848 = vcmask 60416
      %849 = vst.msk [vmem:[%s268] sm:$0xf] %vm848, %v784
      %850 = vst.msk [vmem:[%s268 + $0x4] sm:$0xf] %vm848, %v785
      %851 = vst.msk [vmem:[%s268 + $0x8] sm:$0xf] %vm848, %v786
      %852 = vst.msk [vmem:[%s268 + $0xc] sm:$0xf] %vm848, %v787
      %853 = vst.msk [vmem:[%s268 + $0x10] sm:$0xf] %vm848, %v788
      %854 = vst.msk [vmem:[%s268 + $0x14] sm:$0xf] %vm848, %v789
      %855 = vst.msk [vmem:[%s268 + $0x18] sm:$0xf] %vm848, %v790
      %856 = vst.msk [vmem:[%s268 + $0x1c] sm:$0xf] %vm848, %v791
      %857 = vst.msk [vmem:[%s268 + $0x20] sm:$0xf] %vm848, %v792
      %858 = vst.msk [vmem:[%s268 + $0x24] sm:$0xf] %vm848, %v793
      %859 = vst.msk [vmem:[%s268 + $0x28] sm:$0xf] %vm848, %v794
      %860 = vst.msk [vmem:[%s268 + $0x2c] sm:$0xf] %vm848, %v795
      %861 = vst.msk [vmem:[%s268 + $0x30] sm:$0xf] %vm848, %v796
      %862 = vst.msk [vmem:[%s268 + $0x34] sm:$0xf] %vm848, %v797
      %863 = vst.msk [vmem:[%s268 + $0x38] sm:$0xf] %vm848, %v798
      %864 = vst.msk [vmem:[%s268 + $0x3c] sm:$0xf] %vm848, %v799
      %865 = vst.msk [vmem:[%s268 + $0x40] sm:$0xf] %vm848, %v800
      %866 = vst.msk [vmem:[%s268 + $0x44] sm:$0xf] %vm848, %v801
      %867 = vst.msk [vmem:[%s268 + $0x48] sm:$0xf] %vm848, %v802
      %868 = vst.msk [vmem:[%s268 + $0x4c] sm:$0xf] %vm848, %v803
      %869 = vst.msk [vmem:[%s268 + $0x50] sm:$0xf] %vm848, %v804
      %870 = vst.msk [vmem:[%s268 + $0x54] sm:$0xf] %vm848, %v805
      %871 = vst.msk [vmem:[%s268 + $0x58] sm:$0xf] %vm848, %v806
      %872 = vst.msk [vmem:[%s268 + $0x5c] sm:$0xf] %vm848, %v807
      %873 = vst.msk [vmem:[%s268 + $0x60] sm:$0xf] %vm848, %v808
      %874 = vst.msk [vmem:[%s268 + $0x64] sm:$0xf] %vm848, %v809
      %875 = vst.msk [vmem:[%s268 + $0x68] sm:$0xf] %vm848, %v810
      %876 = vst.msk [vmem:[%s268 + $0x6c] sm:$0xf] %vm848, %v811
      %877 = vst.msk [vmem:[%s268 + $0x70] sm:$0xf] %vm848, %v812
      %878 = vst.msk [vmem:[%s268 + $0x74] sm:$0xf] %vm848, %v813
      %879 = vst.msk [vmem:[%s268 + $0x78] sm:$0xf] %vm848, %v814
      %880 = vst.msk [vmem:[%s268 + $0x7c] sm:$0xf] %vm848, %v815
      %881 = vrot.lane.b32.xlu0 %v784, 120
      %v882 = vpop.permute.xlu0 %881
      %883 = vrot.lane.b32.xlu0 %v785, 120
      %v884 = vpop.permute.xlu0 %883
      %885 = vrot.lane.b32.xlu0 %v786, 120
      %v886 = vpop.permute.xlu0 %885
      %887 = vrot.lane.b32.xlu0 %v787, 120
      %v888 = vpop.permute.xlu0 %887
      %889 = vrot.lane.b32.xlu0 %v788, 120
      %v890 = vpop.permute.xlu0 %889
      %891 = vrot.lane.b32.xlu0 %v789, 120
      %v892 = vpop.permute.xlu0 %891
      %893 = vrot.lane.b32.xlu0 %v790, 120
      %v894 = vpop.permute.xlu0 %893
      %895 = vrot.lane.b32.xlu0 %v791, 120
      %v896 = vpop.permute.xlu0 %895
      %897 = vrot.lane.b32.xlu0 %v792, 120
      %v898 = vpop.permute.xlu0 %897
      %899 = vrot.lane.b32.xlu0 %v793, 120
      %v900 = vpop.permute.xlu0 %899
      %901 = vrot.lane.b32.xlu0 %v794, 120
      %v902 = vpop.permute.xlu0 %901
      %903 = vrot.lane.b32.xlu0 %v795, 120
      %v904 = vpop.permute.xlu0 %903
      %905 = vrot.lane.b32.xlu0 %v796, 120
      %v906 = vpop.permute.xlu0 %905
      %907 = vrot.lane.b32.xlu0 %v797, 120
      %v908 = vpop.permute.xlu0 %907
      %909 = vrot.lane.b32.xlu0 %v798, 120
      %v910 = vpop.permute.xlu0 %909
      %911 = vrot.lane.b32.xlu0 %v799, 120
      %v912 = vpop.permute.xlu0 %911
      %913 = vrot.lane.b32.xlu0 %v800, 120
      %v914 = vpop.permute.xlu0 %913
      %915 = vrot.lane.b32.xlu0 %v801, 120
      %v916 = vpop.permute.xlu0 %915
      %917 = vrot.lane.b32.xlu0 %v802, 120
      %v918 = vpop.permute.xlu0 %917
      %919 = vrot.lane.b32.xlu0 %v803, 120
      %v920 = vpop.permute.xlu0 %919
      %921 = vrot.lane.b32.xlu0 %v804, 120
      %v922 = vpop.permute.xlu0 %921
      %923 = vrot.lane.b32.xlu0 %v805, 120
      %v924 = vpop.permute.xlu0 %923
      %925 = vrot.lane.b32.xlu0 %v806, 120
      %v926 = vpop.permute.xlu0 %925
      %927 = vrot.lane.b32.xlu0 %v807, 120
      %v928 = vpop.permute.xlu0 %927
      %929 = vrot.lane.b32.xlu0 %v808, 120
      %v930 = vpop.permute.xlu0 %929
      %931 = vrot.lane.b32.xlu0 %v809, 120
      %v932 = vpop.permute.xlu0 %931
      %933 = vrot.lane.b32.xlu0 %v810, 120
      %v934 = vpop.permute.xlu0 %933
      %935 = vrot.lane.b32.xlu0 %v811, 120
      %v936 = vpop.permute.xlu0 %935
      %937 = vrot.lane.b32.xlu0 %v812, 120
      %v938 = vpop.permute.xlu0 %937
      %939 = vrot.lane.b32.xlu0 %v813, 120
      %v940 = vpop.permute.xlu0 %939
      %941 = vrot.lane.b32.xlu0 %v814, 120
      %v942 = vpop.permute.xlu0 %941
      %943 = vrot.lane.b32.xlu0 %v815, 120
      %v944 = vpop.permute.xlu0 %943
      %vm977 = vcmask 27648
      %978 = vst.msk [vmem:[%s274] sm:$0xf] %vm977, %v882
      %979 = vst.msk [vmem:[%s274 + $0x4] sm:$0xf] %vm977, %v884
      %980 = vst.msk [vmem:[%s274 + $0x8] sm:$0xf] %vm977, %v886
      %981 = vst.msk [vmem:[%s274 + $0xc] sm:$0xf] %vm977, %v888
      %982 = vst.msk [vmem:[%s274 + $0x10] sm:$0xf] %vm977, %v890
      %983 = vst.msk [vmem:[%s274 + $0x14] sm:$0xf] %vm977, %v892
      %984 = vst.msk [vmem:[%s274 + $0x18] sm:$0xf] %vm977, %v894
      %985 = vst.msk [vmem:[%s274 + $0x1c] sm:$0xf] %vm977, %v896
      %986 = vst.msk [vmem:[%s274 + $0x20] sm:$0xf] %vm977, %v898
      %987 = vst.msk [vmem:[%s274 + $0x24] sm:$0xf] %vm977, %v900
      %988 = vst.msk [vmem:[%s274 + $0x28] sm:$0xf] %vm977, %v902
      %989 = vst.msk [vmem:[%s274 + $0x2c] sm:$0xf] %vm977, %v904
      %990 = vst.msk [vmem:[%s274 + $0x30] sm:$0xf] %vm977, %v906
      %991 = vst.msk [vmem:[%s274 + $0x34] sm:$0xf] %vm977, %v908
      %992 = vst.msk [vmem:[%s274 + $0x38] sm:$0xf] %vm977, %v910
      %993 = vst.msk [vmem:[%s274 + $0x3c] sm:$0xf] %vm977, %v912
      %994 = vst.msk [vmem:[%s274 + $0x40] sm:$0xf] %vm977, %v914
      %995 = vst.msk [vmem:[%s274 + $0x44] sm:$0xf] %vm977, %v916
      %996 = vst.msk [vmem:[%s274 + $0x48] sm:$0xf] %vm977, %v918
      %997 = vst.msk [vmem:[%s274 + $0x4c] sm:$0xf] %vm977, %v920
      %998 = vst.msk [vmem:[%s274 + $0x50] sm:$0xf] %vm977, %v922
      %999 = vst.msk [vmem:[%s274 + $0x54] sm:$0xf] %vm977, %v924
      %1000 = vst.msk [vmem:[%s274 + $0x58] sm:$0xf] %vm977, %v926
      %1001 = vst.msk [vmem:[%s274 + $0x5c] sm:$0xf] %vm977, %v928
      %1002 = vst.msk [vmem:[%s274 + $0x60] sm:$0xf] %vm977, %v930
      %1003 = vst.msk [vmem:[%s274 + $0x64] sm:$0xf] %vm977, %v932
      %1004 = vst.msk [vmem:[%s274 + $0x68] sm:$0xf] %vm977, %v934
      %1005 = vst.msk [vmem:[%s274 + $0x6c] sm:$0xf] %vm977, %v936
      %1006 = vst.msk [vmem:[%s274 + $0x70] sm:$0xf] %vm977, %v938
      %1007 = vst.msk [vmem:[%s274 + $0x74] sm:$0xf] %vm977, %v940
      %1008 = vst.msk [vmem:[%s274 + $0x78] sm:$0xf] %vm977, %v942
      %1009 = vst.msk [vmem:[%s274 + $0x7c] sm:$0xf] %vm977, %v944
      %1010 = vrot.lane.b32.xlu0 %v784, 116
      %v1011 = vpop.permute.xlu0 %1010
      %1012 = vrot.lane.b32.xlu0 %v785, 116
      %v1013 = vpop.permute.xlu0 %1012
      %1014 = vrot.lane.b32.xlu0 %v786, 116
      %v1015 = vpop.permute.xlu0 %1014
      %1016 = vrot.lane.b32.xlu0 %v787, 116
      %v1017 = vpop.permute.xlu0 %1016
      %1018 = vrot.lane.b32.xlu0 %v788, 116
      %v1019 = vpop.permute.xlu0 %1018
      %1020 = vrot.lane.b32.xlu0 %v789, 116
      %v1021 = vpop.permute.xlu0 %1020
      %1022 = vrot.lane.b32.xlu0 %v790, 116
      %v1023 = vpop.permute.xlu0 %1022
      %1024 = vrot.lane.b32.xlu0 %v791, 116
      %v1025 = vpop.permute.xlu0 %1024
      %1026 = vrot.lane.b32.xlu0 %v792, 116
      %v1027 = vpop.permute.xlu0 %1026
      %1028 = vrot.lane.b32.xlu0 %v793, 116
      %v1029 = vpop.permute.xlu0 %1028
      %1030 = vrot.lane.b32.xlu0 %v794, 116
      %v1031 = vpop.permute.xlu0 %1030
      %1032 = vrot.lane.b32.xlu0 %v795, 116
      %v1033 = vpop.permute.xlu0 %1032
      %1034 = vrot.lane.b32.xlu0 %v796, 116
      %v1035 = vpop.permute.xlu0 %1034
      %1036 = vrot.lane.b32.xlu0 %v797, 116
      %v1037 = vpop.permute.xlu0 %1036
      %1038 = vrot.lane.b32.xlu0 %v798, 116
      %v1039 = vpop.permute.xlu0 %1038
      %1040 = vrot.lane.b32.xlu0 %v799, 116
      %v1041 = vpop.permute.xlu0 %1040
      %1042 = vrot.lane.b32.xlu0 %v800, 116
      %v1043 = vpop.permute.xlu0 %1042
      %1044 = vrot.lane.b32.xlu0 %v801, 116
      %v1045 = vpop.permute.xlu0 %1044
      %1046 = vrot.lane.b32.xlu0 %v802, 116
      %v1047 = vpop.permute.xlu0 %1046
      %1048 = vrot.lane.b32.xlu0 %v803, 116
      %v1049 = vpop.permute.xlu0 %1048
      %1050 = vrot.lane.b32.xlu0 %v804, 116
      %v1051 = vpop.permute.xlu0 %1050
      %1052 = vrot.lane.b32.xlu0 %v805, 116
      %v1053 = vpop.permute.xlu0 %1052
      %1054 = vrot.lane.b32.xlu0 %v806, 116
      %v1055 = vpop.permute.xlu0 %1054
      %1056 = vrot.lane.b32.xlu0 %v807, 116
      %v1057 = vpop.permute.xlu0 %1056
      %1058 = vrot.lane.b32.xlu0 %v808, 116
      %v1059 = vpop.permute.xlu0 %1058
      %1060 = vrot.lane.b32.xlu0 %v809, 116
      %v1061 = vpop.permute.xlu0 %1060
      %1062 = vrot.lane.b32.xlu0 %v810, 116
      %v1063 = vpop.permute.xlu0 %1062
      %1064 = vrot.lane.b32.xlu0 %v811, 116
      %v1065 = vpop.permute.xlu0 %1064
      %1066 = vrot.lane.b32.xlu0 %v812, 116
      %v1067 = vpop.permute.xlu0 %1066
      %1068 = vrot.lane.b32.xlu0 %v813, 116
      %v1069 = vpop.permute.xlu0 %1068
      %1070 = vrot.lane.b32.xlu0 %v814, 116
      %v1071 = vpop.permute.xlu0 %1070
      %1072 = vrot.lane.b32.xlu0 %v815, 116
      %v1073 = vpop.permute.xlu0 %1072
      %1106 = vst.msk [vmem:[%s280] sm:$0xf] %vm977, %v1011
      %1107 = vst.msk [vmem:[%s280 + $0x4] sm:$0xf] %vm977, %v1013
      %1108 = vst.msk [vmem:[%s280 + $0x8] sm:$0xf] %vm977, %v1015
      %1109 = vst.msk [vmem:[%s280 + $0xc] sm:$0xf] %vm977, %v1017
      %1110 = vst.msk [vmem:[%s280 + $0x10] sm:$0xf] %vm977, %v1019
      %1111 = vst.msk [vmem:[%s280 + $0x14] sm:$0xf] %vm977, %v1021
      %1112 = vst.msk [vmem:[%s280 + $0x18] sm:$0xf] %vm977, %v1023
      %1113 = vst.msk [vmem:[%s280 + $0x1c] sm:$0xf] %vm977, %v1025
      %1114 = vst.msk [vmem:[%s280 + $0x20] sm:$0xf] %vm977, %v1027
      %1115 = vst.msk [vmem:[%s280 + $0x24] sm:$0xf] %vm977, %v1029
      %1116 = vst.msk [vmem:[%s280 + $0x28] sm:$0xf] %vm977, %v1031
      %1117 = vst.msk [vmem:[%s280 + $0x2c] sm:$0xf] %vm977, %v1033
      %1118 = vst.msk [vmem:[%s280 + $0x30] sm:$0xf] %vm977, %v1035
      %1119 = vst.msk [vmem:[%s280 + $0x34] sm:$0xf] %vm977, %v1037
      %1120 = vst.msk [vmem:[%s280 + $0x38] sm:$0xf] %vm977, %v1039
      %1121 = vst.msk [vmem:[%s280 + $0x3c] sm:$0xf] %vm977, %v1041
      %1122 = vst.msk [vmem:[%s280 + $0x40] sm:$0xf] %vm977, %v1043
      %1123 = vst.msk [vmem:[%s280 + $0x44] sm:$0xf] %vm977, %v1045
      %1124 = vst.msk [vmem:[%s280 + $0x48] sm:$0xf] %vm977, %v1047
      %1125 = vst.msk [vmem:[%s280 + $0x4c] sm:$0xf] %vm977, %v1049
      %1126 = vst.msk [vmem:[%s280 + $0x50] sm:$0xf] %vm977, %v1051
      %1127 = vst.msk [vmem:[%s280 + $0x54] sm:$0xf] %vm977, %v1053
      %1128 = vst.msk [vmem:[%s280 + $0x58] sm:$0xf] %vm977, %v1055
      %1129 = vst.msk [vmem:[%s280 + $0x5c] sm:$0xf] %vm977, %v1057
      %1130 = vst.msk [vmem:[%s280 + $0x60] sm:$0xf] %vm977, %v1059
      %1131 = vst.msk [vmem:[%s280 + $0x64] sm:$0xf] %vm977, %v1061
      %1132 = vst.msk [vmem:[%s280 + $0x68] sm:$0xf] %vm977, %v1063
      %1133 = vst.msk [vmem:[%s280 + $0x6c] sm:$0xf] %vm977, %v1065
      %1134 = vst.msk [vmem:[%s280 + $0x70] sm:$0xf] %vm977, %v1067
      %1135 = vst.msk [vmem:[%s280 + $0x74] sm:$0xf] %vm977, %v1069
      %1136 = vst.msk [vmem:[%s280 + $0x78] sm:$0xf] %vm977, %v1071
      %1137 = vst.msk [vmem:[%s280 + $0x7c] sm:$0xf] %vm977, %v1073
      %s1138 = smul.u32 32, %s18
      %p1139 = scmp.lt.s32.totalorder %s1138, 63
      %s1140 = scalar_select %p1139, %s1138, 63
      %s1141 = smul.addr %s1140, 4
      %s1142 = scalar_lea.vmem %s4, %s1141
      %s1143 = smul.u32 32, %s18
      %p1144 = scmp.lt.s32.totalorder %s1143, 63
      %s1145 = scalar_select %p1144, %s1143, 63
      %s1146 = smul.addr %s1145, 4
      %s1147 = scalar_lea.vmem %s5, %s1146
      %s1148 = smul.u32 32, %s18
      %p1149 = scmp.lt.s32.totalorder %s1148, 63
      %s1150 = scalar_select %p1149, %s1148, 63
      %s1151 = smul.addr %s1150, 4
      %s1152 = scalar_lea.vmem %s6, %s1151
      // Predicated region
      $region37: #{inception_forward.4} parent=35 // pred_check
        %p1153 = pneg %p125
      $region38: #{inception_forward.4} parent=35 // pred_check_branch
        %1155 = sbr.rel (%p1153) target = $region40
      $region39: #{inception_forward.4} parent=35 // pred_region
        %s1156 = smul.u32 32, %s18
      $region40: #{inception_forward.4} parent=35 // pred_fallthru
        _
      // Predicated region
      $region41: #{inception_forward.4} parent=35 // pred_check
        %p1157 = pneg %p151
      $region42: #{inception_forward.4} parent=35 // pred_check_branch
        %1159 = sbr.rel (%p1157) target = $region44
      $region43: #{inception_forward.4} parent=35 // pred_region
        %s1160 = smul.u32 32, %s18
      $region44: #{inception_forward.4} parent=35 // pred_fallthru
        _
      // Predicated region
      $region45: #{inception_forward.4} parent=35 // pred_check
        %p1161 = pneg %p177
      $region46: #{inception_forward.4} parent=35 // pred_check_branch
        %1163 = sbr.rel (%p1161) target = $region48
      $region47: #{inception_forward.4} parent=35 // pred_region
        %s1164 = smul.u32 32, %s18
      $region48: #{inception_forward.4} parent=35 // pred_fallthru
        _
    $region36: #{inception_forward.4} parent=5 // pred_fallthru
      _
    %p1165 = scmp.le.s32.totalorder 2, %s13
    // Predicated region
    $region49: #{inception_forward.4} parent=5 // pred_check
      %p1166 = pneg %p1165
    $region50: #{inception_forward.4} parent=5 // pred_check_branch
      %1168 = sbr.rel (%p1166) target = $region52
    $region51: #{inception_forward.4} parent=5 // pred_region
      %s1169 = ssub.s32 %s13, 2
      // Predicated region
      $region53: #{inception_forward.4} parent=51 // pred_check
        %p1170 = pneg %p131
      $region54: #{inception_forward.4} parent=51 // pred_check_branch
        %1172 = sbr.rel (%p1170) target = $region56
      $region55: #{inception_forward.4} parent=51 // pred_region
        %s1173 = smul.u32 32, %s19
        %p1174 = scmp.lt.s32.totalorder %s1173, 63
        %s1175 = scalar_select %p1174, %s1173, 63
        %s1176 = smul.addr %s1175, 4
        %s1177 = scalar_lea.vmem %s4, %s1176
      $region56: #{inception_forward.4} parent=51 // pred_fallthru
        _
      // Predicated region
      $region57: #{inception_forward.4} parent=51 // pred_check
        %p1178 = pneg %p157
      $region58: #{inception_forward.4} parent=51 // pred_check_branch
        %1180 = sbr.rel (%p1178) target = $region60
      $region59: #{inception_forward.4} parent=51 // pred_region
        %s1181 = smul.u32 32, %s19
        %p1182 = scmp.lt.s32.totalorder %s1181, 63
        %s1183 = scalar_select %p1182, %s1181, 63
        %s1184 = smul.addr %s1183, 4
        %s1185 = scalar_lea.vmem %s5, %s1184
      $region60: #{inception_forward.4} parent=51 // pred_fallthru
        _
      // Predicated region
      $region61: #{inception_forward.4} parent=51 // pred_check
        %p1186 = pneg %p183
      $region62: #{inception_forward.4} parent=51 // pred_check_branch
        %1188 = sbr.rel (%p1186) target = $region64
      $region63: #{inception_forward.4} parent=51 // pred_region
        %s1189 = smul.u32 32, %s19
        %p1190 = scmp.lt.s32.totalorder %s1189, 63
        %s1191 = scalar_select %p1190, %s1189, 63
        %s1192 = smul.addr %s1191, 4
        %s1193 = scalar_lea.vmem %s6, %s1192
      $region64: #{inception_forward.4} parent=51 // pred_fallthru
        _
    $region52: #{inception_forward.4} parent=5 // pred_fallthru
      _
  $region6: #{inception_forward.4} parent=0 // loop_footer
    %s17 = sadd.s32 1, %s13
  $region7: #{inception_forward.4} parent=0 // loop_footer_branch
    %12 = sbr.rel target = $region3
  $region8: #{inception_forward.4} parent=0 // loop_exit
    _

// kernel: inception_forward.7
$region0: #{inception_forward.7}
  #allocation0 [shape = 'u32[]', space=smem, size = 0x4, offset = 0x4, fixed_abs, tag = 'smem constant byte address 0x4 - core index']
  #allocation1 [shape = 'u32[144,128]{1,0:T(1,128)}', space=vmem, size = 0x12000, scoped, tag = 'internal scratch']
  #allocation2 [shape = 'bf16[456,4]{1,0:T(8,128)(2,1)}', space=vmem, size = 0x1c800, scoped, tag = 'scratch operand']
  %s0 = inlined_call_operand.vmem [shape: bf16[2,16,16,4], index: 0, kind: input, shape index: {}]
  %s1 = inlined_call_operand.vmem [shape: bf16[4,8], index: 1, kind: input, shape index: {}]
  %s2 = inlined_call_operand.vmem [shape: f32[1,8], index: 2, kind: input, shape index: {}]
  %s3 = inlined_call_operand.vmem [shape: f32[1,8], index: 3, kind: input, shape index: {}]
  %s4 = inlined_call_operand.vmem [shape: bf16[2,16,16,8], index: 4, kind: output, shape index: {}]
  %s5 = sld [smem:[#allocation0]]
  $region49: #{inception_forward.7} parent=0
    _
  %s7 = ssub.s32 1, %s5
  %s8 = scalar_select 0, %s7, %s5
  loop: start=0, step=1, limit=4
  $region2: #{inception_forward.7} parent=0 // loop_pre_header
    _
  $region3: #{inception_forward.7} parent=0 // loop_header
    %s10 = sphi 0, %s14
    %p11 = scmp.ge.s32.totalorder %s10, 4
    %s20 = sphi 0, %s22
    %s23 = sphi 0, %s20
    %s24 = sphi 0, %s23
    %s40 = sphi 0, %s24
    %s44 = sphi 0, %s44
    %s46 = sphi 0, %s44
    %s47 = sphi 0, %s46
    %s61 = sphi 0, %s47
    %s65 = sphi 0, %s65
    %s67 = sphi 0, %s65
    %s68 = sphi 0, %s67
    %s82 = sphi 0, %s68
    %s86 = sphi 0, %s86
    %s88 = sphi 0, %s86
    %s89 = sphi 0, %s88
    %s103 = sphi 0, %s89
    %s109 = sphi 0, %s111
    %s112 = sphi 0, %s109
    %s113 = sphi 0, %s112
    %s129 = sphi 0, %s113
  $region4: #{inception_forward.7} parent=0 // loop_header_branch
    %13 = sbr.rel (%p11) target = $region8
  $region5: #{inception_forward.7} parent=0 // loop_body
    %s15 = ssub.s32 %s10, 1
    %s16 = ssub.s32 %s10, 2
    %s17 = sadd.s32 %s10, 1
    %s18 = ssub.s32 %s10, %s17
    %p19 = scmp.eq.s32.totalorder %s18, 0
    %s21 = sadd.s32 %s20, 1
    %s22 = scalar_select %p19, %s20, %s21
    %p25 = pneg %p19
    %p26 = scmp.eq.s32.totalorder %s10, 1
    %p27 = por %p25, %p26
    %p28 = scmp.ne.s32.totalorder %s20, %s23
    %p29 = scmp.eq.s32.totalorder %s10, 0
    %p30 = por %p28, %p29
    %p31 = scmp.ne.s32.totalorder %s20, %s23
    %p32 = scmp.eq.s32.totalorder %s15, 1
    %p33 = por %p31, %p32
    %p34 = scmp.ne.s32.totalorder %s23, %s24
    %p35 = scmp.eq.s32.totalorder %s15, 0
    %p36 = por %p34, %p35
    %p37 = scmp.ne.s32.totalorder %s23, %s24
    %p38 = scmp.eq.s32.totalorder %s16, 1
    %p39 = por %p37, %p38
    %p41 = scmp.ne.s32.totalorder %s24, %s40
    %p42 = scmp.eq.s32.totalorder %s16, 0
    %p43 = por %p41, %p42
    %s45 = sadd.s32 %s44, 1
    %p48 = scmp.eq.s32.totalorder %s10, 1
    %p49 = scmp.ne.s32.totalorder %s44, %s46
    %p50 = scmp.eq.s32.totalorder %s10, 0
    %p51 = por %p49, %p50
    %p52 = scmp.ne.s32.totalorder %s44, %s46
    %p53 = scmp.eq.s32.totalorder %s15, 1
    %p54 = por %p52, %p53
    %p55 = scmp.ne.s32.totalorder %s46, %s47
    %p56 = scmp.eq.s32.totalorder %s15, 0
    %p57 = por %p55, %p56
    %p58 = scmp.ne.s32.totalorder %s46, %s47
    %p59 = scmp.eq.s32.totalorder %s16, 1
    %p60 = por %p58, %p59
    %p62 = scmp.ne.s32.totalorder %s47, %s61
    %p63 = scmp.eq.s32.totalorder %s16, 0
    %p64 = por %p62, %p63
    %s66 = sadd.s32 %s65, 1
    %p69 = scmp.eq.s32.totalorder %s10, 1
    %p70 = scmp.ne.s32.totalorder %s65, %s67
    %p71 = scmp.eq.s32.totalorder %s10, 0
    %p72 = por %p70, %p71
    %p73 = scmp.ne.s32.totalorder %s65, %s67
    %p74 = scmp.eq.s32.totalorder %s15, 1
    %p75 = por %p73, %p74
    %p76 = scmp.ne.s32.totalorder %s67, %s68
    %p77 = scmp.eq.s32.totalorder %s15, 0
    %p78 = por %p76, %p77
    %p79 = scmp.ne.s32.totalorder %s67, %s68
    %p80 = scmp.eq.s32.totalorder %s16, 1
    %p81 = por %p79, %p80
    %p83 = scmp.ne.s32.totalorder %s68, %s82
    %p84 = scmp.eq.s32.totalorder %s16, 0
    %p85 = por %p83, %p84
    %s87 = sadd.s32 %s86, 1
    %p90 = scmp.eq.s32.totalorder %s10, 1
    %p91 = scmp.ne.s32.totalorder %s86, %s88
    %p92 = scmp.eq.s32.totalorder %s10, 0
    %p93 = por %p91, %p92
    %p94 = scmp.ne.s32.totalorder %s86, %s88
    %p95 = scmp.eq.s32.totalorder %s15, 1
    %p96 = por %p94, %p95
    %p97 = scmp.ne.s32.totalorder %s88, %s89
    %p98 = scmp.eq.s32.totalorder %s15, 0
    %p99 = por %p97, %p98
    %p100 = scmp.ne.s32.totalorder %s88, %s89
    %p101 = scmp.eq.s32.totalorder %s16, 1
    %p102 = por %p100, %p101
    %p104 = scmp.ne.s32.totalorder %s89, %s103
    %p105 = scmp.eq.s32.totalorder %s16, 0
    %p106 = por %p104, %p105
    %s107 = ssub.s32 %s10, %s17
    %p108 = scmp.eq.s32.totalorder %s107, 0
    %s110 = sadd.s32 %s109, 1
    %s111 = scalar_select %p108, %s109, %s110
    %p114 = pneg %p108
    %p115 = scmp.eq.s32.totalorder %s10, 1
    %p116 = por %p114, %p115
    %p117 = scmp.ne.s32.totalorder %s109, %s112
    %p118 = scmp.eq.s32.totalorder %s10, 0
    %p119 = por %p117, %p118
    %p120 = scmp.ne.s32.totalorder %s109, %s112
    %p121 = scmp.eq.s32.totalorder %s15, 1
    %p122 = por %p120, %p121
    %p123 = scmp.ne.s32.totalorder %s112, %s113
    %p124 = scmp.eq.s32.totalorder %s15, 0
    %p125 = por %p123, %p124
    %p126 = scmp.ne.s32.totalorder %s112, %s113
    %p127 = scmp.eq.s32.totalorder %s16, 1
    %p128 = por %p126, %p127
    %p130 = scmp.ne.s32.totalorder %s113, %s129
    %p131 = scmp.eq.s32.totalorder %s16, 0
    %p132 = por %p130, %p131
    %p133 = scmp.le.s32.totalorder 1, %s10
    %p134 = scmp.lt.s32.totalorder %s10, 3
    %p135 = pnand %p133, %p134
    %p136 = pneg %p135
    // Predicated region
    $region9: #{inception_forward.7} parent=5 // pred_check
      _
    $region10: #{inception_forward.7} parent=5 // pred_check_branch
      %138 = sbr.rel (%p135) target = $region12
    $region11: #{inception_forward.7} parent=5 // pred_region
      %s139 = ssub.s32 %s10, 1
      // Predicated region
      $region13: #{inception_forward.7} parent=11 // pred_check
        %p140 = pneg %p57
      $region14: #{inception_forward.7} parent=11 // pred_check_branch
        %142 = sbr.rel (%p140) target = $region16
      $region15: #{inception_forward.7} parent=11 // pred_region
        _
      $region16: #{inception_forward.7} parent=11 // pred_fallthru
        _
      // Predicated region
      $region17: #{inception_forward.7} parent=11 // pred_check
        %p143 = pneg %p78
      $region18: #{inception_forward.7} parent=11 // pred_check_branch
        %145 = sbr.rel (%p143) target = $region20
      $region19: #{inception_forward.7} parent=11 // pred_region
        _
      $region20: #{inception_forward.7} parent=11 // pred_fallthru
        _
      // Predicated region
      $region21: #{inception_forward.7} parent=11 // pred_check
        %p146 = pneg %p99
      $region22: #{inception_forward.7} parent=11 // pred_check_branch
        %148 = sbr.rel (%p146) target = $region24
      $region23: #{inception_forward.7} parent=11 // pred_region
        _
      $region24: #{inception_forward.7} parent=11 // pred_fallthru
        _
    $region12: #{inception_forward.7} parent=5 // pred_fallthru
      _
    %p149 = scmp.lt.s32.totalorder %s10, 2
    // Predicated region
    $region25: #{inception_forward.7} parent=5 // pred_check
      %p150 = pneg %p149
    $region26: #{inception_forward.7} parent=5 // pred_check_branch
      %152 = sbr.rel (%p150) target = $region28
    $region27: #{inception_forward.7} parent=5 // pred_region
      // Predicated region
      $region29: #{inception_forward.7} parent=27 // pred_check
        %p153 = pneg %p30
      $region30: #{inception_forward.7} parent=27 // pred_check_branch
        %155 = sbr.rel (%p153) target = $region32
      $region31: #{inception_forward.7} parent=27 // pred_region
        %p156 = scmp.lt.s32.totalorder %s10, 1
        %s157 = scalar_select %p156, %s10, 1
        %s158 = smul.addr %s157, 32
        %s159 = smul.addr %s158, 4
        %s160 = scalar_lea.vmem %s0, %s159
      $region32: #{inception_forward.7} parent=27 // pred_fallthru
        _
    $region28: #{inception_forward.7} parent=5 // pred_fallthru
      _
    %p161 = scmp.le.s32.totalorder 1, %s10
    %p162 = scmp.lt.s32.totalorder %s10, 3
    %p163 = pnand %p161, %p162
    %p164 = pneg %p163
    // Predicated region
    $region33: #{inception_forward.7} parent=5 // pred_check
      _
    $region34: #{inception_forward.7} parent=5 // pred_check_branch
      %166 = sbr.rel (%p163) target = $region36
    $region35: #{inception_forward.7} parent=5 // pred_region
      %s167 = ssub.s32 %s10, 1
      %p168 = scmp.lt.s32.totalorder %s15, 1
      %s169 = scalar_select %p168, %s15, 1
      %s170 = smul.addr %s169, 32
      %s171 = smul.addr %s170, 4
      %s172 = scalar_lea.vmem %s0, %s171
      %p173 = pneg %p36
      %p174 = pneg %p33
      %p175 = pneg %p57
      %p176 = pneg %p54
      %p177 = pneg %p78
      %p178 = pneg %p75
      %p179 = pneg %p99
      %p180 = pneg %p96
      %p181 = pneg %p125
      %p182 = pneg %p122
      %p183 = scmp.lt.s32.totalorder %s15, 1
      %s184 = scalar_select %p183, %s15, 1
      %s185 = smul.addr %s184, 32
      %s186 = smul.addr %s185, 4
      %s187 = scalar_lea.vmem %s4, %s186
      %p188 = scmp.lt.s32.totalorder %s15, 1
      %s189 = scalar_select %p188, %s15, 1
      %s190 = smul.addr %s189, 32
      %s191 = smul.addr %s190, 4
      %s192 = scalar_lea.vmem %s0, %s191
      %p193 = scmp.lt.s32.totalorder %s15, 1
      %s194 = scalar_select %p193, %s15, 1
      %s195 = smul.addr %s194, 32
      %s196 = smul.addr %s195, 4
      %s197 = scalar_lea.vmem %s4, %s196
      %vm201 = vcmask 27648
      %202 = vst.msk [vmem:[#allocation2] sm:$0xf] %vm201, 4048220490
      %203 = vst.msk [vmem:[#allocation2 + $0x4] sm:$0xf] %vm201, 4048220490
      %204 = vst.msk [vmem:[#allocation2 + $0x8] sm:$0xf] %vm201, 4048220490
      %205 = vst.msk [vmem:[#allocation2 + $0xc] sm:$0xf] %vm201, 4048220490
      %206 = vst.msk [vmem:[#allocation2 + $0x10] sm:$0xf] %vm201, 4048220490
      %207 = vst.msk [vmem:[#allocation2 + $0x14] sm:$0xf] %vm201, 4048220490
      %208 = vst.msk [vmem:[#allocation2 + $0x18] sm:$0xf] %vm201, 4048220490
      %209 = vst.msk [vmem:[#allocation2 + $0x1c] sm:$0xf] %vm201, 4048220490
      %210 = vst.msk [vmem:[#allocation2 + $0x20] sm:$0xf] %vm201, 4048220490
      %211 = vst.msk [vmem:[#allocation2 + $0x24] sm:$0xf] %vm201, 4048220490
      %212 = vst.msk [vmem:[#allocation2 + $0x28] sm:$0xf] %vm201, 4048220490
      %213 = vst.msk [vmem:[#allocation2 + $0x2c] sm:$0xf] %vm201, 4048220490
      %214 = vst.msk [vmem:[#allocation2 + $0x30] sm:$0xf] %vm201, 4048220490
      %215 = vst.msk [vmem:[#allocation2 + $0x34] sm:$0xf] %vm201, 4048220490
      %216 = vst.msk [vmem:[#allocation2 + $0x38] sm:$0xf] %vm201, 4048220490
      %217 = vst.msk [vmem:[#allocation2 + $0x3c] sm:$0xf] %vm201, 4048220490
      %218 = vst.msk [vmem:[#allocation2 + $0x40] sm:$0xf] %vm201, 4048220490
      %219 = vst.msk [vmem:[#allocation2 + $0x44] sm:$0xf] %vm201, 4048220490
      %220 = vst.msk [vmem:[#allocation2 + $0x48] sm:$0xf] %vm201, 4048220490
      %221 = vst.msk [vmem:[#allocation2 + $0x4c] sm:$0xf] %vm201, 4048220490
      %222 = vst.msk [vmem:[#allocation2 + $0x50] sm:$0xf] %vm201, 4048220490
      %223 = vst.msk [vmem:[#allocation2 + $0x54] sm:$0xf] %vm201, 4048220490
      %224 = vst.msk [vmem:[#allocation2 + $0x58] sm:$0xf] %vm201, 4048220490
      %225 = vst.msk [vmem:[#allocation2 + $0x5c] sm:$0xf] %vm201, 4048220490
      %226 = vst.msk [vmem:[#allocation2 + $0x60] sm:$0xf] %vm201, 4048220490
      %227 = vst.msk [vmem:[#allocation2 + $0x64] sm:$0xf] %vm201, 4048220490
      %228 = vst.msk [vmem:[#allocation2 + $0x68] sm:$0xf] %vm201, 4048220490
      %229 = vst.msk [vmem:[#allocation2 + $0x6c] sm:$0xf] %vm201, 4048220490
      %230 = vst.msk [vmem:[#allocation2 + $0x70] sm:$0xf] %vm201, 4048220490
      %231 = vst.msk [vmem:[#allocation2 + $0x74] sm:$0xf] %vm201, 4048220490
      %232 = vst.msk [vmem:[#allocation2 + $0x78] sm:$0xf] %vm201, 4048220490
      %233 = vst.msk [vmem:[#allocation2 + $0x7c] sm:$0xf] %vm201, 4048220490
      %234 = vst.msk [vmem:[#allocation2 + $0x80] sm:$0xf] %vm201, 4048220490
      %235 = vst.msk [vmem:[#allocation2 + $0x84] sm:$0xf] %vm201, 4048220490
      %236 = vst.msk [vmem:[#allocation2 + $0x88] sm:$0xf] %vm201, 4048220490
      %237 = vst.msk [vmem:[#allocation2 + $0x8c] sm:$0xf] %vm201, 4048220490
      %238 = vst.msk [vmem:[#allocation2 + $0x90] sm:$0xf] %vm201, 4048220490
      %239 = vst.msk [vmem:[#allocation2 + $0x94] sm:$0xf] %vm201, 4048220490
      %240 = vst.msk [vmem:[#allocation2 + $0x98] sm:$0xf] %vm201, 4048220490
      %241 = vst.msk [vmem:[#allocation2 + $0x9c] sm:$0xf] %vm201, 4048220490
      %242 = vst.msk [vmem:[#allocation2 + $0xa0] sm:$0xf] %vm201, 4048220490
      %243 = vst.msk [vmem:[#allocation2 + $0xa4] sm:$0xf] %vm201, 4048220490
      %244 = vst.msk [vmem:[#allocation2 + $0xa8] sm:$0xf] %vm201, 4048220490
      %245 = vst.msk [vmem:[#allocation2 + $0xac] sm:$0xf] %vm201, 4048220490
      %246 = vst.msk [vmem:[#allocation2 + $0xb0] sm:$0xf] %vm201, 4048220490
      %247 = vst.msk [vmem:[#allocation2 + $0xb4] sm:$0xf] %vm201, 4048220490
      %248 = vst.msk [vmem:[#allocation2 + $0xb8] sm:$0xf] %vm201, 4048220490
      %249 = vst.msk [vmem:[#allocation2 + $0xbc] sm:$0xf] %vm201, 4048220490
      %250 = vst.msk [vmem:[#allocation2 + $0xc0] sm:$0xf] %vm201, 4048220490
      %251 = vst.msk [vmem:[#allocation2 + $0xc4] sm:$0xf] %vm201, 4048220490
      %252 = vst.msk [vmem:[#allocation2 + $0xc8] sm:$0xf] %vm201, 4048220490
      %253 = vst.msk [vmem:[#allocation2 + $0xcc] sm:$0xf] %vm201, 4048220490
      %254 = vst.msk [vmem:[#allocation2 + $0xd0] sm:$0xf] %vm201, 4048220490
      %255 = vst.msk [vmem:[#allocation2 + $0xd4] sm:$0xf] %vm201, 4048220490
      %256 = vst.msk [vmem:[#allocation2 + $0xd8] sm:$0xf] %vm201, 4048220490
      %257 = vst.msk [vmem:[#allocation2 + $0xdc] sm:$0xf] %vm201, 4048220490
      %258 = vst.msk [vmem:[#allocation2 + $0xe0] sm:$0xf] %vm201, 4048220490
      %v259 = vld [vmem:[%s192] sm:$0xf]
      %v260 = vld [vmem:[%s192 + $0x4] sm:$0xf]
      %vm261 = vsmask.f32 256
      %vm262 = vsmask.f32 4368
      %vm263 = vmor %vm261, %vm262
      %v265 = vshrl.u32 %v259, 16
      %v267 = vrot.slane %v265, 7
      %v268 = vshll.u32 %v259, 16
      %v270 = vor.u32 %v267, %v268
      %v271 = vrot.slane %v267, 4
      %v273 = vshrl.u32 %v260, 16
      %v275 = vrot.slane %v273, 7
      %v276 = vshll.u32 %v260, 16
      %v278 = vor.u32 %v275, %v276
      %v279 = vsel %vm263, %v271, %v278
      %v280 = vrot.slane %v275, 4
      %vm284 = vcmask 27648
      %vm285 = vsmask.f32 7938
      %vm286 = vmand %vm284, %vm285
      %v287 = vld [vmem:[#allocation2 + $0xc] sm:$0xf]
      %v288 = vsel %vm286, %v270, %v287
      %289 = vst [vmem:[#allocation2 + $0xc] sm:$0xf] %v288
      %290 = vst.msk [vmem:[#allocation2 + $0x10] sm:$0xf] %vm201, %v279
      %vm291 = vcmask 24576
      %vm292 = vmand %vm291, %vm261
      %v293 = vld [vmem:[#allocation2 + $0x14] sm:$0x1]
      %v294 = vsel %vm292, %v280, %v293
      %295 = vst [vmem:[#allocation2 + $0x14] sm:$0x1] %v294
      %s296 = scalar_lea.vmem %s192, 8
      %v297 = vld [vmem:[%s296] sm:$0xf]
      %v298 = vld [vmem:[%s296 + $0x4] sm:$0xf]
      %v300 = vshrl.u32 %v297, 16
      %v302 = vrot.slane %v300, 7
      %v303 = vshll.u32 %v297, 16
      %v305 = vor.u32 %v302, %v303
      %v306 = vrot.slane %v302, 4
      %v308 = vshrl.u32 %v298, 16
      %v310 = vrot.slane %v308, 7
      %v311 = vshll.u32 %v298, 16
      %v313 = vor.u32 %v310, %v311
      %v314 = vsel %vm263, %v306, %v313
      %v315 = vrot.slane %v310, 4
      %v319 = vld [vmem:[#allocation2 + $0x18] sm:$0xf]
      %v320 = vsel %vm286, %v305, %v319
      %321 = vst [vmem:[#allocation2 + $0x18] sm:$0xf] %v320
      %322 = vst.msk [vmem:[#allocation2 + $0x1c] sm:$0xf] %vm201, %v314
      %v323 = vld [vmem:[#allocation2 + $0x20] sm:$0x1]
      %v324 = vsel %vm292, %v315, %v323
      %325 = vst [vmem:[#allocation2 + $0x20] sm:$0x1] %v324
      %s326 = scalar_lea.vmem %s192, 16
      %v327 = vld [vmem:[%s326] sm:$0xf]
      %v328 = vld [vmem:[%s326 + $0x4] sm:$0xf]
      %v330 = vshrl.u32 %v327, 16
      %v332 = vrot.slane %v330, 7
      %v333 = vshll.u32 %v327, 16
      %v335 = vor.u32 %v332, %v333
      %v336 = vrot.slane %v332, 4
      %v338 = vshrl.u32 %v328, 16
      %v340 = vrot.slane %v338, 7
      %v341 = vshll.u32 %v328, 16
      %v343 = vor.u32 %v340, %v341
      %v344 = vsel %vm263, %v336, %v343
      %v345 = vrot.slane %v340, 4
      %v349 = vld [vmem:[#allocation2 + $0x24] sm:$0xf]
      %v350 = vsel %vm286, %v335, %v349
      %351 = vst [vmem:[#allocation2 + $0x24] sm:$0xf] %v350
      %352 = vst.msk [vmem:[#allocation2 + $0x28] sm:$0xf] %vm201, %v344
      %v353 = vld [vmem:[#allocation2 + $0x2c] sm:$0x1]
      %v354 = vsel %vm292, %v345, %v353
      %355 = vst [vmem:[#allocation2 + $0x2c] sm:$0x1] %v354
      %s356 = scalar_lea.vmem %s192, 24
      %v357 = vld [vmem:[%s356] sm:$0xf]
      %v358 = vld [vmem:[%s356 + $0x4] sm:$0xf]
      %v360 = vshrl.u32 %v357, 16
      %v362 = vrot.slane %v360, 7
      %v363 = vshll.u32 %v357, 16
      %v365 = vor.u32 %v362, %v363
      %v366 = vrot.slane %v362, 4
      %v368 = vshrl.u32 %v358, 16
      %v370 = vrot.slane %v368, 7
      %v371 = vshll.u32 %v358, 16
      %v373 = vor.u32 %v370, %v371
      %v374 = vsel %vm263, %v366, %v373
      %v375 = vrot.slane %v370, 4
      %v379 = vld [vmem:[#allocation2 + $0x30] sm:$0xf]
      %v380 = vsel %vm286, %v365, %v379
      %381 = vst [vmem:[#allocation2 + $0x30] sm:$0xf] %v380
      %382 = vst.msk [vmem:[#allocation2 + $0x34] sm:$0xf] %vm201, %v374
      %v383 = vld [vmem:[#allocation2 + $0x38] sm:$0x1]
      %v384 = vsel %vm292, %v375, %v383
      %385 = vst [vmem:[#allocation2 + $0x38] sm:$0x1] %v384
      %s386 = scalar_lea.vmem %s192, 32
      %v387 = vld [vmem:[%s386] sm:$0xf]
      %v388 = vld [vmem:[%s386 + $0x4] sm:$0xf]
      %v390 = vshrl.u32 %v387, 16
      %v392 = vrot.slane %v390, 7
      %v393 = vshll.u32 %v387, 16
      %v395 = vor.u32 %v392, %v393
      %v396 = vrot.slane %v392, 4
      %v398 = vshrl.u32 %v388, 16
      %v400 = vrot.slane %v398, 7
      %v401 = vshll.u32 %v388, 16
      %v403 = vor.u32 %v400, %v401
      %v404 = vsel %vm263, %v396, %v403
      %v405 = vrot.slane %v400, 4
      %v409 = vld [vmem:[#allocation2 + $0x3c] sm:$0xf]
      %v410 = vsel %vm286, %v395, %v409
      %411 = vst [vmem:[#allocation2 + $0x3c] sm:$0xf] %v410
      %412 = vst.msk [vmem:[#allocation2 + $0x40] sm:$0xf] %vm201, %v404
      %v413 = vld [vmem:[#allocation2 + $0x44] sm:$0x1]
      %v414 = vsel %vm292, %v405, %v413
      %415 = vst [vmem:[#allocation2 + $0x44] sm:$0x1] %v414
      %s416 = scalar_lea.vmem %s192, 40
      %v417 = vld [vmem:[%s416] sm:$0xf]
      %v418 = vld [vmem:[%s416 + $0x4] sm:$0xf]
      %v420 = vshrl.u32 %v417, 16
      %v422 = vrot.slane %v420, 7
      %v423 = vshll.u32 %v417, 16
      %v425 = vor.u32 %v422, %v423
      %v426 = vrot.slane %v422, 4
      %v428 = vshrl.u32 %v418, 16
      %v430 = vrot.slane %v428, 7
      %v431 = vshll.u32 %v418, 16
      %v433 = vor.u32 %v430, %v431
      %v434 = vsel %vm263, %v426, %v433
      %v435 = vrot.slane %v430, 4
      %v439 = vld [vmem:[#allocation2 + $0x48] sm:$0xf]
      %v440 = vsel %vm286, %v425, %v439
      %441 = vst [vmem:[#allocation2 + $0x48] sm:$0xf] %v440
      %442 = vst.msk [vmem:[#allocation2 + $0x4c] sm:$0xf] %vm201, %v434
      %v443 = vld [vmem:[#allocation2 + $0x50] sm:$0x1]
      %v444 = vsel %vm292, %v435, %v443
      %445 = vst [vmem:[#allocation2 + $0x50] sm:$0x1] %v444
      %s446 = scalar_lea.vmem %s192, 48
      %v447 = vld [vmem:[%s446] sm:$0xf]
      %v448 = vld [vmem:[%s446 + $0x4] sm:$0xf]
      %v450 = vshrl.u32 %v447, 16
      %v452 = vrot.slane %v450, 7
      %v453 = vshll.u32 %v447, 16
      %v455 = vor.u32 %v452, %v453
      %v456 = vrot.slane %v452, 4
      %v458 = vshrl.u32 %v448, 16
      %v460 = vrot.slane %v458, 7
      %v461 = vshll.u32 %v448, 16
      %v463 = vor.u32 %v460, %v461
      %v464 = vsel %vm263, %v456, %v463
      %v465 = vrot.slane %v460, 4
      %v469 = vld [vmem:[#allocation2 + $0x54] sm:$0xf]
      %v470 = vsel %vm286, %v455, %v469
      %471 = vst [vmem:[#allocation2 + $0x54] sm:$0xf] %v470
      %472 = vst.msk [vmem:[#allocation2 + $0x58] sm:$0xf] %vm201, %v464
      %v473 = vld [vmem:[#allocation2 + $0x5c] sm:$0x1]
      %v474 = vsel %vm292, %v465, %v473
      %475 = vst [vmem:[#allocation2 + $0x5c] sm:$0x1] %v474
      %s476 = scalar_lea.vmem %s192, 56
      %v477 = vld [vmem:[%s476] sm:$0xf]
      %v478 = vld [vmem:[%s476 + $0x4] sm:$0xf]
      %v480 = vshrl.u32 %v477, 16
      %v482 = vrot.slane %v480, 7
      %v483 = vshll.u32 %v477, 16
      %v485 = vor.u32 %v482, %v483
      %v486 = vrot.slane %v482, 4
      %v488 = vshrl.u32 %v478, 16
      %v490 = vrot.slane %v488, 7
      %v491 = vshll.u32 %v478, 16
      %v493 = vor.u32 %v490, %v491
      %v494 = vsel %vm263, %v486, %v493
      %v495 = vrot.slane %v490, 4
      %v499 = vld [vmem:[#allocation2 + $0x60] sm:$0xf]
      %v500 = vsel %vm286, %v485, %v499
      %501 = vst [vmem:[#allocation2 + $0x60] sm:$0xf] %v500
      %502 = vst.msk [vmem:[#allocation2 + $0x64] sm:$0xf] %vm201, %v494
      %v503 = vld [vmem:[#allocation2 + $0x68] sm:$0x1]
      %v504 = vsel %vm292, %v495, %v503
      %505 = vst [vmem:[#allocation2 + $0x68] sm:$0x1] %v504
      %s506 = scalar_lea.vmem %s192, 64
      %v507 = vld [vmem:[%s506] sm:$0xf]
      %v508 = vld [vmem:[%s506 + $0x4] sm:$0xf]
      %v510 = vshrl.u32 %v507, 16
      %v512 = vrot.slane %v510, 7
      %v513 = vshll.u32 %v507, 16
      %v515 = vor.u32 %v512, %v513
      %v516 = vrot.slane %v512, 4
      %v518 = vshrl.u32 %v508, 16
      %v520 = vrot.slane %v518, 7
      %v521 = vshll.u32 %v508, 16
      %v523 = vor.u32 %v520, %v521
      %v524 = vsel %vm263, %v516, %v523
      %v525 = vrot.slane %v520, 4
      %v529 = vld [vmem:[#allocation2 + $0x6c] sm:$0xf]
      %v530 = vsel %vm286, %v515, %v529
      %531 = vst [vmem:[#allocation2 + $0x6c] sm:$0xf] %v530
      %532 = vst.msk [vmem:[#allocation2 + $0x70] sm:$0xf] %vm201, %v524
      %v533 = vld [vmem:[#allocation2 + $0x74] sm:$0x1]
      %v534 = vsel %vm292, %v525, %v533
      %535 = vst [vmem:[#allocation2 + $0x74] sm:$0x1] %v534
      %s536 = scalar_lea.vmem %s192, 72
      %v537 = vld [vmem:[%s536] sm:$0xf]
      %v538 = vld [vmem:[%s536 + $0x4] sm:$0xf]
      %v540 = vshrl.u32 %v537, 16
      %v542 = vrot.slane %v540, 7
      %v543 = vshll.u32 %v537, 16
      %v545 = vor.u32 %v542, %v543
      %v546 = vrot.slane %v542, 4
      %v548 = vshrl.u32 %v538, 16
      %v550 = vrot.slane %v548, 7
      %v551 = vshll.u32 %v538, 16
      %v553 = vor.u32 %v550, %v551
      %v554 = vsel %vm263, %v546, %v553
      %v555 = vrot.slane %v550, 4
      %v559 = vld [vmem:[#allocation2 + $0x78] sm:$0xf]
      %v560 = vsel %vm286, %v545, %v559
      %561 = vst [vmem:[#allocation2 + $0x78] sm:$0xf] %v560
      %562 = vst.msk [vmem:[#allocation2 + $0x7c] sm:$0xf] %vm201, %v554
      %v563 = vld [vmem:[#allocation2 + $0x80] sm:$0x1]
      %v564 = vsel %vm292, %v555, %v563
      %565 = vst [vmem:[#allocation2 + $0x80] sm:$0x1] %v564
      %s566 = scalar_lea.vmem %s192, 80
      %v567 = vld [vmem:[%s566] sm:$0xf]
      %v568 = vld [vmem:[%s566 + $0x4] sm:$0xf]
      %v570 = vshrl.u32 %v567, 16
      %v572 = vrot.slane %v570, 7
      %v573 = vshll.u32 %v567, 16
      %v575 = vor.u32 %v572, %v573
      %v576 = vrot.slane %v572, 4
      %v578 = vshrl.u32 %v568, 16
      %v580 = vrot.slane %v578, 7
      %v581 = vshll.u32 %v568, 16
      %v583 = vor.u32 %v580, %v581
      %v584 = vsel %vm263, %v576, %v583
      %v585 = vrot.slane %v580, 4
      %v589 = vld [vmem:[#allocation2 + $0x84] sm:$0xf]
      %v590 = vsel %vm286, %v575, %v589
      %591 = vst [vmem:[#allocation2 + $0x84] sm:$0xf] %v590
      %592 = vst.msk [vmem:[#allocation2 + $0x88] sm:$0xf] %vm201, %v584
      %v593 = vld [vmem:[#allocation2 + $0x8c] sm:$0x1]
      %v594 = vsel %vm292, %v585, %v593
      %595 = vst [vmem:[#allocation2 + $0x8c] sm:$0x1] %v594
      %s596 = scalar_lea.vmem %s192, 88
      %v597 = vld [vmem:[%s596] sm:$0xf]
      %v598 = vld [vmem:[%s596 + $0x4] sm:$0xf]
      %v600 = vshrl.u32 %v597, 16
      %v602 = vrot.slane %v600, 7
      %v603 = vshll.u32 %v597, 16
      %v605 = vor.u32 %v602, %v603
      %v606 = vrot.slane %v602, 4
      %v608 = vshrl.u32 %v598, 16
      %v610 = vrot.slane %v608, 7
      %v611 = vshll.u32 %v598, 16
      %v613 = vor.u32 %v610, %v611
      %v614 = vsel %vm263, %v606, %v613
      %v615 = vrot.slane %v610, 4
      %v619 = vld [vmem:[#allocation2 + $0x90] sm:$0xf]
      %v620 = vsel %vm286, %v605, %v619
      %621 = vst [vmem:[#allocation2 + $0x90] sm:$0xf] %v620
      %622 = vst.msk [vmem:[#allocation2 + $0x94] sm:$0xf] %vm201, %v614
      %v623 = vld [vmem:[#allocation2 + $0x98] sm:$0x1]
      %v624 = vsel %vm292, %v615, %v623
      %625 = vst [vmem:[#allocation2 + $0x98] sm:$0x1] %v624
      %s626 = scalar_lea.vmem %s192, 96
      %v627 = vld [vmem:[%s626] sm:$0xf]
      %v628 = vld [vmem:[%s626 + $0x4] sm:$0xf]
      %v630 = vshrl.u32 %v627, 16
      %v632 = vrot.slane %v630, 7
      %v633 = vshll.u32 %v627, 16
      %v635 = vor.u32 %v632, %v633
      %v636 = vrot.slane %v632, 4
      %v638 = vshrl.u32 %v628, 16
      %v640 = vrot.slane %v638, 7
      %v641 = vshll.u32 %v628, 16
      %v643 = vor.u32 %v640, %v641
      %v644 = vsel %vm263, %v636, %v643
      %v645 = vrot.slane %v640, 4
      %v649 = vld [vmem:[#allocation2 + $0x9c] sm:$0xf]
      %v650 = vsel %vm286, %v635, %v649
      %651 = vst [vmem:[#allocation2 + $0x9c] sm:$0xf] %v650
      %652 = vst.msk [vmem:[#allocation2 + $0xa0] sm:$0xf] %vm201, %v644
      %v653 = vld [vmem:[#allocation2 + $0xa4] sm:$0x1]
      %v654 = vsel %vm292, %v645, %v653
      %655 = vst [vmem:[#allocation2 + $0xa4] sm:$0x1] %v654
      %s656 = scalar_lea.vmem %s192, 104
      %v657 = vld [vmem:[%s656] sm:$0xf]
      %v658 = vld [vmem:[%s656 + $0x4] sm:$0xf]
      %v660 = vshrl.u32 %v657, 16
      %v662 = vrot.slane %v660, 7
      %v663 = vshll.u32 %v657, 16
      %v665 = vor.u32 %v662, %v663
      %v666 = vrot.slane %v662, 4
      %v668 = vshrl.u32 %v658, 16
      %v670 = vrot.slane %v668, 7
      %v671 = vshll.u32 %v658, 16
      %v673 = vor.u32 %v670, %v671
      %v674 = vsel %vm263, %v666, %v673
      %v675 = vrot.slane %v670, 4
      %v679 = vld [vmem:[#allocation2 + $0xa8] sm:$0xf]
      %v680 = vsel %vm286, %v665, %v679
      %681 = vst [vmem:[#allocation2 + $0xa8] sm:$0xf] %v680
      %682 = vst.msk [vmem:[#allocation2 + $0xac] sm:$0xf] %vm201, %v674
      %v683 = vld [vmem:[#allocation2 + $0xb0] sm:$0x1]
      %v684 = vsel %vm292, %v675, %v683
      %685 = vst [vmem:[#allocation2 + $0xb0] sm:$0x1] %v684
      %s686 = scalar_lea.vmem %s192, 112
      %v687 = vld [vmem:[%s686] sm:$0xf]
      %v688 = vld [vmem:[%s686 + $0x4] sm:$0xf]
      %v690 = vshrl.u32 %v687, 16
      %v692 = vrot.slane %v690, 7
      %v693 = vshll.u32 %v687, 16
      %v695 = vor.u32 %v692, %v693
      %v696 = vrot.slane %v692, 4
      %v698 = vshrl.u32 %v688, 16
      %v700 = vrot.slane %v698, 7
      %v701 = vshll.u32 %v688, 16
      %v703 = vor.u32 %v700, %v701
      %v704 = vsel %vm263, %v696, %v703
      %v705 = vrot.slane %v700, 4
      %v709 = vld [vmem:[#allocation2 + $0xb4] sm:$0xf]
      %v710 = vsel %vm286, %v695, %v709
      %711 = vst [vmem:[#allocation2 + $0xb4] sm:$0xf] %v710
      %712 = vst.msk [vmem:[#allocation2 + $0xb8] sm:$0xf] %vm201, %v704
      %v713 = vld [vmem:[#allocation2 + $0xbc] sm:$0x1]
      %v714 = vsel %vm292, %v705, %v713
      %715 = vst [vmem:[#allocation2 + $0xbc] sm:$0x1] %v714
      %s716 = scalar_lea.vmem %s192, 120
      %v717 = vld [vmem:[%s716] sm:$0xf]
      %v718 = vld [vmem:[%s716 + $0x4] sm:$0xf]
      %v720 = vshrl.u32 %v717, 16
      %v722 = vrot.slane %v720, 7
      %v723 = vshll.u32 %v717, 16
      %v725 = vor.u32 %v722, %v723
      %v726 = vrot.slane %v722, 4
      %v728 = vshrl.u32 %v718, 16
      %v730 = vrot.slane %v728, 7
      %v731 = vshll.u32 %v718, 16
      %v733 = vor.u32 %v730, %v731
      %v734 = vsel %vm263, %v726, %v733
      %v735 = vrot.slane %v730, 4
      %v739 = vld [vmem:[#allocation2 + $0xc0] sm:$0xf]
      %v740 = vsel %vm286, %v725, %v739
      %741 = vst [vmem:[#allocation2 + $0xc0] sm:$0xf] %v740
      %742 = vst.msk [vmem:[#allocation2 + $0xc4] sm:$0xf] %vm201, %v734
      %v743 = vld [vmem:[#allocation2 + $0xc8] sm:$0x1]
      %v744 = vsel %vm292, %v735, %v743
      %745 = vst [vmem:[#allocation2 + $0xc8] sm:$0x1] %v744
      %v746 = vld [vmem:[#allocation2] sm:$0xf]
      %v747 = vld [vmem:[#allocation2 + $0x4] sm:$0xf]
      %v748 = vld [vmem:[#allocation2 + $0x8] sm:$0xf]
      %v749 = vld [vmem:[#allocation2 + $0xc] sm:$0xf]
      %v750 = vld [vmem:[#allocation2 + $0x10] sm:$0xf]
      %v751 = vld [vmem:[#allocation2 + $0x14] sm:$0xf]
      %v752 = vld [vmem:[#allocation2 + $0x18] sm:$0xf]
      %v753 = vld [vmem:[#allocation2 + $0x1c] sm:$0xf]
      %v754 = vld [vmem:[#allocation2 + $0x20] sm:$0xf]
      %v755 = vld [vmem:[#allocation2 + $0x24] sm:$0xf]
      %v756 = vld [vmem:[#allocation2 + $0x28] sm:$0xf]
      %v757 = vld [vmem:[#allocation2 + $0x2c] sm:$0xf]
      %v758 = vld [vmem:[#allocation2 + $0x30] sm:$0xf]
      %v759 = vld [vmem:[#allocation2 + $0x34] sm:$0xf]
      %v760 = vld [vmem:[#allocation2 + $0x38] sm:$0xf]
      %v761 = vld [vmem:[#allocation2 + $0x3c] sm:$0xf]
      %v762 = vld [vmem:[#allocation2 + $0x40] sm:$0xf]
      %v763 = vld [vmem:[#allocation2 + $0x44] sm:$0xf]
      %v764 = vld [vmem:[#allocation2 + $0x48] sm:$0xf]
      %v765 = vld [vmem:[#allocation2 + $0x4c] sm:$0xf]
      %v766 = vld [vmem:[#allocation2 + $0x50] sm:$0xf]
      %v767 = vld [vmem:[#allocation2 + $0x54] sm:$0xf]
      %v768 = vld [vmem:[#allocation2 + $0x58] sm:$0xf]
      %v769 = vld [vmem:[#allocation2 + $0x5c] sm:$0xf]
      %v770 = vld [vmem:[#allocation2 + $0x60] sm:$0xf]
      %v771 = vld [vmem:[#allocation2 + $0x64] sm:$0xf]
      %v772 = vld [vmem:[#allocation2 + $0x68] sm:$0xf]
      %v773 = vld [vmem:[#allocation2 + $0x6c] sm:$0xf]
      %v774 = vld [vmem:[#allocation2 + $0x70] sm:$0xf]
      %v775 = vld [vmem:[#allocation2 + $0x74] sm:$0xf]
      %v776 = vld [vmem:[#allocation2 + $0x78] sm:$0xf]
      %v777 = vld [vmem:[#allocation2 + $0x7c] sm:$0xf]
      %v778 = vld [vmem:[#allocation2 + $0x80] sm:$0xf]
      %v779 = vld [vmem:[#allocation2 + $0x84] sm:$0xf]
      %v780 = vld [vmem:[#allocation2 + $0x88] sm:$0xf]
      %v781 = vld [vmem:[#allocation2 + $0x8c] sm:$0xf]
      %v782 = vld [vmem:[#allocation2 + $0x90] sm:$0xf]
      %v783 = vld [vmem:[#allocation2 + $0x94] sm:$0xf]
      %v784 = vld [vmem:[#allocation2 + $0x98] sm:$0xf]
      %v785 = vld [vmem:[#allocation2 + $0x9c] sm:$0xf]
      %v786 = vld [vmem:[#allocation2 + $0xa0] sm:$0xf]
      %v787 = vld [vmem:[#allocation2 + $0xa4] sm:$0xf]
      %v788 = vld [vmem:[#allocation2 + $0xa8] sm:$0xf]
      %v789 = vld [vmem:[#allocation2 + $0xac] sm:$0xf]
      %v790 = vld [vmem:[#allocation2 + $0xb0] sm:$0xf]
      %v791 = vld [vmem:[#allocation2 + $0xb4] sm:$0xf]
      %v792 = vld [vmem:[#allocation2 + $0xb8] sm:$0xf]
      %v793 = vld [vmem:[#allocation2 + $0xbc] sm:$0xf]
      %v794 = vld [vmem:[#allocation2 + $0xc0] sm:$0xf]
      %v795 = vld [vmem:[#allocation2 + $0xc4] sm:$0xf]
      %v796 = vld [vmem:[#allocation2 + $0xc8] sm:$0xf]
      %v797 = vld [vmem:[#allocation2 + $0xcc] sm:$0xf]
      %v798 = vld [vmem:[#allocation2 + $0xd0] sm:$0xf]
      %v799 = vld [vmem:[#allocation2 + $0xd4] sm:$0xf]
      %v800 = vld [vmem:[#allocation2 + $0xd8] sm:$0x1]
      %vm801 = vsmask.f32 3328
      %vm802 = vsmask.f32 7440
      %vm803 = vmor %vm801, %vm802
      %v805 = vshrl.u32 %v746, 16
      %v807 = vrot.slane %v805, 4
      %v808 = vshll.u32 %v746, 16
      %v810 = vrot.slane %v808, 5
      %v811 = vor.u32 %v807, %v810
      %v812 = vrot.slane %v811, 4
      %v814 = vshll.u32 %v747, 16
      %v816 = vrot.slane %v814, 5
      %v817 = vsel %vm803, %v812, %v816
      %v818 = vshrl.u32 %v747, 16
      %v820 = vrot.slane %v818, 4
      %v821 = vor.u32 %v820, %v816
      %v822 = vrot.slane %v821, 4
      %v824 = vshll.u32 %v748, 16
      %v826 = vrot.slane %v824, 5
      %v827 = vsel %vm803, %v822, %v826
      %v828 = vshrl.u32 %v748, 16
      %v830 = vrot.slane %v828, 4
      %v831 = vor.u32 %v830, %v826
      %v832 = vrot.slane %v831, 4
      %v834 = vshll.u32 %v749, 16
      %v836 = vrot.slane %v834, 5
      %v837 = vsel %vm803, %v832, %v836
      %v838 = vshrl.u32 %v749, 16
      %v840 = vrot.slane %v838, 4
      %v841 = vor.u32 %v840, %v836
      %v842 = vrot.slane %v841, 4
      %v844 = vshll.u32 %v750, 16
      %v846 = vrot.slane %v844, 5
      %v847 = vsel %vm803, %v842, %v846
      %v848 = vshrl.u32 %v750, 16
      %v850 = vrot.slane %v848, 4
      %v851 = vor.u32 %v850, %v846
      %v852 = vrot.slane %v851, 4
      %v854 = vshll.u32 %v751, 16
      %v856 = vrot.slane %v854, 5
      %v857 = vsel %vm803, %v852, %v856
      %v858 = vshrl.u32 %v751, 16
      %v860 = vrot.slane %v858, 4
      %v861 = vor.u32 %v860, %v856
      %v862 = vrot.slane %v861, 4
      %v864 = vshll.u32 %v752, 16
      %v866 = vrot.slane %v864, 5
      %v867 = vsel %vm803, %v862, %v866
      %v868 = vshrl.u32 %v752, 16
      %v870 = vrot.slane %v868, 4
      %v871 = vor.u32 %v870, %v866
      %v872 = vrot.slane %v871, 4
      %v874 = vshll.u32 %v753, 16
      %v876 = vrot.slane %v874, 5
      %v877 = vsel %vm803, %v872, %v876
      %v878 = vshrl.u32 %v753, 16
      %v880 = vrot.slane %v878, 4
      %v881 = vor.u32 %v880, %v876
      %v882 = vrot.slane %v881, 4
      %v884 = vshll.u32 %v754, 16
      %v886 = vrot.slane %v884, 5
      %v887 = vsel %vm803, %v882, %v886
      %v888 = vshrl.u32 %v754, 16
      %v890 = vrot.slane %v888, 4
      %v891 = vor.u32 %v890, %v886
      %v892 = vrot.slane %v891, 4
      %v894 = vshll.u32 %v755, 16
      %v896 = vrot.slane %v894, 5
      %v897 = vsel %vm803, %v892, %v896
      %v898 = vshrl.u32 %v755, 16
      %v900 = vrot.slane %v898, 4
      %v901 = vor.u32 %v900, %v896
      %v902 = vrot.slane %v901, 4
      %v904 = vshll.u32 %v756, 16
      %v906 = vrot.slane %v904, 5
      %v907 = vsel %vm803, %v902, %v906
      %v908 = vshrl.u32 %v756, 16
      %v910 = vrot.slane %v908, 4
      %v911 = vor.u32 %v910, %v906
      %v912 = vrot.slane %v911, 4
      %v914 = vshll.u32 %v757, 16
      %v916 = vrot.slane %v914, 5
      %v917 = vsel %vm803, %v912, %v916
      %v918 = vshrl.u32 %v757, 16
      %v920 = vrot.slane %v918, 4
      %v921 = vor.u32 %v920, %v916
      %v922 = vrot.slane %v921, 4
      %v924 = vshll.u32 %v758, 16
      %v926 = vrot.slane %v924, 5
      %v927 = vsel %vm803, %v922, %v926
      %v928 = vshrl.u32 %v758, 16
      %v930 = vrot.slane %v928, 4
      %v931 = vor.u32 %v930, %v926
      %v932 = vrot.slane %v931, 4
      %v934 = vshll.u32 %v759, 16
      %v936 = vrot.slane %v934, 5
      %v937 = vsel %vm803, %v932, %v936
      %v938 = vshrl.u32 %v759, 16
      %v940 = vrot.slane %v938, 4
      %v941 = vor.u32 %v940, %v936
      %v942 = vrot.slane %v941, 4
      %v944 = vshll.u32 %v760, 16
      %v946 = vrot.slane %v944, 5
      %v947 = vsel %vm803, %v942, %v946
      %v948 = vshrl.u32 %v760, 16
      %v950 = vrot.slane %v948, 4
      %v951 = vor.u32 %v950, %v946
      %v952 = vrot.slane %v951, 4
      %v954 = vshll.u32 %v761, 16
      %v956 = vrot.slane %v954, 5
      %v957 = vsel %vm803, %v952, %v956
      %v958 = vshrl.u32 %v761, 16
      %v960 = vrot.slane %v958, 4
      %v961 = vor.u32 %v960, %v956
      %v962 = vrot.slane %v961, 4
      %v964 = vshll.u32 %v762, 16
      %v966 = vrot.slane %v964, 5
      %v967 = vsel %vm803, %v962, %v966
      %v968 = vshrl.u32 %v762, 16
      %v970 = vrot.slane %v968, 4
      %v971 = vor.u32 %v970, %v966
      %v972 = vrot.slane %v971, 4
      %v974 = vshll.u32 %v763, 16
      %v976 = vrot.slane %v974, 5
      %v977 = vsel %vm803, %v972, %v976
      %v978 = vshrl.u32 %v763, 16
      %v980 = vrot.slane %v978, 4
      %v981 = vor.u32 %v980, %v976
      %v982 = vrot.slane %v981, 4
      %v984 = vshll.u32 %v764, 16
      %v986 = vrot.slane %v984, 5
      %v987 = vsel %vm803, %v982, %v986
      %v988 = vshrl.u32 %v764, 16
      %v990 = vrot.slane %v988, 4
      %v991 = vor.u32 %v990, %v986
      %v992 = vrot.slane %v991, 4
      %v994 = vshll.u32 %v765, 16
      %v996 = vrot.slane %v994, 5
      %v997 = vsel %vm803, %v992, %v996
      %v998 = vshrl.u32 %v765, 16
      %v1000 = vrot.slane %v998, 4
      %v1001 = vor.u32 %v1000, %v996
      %v1002 = vrot.slane %v1001, 4
      %v1004 = vshll.u32 %v766, 16
      %v1006 = vrot.slane %v1004, 5
      %v1007 = vsel %vm803, %v1002, %v1006
      %v1008 = vshrl.u32 %v766, 16
      %v1010 = vrot.slane %v1008, 4
      %v1011 = vor.u32 %v1010, %v1006
      %v1012 = vrot.slane %v1011, 4
      %v1014 = vshll.u32 %v767, 16
      %v1016 = vrot.slane %v1014, 5
      %v1017 = vsel %vm803, %v1012, %v1016
      %v1018 = vshrl.u32 %v767, 16
      %v1020 = vrot.slane %v1018, 4
      %v1021 = vor.u32 %v1020, %v1016
      %v1022 = vrot.slane %v1021, 4
      %v1024 = vshll.u32 %v768, 16
      %v1026 = vrot.slane %v1024, 5
      %v1027 = vsel %vm803, %v1022, %v1026
      %v1028 = vshrl.u32 %v768, 16
      %v1030 = vrot.slane %v1028, 4
      %v1031 = vor.u32 %v1030, %v1026
      %v1032 = vrot.slane %v1031, 4
      %v1034 = vshll.u32 %v769, 16
      %v1036 = vrot.slane %v1034, 5
      %v1037 = vsel %vm803, %v1032, %v1036
      %v1038 = vshrl.u32 %v769, 16
      %v1040 = vrot.slane %v1038, 4
      %v1041 = vor.u32 %v1040, %v1036
      %v1042 = vrot.slane %v1041, 4
      %v1044 = vshll.u32 %v770, 16
      %v1046 = vrot.slane %v1044, 5
      %v1047 = vsel %vm803, %v1042, %v1046
      %v1048 = vshrl.u32 %v770, 16
      %v1050 = vrot.slane %v1048, 4
      %v1051 = vor.u32 %v1050, %v1046
      %v1052 = vrot.slane %v1051, 4
      %v1054 = vshll.u32 %v771, 16
      %v1056 = vrot.slane %v1054, 5
      %v1057 = vsel %vm803, %v1052, %v1056
      %v1058 = vshrl.u32 %v771, 16
      %v1060 = vrot.slane %v1058, 4
      %v1061 = vor.u32 %v1060, %v1056
      %v1062 = vrot.slane %v1061, 4
      %v1064 = vshll.u32 %v772, 16
      %v1066 = vrot.slane %v1064, 5
      %v1067 = vsel %vm803, %v1062, %v1066
      %v1068 = vshrl.u32 %v772, 16
      %v1070 = vrot.slane %v1068, 4
      %v1071 = vor.u32 %v1070, %v1066
      %v1072 = vrot.slane %v1071, 4
      %v1074 = vshll.u32 %v773, 16
      %v1076 = vrot.slane %v1074, 5
      %v1077 = vsel %vm803, %v1072, %v1076
      %v1078 = vshrl.u32 %v773, 16
      %v1080 = vrot.slane %v1078, 4
      %v1081 = vor.u32 %v1080, %v1076
      %v1082 = vrot.slane %v1081, 4
      %v1084 = vshll.u32 %v774, 16
      %v1086 = vrot.slane %v1084, 5
      %v1087 = vsel %vm803, %v1082, %v1086
      %v1088 = vshrl.u32 %v774, 16
      %v1090 = vrot.slane %v1088, 4
      %v1091 = vor.u32 %v1090, %v1086
      %v1092 = vrot.slane %v1091, 4
      %v1094 = vshll.u32 %v775, 16
      %v1096 = vrot.slane %v1094, 5
      %v1097 = vsel %vm803, %v1092, %v1096
      %v1098 = vshrl.u32 %v775, 16
      %v1100 = vrot.slane %v1098, 4
      %v1101 = vor.u32 %v1100, %v1096
      %v1102 = vrot.slane %v1101, 4
      %v1104 = vshll.u32 %v776, 16
      %v1106 = vrot.slane %v1104, 5
      %v1107 = vsel %vm803, %v1102, %v1106
      %v1108 = vshrl.u32 %v776, 16
      %v1110 = vrot.slane %v1108, 4
      %v1111 = vor.u32 %v1110, %v1106
      %v1112 = vrot.slane %v1111, 4
      %v1114 = vshll.u32 %v777, 16
      %v1116 = vrot.slane %v1114, 5
      %v1117 = vsel %vm803, %v1112, %v1116
      %v1118 = vshrl.u32 %v777, 16
      %v1120 = vrot.slane %v1118, 4
      %v1121 = vor.u32 %v1120, %v1116
      %v1122 = vrot.slane %v1121, 4
      %v1124 = vshll.u32 %v778, 16
      %v1126 = vrot.slane %v1124, 5
      %v1127 = vsel %vm803, %v1122, %v1126
      %v1128 = vshrl.u32 %v778, 16
      %v1130 = vrot.slane %v1128, 4
      %v1131 = vor.u32 %v1130, %v1126
      %v1132 = vrot.slane %v1131, 4
      %v1134 = vshll.u32 %v779, 16
      %v1136 = vrot.slane %v1134, 5
      %v1137 = vsel %vm803, %v1132, %v1136
      %v1138 = vshrl.u32 %v779, 16
      %v1140 = vrot.slane %v1138, 4
      %v1141 = vor.u32 %v1140, %v1136
      %v1142 = vrot.slane %v1141, 4
      %v1144 = vshll.u32 %v780, 16
      %v1146 = vrot.slane %v1144, 5
      %v1147 = vsel %vm803, %v1142, %v1146
      %v1148 = vshrl.u32 %v780, 16
      %v1150 = vrot.slane %v1148, 4
      %v1151 = vor.u32 %v1150, %v1146
      %v1152 = vrot.slane %v1151, 4
      %v1154 = vshll.u32 %v781, 16
      %v1156 = vrot.slane %v1154, 5
      %v1157 = vsel %vm803, %v1152, %v1156
      %v1158 = vshrl.u32 %v781, 16
      %v1160 = vrot.slane %v1158, 4
      %v1161 = vor.u32 %v1160, %v1156
      %v1162 = vrot.slane %v1161, 4
      %v1164 = vshll.u32 %v782, 16
      %v1166 = vrot.slane %v1164, 5
      %v1167 = vsel %vm803, %v1162, %v1166
      %v1168 = vshrl.u32 %v782, 16
      %v1170 = vrot.slane %v1168, 4
      %v1171 = vor.u32 %v1170, %v1166
      %v1172 = vrot.slane %v1171, 4
      %v1174 = vshll.u32 %v783, 16
      %v1176 = vrot.slane %v1174, 5
      %v1177 = vsel %vm803, %v1172, %v1176
      %v1178 = vshrl.u32 %v783, 16
      %v1180 = vrot.slane %v1178, 4
      %v1181 = vor.u32 %v1180, %v1176
      %v1182 = vrot.slane %v1181, 4
      %v1184 = vshll.u32 %v784, 16
      %v1186 = vrot.slane %v1184, 5
      %v1187 = vsel %vm803, %v1182, %v1186
      %v1188 = vshrl.u32 %v784, 16
      %v1190 = vrot.slane %v1188, 4
      %v1191 = vor.u32 %v1190, %v1186
      %v1192 = vrot.slane %v1191, 4
      %v1194 = vshll.u32 %v785, 16
      %v1196 = vrot.slane %v1194, 5
      %v1197 = vsel %vm803, %v1192, %v1196
      %v1198 = vshrl.u32 %v785, 16
      %v1200 = vrot.slane %v1198, 4
      %v1201 = vor.u32 %v1200, %v1196
      %v1202 = vrot.slane %v1201, 4
      %v1204 = vshll.u32 %v786, 16
      %v1206 = vrot.slane %v1204, 5
      %v1207 = vsel %vm803, %v1202, %v1206
      %v1208 = vshrl.u32 %v786, 16
      %v1210 = vrot.slane %v1208, 4
      %v1211 = vor.u32 %v1210, %v1206
      %v1212 = vrot.slane %v1211, 4
      %v1214 = vshll.u32 %v787, 16
      %v1216 = vrot.slane %v1214, 5
      %v1217 = vsel %vm803, %v1212, %v1216
      %v1218 = vshrl.u32 %v787, 16
      %v1220 = vrot.slane %v1218, 4
      %v1221 = vor.u32 %v1220, %v1216
      %v1222 = vrot.slane %v1221, 4
      %v1224 = vshll.u32 %v788, 16
      %v1226 = vrot.slane %v1224, 5
      %v1227 = vsel %vm803, %v1222, %v1226
      %v1228 = vshrl.u32 %v788, 16
      %v1230 = vrot.slane %v1228, 4
      %v1231 = vor.u32 %v1230, %v1226
      %v1232 = vrot.slane %v1231, 4
      %v1234 = vshll.u32 %v789, 16
      %v1236 = vrot.slane %v1234, 5
      %v1237 = vsel %vm803, %v1232, %v1236
      %v1238 = vshrl.u32 %v789, 16
      %v1240 = vrot.slane %v1238, 4
      %v1241 = vor.u32 %v1240, %v1236
      %v1242 = vrot.slane %v1241, 4
      %v1244 = vshll.u32 %v790, 16
      %v1246 = vrot.slane %v1244, 5
      %v1247 = vsel %vm803, %v1242, %v1246
      %v1248 = vshrl.u32 %v790, 16
      %v1250 = vrot.slane %v1248, 4
      %v1251 = vor.u32 %v1250, %v1246
      %v1252 = vrot.slane %v1251, 4
      %v1254 = vshll.u32 %v791, 16
      %v1256 = vrot.slane %v1254, 5
      %v1257 = vsel %vm803, %v1252, %v1256
      %v1258 = vshrl.u32 %v791, 16
      %v1260 = vrot.slane %v1258, 4
      %v1261 = vor.u32 %v1260, %v1256
      %v1262 = vrot.slane %v1261, 4
      %v1264 = vshll.u32 %v792, 16
      %v1266 = vrot.slane %v1264, 5
      %v1267 = vsel %vm803, %v1262, %v1266
      %v1268 = vshrl.u32 %v792, 16
      %v1270 = vrot.slane %v1268, 4
      %v1271 = vor.u32 %v1270, %v1266
      %v1272 = vrot.slane %v1271, 4
      %v1274 = vshll.u32 %v793, 16
      %v1276 = vrot.slane %v1274, 5
      %v1277 = vsel %vm803, %v1272, %v1276
      %v1278 = vshrl.u32 %v793, 16
      %v1280 = vrot.slane %v1278, 4
      %v1281 = vor.u32 %v1280, %v1276
      %v1282 = vrot.slane %v1281, 4
      %v1284 = vshll.u32 %v794, 16
      %v1286 = vrot.slane %v1284, 5
      %v1287 = vsel %vm803, %v1282, %v1286
      %v1288 = vshrl.u32 %v794, 16
      %v1290 = vrot.slane %v1288, 4
      %v1291 = vor.u32 %v1290, %v1286
      %v1292 = vrot.slane %v1291, 4
      %v1294 = vshll.u32 %v795, 16
      %v1296 = vrot.slane %v1294, 5
      %v1297 = vsel %vm803, %v1292, %v1296
      %v1298 = vshrl.u32 %v795, 16
      %v1300 = vrot.slane %v1298, 4
      %v1301 = vor.u32 %v1300, %v1296
      %v1302 = vrot.slane %v1301, 4
      %v1304 = vshll.u32 %v796, 16
      %v1306 = vrot.slane %v1304, 5
      %v1307 = vsel %vm803, %v1302, %v1306
      %v1308 = vshrl.u32 %v796, 16
      %v1310 = vrot.slane %v1308, 4
      %v1311 = vor.u32 %v1310, %v1306
      %v1312 = vrot.slane %v1311, 4
      %v1314 = vshll.u32 %v797, 16
      %v1316 = vrot.slane %v1314, 5
      %v1317 = vsel %vm803, %v1312, %v1316
      %v1318 = vshrl.u32 %v797, 16
      %v1320 = vrot.slane %v1318, 4
      %v1321 = vor.u32 %v1320, %v1316
      %v1322 = vrot.slane %v1321, 4
      %v1324 = vshll.u32 %v798, 16
      %v1326 = vrot.slane %v1324, 5
      %v1327 = vsel %vm803, %v1322, %v1326
      %v1328 = vshrl.u32 %v798, 16
      %v1330 = vrot.slane %v1328, 4
      %v1331 = vor.u32 %v1330, %v1326
      %v1332 = vrot.slane %v1331, 4
      %v1334 = vshll.u32 %v799, 16
      %v1336 = vrot.slane %v1334, 5
      %v1337 = vsel %vm803, %v1332, %v1336
      %v1338 = vshrl.u32 %v799, 16
      %v1340 = vrot.slane %v1338, 4
      %v1341 = vor.u32 %v1340, %v1336
      %v1342 = vrot.slane %v1341, 4
      %v1344 = vshll.u32 %v800, 16
      %v1346 = vrot.slane %v1344, 5
      %v1347 = vsel %vm803, %v1342, %v1346
      %v1402 = vmax.bf16 %v746, %v817
      %v1403 = vmax.bf16 %v747, %v827
      %v1404 = vmax.bf16 %v748, %v837
      %v1405 = vmax.bf16 %v749, %v847
      %v1406 = vmax.bf16 %v750, %v857
      %v1407 = vmax.bf16 %v751, %v867
      %v1408 = vmax.bf16 %v752, %v877
      %v1409 = vmax.bf16 %v753, %v887
      %v1410 = vmax.bf16 %v754, %v897
      %v1411 = vmax.bf16 %v755, %v907
      %v1412 = vmax.bf16 %v756, %v917
      %v1413 = vmax.bf16 %v757, %v927
      %v1414 = vmax.bf16 %v758, %v937
      %v1415 = vmax.bf16 %v759, %v947
      %v1416 = vmax.bf16 %v760, %v957
      %v1417 = vmax.bf16 %v761, %v967
      %v1418 = vmax.bf16 %v762, %v977
      %v1419 = vmax.bf16 %v763, %v987
      %v1420 = vmax.bf16 %v764, %v997
      %v1421 = vmax.bf16 %v765, %v1007
      %v1422 = vmax.bf16 %v766, %v1017
      %v1423 = vmax.bf16 %v767, %v1027
      %v1424 = vmax.bf16 %v768, %v1037
      %v1425 = vmax.bf16 %v769, %v1047
      %v1426 = vmax.bf16 %v770, %v1057
      %v1427 = vmax.bf16 %v771, %v1067
      %v1428 = vmax.bf16 %v772, %v1077
      %v1429 = vmax.bf16 %v773, %v1087
      %v1430 = vmax.bf16 %v774, %v1097
      %v1431 = vmax.bf16 %v775, %v1107
      %v1432 = vmax.bf16 %v776, %v1117
      %v1433 = vmax.bf16 %v777, %v1127
      %v1434 = vmax.bf16 %v778, %v1137
      %v1435 = vmax.bf16 %v779, %v1147
      %v1436 = vmax.bf16 %v780, %v1157
      %v1437 = vmax.bf16 %v781, %v1167
      %v1438 = vmax.bf16 %v782, %v1177
      %v1439 = vmax.bf16 %v783, %v1187
      %v1440 = vmax.bf16 %v784, %v1197
      %v1441 = vmax.bf16 %v785, %v1207
      %v1442 = vmax.bf16 %v786, %v1217
      %v1443 = vmax.bf16 %v787, %v1227
      %v1444 = vmax.bf16 %v788, %v1237
      %v1445 = vmax.bf16 %v789, %v1247
      %v1446 = vmax.bf16 %v790, %v1257
      %v1447 = vmax.bf16 %v791, %v1267
      %v1448 = vmax.bf16 %v792, %v1277
      %v1449 = vmax.bf16 %v793, %v1287
      %v1450 = vmax.bf16 %v794, %v1297
      %v1451 = vmax.bf16 %v795, %v1307
      %v1452 = vmax.bf16 %v796, %v1317
      %v1453 = vmax.bf16 %v797, %v1327
      %v1454 = vmax.bf16 %v798, %v1337
      %v1455 = vmax.bf16 %v799, %v1347
      %v1456 = vld [vmem:[#allocation2] sm:$0xe]
      %vm1512 = vcmask 1042432
      %vm1513 = vcmask 1046532
      %vm1514 = vmor %vm1512, %vm1513
      %v1515 = vrot.slane %v1456, 5
      %v1516 = vrot.slane %v1515, 4
      %v1517 = vrot.slane %v747, 5
      %v1518 = vsel %vm1514, %v1516, %v1517
      %v1519 = vrot.slane %v1517, 4
      %v1520 = vrot.slane %v748, 5
      %v1521 = vsel %vm1514, %v1519, %v1520
      %v1522 = vrot.slane %v1520, 4
      %v1523 = vrot.slane %v749, 5
      %v1524 = vsel %vm1514, %v1522, %v1523
      %v1525 = vrot.slane %v1523, 4
      %v1526 = vrot.slane %v750, 5
      %v1527 = vsel %vm1514, %v1525, %v1526
      %v1528 = vrot.slane %v1526, 4
      %v1529 = vrot.slane %v751, 5
      %v1530 = vsel %vm1514, %v1528, %v1529
      %v1531 = vrot.slane %v1529, 4
      %v1532 = vrot.slane %v752, 5
      %v1533 = vsel %vm1514, %v1531, %v1532
      %v1534 = vrot.slane %v1532, 4
      %v1535 = vrot.slane %v753, 5
      %v1536 = vsel %vm1514, %v1534, %v1535
      %v1537 = vrot.slane %v1535, 4
      %v1538 = vrot.slane %v754, 5
      %v1539 = vsel %vm1514, %v1537, %v1538
      %v1540 = vrot.slane %v1538, 4
      %v1541 = vrot.slane %v755, 5
      %v1542 = vsel %vm1514, %v1540, %v1541
      %v1543 = vrot.slane %v1541, 4
      %v1544 = vrot.slane %v756, 5
      %v1545 = vsel %vm1514, %v1543, %v1544
      %v1546 = vrot.slane %v1544, 4
      %v1547 = vrot.slane %v757, 5
      %v1548 = vsel %vm1514, %v1546, %v1547
      %v1549 = vrot.slane %v1547, 4
      %v1550 = vrot.slane %v758, 5
      %v1551 = vsel %vm1514, %v1549, %v1550
      %v1552 = vrot.slane %v1550, 4
      %v1553 = vrot.slane %v759, 5
      %v1554 = vsel %vm1514, %v1552, %v1553
      %v1555 = vrot.slane %v1553, 4
      %v1556 = vrot.slane %v760, 5
      %v1557 = vsel %vm1514, %v1555, %v1556
      %v1558 = vrot.slane %v1556, 4
      %v1559 = vrot.slane %v761, 5
      %v1560 = vsel %vm1514, %v1558, %v1559
      %v1561 = vrot.slane %v1559, 4
      %v1562 = vrot.slane %v762, 5
      %v1563 = vsel %vm1514, %v1561, %v1562
      %v1564 = vrot.slane %v1562, 4
      %v1565 = vrot.slane %v763, 5
      %v1566 = vsel %vm1514, %v1564, %v1565
      %v1567 = vrot.slane %v1565, 4
      %v1568 = vrot.slane %v764, 5
      %v1569 = vsel %vm1514, %v1567, %v1568
      %v1570 = vrot.slane %v1568, 4
      %v1571 = vrot.slane %v765, 5
      %v1572 = vsel %vm1514, %v1570, %v1571
      %v1573 = vrot.slane %v1571, 4
      %v1574 = vrot.slane %v766, 5
      %v1575 = vsel %vm1514, %v1573, %v1574
      %v1576 = vrot.slane %v1574, 4
      %v1577 = vrot.slane %v767, 5
      %v1578 = vsel %vm1514, %v1576, %v1577
      %v1579 = vrot.slane %v1577, 4
      %v1580 = vrot.slane %v768, 5
      %v1581 = vsel %vm1514, %v1579, %v1580
      %v1582 = vrot.slane %v1580, 4
      %v1583 = vrot.slane %v769, 5
      %v1584 = vsel %vm1514, %v1582, %v1583
      %v1585 = vrot.slane %v1583, 4
      %v1586 = vrot.slane %v770, 5
      %v1587 = vsel %vm1514, %v1585, %v1586
      %v1588 = vrot.slane %v1586, 4
      %v1589 = vrot.slane %v771, 5
      %v1590 = vsel %vm1514, %v1588, %v1589
      %v1591 = vrot.slane %v1589, 4
      %v1592 = vrot.slane %v772, 5
      %v1593 = vsel %vm1514, %v1591, %v1592
      %v1594 = vrot.slane %v1592, 4
      %v1595 = vrot.slane %v773, 5
      %v1596 = vsel %vm1514, %v1594, %v1595
      %v1597 = vrot.slane %v1595, 4
      %v1598 = vrot.slane %v774, 5
      %v1599 = vsel %vm1514, %v1597, %v1598
      %v1600 = vrot.slane %v1598, 4
      %v1601 = vrot.slane %v775, 5
      %v1602 = vsel %vm1514, %v1600, %v1601
      %v1603 = vrot.slane %v1601, 4
      %v1604 = vrot.slane %v776, 5
      %v1605 = vsel %vm1514, %v1603, %v1604
      %v1606 = vrot.slane %v1604, 4
      %v1607 = vrot.slane %v777, 5
      %v1608 = vsel %vm1514, %v1606, %v1607
      %v1609 = vrot.slane %v1607, 4
      %v1610 = vrot.slane %v778, 5
      %v1611 = vsel %vm1514, %v1609, %v1610
      %v1612 = vrot.slane %v1610, 4
      %v1613 = vrot.slane %v779, 5
      %v1614 = vsel %vm1514, %v1612, %v1613
      %v1615 = vrot.slane %v1613, 4
      %v1616 = vrot.slane %v780, 5
      %v1617 = vsel %vm1514, %v1615, %v1616
      %v1618 = vrot.slane %v1616, 4
      %v1619 = vrot.slane %v781, 5
      %v1620 = vsel %vm1514, %v1618, %v1619
      %v1621 = vrot.slane %v1619, 4
      %v1622 = vrot.slane %v782, 5
      %v1623 = vsel %vm1514, %v1621, %v1622
      %v1624 = vrot.slane %v1622, 4
      %v1625 = vrot.slane %v783, 5
      %v1626 = vsel %vm1514, %v1624, %v1625
      %v1627 = vrot.slane %v1625, 4
      %v1628 = vrot.slane %v784, 5
      %v1629 = vsel %vm1514, %v1627, %v1628
      %v1630 = vrot.slane %v1628, 4
      %v1631 = vrot.slane %v785, 5
      %v1632 = vsel %vm1514, %v1630, %v1631
      %v1633 = vrot.slane %v1631, 4
      %v1634 = vrot.slane %v786, 5
      %v1635 = vsel %vm1514, %v1633, %v1634
      %v1636 = vrot.slane %v1634, 4
      %v1637 = vrot.slane %v787, 5
      %v1638 = vsel %vm1514, %v1636, %v1637
      %v1639 = vrot.slane %v1637, 4
      %v1640 = vrot.slane %v788, 5
      %v1641 = vsel %vm1514, %v1639, %v1640
      %v1642 = vrot.slane %v1640, 4
      %v1643 = vrot.slane %v789, 5
      %v1644 = vsel %vm1514, %v1642, %v1643
      %v1645 = vrot.slane %v1643, 4
      %v1646 = vrot.slane %v790, 5
      %v1647 = vsel %vm1514, %v1645, %v1646
      %v1648 = vrot.slane %v1646, 4
      %v1649 = vrot.slane %v791, 5
      %v1650 = vsel %vm1514, %v1648, %v1649
      %v1651 = vrot.slane %v1649, 4
      %v1652 = vrot.slane %v792, 5
      %v1653 = vsel %vm1514, %v1651, %v1652
      %v1654 = vrot.slane %v1652, 4
      %v1655 = vrot.slane %v793, 5
      %v1656 = vsel %vm1514, %v1654, %v1655
      %v1657 = vrot.slane %v1655, 4
      %v1658 = vrot.slane %v794, 5
      %v1659 = vsel %vm1514, %v1657, %v1658
      %v1660 = vrot.slane %v1658, 4
      %v1661 = vrot.slane %v795, 5
      %v1662 = vsel %vm1514, %v1660, %v1661
      %v1663 = vrot.slane %v1661, 4
      %v1664 = vrot.slane %v796, 5
      %v1665 = vsel %vm1514, %v1663, %v1664
      %v1666 = vrot.slane %v1664, 4
      %v1667 = vrot.slane %v797, 5
      %v1668 = vsel %vm1514, %v1666, %v1667
      %v1669 = vrot.slane %v1667, 4
      %v1670 = vrot.slane %v798, 5
      %v1671 = vsel %vm1514, %v1669, %v1670
      %v1672 = vrot.slane %v1670, 4
      %v1673 = vrot.slane %v799, 5
      %v1674 = vsel %vm1514, %v1672, %v1673
      %v1675 = vrot.slane %v1673, 4
      %v1676 = vrot.slane %v800, 5
      %v1677 = vsel %vm1514, %v1675, %v1676
      %v1732 = vmax.bf16 %v1402, %v1518
      %v1733 = vmax.bf16 %v1403, %v1521
      %v1734 = vmax.bf16 %v1404, %v1524
      %v1735 = vmax.bf16 %v1405, %v1527
      %v1736 = vmax.bf16 %v1406, %v1530
      %v1737 = vmax.bf16 %v1407, %v1533
      %v1738 = vmax.bf16 %v1408, %v1536
      %v1739 = vmax.bf16 %v1409, %v1539
      %v1740 = vmax.bf16 %v1410, %v1542
      %v1741 = vmax.bf16 %v1411, %v1545
      %v1742 = vmax.bf16 %v1412, %v1548
      %v1743 = vmax.bf16 %v1413, %v1551
      %v1744 = vmax.bf16 %v1414, %v1554
      %v1745 = vmax.bf16 %v1415, %v1557
      %v1746 = vmax.bf16 %v1416, %v1560
      %v1747 = vmax.bf16 %v1417, %v1563
      %v1748 = vmax.bf16 %v1418, %v1566
      %v1749 = vmax.bf16 %v1419, %v1569
      %v1750 = vmax.bf16 %v1420, %v1572
      %v1751 = vmax.bf16 %v1421, %v1575
      %v1752 = vmax.bf16 %v1422, %v1578
      %v1753 = vmax.bf16 %v1423, %v1581
      %v1754 = vmax.bf16 %v1424, %v1584
      %v1755 = vmax.bf16 %v1425, %v1587
      %v1756 = vmax.bf16 %v1426, %v1590
      %v1757 = vmax.bf16 %v1427, %v1593
      %v1758 = vmax.bf16 %v1428, %v1596
      %v1759 = vmax.bf16 %v1429, %v1599
      %v1760 = vmax.bf16 %v1430, %v1602
      %v1761 = vmax.bf16 %v1431, %v1605
      %v1762 = vmax.bf16 %v1432, %v1608
      %v1763 = vmax.bf16 %v1433, %v1611
      %v1764 = vmax.bf16 %v1434, %v1614
      %v1765 = vmax.bf16 %v1435, %v1617
      %v1766 = vmax.bf16 %v1436, %v1620
      %v1767 = vmax.bf16 %v1437, %v1623
      %v1768 = vmax.bf16 %v1438, %v1626
      %v1769 = vmax.bf16 %v1439, %v1629
      %v1770 = vmax.bf16 %v1440, %v1632
      %v1771 = vmax.bf16 %v1441, %v1635
      %v1772 = vmax.bf16 %v1442, %v1638
      %v1773 = vmax.bf16 %v1443, %v1641
      %v1774 = vmax.bf16 %v1444, %v1644
      %v1775 = vmax.bf16 %v1445, %v1647
      %v1776 = vmax.bf16 %v1446, %v1650
      %v1777 = vmax.bf16 %v1447, %v1653
      %v1778 = vmax.bf16 %v1448, %v1656
      %v1779 = vmax.bf16 %v1449, %v1659
      %v1780 = vmax.bf16 %v1450, %v1662
      %v1781 = vmax.bf16 %v1451, %v1665
      %v1782 = vmax.bf16 %v1452, %v1668
      %v1783 = vmax.bf16 %v1453, %v1671
      %v1784 = vmax.bf16 %v1454, %v1674
      %v1785 = vmax.bf16 %v1455, %v1677
      %v1786 = vmax.bf16 %v1732, %v1735
      %v1787 = vmax.bf16 %v1733, %v1736
      %v1788 = vmax.bf16 %v1734, %v1737
      %v1789 = vmax.bf16 %v1735, %v1738
      %v1790 = vmax.bf16 %v1736, %v1739
      %v1791 = vmax.bf16 %v1737, %v1740
      %v1792 = vmax.bf16 %v1738, %v1741
      %v1793 = vmax.bf16 %v1739, %v1742
      %v1794 = vmax.bf16 %v1740, %v1743
      %v1795 = vmax.bf16 %v1741, %v1744
      %v1796 = vmax.bf16 %v1742, %v1745
      %v1797 = vmax.bf16 %v1743, %v1746
      %v1798 = vmax.bf16 %v1744, %v1747
      %v1799 = vmax.bf16 %v1745, %v1748
      %v1800 = vmax.bf16 %v1746, %v1749
      %v1801 = vmax.bf16 %v1747, %v1750
      %v1802 = vmax.bf16 %v1748, %v1751
      %v1803 = vmax.bf16 %v1749, %v1752
      %v1804 = vmax.bf16 %v1750, %v1753
      %v1805 = vmax.bf16 %v1751, %v1754
      %v1806 = vmax.bf16 %v1752, %v1755
      %v1807 = vmax.bf16 %v1753, %v1756
      %v1808 = vmax.bf16 %v1754, %v1757
      %v1809 = vmax.bf16 %v1755, %v1758
      %v1810 = vmax.bf16 %v1756, %v1759
      %v1811 = vmax.bf16 %v1757, %v1760
      %v1812 = vmax.bf16 %v1758, %v1761
      %v1813 = vmax.bf16 %v1759, %v1762
      %v1814 = vmax.bf16 %v1760, %v1763
      %v1815 = vmax.bf16 %v1761, %v1764
      %v1816 = vmax.bf16 %v1762, %v1765
      %v1817 = vmax.bf16 %v1763, %v1766
      %v1818 = vmax.bf16 %v1764, %v1767
      %v1819 = vmax.bf16 %v1765, %v1768
      %v1820 = vmax.bf16 %v1766, %v1769
      %v1821 = vmax.bf16 %v1767, %v1770
      %v1822 = vmax.bf16 %v1768, %v1771
      %v1823 = vmax.bf16 %v1769, %v1772
      %v1824 = vmax.bf16 %v1770, %v1773
      %v1825 = vmax.bf16 %v1771, %v1774
      %v1826 = vmax.bf16 %v1772, %v1775
      %v1827 = vmax.bf16 %v1773, %v1776
      %v1828 = vmax.bf16 %v1774, %v1777
      %v1829 = vmax.bf16 %v1775, %v1778
      %v1830 = vmax.bf16 %v1776, %v1779
      %v1831 = vmax.bf16 %v1777, %v1780
      %v1832 = vmax.bf16 %v1778, %v1781
      %v1833 = vmax.bf16 %v1779, %v1782
      %v1834 = vmax.bf16 %v1786, %v1738
      %v1835 = vmax.bf16 %v1787, %v1739
      %v1836 = vmax.bf16 %v1788, %v1740
      %v1837 = vmax.bf16 %v1789, %v1741
      %v1838 = vmax.bf16 %v1790, %v1742
      %v1839 = vmax.bf16 %v1791, %v1743
      %v1840 = vmax.bf16 %v1792, %v1744
      %v1841 = vmax.bf16 %v1793, %v1745
      %v1842 = vmax.bf16 %v1794, %v1746
      %v1843 = vmax.bf16 %v1795, %v1747
      %v1844 = vmax.bf16 %v1796, %v1748
      %v1845 = vmax.bf16 %v1797, %v1749
      %v1846 = vmax.bf16 %v1798, %v1750
      %v1847 = vmax.bf16 %v1799, %v1751
      %v1848 = vmax.bf16 %v1800, %v1752
      %v1849 = vmax.bf16 %v1801, %v1753
      %v1850 = vmax.bf16 %v1802, %v1754
      %v1851 = vmax.bf16 %v1803, %v1755
      %v1852 = vmax.bf16 %v1804, %v1756
      %v1853 = vmax.bf16 %v1805, %v1757
      %v1854 = vmax.bf16 %v1806, %v1758
      %v1855 = vmax.bf16 %v1807, %v1759
      %v1856 = vmax.bf16 %v1808, %v1760
      %v1857 = vmax.bf16 %v1809, %v1761
      %v1858 = vmax.bf16 %v1810, %v1762
      %v1859 = vmax.bf16 %v1811, %v1763
      %v1860 = vmax.bf16 %v1812, %v1764
      %v1861 = vmax.bf16 %v1813, %v1765
      %v1862 = vmax.bf16 %v1814, %v1766
      %v1863 = vmax.bf16 %v1815, %v1767
      %v1864 = vmax.bf16 %v1816, %v1768
      %v1865 = vmax.bf16 %v1817, %v1769
      %v1866 = vmax.bf16 %v1818, %v1770
      %v1867 = vmax.bf16 %v1819, %v1771
      %v1868 = vmax.bf16 %v1820, %v1772
      %v1869 = vmax.bf16 %v1821, %v1773
      %v1870 = vmax.bf16 %v1822, %v1774
      %v1871 = vmax.bf16 %v1823, %v1775
      %v1872 = vmax.bf16 %v1824, %v1776
      %v1873 = vmax.bf16 %v1825, %v1777
      %v1874 = vmax.bf16 %v1826, %v1778
      %v1875 = vmax.bf16 %v1827, %v1779
      %v1876 = vmax.bf16 %v1828, %v1780
      %v1877 = vmax.bf16 %v1829, %v1781
      %v1878 = vmax.bf16 %v1830, %v1782
      %v1879 = vmax.bf16 %v1831, %v1783
      %v1880 = vmax.bf16 %v1832, %v1784
      %v1881 = vmax.bf16 %v1833, %v1785
      %vm1882 = vcmp.lt.bf16.partialorder %v1834, 4039831754
      %vm1883 = vcmp.lt.bf16.partialorder %v1835, 4039831754
      %vm1884 = vcmp.lt.bf16.partialorder %v1836, 4039831754
      %vm1885 = vcmp.lt.bf16.partialorder %v1837, 4039831754
      %vm1886 = vcmp.lt.bf16.partialorder %v1838, 4039831754
      %vm1887 = vcmp.lt.bf16.partialorder %v1839, 4039831754
      %vm1888 = vcmp.lt.bf16.partialorder %v1840, 4039831754
      %vm1889 = vcmp.lt.bf16.partialorder %v1841, 4039831754
      %vm1890 = vcmp.lt.bf16.partialorder %v1842, 4039831754
      %vm1891 = vcmp.lt.bf16.partialorder %v1843, 4039831754
      %vm1892 = vcmp.lt.bf16.partialorder %v1844, 4039831754
      %vm1893 = vcmp.lt.bf16.partialorder %v1845, 4039831754
      %vm1894 = vcmp.lt.bf16.partialorder %v1846, 4039831754
      %vm1895 = vcmp.lt.bf16.partialorder %v1847, 4039831754
      %vm1896 = vcmp.lt.bf16.partialorder %v1848, 4039831754
      %vm1897 = vcmp.lt.bf16.partialorder %v1849, 4039831754
      %vm1898 = vcmp.lt.bf16.partialorder %v1850, 4039831754
      %vm1899 = vcmp.lt.bf16.partialorder %v1851, 4039831754
      %vm1900 = vcmp.lt.bf16.partialorder %v1852, 4039831754
      %vm1901 = vcmp.lt.bf16.partialorder %v1853, 4039831754
      %vm1902 = vcmp.lt.bf16.partialorder %v1854, 4039831754
      %vm1903 = vcmp.lt.bf16.partialorder %v1855, 4039831754
      %vm1904 = vcmp.lt.bf16.partialorder %v1856, 4039831754
      %vm1905 = vcmp.lt.bf16.partialorder %v1857, 4039831754
      %vm1906 = vcmp.lt.bf16.partialorder %v1858, 4039831754
      %vm1907 = vcmp.lt.bf16.partialorder %v1859, 4039831754
      %vm1908 = vcmp.lt.bf16.partialorder %v1860, 4039831754
      %vm1909 = vcmp.lt.bf16.partialorder %v1861, 4039831754
      %vm1910 = vcmp.lt.bf16.partialorder %v1862, 4039831754
      %vm1911 = vcmp.lt.bf16.partialorder %v1863, 4039831754
      %vm1912 = vcmp.lt.bf16.partialorder %v1864, 4039831754
      %vm1913 = vcmp.lt.bf16.partialorder %v1865, 4039831754
      %vm1914 = vcmp.lt.bf16.partialorder %v1866, 4039831754
      %vm1915 = vcmp.lt.bf16.partialorder %v1867, 4039831754
      %vm1916 = vcmp.lt.bf16.partialorder %v1868, 4039831754
      %vm1917 = vcmp.lt.bf16.partialorder %v1869, 4039831754
      %vm1918 = vcmp.lt.bf16.partialorder %v1870, 4039831754
      %vm1919 = vcmp.lt.bf16.partialorder %v1871, 4039831754
      %vm1920 = vcmp.lt.bf16.partialorder %v1872, 4039831754
      %vm1921 = vcmp.lt.bf16.partialorder %v1873, 4039831754
      %vm1922 = vcmp.lt.bf16.partialorder %v1874, 4039831754
      %vm1923 = vcmp.lt.bf16.partialorder %v1875, 4039831754
      %vm1924 = vcmp.lt.bf16.partialorder %v1876, 4039831754
      %vm1925 = vcmp.lt.bf16.partialorder %v1877, 4039831754
      %vm1926 = vcmp.lt.bf16.partialorder %v1878, 4039831754
      %vm1927 = vcmp.lt.bf16.partialorder %v1879, 4039831754
      %vm1928 = vcmp.lt.bf16.partialorder %v1880, 4039831754
      %vm1929 = vcmp.lt.bf16.partialorder %v1881, 4039831754
      %v1930 = vsel %vm1882, 0, %v1834
      %v1931 = vsel %vm1883, 0, %v1835
      %v1932 = vsel %vm1884, 0, %v1836
      %v1933 = vsel %vm1885, 0, %v1837
      %v1934 = vsel %vm1886, 0, %v1838
      %v1935 = vsel %vm1887, 0, %v1839
      %v1936 = vsel %vm1888, 0, %v1840
      %v1937 = vsel %vm1889, 0, %v1841
      %v1938 = vsel %vm1890, 0, %v1842
      %v1939 = vsel %vm1891, 0, %v1843
      %v1940 = vsel %vm1892, 0, %v1844
      %v1941 = vsel %vm1893, 0, %v1845
      %v1942 = vsel %vm1894, 0, %v1846
      %v1943 = vsel %vm1895, 0, %v1847
      %v1944 = vsel %vm1896, 0, %v1848
      %v1945 = vsel %vm1897, 0, %v1849
      %v1946 = vsel %vm1898, 0, %v1850
      %v1947 = vsel %vm1899, 0, %v1851
      %v1948 = vsel %vm1900, 0, %v1852
      %v1949 = vsel %vm1901, 0, %v1853
      %v1950 = vsel %vm1902, 0, %v1854
      %v1951 = vsel %vm1903, 0, %v1855
      %v1952 = vsel %vm1904, 0, %v1856
      %v1953 = vsel %vm1905, 0, %v1857
      %v1954 = vsel %vm1906, 0, %v1858
      %v1955 = vsel %vm1907, 0, %v1859
      %v1956 = vsel %vm1908, 0, %v1860
      %v1957 = vsel %vm1909, 0, %v1861
      %v1958 = vsel %vm1910, 0, %v1862
      %v1959 = vsel %vm1911, 0, %v1863
      %v1960 = vsel %vm1912, 0, %v1864
      %v1961 = vsel %vm1913, 0, %v1865
      %v1962 = vsel %vm1914, 0, %v1866
      %v1963 = vsel %vm1915, 0, %v1867
      %v1964 = vsel %vm1916, 0, %v1868
      %v1965 = vsel %vm1917, 0, %v1869
      %v1966 = vsel %vm1918, 0, %v1870
      %v1967 = vsel %vm1919, 0, %v1871
      %v1968 = vsel %vm1920, 0, %v1872
      %v1969 = vsel %vm1921, 0, %v1873
      %v1970 = vsel %vm1922, 0, %v1874
      %v1971 = vsel %vm1923, 0, %v1875
      %v1972 = vsel %vm1924, 0, %v1876
      %v1973 = vsel %vm1925, 0, %v1877
      %v1974 = vsel %vm1926, 0, %v1878
      %v1975 = vsel %vm1927, 0, %v1879
      %v1976 = vsel %vm1928, 0, %v1880
      %v1977 = vsel %vm1929, 0, %v1881
      %v1978 = vld [vmem:[%s1] sm:$0x3]
      %v2027 = vunpack.c.l.b16 %v1930
      %v2028 = vunpack.c.l.b16 %v1931
      %v2029 = vunpack.c.l.b16 %v1932
      %v2030 = vunpack.c.l.b16 %v1933
      %v2031 = vunpack.c.l.b16 %v1934
      %v2032 = vunpack.c.l.b16 %v1935
      %v2033 = vunpack.c.l.b16 %v1936
      %v2034 = vunpack.c.l.b16 %v1937
      %v2035 = vunpack.c.l.b16 %v1938
      %v2036 = vunpack.c.l.b16 %v1939
      %v2037 = vunpack.c.l.b16 %v1940
      %v2038 = vunpack.c.l.b16 %v1941
      %v2039 = vunpack.c.l.b16 %v1942
      %v2040 = vunpack.c.l.b16 %v1943
      %v2041 = vunpack.c.l.b16 %v1944
      %v2042 = vunpack.c.l.b16 %v1945
      %v2043 = vunpack.c.l.b16 %v1946
      %v2044 = vunpack.c.l.b16 %v1947
      %v2045 = vunpack.c.l.b16 %v1948
      %v2046 = vunpack.c.l.b16 %v1949
      %v2047 = vunpack.c.l.b16 %v1950
      %v2048 = vunpack.c.l.b16 %v1951
      %v2049 = vunpack.c.l.b16 %v1952
      %v2050 = vunpack.c.l.b16 %v1953
      %v2051 = vunpack.c.l.b16 %v1954
      %v2052 = vunpack.c.l.b16 %v1955
      %v2053 = vunpack.c.l.b16 %v1956
      %v2054 = vunpack.c.l.b16 %v1957
      %v2055 = vunpack.c.l.b16 %v1958
      %v2056 = vunpack.c.l.b16 %v1959
      %v2057 = vunpack.c.l.b16 %v1960
      %v2058 = vunpack.c.l.b16 %v1961
      %v2059 = vunpack.c.l.b16 %v1962
      %v2060 = vunpack.c.l.b16 %v1963
      %v2061 = vunpack.c.l.b16 %v1964
      %v2062 = vunpack.c.l.b16 %v1965
      %v2063 = vunpack.c.l.b16 %v1966
      %v2064 = vunpack.c.l.b16 %v1967
      %v2065 = vunpack.c.l.b16 %v1968
      %v2066 = vunpack.c.l.b16 %v1969
      %v2067 = vunpack.c.l.b16 %v1970
      %v2068 = vunpack.c.l.b16 %v1971
      %v2069 = vunpack.c.l.b16 %v1972
      %v2070 = vunpack.c.l.b16 %v1973
      %v2071 = vunpack.c.l.b16 %v1974
      %v2072 = vunpack.c.l.b16 %v1975
      %v2073 = vunpack.c.l.b16 %v1976
      %v2074 = vunpack.c.l.b16 %v1977
      %v2075 = vpack.c.b16 %v2028, %v2027
      %v2076 = vpack.c.b16 %v2030, %v2029
      %v2077 = vpack.c.b16 %v2032, %v2031
      %v2078 = vpack.c.b16 %v2034, %v2033
      %v2079 = vpack.c.b16 %v2036, %v2035
      %v2080 = vpack.c.b16 %v2038, %v2037
      %v2081 = vpack.c.b16 %v2040, %v2039
      %v2082 = vpack.c.b16 %v2042, %v2041
      %v2083 = vpack.c.b16 %v2044, %v2043
      %v2084 = vpack.c.b16 %v2046, %v2045
      %v2085 = vpack.c.b16 %v2048, %v2047
      %v2086 = vpack.c.b16 %v2050, %v2049
      %v2087 = vpack.c.b16 %v2052, %v2051
      %v2088 = vpack.c.b16 %v2054, %v2053
      %v2089 = vpack.c.b16 %v2056, %v2055
      %v2090 = vpack.c.b16 %v2058, %v2057
      %v2091 = vpack.c.b16 %v2060, %v2059
      %v2092 = vpack.c.b16 %v2062, %v2061
      %v2093 = vpack.c.b16 %v2064, %v2063
      %v2094 = vpack.c.b16 %v2066, %v2065
      %v2095 = vpack.c.b16 %v2068, %v2067
      %v2096 = vpack.c.b16 %v2070, %v2069
      %v2097 = vpack.c.b16 %v2072, %v2071
      %v2098 = vpack.c.b16 %v2074, %v2073
      %vm2099 = vcmask 31744
      %v2101 = vsel %vm2099, %v2075, 0
      %v2104 = vsel %vm2099, %v2076, 0
      %v2107 = vsel %vm2099, %v2077, 0
      %v2110 = vsel %vm2099, %v2078, 0
      %v2113 = vsel %vm2099, %v2079, 0
      %v2116 = vsel %vm2099, %v2080, 0
      %v2119 = vsel %vm2099, %v2081, 0
      %v2122 = vsel %vm2099, %v2082, 0
      %v2125 = vsel %vm2099, %v2083, 0
      %v2128 = vsel %vm2099, %v2084, 0
      %v2131 = vsel %vm2099, %v2085, 0
      %v2134 = vsel %vm2099, %v2086, 0
      %v2137 = vsel %vm2099, %v2087, 0
      %v2140 = vsel %vm2099, %v2088, 0
      %v2143 = vsel %vm2099, %v2089, 0
      %v2146 = vsel %vm2099, %v2090, 0
      %v2149 = vsel %vm2099, %v2091, 0
      %v2152 = vsel %vm2099, %v2092, 0
      %v2155 = vsel %vm2099, %v2093, 0
      %v2158 = vsel %vm2099, %v2094, 0
      %v2161 = vsel %vm2099, %v2095, 0
      %v2164 = vsel %vm2099, %v2096, 0
      %v2167 = vsel %vm2099, %v2097, 0
      %v2170 = vsel %vm2099, %v2098, 0
      %vm2172 = vcmask 1041408
      %v2174 = vsel %vm2172, %v1978, 0
      %2176 = vmatprep.subr.bf16.mxu0 0
      %2177 = vmatpush1.bf16.msra.mxu0 %v2174
      %2178 = vmatprep.subr.bf16.mxu0 0
      %2179 = vmatpush1.bf16.msra.mxu0 0
      %2180 = vmatprep.subr.bf16.mxu0 0
      %2181 = vmatpush1.bf16.msra.mxu0 0
      %2182 = vmatprep.subr.bf16.mxu0 0
      %2183 = vmatpush1.bf16.msra.mxu0 0
      %2184 = vmatprep.subr.bf16.mxu0 0
      %2185 = vmatpush1.bf16.msra.mxu0 0
      %2186 = vmatprep.subr.bf16.mxu0 0
      %2187 = vmatpush1.bf16.msra.mxu0 0
      %2188 = vmatprep.subr.bf16.mxu0 0
      %2189 = vmatpush1.bf16.msra.mxu0 0
      %2190 = vmatprep.subr.bf16.mxu0 0
      %2191 = vmatpush1.bf16.msra.mxu0 0
      %2192 = vmatprep.subr.bf16.mxu0 0
      %2193 = vmatpush1.bf16.msra.mxu0 0
      %2194 = vmatprep.subr.bf16.mxu0 0
      %2195 = vmatpush1.bf16.msra.mxu0 0
      %2196 = vmatprep.subr.bf16.mxu0 0
      %2197 = vmatpush1.bf16.msra.mxu0 0
      %2198 = vmatprep.subr.bf16.mxu0 0
      %2199 = vmatpush1.bf16.msra.mxu0 0
      %2200 = vmatprep.subr.bf16.mxu0 0
      %2201 = vmatpush1.bf16.msra.mxu0 0
      %2202 = vmatprep.subr.bf16.mxu0 0
      %2203 = vmatpush1.bf16.msra.mxu0 0
      %2204 = vmatprep.subr.bf16.mxu0 0
      %2205 = vmatpush1.bf16.msra.mxu0 0
      %2206 = vmatprep.subr.bf16.mxu0 0
      %2207 = vmatpush1.bf16.msra.mxu0 0
      %2208 = vmatprep.mubr.bf16.mxu0 0
      %2209 = vmatmul.mubr.bf16.gmra.mrb[0].mxu0 %v2101
      %v2210 = vpop.f32.mrb[0].mxu0
      %v2211 = vadd.f32 0.0, %v2210
      %v2212 = vpop.f32.mrb[0].mxu0
      %v2213 = vpop.f32.mrb[0].mxu0
      %v2214 = vadd.f32 0.0, %v2213
      %v2215 = vpop.f32.mrb[0].mxu0
      %2216 = vmatprep.mubr.bf16.mxu0 0
      %2217 = vmatmul.mubr.bf16.gmra.mrb[0].mxu0 %v2104
      %v2218 = vpop.f32.mrb[0].mxu0
      %v2219 = vadd.f32 0.0, %v2218
      %v2220 = vpop.f32.mrb[0].mxu0
      %v2221 = vpop.f32.mrb[0].mxu0
      %v2222 = vadd.f32 0.0, %v2221
      %v2223 = vpop.f32.mrb[0].mxu0
      %2224 = vmatprep.mubr.bf16.mxu0 0
      %2225 = vmatmul.mubr.bf16.gmra.mrb[0].mxu0 %v2107
      %v2226 = vpop.f32.mrb[0].mxu0
      %v2227 = vadd.f32 0.0, %v2226
      %v2228 = vpop.f32.mrb[0].mxu0
      %v2229 = vpop.f32.mrb[0].mxu0
      %v2230 = vadd.f32 0.0, %v2229
      %v2231 = vpop.f32.mrb[0].mxu0
      %2232 = vmatprep.mubr.bf16.mxu0 0
      %2233 = vmatmul.mubr.bf16.gmra.mrb[0].mxu0 %v2110
      %v2234 = vpop.f32.mrb[0].mxu0
      %v2235 = vadd.f32 0.0, %v2234
      %v2236 = vpop.f32.mrb[0].mxu0
      %v2237 = vpop.f32.mrb[0].mxu0
      %v2238 = vadd.f32 0.0, %v2237
      %v2239 = vpop.f32.mrb[0].mxu0
      %2240 = vmatprep.mubr.bf16.mxu0 0
      %2241 = vmatmul.mubr.bf16.gmra.mrb[0].mxu0 %v2113
      %v2242 = vpop.f32.mrb[0].mxu0
      %v2243 = vadd.f32 0.0, %v2242
      %v2244 = vpop.f32.mrb[0].mxu0
      %v2245 = vpop.f32.mrb[0].mxu0
      %v2246 = vadd.f32 0.0, %v2245
      %v2247 = vpop.f32.mrb[0].mxu0
      %2248 = vmatprep.mubr.bf16.mxu0 0
      %2249 = vmatmul.mubr.bf16.gmra.mrb[0].mxu0 %v2116
      %v2250 = vpop.f32.mrb[0].mxu0
      %v2251 = vadd.f32 0.0, %v2250
      %v2252 = vpop.f32.mrb[0].mxu0
      %v2253 = vpop.f32.mrb[0].mxu0
      %v2254 = vadd.f32 0.0, %v2253
      %v2255 = vpop.f32.mrb[0].mxu0
      %2256 = vmatprep.mubr.bf16.mxu0 0
      %2257 = vmatmul.mubr.bf16.gmra.mrb[0].mxu0 %v2119
      %v2258 = vpop.f32.mrb[0].mxu0
      %v2259 = vadd.f32 0.0, %v2258
      %v2260 = vpop.f32.mrb[0].mxu0
      %v2261 = vpop.f32.mrb[0].mxu0
      %v2262 = vadd.f32 0.0, %v2261
      %v2263 = vpop.f32.mrb[0].mxu0
      %2264 = vmatprep.mubr.bf16.mxu0 0
      %2265 = vmatmul.mubr.bf16.gmra.mrb[0].mxu0 %v2122
      %v2266 = vpop.f32.mrb[0].mxu0
      %v2267 = vadd.f32 0.0, %v2266
      %v2268 = vpop.f32.mrb[0].mxu0
      %v2269 = vpop.f32.mrb[0].mxu0
      %v2270 = vadd.f32 0.0, %v2269
      %v2271 = vpop.f32.mrb[0].mxu0
      %2272 = vmatprep.mubr.bf16.mxu0 0
      %2273 = vmatmul.mubr.bf16.gmra.mrb[0].mxu0 %v2125
      %v2274 = vpop.f32.mrb[0].mxu0
      %v2275 = vadd.f32 0.0, %v2274
      %v2276 = vpop.f32.mrb[0].mxu0
      %v2277 = vpop.f32.mrb[0].mxu0
      %v2278 = vadd.f32 0.0, %v2277
      %v2279 = vpop.f32.mrb[0].mxu0
      %2280 = vmatprep.mubr.bf16.mxu0 0
      %2281 = vmatmul.mubr.bf16.gmra.mrb[0].mxu0 %v2128
      %v2282 = vpop.f32.mrb[0].mxu0
      %v2283 = vadd.f32 0.0, %v2282
      %v2284 = vpop.f32.mrb[0].mxu0
      %v2285 = vpop.f32.mrb[0].mxu0
      %v2286 = vadd.f32 0.0, %v2285
      %v2287 = vpop.f32.mrb[0].mxu0
      %2288 = vmatprep.mubr.bf16.mxu0 0
      %2289 = vmatmul.mubr.bf16.gmra.mrb[0].mxu0 %v2131
      %v2290 = vpop.f32.mrb[0].mxu0
      %v2291 = vadd.f32 0.0, %v2290
      %v2292 = vpop.f32.mrb[0].mxu0
      %v2293 = vpop.f32.mrb[0].mxu0
      %v2294 = vadd.f32 0.0, %v2293
      %v2295 = vpop.f32.mrb[0].mxu0
      %2296 = vmatprep.mubr.bf16.mxu0 0
      %2297 = vmatmul.mubr.bf16.gmra.mrb[0].mxu0 %v2134
      %v2298 = vpop.f32.mrb[0].mxu0
      %v2299 = vadd.f32 0.0, %v2298
      %v2300 = vpop.f32.mrb[0].mxu0
      %v2301 = vpop.f32.mrb[0].mxu0
      %v2302 = vadd.f32 0.0, %v2301
      %v2303 = vpop.f32.mrb[0].mxu0
      %2304 = vmatprep.mubr.bf16.mxu0 0
      %2305 = vmatmul.mubr.bf16.gmra.mrb[0].mxu0 %v2137
      %v2306 = vpop.f32.mrb[0].mxu0
      %v2307 = vadd.f32 0.0, %v2306
      %v2308 = vpop.f32.mrb[0].mxu0
      %v2309 = vpop.f32.mrb[0].mxu0
      %v2310 = vadd.f32 0.0, %v2309
      %v2311 = vpop.f32.mrb[0].mxu0
      %2312 = vmatprep.mubr.bf16.mxu0 0
      %2313 = vmatmul.mubr.bf16.gmra.mrb[0].mxu0 %v2140
      %v2314 = vpop.f32.mrb[0].mxu0
      %v2315 = vadd.f32 0.0, %v2314
      %v2316 = vpop.f32.mrb[0].mxu0
      %v2317 = vpop.f32.mrb[0].mxu0
      %v2318 = vadd.f32 0.0, %v2317
      %v2319 = vpop.f32.mrb[0].mxu0
      %2320 = vmatprep.mubr.bf16.mxu0 0
      %2321 = vmatmul.mubr.bf16.gmra.mrb[0].mxu0 %v2143
      %v2322 = vpop.f32.mrb[0].mxu0
      %v2323 = vadd.f32 0.0, %v2322
      %v2324 = vpop.f32.mrb[0].mxu0
      %v2325 = vpop.f32.mrb[0].mxu0
      %v2326 = vadd.f32 0.0, %v2325
      %v2327 = vpop.f32.mrb[0].mxu0
      %2328 = vmatprep.mubr.bf16.mxu0 0
      %2329 = vmatmul.mubr.bf16.gmra.mrb[0].mxu0 %v2146
      %v2330 = vpop.f32.mrb[0].mxu0
      %v2331 = vadd.f32 0.0, %v2330
      %v2332 = vpop.f32.mrb[0].mxu0
      %v2333 = vpop.f32.mrb[0].mxu0
      %v2334 = vadd.f32 0.0, %v2333
      %v2335 = vpop.f32.mrb[0].mxu0
      %2336 = vmatprep.mubr.bf16.mxu0 0
      %2337 = vmatmul.mubr.bf16.gmra.mrb[0].mxu0 %v2149
      %v2338 = vpop.f32.mrb[0].mxu0
      %v2339 = vadd.f32 0.0, %v2338
      %v2340 = vpop.f32.mrb[0].mxu0
      %v2341 = vpop.f32.mrb[0].mxu0
      %v2342 = vadd.f32 0.0, %v2341
      %v2343 = vpop.f32.mrb[0].mxu0
      %2344 = vmatprep.mubr.bf16.mxu0 0
      %2345 = vmatmul.mubr.bf16.gmra.mrb[0].mxu0 %v2152
      %v2346 = vpop.f32.mrb[0].mxu0
      %v2347 = vadd.f32 0.0, %v2346
      %v2348 = vpop.f32.mrb[0].mxu0
      %v2349 = vpop.f32.mrb[0].mxu0
      %v2350 = vadd.f32 0.0, %v2349
      %v2351 = vpop.f32.mrb[0].mxu0
      %2352 = vmatprep.mubr.bf16.mxu0 0
      %2353 = vmatmul.mubr.bf16.gmra.mrb[0].mxu0 %v2155
      %v2354 = vpop.f32.mrb[0].mxu0
      %v2355 = vadd.f32 0.0, %v2354
      %v2356 = vpop.f32.mrb[0].mxu0
      %v2357 = vpop.f32.mrb[0].mxu0
      %v2358 = vadd.f32 0.0, %v2357
      %v2359 = vpop.f32.mrb[0].mxu0
      %2360 = vmatprep.mubr.bf16.mxu0 0
      %2361 = vmatmul.mubr.bf16.gmra.mrb[0].mxu0 %v2158
      %v2362 = vpop.f32.mrb[0].mxu0
      %v2363 = vadd.f32 0.0, %v2362
      %v2364 = vpop.f32.mrb[0].mxu0
      %v2365 = vpop.f32.mrb[0].mxu0
      %v2366 = vadd.f32 0.0, %v2365
      %v2367 = vpop.f32.mrb[0].mxu0
      %2368 = vmatprep.mubr.bf16.mxu0 0
      %2369 = vmatmul.mubr.bf16.gmra.mrb[0].mxu0 %v2161
      %v2370 = vpop.f32.mrb[0].mxu0
      %v2371 = vadd.f32 0.0, %v2370
      %v2372 = vpop.f32.mrb[0].mxu0
      %v2373 = vpop.f32.mrb[0].mxu0
      %v2374 = vadd.f32 0.0, %v2373
      %v2375 = vpop.f32.mrb[0].mxu0
      %2376 = vmatprep.mubr.bf16.mxu0 0
      %2377 = vmatmul.mubr.bf16.gmra.mrb[0].mxu0 %v2164
      %v2378 = vpop.f32.mrb[0].mxu0
      %v2379 = vadd.f32 0.0, %v2378
      %v2380 = vpop.f32.mrb[0].mxu0
      %v2381 = vpop.f32.mrb[0].mxu0
      %v2382 = vadd.f32 0.0, %v2381
      %v2383 = vpop.f32.mrb[0].mxu0
      %2384 = vmatprep.mubr.bf16.mxu0 0
      %2385 = vmatmul.mubr.bf16.gmra.mrb[0].mxu0 %v2167
      %v2386 = vpop.f32.mrb[0].mxu0
      %v2387 = vadd.f32 0.0, %v2386
      %v2388 = vpop.f32.mrb[0].mxu0
      %v2389 = vpop.f32.mrb[0].mxu0
      %v2390 = vadd.f32 0.0, %v2389
      %v2391 = vpop.f32.mrb[0].mxu0
      %2392 = vmatprep.mubr.bf16.mxu0 0
      %2393 = vmatmul.mubr.bf16.gmra.mrb[0].mxu0 %v2170
      %v2394 = vpop.f32.mrb[0].mxu0
      %v2395 = vadd.f32 0.0, %v2394
      %v2396 = vpop.f32.mrb[0].mxu0
      %v2397 = vpop.f32.mrb[0].mxu0
      %v2398 = vadd.f32 0.0, %v2397
      %v2399 = vpop.f32.mrb[0].mxu0
      %2400 = vdwg.mxu0
      %v2401 = vld [vmem:[%s2] sm:$0x1]
      %v2403 = vlaneseq
      %v2404 = vshrl.u32 %v2403, 7
      %v2405 = vsub.s32 0, %v2404
      %v2406 = vrot.slane %v2401, %v2405
      %v2408 = vmul.f32 %v2211, %v2406
      %v2409 = vmul.f32 %v2214, %v2406
      %v2410 = vmul.f32 %v2219, %v2406
      %v2411 = vmul.f32 %v2222, %v2406
      %v2412 = vmul.f32 %v2227, %v2406
      %v2413 = vmul.f32 %v2230, %v2406
      %v2414 = vmul.f32 %v2235, %v2406
      %v2415 = vmul.f32 %v2238, %v2406
      %v2416 = vmul.f32 %v2243, %v2406
      %v2417 = vmul.f32 %v2246, %v2406
      %v2418 = vmul.f32 %v2251, %v2406
      %v2419 = vmul.f32 %v2254, %v2406
      %v2420 = vmul.f32 %v2259, %v2406
      %v2421 = vmul.f32 %v2262, %v2406
      %v2422 = vmul.f32 %v2267, %v2406
      %v2423 = vmul.f32 %v2270, %v2406
      %v2424 = vmul.f32 %v2275, %v2406
      %v2425 = vmul.f32 %v2278, %v2406
      %v2426 = vmul.f32 %v2283, %v2406
      %v2427 = vmul.f32 %v2286, %v2406
      %v2428 = vmul.f32 %v2291, %v2406
      %v2429 = vmul.f32 %v2294, %v2406
      %v2430 = vmul.f32 %v2299, %v2406
      %v2431 = vmul.f32 %v2302, %v2406
      %v2432 = vmul.f32 %v2307, %v2406
      %v2433 = vmul.f32 %v2310, %v2406
      %v2434 = vmul.f32 %v2315, %v2406
      %v2435 = vmul.f32 %v2318, %v2406
      %v2436 = vmul.f32 %v2323, %v2406
      %v2437 = vmul.f32 %v2326, %v2406
      %v2438 = vmul.f32 %v2331, %v2406
      %v2439 = vmul.f32 %v2334, %v2406
      %v2440 = vmul.f32 %v2339, %v2406
      %v2441 = vmul.f32 %v2342, %v2406
      %v2442 = vmul.f32 %v2347, %v2406
      %v2443 = vmul.f32 %v2350, %v2406
      %v2444 = vmul.f32 %v2355, %v2406
      %v2445 = vmul.f32 %v2358, %v2406
      %v2446 = vmul.f32 %v2363, %v2406
      %v2447 = vmul.f32 %v2366, %v2406
      %v2448 = vmul.f32 %v2371, %v2406
      %v2449 = vmul.f32 %v2374, %v2406
      %v2450 = vmul.f32 %v2379, %v2406
      %v2451 = vmul.f32 %v2382, %v2406
      %v2452 = vmul.f32 %v2387, %v2406
      %v2453 = vmul.f32 %v2390, %v2406
      %v2454 = vmul.f32 %v2395, %v2406
      %v2455 = vmul.f32 %v2398, %v2406
      %v2456 = vld [vmem:[%s3] sm:$0x1]
      %v2458 = vlaneseq
      %v2459 = vshrl.u32 %v2458, 7
      %v2460 = vsub.s32 0, %v2459
      %v2461 = vrot.slane %v2456, %v2460
      %v2463 = vadd.f32 %v2408, %v2461
      %v2464 = vadd.f32 %v2409, %v2461
      %v2465 = vadd.f32 %v2410, %v2461
      %v2466 = vadd.f32 %v2411, %v2461
      %v2467 = vadd.f32 %v2412, %v2461
      %v2468 = vadd.f32 %v2413, %v2461
      %v2469 = vadd.f32 %v2414, %v2461
      %v2470 = vadd.f32 %v2415, %v2461
      %v2471 = vadd.f32 %v2416, %v2461
      %v2472 = vadd.f32 %v2417, %v2461
      %v2473 = vadd.f32 %v2418, %v2461
      %v2474 = vadd.f32 %v2419, %v2461
      %v2475 = vadd.f32 %v2420, %v2461
      %v2476 = vadd.f32 %v2421, %v2461
      %v2477 = vadd.f32 %v2422, %v2461
      %v2478 = vadd.f32 %v2423, %v2461
      %v2479 = vadd.f32 %v2424, %v2461
      %v2480 = vadd.f32 %v2425, %v2461
      %v2481 = vadd.f32 %v2426, %v2461
      %v2482 = vadd.f32 %v2427, %v2461
      %v2483 = vadd.f32 %v2428, %v2461
      %v2484 = vadd.f32 %v2429, %v2461
      %v2485 = vadd.f32 %v2430, %v2461
      %v2486 = vadd.f32 %v2431, %v2461
      %v2487 = vadd.f32 %v2432, %v2461
      %v2488 = vadd.f32 %v2433, %v2461
      %v2489 = vadd.f32 %v2434, %v2461
      %v2490 = vadd.f32 %v2435, %v2461
      %v2491 = vadd.f32 %v2436, %v2461
      %v2492 = vadd.f32 %v2437, %v2461
      %v2493 = vadd.f32 %v2438, %v2461
      %v2494 = vadd.f32 %v2439, %v2461
      %v2495 = vadd.f32 %v2440, %v2461
      %v2496 = vadd.f32 %v2441, %v2461
      %v2497 = vadd.f32 %v2442, %v2461
      %v2498 = vadd.f32 %v2443, %v2461
      %v2499 = vadd.f32 %v2444, %v2461
      %v2500 = vadd.f32 %v2445, %v2461
      %v2501 = vadd.f32 %v2446, %v2461
      %v2502 = vadd.f32 %v2447, %v2461
      %v2503 = vadd.f32 %v2448, %v2461
      %v2504 = vadd.f32 %v2449, %v2461
      %v2505 = vadd.f32 %v2450, %v2461
      %v2506 = vadd.f32 %v2451, %v2461
      %v2507 = vadd.f32 %v2452, %v2461
      %v2508 = vadd.f32 %v2453, %v2461
      %v2509 = vadd.f32 %v2454, %v2461
      %v2510 = vadd.f32 %v2455, %v2461
      %v2511 = vmax.f32 %v2463, 0.0
      %v2512 = vmax.f32 %v2464, 0.0
      %v2513 = vmax.f32 %v2465, 0.0
      %v2514 = vmax.f32 %v2466, 0.0
      %v2515 = vmax.f32 %v2467, 0.0
      %v2516 = vmax.f32 %v2468, 0.0
      %v2517 = vmax.f32 %v2469, 0.0
      %v2518 = vmax.f32 %v2470, 0.0
      %v2519 = vmax.f32 %v2471, 0.0
      %v2520 = vmax.f32 %v2472, 0.0
      %v2521 = vmax.f32 %v2473, 0.0
      %v2522 = vmax.f32 %v2474, 0.0
      %v2523 = vmax.f32 %v2475, 0.0
      %v2524 = vmax.f32 %v2476, 0.0
      %v2525 = vmax.f32 %v2477, 0.0
      %v2526 = vmax.f32 %v2478, 0.0
      %v2527 = vmax.f32 %v2479, 0.0
      %v2528 = vmax.f32 %v2480, 0.0
      %v2529 = vmax.f32 %v2481, 0.0
      %v2530 = vmax.f32 %v2482, 0.0
      %v2531 = vmax.f32 %v2483, 0.0
      %v2532 = vmax.f32 %v2484, 0.0
      %v2533 = vmax.f32 %v2485, 0.0
      %v2534 = vmax.f32 %v2486, 0.0
      %v2535 = vmax.f32 %v2487, 0.0
      %v2536 = vmax.f32 %v2488, 0.0
      %v2537 = vmax.f32 %v2489, 0.0
      %v2538 = vmax.f32 %v2490, 0.0
      %v2539 = vmax.f32 %v2491, 0.0
      %v2540 = vmax.f32 %v2492, 0.0
      %v2541 = vmax.f32 %v2493, 0.0
      %v2542 = vmax.f32 %v2494, 0.0
      %v2543 = vmax.f32 %v2495, 0.0
      %v2544 = vmax.f32 %v2496, 0.0
      %v2545 = vmax.f32 %v2497, 0.0
      %v2546 = vmax.f32 %v2498, 0.0
      %v2547 = vmax.f32 %v2499, 0.0
      %v2548 = vmax.f32 %v2500, 0.0
      %v2549 = vmax.f32 %v2501, 0.0
      %v2550 = vmax.f32 %v2502, 0.0
      %v2551 = vmax.f32 %v2503, 0.0
      %v2552 = vmax.f32 %v2504, 0.0
      %v2553 = vmax.f32 %v2505, 0.0
      %v2554 = vmax.f32 %v2506, 0.0
      %v2555 = vmax.f32 %v2507, 0.0
      %v2556 = vmax.f32 %v2508, 0.0
      %v2557 = vmax.f32 %v2509, 0.0
      %v2558 = vmax.f32 %v2510, 0.0
      %v2559 = vpack.c.bf16 %v2512, %v2511
      %v2560 = vpack.c.bf16 %v2514, %v2513
      %v2561 = vpack.c.bf16 %v2516, %v2515
      %v2562 = vpack.c.bf16 %v2518, %v2517
      %v2563 = vpack.c.bf16 %v2520, %v2519
      %v2564 = vpack.c.bf16 %v2522, %v2521
      %v2565 = vpack.c.bf16 %v2524, %v2523
      %v2566 = vpack.c.bf16 %v2526, %v2525
      %v2567 = vpack.c.bf16 %v2528, %v2527
      %v2568 = vpack.c.bf16 %v2530, %v2529
      %v2569 = vpack.c.bf16 %v2532, %v2531
      %v2570 = vpack.c.bf16 %v2534, %v2533
      %v2571 = vpack.c.bf16 %v2536, %v2535
      %v2572 = vpack.c.bf16 %v2538, %v2537
      %v2573 = vpack.c.bf16 %v2540, %v2539
      %v2574 = vpack.c.bf16 %v2542, %v2541
      %v2575 = vpack.c.bf16 %v2544, %v2543
      %v2576 = vpack.c.bf16 %v2546, %v2545
      %v2577 = vpack.c.bf16 %v2548, %v2547
      %v2578 = vpack.c.bf16 %v2550, %v2549
      %v2579 = vpack.c.bf16 %v2552, %v2551
      %v2580 = vpack.c.bf16 %v2554, %v2553
      %v2581 = vpack.c.bf16 %v2556, %v2555
      %v2582 = vpack.c.bf16 %v2558, %v2557
      %v2584 = vunpack.c.l.b16 %v2559
      %v2585 = vunpack.c.h.b16 %v2559
      %v2586 = vpack.c.b16 %v2584, %v2584
      %v2587 = vpack.c.b16 %v2585, %v2585
      %vm2590 = vcmask 60416
      %2591 = vst.msk [vmem:[%s197] sm:$0xf] %vm2590, %v2586
      %2592 = vst.msk [vmem:[%s197 + $0x4] sm:$0xf] %vm2590, %v2587
      %v2595 = vunpack.c.h.b16 %v2560
      %v2596 = vunpack.c.l.b16 %v2561
      %v2597 = vpack.c.b16 %v2595, %v2595
      %v2598 = vpack.c.b16 %v2596, %v2596
      %s2601 = scalar_lea.vmem %s197, 8
      %2602 = vst.msk [vmem:[%s2601] sm:$0xf] %vm2590, %v2597
      %2603 = vst.msk [vmem:[%s2601 + $0x4] sm:$0xf] %vm2590, %v2598
      %v2605 = vunpack.c.l.b16 %v2562
      %v2606 = vunpack.c.h.b16 %v2562
      %v2607 = vpack.c.b16 %v2605, %v2605
      %v2608 = vpack.c.b16 %v2606, %v2606
      %s2611 = scalar_lea.vmem %s197, 16
      %2612 = vst.msk [vmem:[%s2611] sm:$0xf] %vm2590, %v2607
      %2613 = vst.msk [vmem:[%s2611 + $0x4] sm:$0xf] %vm2590, %v2608
      %v2616 = vunpack.c.h.b16 %v2563
      %v2617 = vunpack.c.l.b16 %v2564
      %v2618 = vpack.c.b16 %v2616, %v2616
      %v2619 = vpack.c.b16 %v2617, %v2617
      %s2622 = scalar_lea.vmem %s197, 24
      %2623 = vst.msk [vmem:[%s2622] sm:$0xf] %vm2590, %v2618
      %2624 = vst.msk [vmem:[%s2622 + $0x4] sm:$0xf] %vm2590, %v2619
      %v2626 = vunpack.c.l.b16 %v2565
      %v2627 = vunpack.c.h.b16 %v2565
      %v2628 = vpack.c.b16 %v2626, %v2626
      %v2629 = vpack.c.b16 %v2627, %v2627
      %s2632 = scalar_lea.vmem %s197, 32
      %2633 = vst.msk [vmem:[%s2632] sm:$0xf] %vm2590, %v2628
      %2634 = vst.msk [vmem:[%s2632 + $0x4] sm:$0xf] %vm2590, %v2629
      %v2637 = vunpack.c.h.b16 %v2566
      %v2638 = vunpack.c.l.b16 %v2567
      %v2639 = vpack.c.b16 %v2637, %v2637
      %v2640 = vpack.c.b16 %v2638, %v2638
      %s2643 = scalar_lea.vmem %s197, 40
      %2644 = vst.msk [vmem:[%s2643] sm:$0xf] %vm2590, %v2639
      %2645 = vst.msk [vmem:[%s2643 + $0x4] sm:$0xf] %vm2590, %v2640
      %v2647 = vunpack.c.l.b16 %v2568
      %v2648 = vunpack.c.h.b16 %v2568
      %v2649 = vpack.c.b16 %v2647, %v2647
      %v2650 = vpack.c.b16 %v2648, %v2648
      %s2653 = scalar_lea.vmem %s197, 48
      %2654 = vst.msk [vmem:[%s2653] sm:$0xf] %vm2590, %v2649
      %2655 = vst.msk [vmem:[%s2653 + $0x4] sm:$0xf] %vm2590, %v2650
      %v2658 = vunpack.c.h.b16 %v2569
      %v2659 = vunpack.c.l.b16 %v2570
      %v2660 = vpack.c.b16 %v2658, %v2658
      %v2661 = vpack.c.b16 %v2659, %v2659
      %s2664 = scalar_lea.vmem %s197, 56
      %2665 = vst.msk [vmem:[%s2664] sm:$0xf] %vm2590, %v2660
      %2666 = vst.msk [vmem:[%s2664 + $0x4] sm:$0xf] %vm2590, %v2661
      %v2668 = vunpack.c.l.b16 %v2571
      %v2669 = vunpack.c.h.b16 %v2571
      %v2670 = vpack.c.b16 %v2668, %v2668
      %v2671 = vpack.c.b16 %v2669, %v2669
      %s2674 = scalar_lea.vmem %s197, 64
      %2675 = vst.msk [vmem:[%s2674] sm:$0xf] %vm2590, %v2670
      %2676 = vst.msk [vmem:[%s2674 + $0x4] sm:$0xf] %vm2590, %v2671
      %v2679 = vunpack.c.h.b16 %v2572
      %v2680 = vunpack.c.l.b16 %v2573
      %v2681 = vpack.c.b16 %v2679, %v2679
      %v2682 = vpack.c.b16 %v2680, %v2680
      %s2685 = scalar_lea.vmem %s197, 72
      %2686 = vst.msk [vmem:[%s2685] sm:$0xf] %vm2590, %v2681
      %2687 = vst.msk [vmem:[%s2685 + $0x4] sm:$0xf] %vm2590, %v2682
      %v2689 = vunpack.c.l.b16 %v2574
      %v2690 = vunpack.c.h.b16 %v2574
      %v2691 = vpack.c.b16 %v2689, %v2689
      %v2692 = vpack.c.b16 %v2690, %v2690
      %s2695 = scalar_lea.vmem %s197, 80
      %2696 = vst.msk [vmem:[%s2695] sm:$0xf] %vm2590, %v2691
      %2697 = vst.msk [vmem:[%s2695 + $0x4] sm:$0xf] %vm2590, %v2692
      %v2700 = vunpack.c.h.b16 %v2575
      %v2701 = vunpack.c.l.b16 %v2576
      %v2702 = vpack.c.b16 %v2700, %v2700
      %v2703 = vpack.c.b16 %v2701, %v2701
      %s2706 = scalar_lea.vmem %s197, 88
      %2707 = vst.msk [vmem:[%s2706] sm:$0xf] %vm2590, %v2702
      %2708 = vst.msk [vmem:[%s2706 + $0x4] sm:$0xf] %vm2590, %v2703
      %v2710 = vunpack.c.l.b16 %v2577
      %v2711 = vunpack.c.h.b16 %v2577
      %v2712 = vpack.c.b16 %v2710, %v2710
      %v2713 = vpack.c.b16 %v2711, %v2711
      %s2716 = scalar_lea.vmem %s197, 96
      %2717 = vst.msk [vmem:[%s2716] sm:$0xf] %vm2590, %v2712
      %2718 = vst.msk [vmem:[%s2716 + $0x4] sm:$0xf] %vm2590, %v2713
      %v2721 = vunpack.c.h.b16 %v2578
      %v2722 = vunpack.c.l.b16 %v2579
      %v2723 = vpack.c.b16 %v2721, %v2721
      %v2724 = vpack.c.b16 %v2722, %v2722
      %s2727 = scalar_lea.vmem %s197, 104
      %2728 = vst.msk [vmem:[%s2727] sm:$0xf] %vm2590, %v2723
      %2729 = vst.msk [vmem:[%s2727 + $0x4] sm:$0xf] %vm2590, %v2724
      %v2731 = vunpack.c.l.b16 %v2580
      %v2732 = vunpack.c.h.b16 %v2580
      %v2733 = vpack.c.b16 %v2731, %v2731
      %v2734 = vpack.c.b16 %v2732, %v2732
      %s2737 = scalar_lea.vmem %s197, 112
      %2738 = vst.msk [vmem:[%s2737] sm:$0xf] %vm2590, %v2733
      %2739 = vst.msk [vmem:[%s2737 + $0x4] sm:$0xf] %vm2590, %v2734
      %v2742 = vunpack.c.h.b16 %v2581
      %v2743 = vunpack.c.l.b16 %v2582
      %v2744 = vpack.c.b16 %v2742, %v2742
      %v2745 = vpack.c.b16 %v2743, %v2743
      %s2748 = scalar_lea.vmem %s197, 120
      %2749 = vst.msk [vmem:[%s2748] sm:$0xf] %vm2590, %v2744
      %2750 = vst.msk [vmem:[%s2748 + $0x4] sm:$0xf] %vm2590, %v2745
      %p2751 = scmp.lt.s32.totalorder %s15, 1
      %s2752 = scalar_select %p2751, %s15, 1
      %s2753 = smul.addr %s2752, 32
      %s2754 = smul.addr %s2753, 4
      %s2755 = scalar_lea.vmem %s4, %s2754
      // Predicated region
      $region37: #{inception_forward.7} parent=35 // pred_check
        %p2756 = pneg %p122
      $region38: #{inception_forward.7} parent=35 // pred_check_branch
        %2758 = sbr.rel (%p2756) target = $region40
      $region39: #{inception_forward.7} parent=35 // pred_region
        _
      $region40: #{inception_forward.7} parent=35 // pred_fallthru
        _
    $region36: #{inception_forward.7} parent=5 // pred_fallthru
      _
    %p2759 = scmp.le.s32.totalorder 2, %s10
    // Predicated region
    $region41: #{inception_forward.7} parent=5 // pred_check
      %p2760 = pneg %p2759
    $region42: #{inception_forward.7} parent=5 // pred_check_branch
      %2762 = sbr.rel (%p2760) target = $region44
    $region43: #{inception_forward.7} parent=5 // pred_region
      %s2763 = ssub.s32 %s10, 2
      // Predicated region
      $region45: #{inception_forward.7} parent=43 // pred_check
        %p2764 = pneg %p128
      $region46: #{inception_forward.7} parent=43 // pred_check_branch
        %2766 = sbr.rel (%p2764) target = $region48
      $region47: #{inception_forward.7} parent=43 // pred_region
        %p2767 = scmp.lt.s32.totalorder %s16, 1
        %s2768 = scalar_select %p2767, %s16, 1
        %s2769 = smul.addr %s2768, 32
        %s2770 = smul.addr %s2769, 4
        %s2771 = scalar_lea.vmem %s4, %s2770
      $region48: #{inception_forward.7} parent=43 // pred_fallthru
        _
    $region44: #{inception_forward.7} parent=5 // pred_fallthru
      _
  $region6: #{inception_forward.7} parent=0 // loop_footer
    %s14 = sadd.s32 1, %s10
  $region7: #{inception_forward.7} parent=0 // loop_footer_branch
    %9 = sbr.rel target = $region3
  $region8: #{inception_forward.7} parent=0 // loop_exit
    _

// kernel: inception_forward.5
$region0: #{inception_forward.5}
  #allocation0 [shape = 'u32[]', space=smem, size = 0x4, offset = 0x4, fixed_abs, tag = 'smem constant byte address 0x4 - core index']
  #allocation1 [shape = 'u32[144,128]{1,0:T(1,128)}', space=vmem, size = 0x12000, scoped, tag = 'internal scratch']
  #allocation2 [shape = 'bf16[456,4]{1,0:T(8,128)(2,1)}', space=vmem, size = 0x1c800, scoped, tag = 'scratch operand']
  #allocation3 [shape = 'bf16[384,36]{1,0:T(16,128)(2,1)}', space=vmem, size = 0x18000, scoped, tag = 'scratch operand']
  %s0 = inlined_call_operand.vmem [shape: bf16[2,16,16,4], index: 0, kind: input, shape index: {}]
  %s1 = inlined_call_operand.vmem [shape: bf16[36,8], index: 1, kind: input, shape index: {}]
  %s2 = inlined_call_operand.vmem [shape: f32[1,8], index: 2, kind: input, shape index: {}]
  %s3 = inlined_call_operand.vmem [shape: f32[1,8], index: 3, kind: input, shape index: {}]
  %s4 = inlined_call_operand.vmem [shape: bf16[2,16,16,8], index: 4, kind: output, shape index: {}]
  %s5 = sld [smem:[#allocation0]]
  $region49: #{inception_forward.5} parent=0
    _
  %s7 = ssub.s32 1, %s5
  %s8 = scalar_select 0, %s7, %s5
  loop: start=0, step=1, limit=4
  $region2: #{inception_forward.5} parent=0 // loop_pre_header
    _
  $region3: #{inception_forward.5} parent=0 // loop_header
    %s10 = sphi 0, %s14
    %p11 = scmp.ge.s32.totalorder %s10, 4
    %s20 = sphi 0, %s22
    %s23 = sphi 0, %s20
    %s24 = sphi 0, %s23
    %s40 = sphi 0, %s24
    %s44 = sphi 0, %s44
    %s46 = sphi 0, %s44
    %s47 = sphi 0, %s46
    %s61 = sphi 0, %s47
    %s65 = sphi 0, %s65
    %s67 = sphi 0, %s65
    %s68 = sphi 0, %s67
    %s82 = sphi 0, %s68
    %s86 = sphi 0, %s86
    %s88 = sphi 0, %s86
    %s89 = sphi 0, %s88
    %s103 = sphi 0, %s89
    %s109 = sphi 0, %s111
    %s112 = sphi 0, %s109
    %s113 = sphi 0, %s112
    %s129 = sphi 0, %s113
  $region4: #{inception_forward.5} parent=0 // loop_header_branch
    %13 = sbr.rel (%p11) target = $region8
  $region5: #{inception_forward.5} parent=0 // loop_body
    %s15 = ssub.s32 %s10, 1
    %s16 = ssub.s32 %s10, 2
    %s17 = sadd.s32 %s10, 1
    %s18 = ssub.s32 %s10, %s17
    %p19 = scmp.eq.s32.totalorder %s18, 0
    %s21 = sadd.s32 %s20, 1
    %s22 = scalar_select %p19, %s20, %s21
    %p25 = pneg %p19
    %p26 = scmp.eq.s32.totalorder %s10, 1
    %p27 = por %p25, %p26
    %p28 = scmp.ne.s32.totalorder %s20, %s23
    %p29 = scmp.eq.s32.totalorder %s10, 0
    %p30 = por %p28, %p29
    %p31 = scmp.ne.s32.totalorder %s20, %s23
    %p32 = scmp.eq.s32.totalorder %s15, 1
    %p33 = por %p31, %p32
    %p34 = scmp.ne.s32.totalorder %s23, %s24
    %p35 = scmp.eq.s32.totalorder %s15, 0
    %p36 = por %p34, %p35
    %p37 = scmp.ne.s32.totalorder %s23, %s24
    %p38 = scmp.eq.s32.totalorder %s16, 1
    %p39 = por %p37, %p38
    %p41 = scmp.ne.s32.totalorder %s24, %s40
    %p42 = scmp.eq.s32.totalorder %s16, 0
    %p43 = por %p41, %p42
    %s45 = sadd.s32 %s44, 1
    %p48 = scmp.eq.s32.totalorder %s10, 1
    %p49 = scmp.ne.s32.totalorder %s44, %s46
    %p50 = scmp.eq.s32.totalorder %s10, 0
    %p51 = por %p49, %p50
    %p52 = scmp.ne.s32.totalorder %s44, %s46
    %p53 = scmp.eq.s32.totalorder %s15, 1
    %p54 = por %p52, %p53
    %p55 = scmp.ne.s32.totalorder %s46, %s47
    %p56 = scmp.eq.s32.totalorder %s15, 0
    %p57 = por %p55, %p56
    %p58 = scmp.ne.s32.totalorder %s46, %s47
    %p59 = scmp.eq.s32.totalorder %s16, 1
    %p60 = por %p58, %p59
    %p62 = scmp.ne.s32.totalorder %s47, %s61
    %p63 = scmp.eq.s32.totalorder %s16, 0
    %p64 = por %p62, %p63
    %s66 = sadd.s32 %s65, 1
    %p69 = scmp.eq.s32.totalorder %s10, 1
    %p70 = scmp.ne.s32.totalorder %s65, %s67
    %p71 = scmp.eq.s32.totalorder %s10, 0
    %p72 = por %p70, %p71
    %p73 = scmp.ne.s32.totalorder %s65, %s67
    %p74 = scmp.eq.s32.totalorder %s15, 1
    %p75 = por %p73, %p74
    %p76 = scmp.ne.s32.totalorder %s67, %s68
    %p77 = scmp.eq.s32.totalorder %s15, 0
    %p78 = por %p76, %p77
    %p79 = scmp.ne.s32.totalorder %s67, %s68
    %p80 = scmp.eq.s32.totalorder %s16, 1
    %p81 = por %p79, %p80
    %p83 = scmp.ne.s32.totalorder %s68, %s82
    %p84 = scmp.eq.s32.totalorder %s16, 0
    %p85 = por %p83, %p84
    %s87 = sadd.s32 %s86, 1
    %p90 = scmp.eq.s32.totalorder %s10, 1
    %p91 = scmp.ne.s32.totalorder %s86, %s88
    %p92 = scmp.eq.s32.totalorder %s10, 0
    %p93 = por %p91, %p92
    %p94 = scmp.ne.s32.totalorder %s86, %s88
    %p95 = scmp.eq.s32.totalorder %s15, 1
    %p96 = por %p94, %p95
    %p97 = scmp.ne.s32.totalorder %s88, %s89
    %p98 = scmp.eq.s32.totalorder %s15, 0
    %p99 = por %p97, %p98
    %p100 = scmp.ne.s32.totalorder %s88, %s89
    %p101 = scmp.eq.s32.totalorder %s16, 1
    %p102 = por %p100, %p101
    %p104 = scmp.ne.s32.totalorder %s89, %s103
    %p105 = scmp.eq.s32.totalorder %s16, 0
    %p106 = por %p104, %p105
    %s107 = ssub.s32 %s10, %s17
    %p108 = scmp.eq.s32.totalorder %s107, 0
    %s110 = sadd.s32 %s109, 1
    %s111 = scalar_select %p108, %s109, %s110
    %p114 = pneg %p108
    %p115 = scmp.eq.s32.totalorder %s10, 1
    %p116 = por %p114, %p115
    %p117 = scmp.ne.s32.totalorder %s109, %s112
    %p118 = scmp.eq.s32.totalorder %s10, 0
    %p119 = por %p117, %p118
    %p120 = scmp.ne.s32.totalorder %s109, %s112
    %p121 = scmp.eq.s32.totalorder %s15, 1
    %p122 = por %p120, %p121
    %p123 = scmp.ne.s32.totalorder %s112, %s113
    %p124 = scmp.eq.s32.totalorder %s15, 0
    %p125 = por %p123, %p124
    %p126 = scmp.ne.s32.totalorder %s112, %s113
    %p127 = scmp.eq.s32.totalorder %s16, 1
    %p128 = por %p126, %p127
    %p130 = scmp.ne.s32.totalorder %s113, %s129
    %p131 = scmp.eq.s32.totalorder %s16, 0
    %p132 = por %p130, %p131
    %p133 = scmp.le.s32.totalorder 1, %s10
    %p134 = scmp.lt.s32.totalorder %s10, 3
    %p135 = pnand %p133, %p134
    %p136 = pneg %p135
    // Predicated region
    $region9: #{inception_forward.5} parent=5 // pred_check
      _
    $region10: #{inception_forward.5} parent=5 // pred_check_branch
      %138 = sbr.rel (%p135) target = $region12
    $region11: #{inception_forward.5} parent=5 // pred_region
      %s139 = ssub.s32 %s10, 1
      // Predicated region
      $region13: #{inception_forward.5} parent=11 // pred_check
        %p140 = pneg %p57
      $region14: #{inception_forward.5} parent=11 // pred_check_branch
        %142 = sbr.rel (%p140) target = $region16
      $region15: #{inception_forward.5} parent=11 // pred_region
        _
      $region16: #{inception_forward.5} parent=11 // pred_fallthru
        _
      // Predicated region
      $region17: #{inception_forward.5} parent=11 // pred_check
        %p143 = pneg %p78
      $region18: #{inception_forward.5} parent=11 // pred_check_branch
        %145 = sbr.rel (%p143) target = $region20
      $region19: #{inception_forward.5} parent=11 // pred_region
        _
      $region20: #{inception_forward.5} parent=11 // pred_fallthru
        _
      // Predicated region
      $region21: #{inception_forward.5} parent=11 // pred_check
        %p146 = pneg %p99
      $region22: #{inception_forward.5} parent=11 // pred_check_branch
        %148 = sbr.rel (%p146) target = $region24
      $region23: #{inception_forward.5} parent=11 // pred_region
        _
      $region24: #{inception_forward.5} parent=11 // pred_fallthru
        _
    $region12: #{inception_forward.5} parent=5 // pred_fallthru
      _
    %p149 = scmp.lt.s32.totalorder %s10, 2
    // Predicated region
    $region25: #{inception_forward.5} parent=5 // pred_check
      %p150 = pneg %p149
    $region26: #{inception_forward.5} parent=5 // pred_check_branch
      %152 = sbr.rel (%p150) target = $region28
    $region27: #{inception_forward.5} parent=5 // pred_region
      // Predicated region
      $region29: #{inception_forward.5} parent=27 // pred_check
        %p153 = pneg %p30
      $region30: #{inception_forward.5} parent=27 // pred_check_branch
        %155 = sbr.rel (%p153) target = $region32
      $region31: #{inception_forward.5} parent=27 // pred_region
        %p156 = scmp.lt.s32.totalorder %s10, 1
        %s157 = scalar_select %p156, %s10, 1
        %s158 = smul.addr %s157, 32
        %s159 = smul.addr %s158, 4
        %s160 = scalar_lea.vmem %s0, %s159
      $region32: #{inception_forward.5} parent=27 // pred_fallthru
        _
    $region28: #{inception_forward.5} parent=5 // pred_fallthru
      _
    %p161 = scmp.le.s32.totalorder 1, %s10
    %p162 = scmp.lt.s32.totalorder %s10, 3
    %p163 = pnand %p161, %p162
    %p164 = pneg %p163
    // Predicated region
    $region33: #{inception_forward.5} parent=5 // pred_check
      _
    $region34: #{inception_forward.5} parent=5 // pred_check_branch
      %166 = sbr.rel (%p163) target = $region36
    $region35: #{inception_forward.5} parent=5 // pred_region
      %s167 = ssub.s32 %s10, 1
      %p168 = scmp.lt.s32.totalorder %s15, 1
      %s169 = scalar_select %p168, %s15, 1
      %s170 = smul.addr %s169, 32
      %s171 = smul.addr %s170, 4
      %s172 = scalar_lea.vmem %s0, %s171
      %p173 = pneg %p36
      %p174 = pneg %p33
      %p175 = pneg %p57
      %p176 = pneg %p54
      %p177 = pneg %p78
      %p178 = pneg %p75
      %p179 = pneg %p99
      %p180 = pneg %p96
      %p181 = pneg %p125
      %p182 = pneg %p122
      %p183 = scmp.lt.s32.totalorder %s15, 1
      %s184 = scalar_select %p183, %s15, 1
      %s185 = smul.addr %s184, 32
      %s186 = smul.addr %s185, 4
      %s187 = scalar_lea.vmem %s4, %s186
      %p188 = scmp.lt.s32.totalorder %s15, 1
      %s189 = scalar_select %p188, %s15, 1
      %s190 = smul.addr %s189, 32
      %s191 = smul.addr %s190, 4
      %s192 = scalar_lea.vmem %s0, %s191
      %p193 = scmp.lt.s32.totalorder %s15, 1
      %s194 = scalar_select %p193, %s15, 1
      %s195 = smul.addr %s194, 32
      %s196 = smul.addr %s195, 4
      %s197 = scalar_lea.vmem %s4, %s196
      %vm199 = vcmask 27648
      %200 = vst.msk [vmem:[#allocation2] sm:$0xf] %vm199, 0
      %201 = vst.msk [vmem:[#allocation2 + $0x4] sm:$0xf] %vm199, 0
      %202 = vst.msk [vmem:[#allocation2 + $0x8] sm:$0xf] %vm199, 0
      %203 = vst.msk [vmem:[#allocation2 + $0xc] sm:$0xf] %vm199, 0
      %204 = vst.msk [vmem:[#allocation2 + $0x10] sm:$0xf] %vm199, 0
      %205 = vst.msk [vmem:[#allocation2 + $0x14] sm:$0xf] %vm199, 0
      %206 = vst.msk [vmem:[#allocation2 + $0x18] sm:$0xf] %vm199, 0
      %207 = vst.msk [vmem:[#allocation2 + $0x1c] sm:$0xf] %vm199, 0
      %208 = vst.msk [vmem:[#allocation2 + $0x20] sm:$0xf] %vm199, 0
      %209 = vst.msk [vmem:[#allocation2 + $0x24] sm:$0xf] %vm199, 0
      %210 = vst.msk [vmem:[#allocation2 + $0x28] sm:$0xf] %vm199, 0
      %211 = vst.msk [vmem:[#allocation2 + $0x2c] sm:$0xf] %vm199, 0
      %212 = vst.msk [vmem:[#allocation2 + $0x30] sm:$0xf] %vm199, 0
      %213 = vst.msk [vmem:[#allocation2 + $0x34] sm:$0xf] %vm199, 0
      %214 = vst.msk [vmem:[#allocation2 + $0x38] sm:$0xf] %vm199, 0
      %215 = vst.msk [vmem:[#allocation2 + $0x3c] sm:$0xf] %vm199, 0
      %216 = vst.msk [vmem:[#allocation2 + $0x40] sm:$0xf] %vm199, 0
      %217 = vst.msk [vmem:[#allocation2 + $0x44] sm:$0xf] %vm199, 0
      %218 = vst.msk [vmem:[#allocation2 + $0x48] sm:$0xf] %vm199, 0
      %219 = vst.msk [vmem:[#allocation2 + $0x4c] sm:$0xf] %vm199, 0
      %220 = vst.msk [vmem:[#allocation2 + $0x50] sm:$0xf] %vm199, 0
      %221 = vst.msk [vmem:[#allocation2 + $0x54] sm:$0xf] %vm199, 0
      %222 = vst.msk [vmem:[#allocation2 + $0x58] sm:$0xf] %vm199, 0
      %223 = vst.msk [vmem:[#allocation2 + $0x5c] sm:$0xf] %vm199, 0
      %224 = vst.msk [vmem:[#allocation2 + $0x60] sm:$0xf] %vm199, 0
      %225 = vst.msk [vmem:[#allocation2 + $0x64] sm:$0xf] %vm199, 0
      %226 = vst.msk [vmem:[#allocation2 + $0x68] sm:$0xf] %vm199, 0
      %227 = vst.msk [vmem:[#allocation2 + $0x6c] sm:$0xf] %vm199, 0
      %228 = vst.msk [vmem:[#allocation2 + $0x70] sm:$0xf] %vm199, 0
      %229 = vst.msk [vmem:[#allocation2 + $0x74] sm:$0xf] %vm199, 0
      %230 = vst.msk [vmem:[#allocation2 + $0x78] sm:$0xf] %vm199, 0
      %231 = vst.msk [vmem:[#allocation2 + $0x7c] sm:$0xf] %vm199, 0
      %232 = vst.msk [vmem:[#allocation2 + $0x80] sm:$0xf] %vm199, 0
      %233 = vst.msk [vmem:[#allocation2 + $0x84] sm:$0xf] %vm199, 0
      %234 = vst.msk [vmem:[#allocation2 + $0x88] sm:$0xf] %vm199, 0
      %235 = vst.msk [vmem:[#allocation2 + $0x8c] sm:$0xf] %vm199, 0
      %236 = vst.msk [vmem:[#allocation2 + $0x90] sm:$0xf] %vm199, 0
      %237 = vst.msk [vmem:[#allocation2 + $0x94] sm:$0xf] %vm199, 0
      %238 = vst.msk [vmem:[#allocation2 + $0x98] sm:$0xf] %vm199, 0
      %239 = vst.msk [vmem:[#allocation2 + $0x9c] sm:$0xf] %vm199, 0
      %240 = vst.msk [vmem:[#allocation2 + $0xa0] sm:$0xf] %vm199, 0
      %241 = vst.msk [vmem:[#allocation2 + $0xa4] sm:$0xf] %vm199, 0
      %242 = vst.msk [vmem:[#allocation2 + $0xa8] sm:$0xf] %vm199, 0
      %243 = vst.msk [vmem:[#allocation2 + $0xac] sm:$0xf] %vm199, 0
      %244 = vst.msk [vmem:[#allocation2 + $0xb0] sm:$0xf] %vm199, 0
      %245 = vst.msk [vmem:[#allocation2 + $0xb4] sm:$0xf] %vm199, 0
      %246 = vst.msk [vmem:[#allocation2 + $0xb8] sm:$0xf] %vm199, 0
      %247 = vst.msk [vmem:[#allocation2 + $0xbc] sm:$0xf] %vm199, 0
      %248 = vst.msk [vmem:[#allocation2 + $0xc0] sm:$0xf] %vm199, 0
      %249 = vst.msk [vmem:[#allocation2 + $0xc4] sm:$0xf] %vm199, 0
      %250 = vst.msk [vmem:[#allocation2 + $0xc8] sm:$0xf] %vm199, 0
      %251 = vst.msk [vmem:[#allocation2 + $0xcc] sm:$0xf] %vm199, 0
      %252 = vst.msk [vmem:[#allocation2 + $0xd0] sm:$0xf] %vm199, 0
      %253 = vst.msk [vmem:[#allocation2 + $0xd4] sm:$0xf] %vm199, 0
      %254 = vst.msk [vmem:[#allocation2 + $0xd8] sm:$0xf] %vm199, 0
      %255 = vst.msk [vmem:[#allocation2 + $0xdc] sm:$0xf] %vm199, 0
      %256 = vst.msk [vmem:[#allocation2 + $0xe0] sm:$0xf] %vm199, 0
      %v257 = vld [vmem:[%s192] sm:$0xf]
      %v258 = vld [vmem:[%s192 + $0x4] sm:$0xf]
      %vm259 = vsmask.f32 256
      %vm260 = vsmask.f32 4368
      %vm261 = vmor %vm259, %vm260
      %v263 = vshrl.u32 %v257, 16
      %v265 = vrot.slane %v263, 7
      %v266 = vshll.u32 %v257, 16
      %v268 = vor.u32 %v265, %v266
      %v269 = vrot.slane %v265, 4
      %v271 = vshrl.u32 %v258, 16
      %v273 = vrot.slane %v271, 7
      %v274 = vshll.u32 %v258, 16
      %v276 = vor.u32 %v273, %v274
      %v277 = vsel %vm261, %v269, %v276
      %v278 = vrot.slane %v273, 4
      %vm282 = vcmask 27648
      %vm283 = vsmask.f32 7938
      %vm284 = vmand %vm282, %vm283
      %v285 = vld [vmem:[#allocation2 + $0xc] sm:$0xf]
      %v286 = vsel %vm284, %v268, %v285
      %287 = vst [vmem:[#allocation2 + $0xc] sm:$0xf] %v286
      %288 = vst.msk [vmem:[#allocation2 + $0x10] sm:$0xf] %vm199, %v277
      %vm289 = vcmask 24576
      %vm290 = vmand %vm289, %vm259
      %v291 = vld [vmem:[#allocation2 + $0x14] sm:$0x1]
      %v292 = vsel %vm290, %v278, %v291
      %293 = vst [vmem:[#allocation2 + $0x14] sm:$0x1] %v292
      %s294 = scalar_lea.vmem %s192, 8
      %v295 = vld [vmem:[%s294] sm:$0xf]
      %v296 = vld [vmem:[%s294 + $0x4] sm:$0xf]
      %v298 = vshrl.u32 %v295, 16
      %v300 = vrot.slane %v298, 7
      %v301 = vshll.u32 %v295, 16
      %v303 = vor.u32 %v300, %v301
      %v304 = vrot.slane %v300, 4
      %v306 = vshrl.u32 %v296, 16
      %v308 = vrot.slane %v306, 7
      %v309 = vshll.u32 %v296, 16
      %v311 = vor.u32 %v308, %v309
      %v312 = vsel %vm261, %v304, %v311
      %v313 = vrot.slane %v308, 4
      %v317 = vld [vmem:[#allocation2 + $0x18] sm:$0xf]
      %v318 = vsel %vm284, %v303, %v317
      %319 = vst [vmem:[#allocation2 + $0x18] sm:$0xf] %v318
      %320 = vst.msk [vmem:[#allocation2 + $0x1c] sm:$0xf] %vm199, %v312
      %v321 = vld [vmem:[#allocation2 + $0x20] sm:$0x1]
      %v322 = vsel %vm290, %v313, %v321
      %323 = vst [vmem:[#allocation2 + $0x20] sm:$0x1] %v322
      %s324 = scalar_lea.vmem %s192, 16
      %v325 = vld [vmem:[%s324] sm:$0xf]
      %v326 = vld [vmem:[%s324 + $0x4] sm:$0xf]
      %v328 = vshrl.u32 %v325, 16
      %v330 = vrot.slane %v328, 7
      %v331 = vshll.u32 %v325, 16
      %v333 = vor.u32 %v330, %v331
      %v334 = vrot.slane %v330, 4
      %v336 = vshrl.u32 %v326, 16
      %v338 = vrot.slane %v336, 7
      %v339 = vshll.u32 %v326, 16
      %v341 = vor.u32 %v338, %v339
      %v342 = vsel %vm261, %v334, %v341
      %v343 = vrot.slane %v338, 4
      %v347 = vld [vmem:[#allocation2 + $0x24] sm:$0xf]
      %v348 = vsel %vm284, %v333, %v347
      %349 = vst [vmem:[#allocation2 + $0x24] sm:$0xf] %v348
      %350 = vst.msk [vmem:[#allocation2 + $0x28] sm:$0xf] %vm199, %v342
      %v351 = vld [vmem:[#allocation2 + $0x2c] sm:$0x1]
      %v352 = vsel %vm290, %v343, %v351
      %353 = vst [vmem:[#allocation2 + $0x2c] sm:$0x1] %v352
      %s354 = scalar_lea.vmem %s192, 24
      %v355 = vld [vmem:[%s354] sm:$0xf]
      %v356 = vld [vmem:[%s354 + $0x4] sm:$0xf]
      %v358 = vshrl.u32 %v355, 16
      %v360 = vrot.slane %v358, 7
      %v361 = vshll.u32 %v355, 16
      %v363 = vor.u32 %v360, %v361
      %v364 = vrot.slane %v360, 4
      %v366 = vshrl.u32 %v356, 16
      %v368 = vrot.slane %v366, 7
      %v369 = vshll.u32 %v356, 16
      %v371 = vor.u32 %v368, %v369
      %v372 = vsel %vm261, %v364, %v371
      %v373 = vrot.slane %v368, 4
      %v377 = vld [vmem:[#allocation2 + $0x30] sm:$0xf]
      %v378 = vsel %vm284, %v363, %v377
      %379 = vst [vmem:[#allocation2 + $0x30] sm:$0xf] %v378
      %380 = vst.msk [vmem:[#allocation2 + $0x34] sm:$0xf] %vm199, %v372
      %v381 = vld [vmem:[#allocation2 + $0x38] sm:$0x1]
      %v382 = vsel %vm290, %v373, %v381
      %383 = vst [vmem:[#allocation2 + $0x38] sm:$0x1] %v382
      %s384 = scalar_lea.vmem %s192, 32
      %v385 = vld [vmem:[%s384] sm:$0xf]
      %v386 = vld [vmem:[%s384 + $0x4] sm:$0xf]
      %v388 = vshrl.u32 %v385, 16
      %v390 = vrot.slane %v388, 7
      %v391 = vshll.u32 %v385, 16
      %v393 = vor.u32 %v390, %v391
      %v394 = vrot.slane %v390, 4
      %v396 = vshrl.u32 %v386, 16
      %v398 = vrot.slane %v396, 7
      %v399 = vshll.u32 %v386, 16
      %v401 = vor.u32 %v398, %v399
      %v402 = vsel %vm261, %v394, %v401
      %v403 = vrot.slane %v398, 4
      %v407 = vld [vmem:[#allocation2 + $0x3c] sm:$0xf]
      %v408 = vsel %vm284, %v393, %v407
      %409 = vst [vmem:[#allocation2 + $0x3c] sm:$0xf] %v408
      %410 = vst.msk [vmem:[#allocation2 + $0x40] sm:$0xf] %vm199, %v402
      %v411 = vld [vmem:[#allocation2 + $0x44] sm:$0x1]
      %v412 = vsel %vm290, %v403, %v411
      %413 = vst [vmem:[#allocation2 + $0x44] sm:$0x1] %v412
      %s414 = scalar_lea.vmem %s192, 40
      %v415 = vld [vmem:[%s414] sm:$0xf]
      %v416 = vld [vmem:[%s414 + $0x4] sm:$0xf]
      %v418 = vshrl.u32 %v415, 16
      %v420 = vrot.slane %v418, 7
      %v421 = vshll.u32 %v415, 16
      %v423 = vor.u32 %v420, %v421
      %v424 = vrot.slane %v420, 4
      %v426 = vshrl.u32 %v416, 16
      %v428 = vrot.slane %v426, 7
      %v429 = vshll.u32 %v416, 16
      %v431 = vor.u32 %v428, %v429
      %v432 = vsel %vm261, %v424, %v431
      %v433 = vrot.slane %v428, 4
      %v437 = vld [vmem:[#allocation2 + $0x48] sm:$0xf]
      %v438 = vsel %vm284, %v423, %v437
      %439 = vst [vmem:[#allocation2 + $0x48] sm:$0xf] %v438
      %440 = vst.msk [vmem:[#allocation2 + $0x4c] sm:$0xf] %vm199, %v432
      %v441 = vld [vmem:[#allocation2 + $0x50] sm:$0x1]
      %v442 = vsel %vm290, %v433, %v441
      %443 = vst [vmem:[#allocation2 + $0x50] sm:$0x1] %v442
      %s444 = scalar_lea.vmem %s192, 48
      %v445 = vld [vmem:[%s444] sm:$0xf]
      %v446 = vld [vmem:[%s444 + $0x4] sm:$0xf]
      %v448 = vshrl.u32 %v445, 16
      %v450 = vrot.slane %v448, 7
      %v451 = vshll.u32 %v445, 16
      %v453 = vor.u32 %v450, %v451
      %v454 = vrot.slane %v450, 4
      %v456 = vshrl.u32 %v446, 16
      %v458 = vrot.slane %v456, 7
      %v459 = vshll.u32 %v446, 16
      %v461 = vor.u32 %v458, %v459
      %v462 = vsel %vm261, %v454, %v461
      %v463 = vrot.slane %v458, 4
      %v467 = vld [vmem:[#allocation2 + $0x54] sm:$0xf]
      %v468 = vsel %vm284, %v453, %v467
      %469 = vst [vmem:[#allocation2 + $0x54] sm:$0xf] %v468
      %470 = vst.msk [vmem:[#allocation2 + $0x58] sm:$0xf] %vm199, %v462
      %v471 = vld [vmem:[#allocation2 + $0x5c] sm:$0x1]
      %v472 = vsel %vm290, %v463, %v471
      %473 = vst [vmem:[#allocation2 + $0x5c] sm:$0x1] %v472
      %s474 = scalar_lea.vmem %s192, 56
      %v475 = vld [vmem:[%s474] sm:$0xf]
      %v476 = vld [vmem:[%s474 + $0x4] sm:$0xf]
      %v478 = vshrl.u32 %v475, 16
      %v480 = vrot.slane %v478, 7
      %v481 = vshll.u32 %v475, 16
      %v483 = vor.u32 %v480, %v481
      %v484 = vrot.slane %v480, 4
      %v486 = vshrl.u32 %v476, 16
      %v488 = vrot.slane %v486, 7
      %v489 = vshll.u32 %v476, 16
      %v491 = vor.u32 %v488, %v489
      %v492 = vsel %vm261, %v484, %v491
      %v493 = vrot.slane %v488, 4
      %v497 = vld [vmem:[#allocation2 + $0x60] sm:$0xf]
      %v498 = vsel %vm284, %v483, %v497
      %499 = vst [vmem:[#allocation2 + $0x60] sm:$0xf] %v498
      %500 = vst.msk [vmem:[#allocation2 + $0x64] sm:$0xf] %vm199, %v492
      %v501 = vld [vmem:[#allocation2 + $0x68] sm:$0x1]
      %v502 = vsel %vm290, %v493, %v501
      %503 = vst [vmem:[#allocation2 + $0x68] sm:$0x1] %v502
      %s504 = scalar_lea.vmem %s192, 64
      %v505 = vld [vmem:[%s504] sm:$0xf]
      %v506 = vld [vmem:[%s504 + $0x4] sm:$0xf]
      %v508 = vshrl.u32 %v505, 16
      %v510 = vrot.slane %v508, 7
      %v511 = vshll.u32 %v505, 16
      %v513 = vor.u32 %v510, %v511
      %v514 = vrot.slane %v510, 4
      %v516 = vshrl.u32 %v506, 16
      %v518 = vrot.slane %v516, 7
      %v519 = vshll.u32 %v506, 16
      %v521 = vor.u32 %v518, %v519
      %v522 = vsel %vm261, %v514, %v521
      %v523 = vrot.slane %v518, 4
      %v527 = vld [vmem:[#allocation2 + $0x6c] sm:$0xf]
      %v528 = vsel %vm284, %v513, %v527
      %529 = vst [vmem:[#allocation2 + $0x6c] sm:$0xf] %v528
      %530 = vst.msk [vmem:[#allocation2 + $0x70] sm:$0xf] %vm199, %v522
      %v531 = vld [vmem:[#allocation2 + $0x74] sm:$0x1]
      %v532 = vsel %vm290, %v523, %v531
      %533 = vst [vmem:[#allocation2 + $0x74] sm:$0x1] %v532
      %s534 = scalar_lea.vmem %s192, 72
      %v535 = vld [vmem:[%s534] sm:$0xf]
      %v536 = vld [vmem:[%s534 + $0x4] sm:$0xf]
      %v538 = vshrl.u32 %v535, 16
      %v540 = vrot.slane %v538, 7
      %v541 = vshll.u32 %v535, 16
      %v543 = vor.u32 %v540, %v541
      %v544 = vrot.slane %v540, 4
      %v546 = vshrl.u32 %v536, 16
      %v548 = vrot.slane %v546, 7
      %v549 = vshll.u32 %v536, 16
      %v551 = vor.u32 %v548, %v549
      %v552 = vsel %vm261, %v544, %v551
      %v553 = vrot.slane %v548, 4
      %v557 = vld [vmem:[#allocation2 + $0x78] sm:$0xf]
      %v558 = vsel %vm284, %v543, %v557
      %559 = vst [vmem:[#allocation2 + $0x78] sm:$0xf] %v558
      %560 = vst.msk [vmem:[#allocation2 + $0x7c] sm:$0xf] %vm199, %v552
      %v561 = vld [vmem:[#allocation2 + $0x80] sm:$0x1]
      %v562 = vsel %vm290, %v553, %v561
      %563 = vst [vmem:[#allocation2 + $0x80] sm:$0x1] %v562
      %s564 = scalar_lea.vmem %s192, 80
      %v565 = vld [vmem:[%s564] sm:$0xf]
      %v566 = vld [vmem:[%s564 + $0x4] sm:$0xf]
      %v568 = vshrl.u32 %v565, 16
      %v570 = vrot.slane %v568, 7
      %v571 = vshll.u32 %v565, 16
      %v573 = vor.u32 %v570, %v571
      %v574 = vrot.slane %v570, 4
      %v576 = vshrl.u32 %v566, 16
      %v578 = vrot.slane %v576, 7
      %v579 = vshll.u32 %v566, 16
      %v581 = vor.u32 %v578, %v579
      %v582 = vsel %vm261, %v574, %v581
      %v583 = vrot.slane %v578, 4
      %v587 = vld [vmem:[#allocation2 + $0x84] sm:$0xf]
      %v588 = vsel %vm284, %v573, %v587
      %589 = vst [vmem:[#allocation2 + $0x84] sm:$0xf] %v588
      %590 = vst.msk [vmem:[#allocation2 + $0x88] sm:$0xf] %vm199, %v582
      %v591 = vld [vmem:[#allocation2 + $0x8c] sm:$0x1]
      %v592 = vsel %vm290, %v583, %v591
      %593 = vst [vmem:[#allocation2 + $0x8c] sm:$0x1] %v592
      %s594 = scalar_lea.vmem %s192, 88
      %v595 = vld [vmem:[%s594] sm:$0xf]
      %v596 = vld [vmem:[%s594 + $0x4] sm:$0xf]
      %v598 = vshrl.u32 %v595, 16
      %v600 = vrot.slane %v598, 7
      %v601 = vshll.u32 %v595, 16
      %v603 = vor.u32 %v600, %v601
      %v604 = vrot.slane %v600, 4
      %v606 = vshrl.u32 %v596, 16
      %v608 = vrot.slane %v606, 7
      %v609 = vshll.u32 %v596, 16
      %v611 = vor.u32 %v608, %v609
      %v612 = vsel %vm261, %v604, %v611
      %v613 = vrot.slane %v608, 4
      %v617 = vld [vmem:[#allocation2 + $0x90] sm:$0xf]
      %v618 = vsel %vm284, %v603, %v617
      %619 = vst [vmem:[#allocation2 + $0x90] sm:$0xf] %v618
      %620 = vst.msk [vmem:[#allocation2 + $0x94] sm:$0xf] %vm199, %v612
      %v621 = vld [vmem:[#allocation2 + $0x98] sm:$0x1]
      %v622 = vsel %vm290, %v613, %v621
      %623 = vst [vmem:[#allocation2 + $0x98] sm:$0x1] %v622
      %s624 = scalar_lea.vmem %s192, 96
      %v625 = vld [vmem:[%s624] sm:$0xf]
      %v626 = vld [vmem:[%s624 + $0x4] sm:$0xf]
      %v628 = vshrl.u32 %v625, 16
      %v630 = vrot.slane %v628, 7
      %v631 = vshll.u32 %v625, 16
      %v633 = vor.u32 %v630, %v631
      %v634 = vrot.slane %v630, 4
      %v636 = vshrl.u32 %v626, 16
      %v638 = vrot.slane %v636, 7
      %v639 = vshll.u32 %v626, 16
      %v641 = vor.u32 %v638, %v639
      %v642 = vsel %vm261, %v634, %v641
      %v643 = vrot.slane %v638, 4
      %v647 = vld [vmem:[#allocation2 + $0x9c] sm:$0xf]
      %v648 = vsel %vm284, %v633, %v647
      %649 = vst [vmem:[#allocation2 + $0x9c] sm:$0xf] %v648
      %650 = vst.msk [vmem:[#allocation2 + $0xa0] sm:$0xf] %vm199, %v642
      %v651 = vld [vmem:[#allocation2 + $0xa4] sm:$0x1]
      %v652 = vsel %vm290, %v643, %v651
      %653 = vst [vmem:[#allocation2 + $0xa4] sm:$0x1] %v652
      %s654 = scalar_lea.vmem %s192, 104
      %v655 = vld [vmem:[%s654] sm:$0xf]
      %v656 = vld [vmem:[%s654 + $0x4] sm:$0xf]
      %v658 = vshrl.u32 %v655, 16
      %v660 = vrot.slane %v658, 7
      %v661 = vshll.u32 %v655, 16
      %v663 = vor.u32 %v660, %v661
      %v664 = vrot.slane %v660, 4
      %v666 = vshrl.u32 %v656, 16
      %v668 = vrot.slane %v666, 7
      %v669 = vshll.u32 %v656, 16
      %v671 = vor.u32 %v668, %v669
      %v672 = vsel %vm261, %v664, %v671
      %v673 = vrot.slane %v668, 4
      %v677 = vld [vmem:[#allocation2 + $0xa8] sm:$0xf]
      %v678 = vsel %vm284, %v663, %v677
      %679 = vst [vmem:[#allocation2 + $0xa8] sm:$0xf] %v678
      %680 = vst.msk [vmem:[#allocation2 + $0xac] sm:$0xf] %vm199, %v672
      %v681 = vld [vmem:[#allocation2 + $0xb0] sm:$0x1]
      %v682 = vsel %vm290, %v673, %v681
      %683 = vst [vmem:[#allocation2 + $0xb0] sm:$0x1] %v682
      %s684 = scalar_lea.vmem %s192, 112
      %v685 = vld [vmem:[%s684] sm:$0xf]
      %v686 = vld [vmem:[%s684 + $0x4] sm:$0xf]
      %v688 = vshrl.u32 %v685, 16
      %v690 = vrot.slane %v688, 7
      %v691 = vshll.u32 %v685, 16
      %v693 = vor.u32 %v690, %v691
      %v694 = vrot.slane %v690, 4
      %v696 = vshrl.u32 %v686, 16
      %v698 = vrot.slane %v696, 7
      %v699 = vshll.u32 %v686, 16
      %v701 = vor.u32 %v698, %v699
      %v702 = vsel %vm261, %v694, %v701
      %v703 = vrot.slane %v698, 4
      %v707 = vld [vmem:[#allocation2 + $0xb4] sm:$0xf]
      %v708 = vsel %vm284, %v693, %v707
      %709 = vst [vmem:[#allocation2 + $0xb4] sm:$0xf] %v708
      %710 = vst.msk [vmem:[#allocation2 + $0xb8] sm:$0xf] %vm199, %v702
      %v711 = vld [vmem:[#allocation2 + $0xbc] sm:$0x1]
      %v712 = vsel %vm290, %v703, %v711
      %713 = vst [vmem:[#allocation2 + $0xbc] sm:$0x1] %v712
      %s714 = scalar_lea.vmem %s192, 120
      %v715 = vld [vmem:[%s714] sm:$0xf]
      %v716 = vld [vmem:[%s714 + $0x4] sm:$0xf]
      %v718 = vshrl.u32 %v715, 16
      %v720 = vrot.slane %v718, 7
      %v721 = vshll.u32 %v715, 16
      %v723 = vor.u32 %v720, %v721
      %v724 = vrot.slane %v720, 4
      %v726 = vshrl.u32 %v716, 16
      %v728 = vrot.slane %v726, 7
      %v729 = vshll.u32 %v716, 16
      %v731 = vor.u32 %v728, %v729
      %v732 = vsel %vm261, %v724, %v731
      %v733 = vrot.slane %v728, 4
      %v737 = vld [vmem:[#allocation2 + $0xc0] sm:$0xf]
      %v738 = vsel %vm284, %v723, %v737
      %739 = vst [vmem:[#allocation2 + $0xc0] sm:$0xf] %v738
      %740 = vst.msk [vmem:[#allocation2 + $0xc4] sm:$0xf] %vm199, %v732
      %v741 = vld [vmem:[#allocation2 + $0xc8] sm:$0x1]
      %v742 = vsel %vm290, %v733, %v741
      %743 = vst [vmem:[#allocation2 + $0xc8] sm:$0x1] %v742
      %v744 = vld [vmem:[#allocation2] sm:$0xf]
      %v745 = vld [vmem:[#allocation2 + $0x4] sm:$0xf]
      %v746 = vld [vmem:[#allocation2 + $0x8] sm:$0xf]
      %v747 = vld [vmem:[#allocation2 + $0xc] sm:$0xf]
      %v748 = vld [vmem:[#allocation2 + $0x10] sm:$0xf]
      %v749 = vld [vmem:[#allocation2 + $0x14] sm:$0xf]
      %v750 = vld [vmem:[#allocation2 + $0x18] sm:$0xf]
      %v751 = vld [vmem:[#allocation2 + $0x1c] sm:$0xf]
      %v752 = vld [vmem:[#allocation2 + $0x20] sm:$0xf]
      %v753 = vld [vmem:[#allocation2 + $0x24] sm:$0xf]
      %v754 = vld [vmem:[#allocation2 + $0x28] sm:$0xf]
      %v755 = vld [vmem:[#allocation2 + $0x2c] sm:$0xf]
      %v756 = vld [vmem:[#allocation2 + $0x30] sm:$0xf]
      %v757 = vld [vmem:[#allocation2 + $0x34] sm:$0xf]
      %v758 = vld [vmem:[#allocation2 + $0x38] sm:$0xf]
      %v759 = vld [vmem:[#allocation2 + $0x3c] sm:$0xf]
      %v760 = vld [vmem:[#allocation2 + $0x40] sm:$0xf]
      %v761 = vld [vmem:[#allocation2 + $0x44] sm:$0xf]
      %v762 = vld [vmem:[#allocation2 + $0x48] sm:$0xf]
      %v763 = vld [vmem:[#allocation2 + $0x4c] sm:$0xf]
      %v764 = vld [vmem:[#allocation2 + $0x50] sm:$0xf]
      %v765 = vld [vmem:[#allocation2 + $0x54] sm:$0xf]
      %v766 = vld [vmem:[#allocation2 + $0x58] sm:$0xf]
      %v767 = vld [vmem:[#allocation2 + $0x5c] sm:$0xf]
      %v768 = vld [vmem:[#allocation2 + $0x60] sm:$0xf]
      %v769 = vld [vmem:[#allocation2 + $0x64] sm:$0xf]
      %v770 = vld [vmem:[#allocation2 + $0x68] sm:$0xf]
      %v771 = vld [vmem:[#allocation2 + $0x6c] sm:$0xf]
      %v772 = vld [vmem:[#allocation2 + $0x70] sm:$0xf]
      %v773 = vld [vmem:[#allocation2 + $0x74] sm:$0xf]
      %v774 = vld [vmem:[#allocation2 + $0x78] sm:$0xf]
      %v775 = vld [vmem:[#allocation2 + $0x7c] sm:$0xf]
      %v776 = vld [vmem:[#allocation2 + $0x80] sm:$0xf]
      %v777 = vld [vmem:[#allocation2 + $0x84] sm:$0xf]
      %v778 = vld [vmem:[#allocation2 + $0x88] sm:$0xf]
      %v779 = vld [vmem:[#allocation2 + $0x8c] sm:$0xf]
      %v780 = vld [vmem:[#allocation2 + $0x90] sm:$0xf]
      %v781 = vld [vmem:[#allocation2 + $0x94] sm:$0xf]
      %v782 = vld [vmem:[#allocation2 + $0x98] sm:$0xf]
      %v783 = vld [vmem:[#allocation2 + $0x9c] sm:$0xf]
      %v784 = vld [vmem:[#allocation2 + $0xa0] sm:$0xf]
      %v785 = vld [vmem:[#allocation2 + $0xa4] sm:$0xf]
      %v786 = vld [vmem:[#allocation2 + $0xa8] sm:$0xf]
      %v787 = vld [vmem:[#allocation2 + $0xac] sm:$0xf]
      %v788 = vld [vmem:[#allocation2 + $0xb0] sm:$0xf]
      %v789 = vld [vmem:[#allocation2 + $0xb4] sm:$0xf]
      %v790 = vld [vmem:[#allocation2 + $0xb8] sm:$0xf]
      %v791 = vld [vmem:[#allocation2 + $0xbc] sm:$0xf]
      %v840 = vunpack.c.l.b16 %v744
      %v841 = vunpack.c.l.b16 %v745
      %v842 = vunpack.c.l.b16 %v746
      %v843 = vunpack.c.l.b16 %v747
      %v844 = vunpack.c.l.b16 %v748
      %v845 = vunpack.c.l.b16 %v749
      %v846 = vunpack.c.l.b16 %v750
      %v847 = vunpack.c.l.b16 %v751
      %v848 = vunpack.c.l.b16 %v752
      %v849 = vunpack.c.l.b16 %v753
      %v850 = vunpack.c.l.b16 %v754
      %v851 = vunpack.c.l.b16 %v755
      %v852 = vunpack.c.l.b16 %v756
      %v853 = vunpack.c.l.b16 %v757
      %v854 = vunpack.c.l.b16 %v758
      %v855 = vunpack.c.l.b16 %v759
      %v856 = vunpack.c.l.b16 %v760
      %v857 = vunpack.c.l.b16 %v761
      %v858 = vunpack.c.l.b16 %v762
      %v859 = vunpack.c.l.b16 %v763
      %v860 = vunpack.c.l.b16 %v764
      %v861 = vunpack.c.l.b16 %v765
      %v862 = vunpack.c.l.b16 %v766
      %v863 = vunpack.c.l.b16 %v767
      %v864 = vunpack.c.l.b16 %v768
      %v865 = vunpack.c.l.b16 %v769
      %v866 = vunpack.c.l.b16 %v770
      %v867 = vunpack.c.l.b16 %v771
      %v868 = vunpack.c.l.b16 %v772
      %v869 = vunpack.c.l.b16 %v773
      %v870 = vunpack.c.l.b16 %v774
      %v871 = vunpack.c.l.b16 %v775
      %v872 = vunpack.c.l.b16 %v776
      %v873 = vunpack.c.l.b16 %v777
      %v874 = vunpack.c.l.b16 %v778
      %v875 = vunpack.c.l.b16 %v779
      %v876 = vunpack.c.l.b16 %v780
      %v877 = vunpack.c.l.b16 %v781
      %v878 = vunpack.c.l.b16 %v782
      %v879 = vunpack.c.l.b16 %v783
      %v880 = vunpack.c.l.b16 %v784
      %v881 = vunpack.c.l.b16 %v785
      %v882 = vunpack.c.l.b16 %v786
      %v883 = vunpack.c.l.b16 %v787
      %v884 = vunpack.c.l.b16 %v788
      %v885 = vunpack.c.l.b16 %v789
      %v886 = vunpack.c.l.b16 %v790
      %v887 = vunpack.c.l.b16 %v791
      %v888 = vpack.c.b16 %v841, %v840
      %v889 = vpack.c.b16 %v843, %v842
      %v890 = vpack.c.b16 %v845, %v844
      %v891 = vpack.c.b16 %v847, %v846
      %v892 = vpack.c.b16 %v849, %v848
      %v893 = vpack.c.b16 %v851, %v850
      %v894 = vpack.c.b16 %v853, %v852
      %v895 = vpack.c.b16 %v855, %v854
      %v896 = vpack.c.b16 %v857, %v856
      %v897 = vpack.c.b16 %v859, %v858
      %v898 = vpack.c.b16 %v861, %v860
      %v899 = vpack.c.b16 %v863, %v862
      %v900 = vpack.c.b16 %v865, %v864
      %v901 = vpack.c.b16 %v867, %v866
      %v902 = vpack.c.b16 %v869, %v868
      %v903 = vpack.c.b16 %v871, %v870
      %v904 = vpack.c.b16 %v873, %v872
      %v905 = vpack.c.b16 %v875, %v874
      %v906 = vpack.c.b16 %v877, %v876
      %v907 = vpack.c.b16 %v879, %v878
      %v908 = vpack.c.b16 %v881, %v880
      %v909 = vpack.c.b16 %v883, %v882
      %v910 = vpack.c.b16 %v885, %v884
      %v911 = vpack.c.b16 %v887, %v886
      %vm936 = vcmask 31744
      %937 = vst.msk [vmem:[#allocation3] sm:$0xff] %vm936, %v888
      %938 = vst.msk [vmem:[#allocation3 + $0x8] sm:$0xff] %vm936, %v889
      %939 = vst.msk [vmem:[#allocation3 + $0x10] sm:$0xff] %vm936, %v890
      %940 = vst.msk [vmem:[#allocation3 + $0x18] sm:$0xff] %vm936, %v891
      %941 = vst.msk [vmem:[#allocation3 + $0x20] sm:$0xff] %vm936, %v892
      %942 = vst.msk [vmem:[#allocation3 + $0x28] sm:$0xff] %vm936, %v893
      %943 = vst.msk [vmem:[#allocation3 + $0x30] sm:$0xff] %vm936, %v894
      %944 = vst.msk [vmem:[#allocation3 + $0x38] sm:$0xff] %vm936, %v895
      %945 = vst.msk [vmem:[#allocation3 + $0x40] sm:$0xff] %vm936, %v896
      %946 = vst.msk [vmem:[#allocation3 + $0x48] sm:$0xff] %vm936, %v897
      %947 = vst.msk [vmem:[#allocation3 + $0x50] sm:$0xff] %vm936, %v898
      %948 = vst.msk [vmem:[#allocation3 + $0x58] sm:$0xff] %vm936, %v899
      %949 = vst.msk [vmem:[#allocation3 + $0x60] sm:$0xff] %vm936, %v900
      %950 = vst.msk [vmem:[#allocation3 + $0x68] sm:$0xff] %vm936, %v901
      %951 = vst.msk [vmem:[#allocation3 + $0x70] sm:$0xff] %vm936, %v902
      %952 = vst.msk [vmem:[#allocation3 + $0x78] sm:$0xff] %vm936, %v903
      %953 = vst.msk [vmem:[#allocation3 + $0x80] sm:$0xff] %vm936, %v904
      %954 = vst.msk [vmem:[#allocation3 + $0x88] sm:$0xff] %vm936, %v905
      %955 = vst.msk [vmem:[#allocation3 + $0x90] sm:$0xff] %vm936, %v906
      %956 = vst.msk [vmem:[#allocation3 + $0x98] sm:$0xff] %vm936, %v907
      %957 = vst.msk [vmem:[#allocation3 + $0xa0] sm:$0xff] %vm936, %v908
      %958 = vst.msk [vmem:[#allocation3 + $0xa8] sm:$0xff] %vm936, %v909
      %959 = vst.msk [vmem:[#allocation3 + $0xb0] sm:$0xff] %vm936, %v910
      %960 = vst.msk [vmem:[#allocation3 + $0xb8] sm:$0xff] %vm936, %v911
      %v961 = vld [vmem:[#allocation2] sm:$0xf]
      %v962 = vld [vmem:[#allocation2 + $0x4] sm:$0xf]
      %v963 = vld [vmem:[#allocation2 + $0x8] sm:$0xf]
      %v964 = vld [vmem:[#allocation2 + $0xc] sm:$0xf]
      %v965 = vld [vmem:[#allocation2 + $0x10] sm:$0xf]
      %v966 = vld [vmem:[#allocation2 + $0x14] sm:$0xf]
      %v967 = vld [vmem:[#allocation2 + $0x18] sm:$0xf]
      %v968 = vld [vmem:[#allocation2 + $0x1c] sm:$0xf]
      %v969 = vld [vmem:[#allocation2 + $0x20] sm:$0xf]
      %v970 = vld [vmem:[#allocation2 + $0x24] sm:$0xf]
      %v971 = vld [vmem:[#allocation2 + $0x28] sm:$0xf]
      %v972 = vld [vmem:[#allocation2 + $0x2c] sm:$0xf]
      %v973 = vld [vmem:[#allocation2 + $0x30] sm:$0xf]
      %v974 = vld [vmem:[#allocation2 + $0x34] sm:$0xf]
      %v975 = vld [vmem:[#allocation2 + $0x38] sm:$0xf]
      %v976 = vld [vmem:[#allocation2 + $0x3c] sm:$0xf]
      %v977 = vld [vmem:[#allocation2 + $0x40] sm:$0xf]
      %v978 = vld [vmem:[#allocation2 + $0x44] sm:$0xf]
      %v979 = vld [vmem:[#allocation2 + $0x48] sm:$0xf]
      %v980 = vld [vmem:[#allocation2 + $0x4c] sm:$0xf]
      %v981 = vld [vmem:[#allocation2 + $0x50] sm:$0xf]
      %v982 = vld [vmem:[#allocation2 + $0x54] sm:$0xf]
      %v983 = vld [vmem:[#allocation2 + $0x58] sm:$0xf]
      %v984 = vld [vmem:[#allocation2 + $0x5c] sm:$0xf]
      %v985 = vld [vmem:[#allocation2 + $0x60] sm:$0xf]
      %v986 = vld [vmem:[#allocation2 + $0x64] sm:$0xf]
      %v987 = vld [vmem:[#allocation2 + $0x68] sm:$0xf]
      %v988 = vld [vmem:[#allocation2 + $0x6c] sm:$0xf]
      %v989 = vld [vmem:[#allocation2 + $0x70] sm:$0xf]
      %v990 = vld [vmem:[#allocation2 + $0x74] sm:$0xf]
      %v991 = vld [vmem:[#allocation2 + $0x78] sm:$0xf]
      %v992 = vld [vmem:[#allocation2 + $0x7c] sm:$0xf]
      %v993 = vld [vmem:[#allocation2 + $0x80] sm:$0xf]
      %v994 = vld [vmem:[#allocation2 + $0x84] sm:$0xf]
      %v995 = vld [vmem:[#allocation2 + $0x88] sm:$0xf]
      %v996 = vld [vmem:[#allocation2 + $0x8c] sm:$0xf]
      %v997 = vld [vmem:[#allocation2 + $0x90] sm:$0xf]
      %v998 = vld [vmem:[#allocation2 + $0x94] sm:$0xf]
      %v999 = vld [vmem:[#allocation2 + $0x98] sm:$0xf]
      %v1000 = vld [vmem:[#allocation2 + $0x9c] sm:$0xf]
      %v1001 = vld [vmem:[#allocation2 + $0xa0] sm:$0xf]
      %v1002 = vld [vmem:[#allocation2 + $0xa4] sm:$0xf]
      %v1003 = vld [vmem:[#allocation2 + $0xa8] sm:$0xf]
      %v1004 = vld [vmem:[#allocation2 + $0xac] sm:$0xf]
      %v1005 = vld [vmem:[#allocation2 + $0xb0] sm:$0xf]
      %v1006 = vld [vmem:[#allocation2 + $0xb4] sm:$0xf]
      %v1007 = vld [vmem:[#allocation2 + $0xb8] sm:$0xf]
      %v1008 = vld [vmem:[#allocation2 + $0xbc] sm:$0xf]
      %v1009 = vld [vmem:[#allocation2 + $0xc0] sm:$0x1]
      %v1059 = vunpack.c.l.b16 %v961
      %v1060 = vunpack.c.l.b16 %v962
      %v1061 = vunpack.c.l.b16 %v963
      %v1062 = vunpack.c.l.b16 %v964
      %v1063 = vunpack.c.l.b16 %v965
      %v1064 = vunpack.c.l.b16 %v966
      %v1065 = vunpack.c.l.b16 %v967
      %v1066 = vunpack.c.l.b16 %v968
      %v1067 = vunpack.c.l.b16 %v969
      %v1068 = vunpack.c.l.b16 %v970
      %v1069 = vunpack.c.l.b16 %v971
      %v1070 = vunpack.c.l.b16 %v972
      %v1071 = vunpack.c.l.b16 %v973
      %v1072 = vunpack.c.l.b16 %v974
      %v1073 = vunpack.c.l.b16 %v975
      %v1074 = vunpack.c.l.b16 %v976
      %v1075 = vunpack.c.l.b16 %v977
      %v1076 = vunpack.c.l.b16 %v978
      %v1077 = vunpack.c.l.b16 %v979
      %v1078 = vunpack.c.l.b16 %v980
      %v1079 = vunpack.c.l.b16 %v981
      %v1080 = vunpack.c.l.b16 %v982
      %v1081 = vunpack.c.l.b16 %v983
      %v1082 = vunpack.c.l.b16 %v984
      %v1083 = vunpack.c.l.b16 %v985
      %v1084 = vunpack.c.l.b16 %v986
      %v1085 = vunpack.c.l.b16 %v987
      %v1086 = vunpack.c.l.b16 %v988
      %v1087 = vunpack.c.l.b16 %v989
      %v1088 = vunpack.c.l.b16 %v990
      %v1089 = vunpack.c.l.b16 %v991
      %v1090 = vunpack.c.l.b16 %v992
      %v1091 = vunpack.c.l.b16 %v993
      %v1092 = vunpack.c.l.b16 %v994
      %v1093 = vunpack.c.l.b16 %v995
      %v1094 = vunpack.c.l.b16 %v996
      %v1095 = vunpack.c.l.b16 %v997
      %v1096 = vunpack.c.l.b16 %v998
      %v1097 = vunpack.c.l.b16 %v999
      %v1098 = vunpack.c.l.b16 %v1000
      %v1099 = vunpack.c.l.b16 %v1001
      %v1100 = vunpack.c.l.b16 %v1002
      %v1101 = vunpack.c.l.b16 %v1003
      %v1102 = vunpack.c.l.b16 %v1004
      %v1103 = vunpack.c.l.b16 %v1005
      %v1104 = vunpack.c.l.b16 %v1006
      %v1105 = vunpack.c.l.b16 %v1007
      %v1106 = vunpack.c.l.b16 %v1008
      %v1107 = vunpack.c.l.b16 %v1009
      %v1108 = vpack.c.b16 %v1060, %v1059
      %v1109 = vpack.c.b16 %v1062, %v1061
      %v1110 = vpack.c.b16 %v1064, %v1063
      %v1111 = vpack.c.b16 %v1066, %v1065
      %v1112 = vpack.c.b16 %v1068, %v1067
      %v1113 = vpack.c.b16 %v1070, %v1069
      %v1114 = vpack.c.b16 %v1072, %v1071
      %v1115 = vpack.c.b16 %v1074, %v1073
      %v1116 = vpack.c.b16 %v1076, %v1075
      %v1117 = vpack.c.b16 %v1078, %v1077
      %v1118 = vpack.c.b16 %v1080, %v1079
      %v1119 = vpack.c.b16 %v1082, %v1081
      %v1120 = vpack.c.b16 %v1084, %v1083
      %v1121 = vpack.c.b16 %v1086, %v1085
      %v1122 = vpack.c.b16 %v1088, %v1087
      %v1123 = vpack.c.b16 %v1090, %v1089
      %v1124 = vpack.c.b16 %v1092, %v1091
      %v1125 = vpack.c.b16 %v1094, %v1093
      %v1126 = vpack.c.b16 %v1096, %v1095
      %v1127 = vpack.c.b16 %v1098, %v1097
      %v1128 = vpack.c.b16 %v1100, %v1099
      %v1129 = vpack.c.b16 %v1102, %v1101
      %v1130 = vpack.c.b16 %v1104, %v1103
      %v1131 = vpack.c.b16 %v1106, %v1105
      %v1132 = vpack.c.b16 %v1107, %v1107
      %vm1133 = vsmask.f32 7424
      %v1135 = vshrl.u32 %v1108, 16
      %v1137 = vshll.u32 %v1108, 16
      %v1139 = vrot.slane %v1137, 1
      %v1140 = vor.u32 %v1135, %v1139
      %v1142 = vshll.u32 %v1109, 16
      %v1144 = vrot.slane %v1142, 1
      %v1145 = vsel %vm1133, %v1140, %v1144
      %v1146 = vshrl.u32 %v1109, 16
      %v1148 = vor.u32 %v1146, %v1144
      %v1150 = vshll.u32 %v1110, 16
      %v1152 = vrot.slane %v1150, 1
      %v1153 = vsel %vm1133, %v1148, %v1152
      %v1154 = vshrl.u32 %v1110, 16
      %v1156 = vor.u32 %v1154, %v1152
      %v1158 = vshll.u32 %v1111, 16
      %v1160 = vrot.slane %v1158, 1
      %v1161 = vsel %vm1133, %v1156, %v1160
      %v1162 = vshrl.u32 %v1111, 16
      %v1164 = vor.u32 %v1162, %v1160
      %v1166 = vshll.u32 %v1112, 16
      %v1168 = vrot.slane %v1166, 1
      %v1169 = vsel %vm1133, %v1164, %v1168
      %v1170 = vshrl.u32 %v1112, 16
      %v1172 = vor.u32 %v1170, %v1168
      %v1174 = vshll.u32 %v1113, 16
      %v1176 = vrot.slane %v1174, 1
      %v1177 = vsel %vm1133, %v1172, %v1176
      %v1178 = vshrl.u32 %v1113, 16
      %v1180 = vor.u32 %v1178, %v1176
      %v1182 = vshll.u32 %v1114, 16
      %v1184 = vrot.slane %v1182, 1
      %v1185 = vsel %vm1133, %v1180, %v1184
      %v1186 = vshrl.u32 %v1114, 16
      %v1188 = vor.u32 %v1186, %v1184
      %v1190 = vshll.u32 %v1115, 16
      %v1192 = vrot.slane %v1190, 1
      %v1193 = vsel %vm1133, %v1188, %v1192
      %v1194 = vshrl.u32 %v1115, 16
      %v1196 = vor.u32 %v1194, %v1192
      %v1198 = vshll.u32 %v1116, 16
      %v1200 = vrot.slane %v1198, 1
      %v1201 = vsel %vm1133, %v1196, %v1200
      %v1202 = vshrl.u32 %v1116, 16
      %v1204 = vor.u32 %v1202, %v1200
      %v1206 = vshll.u32 %v1117, 16
      %v1208 = vrot.slane %v1206, 1
      %v1209 = vsel %vm1133, %v1204, %v1208
      %v1210 = vshrl.u32 %v1117, 16
      %v1212 = vor.u32 %v1210, %v1208
      %v1214 = vshll.u32 %v1118, 16
      %v1216 = vrot.slane %v1214, 1
      %v1217 = vsel %vm1133, %v1212, %v1216
      %v1218 = vshrl.u32 %v1118, 16
      %v1220 = vor.u32 %v1218, %v1216
      %v1222 = vshll.u32 %v1119, 16
      %v1224 = vrot.slane %v1222, 1
      %v1225 = vsel %vm1133, %v1220, %v1224
      %v1226 = vshrl.u32 %v1119, 16
      %v1228 = vor.u32 %v1226, %v1224
      %v1230 = vshll.u32 %v1120, 16
      %v1232 = vrot.slane %v1230, 1
      %v1233 = vsel %vm1133, %v1228, %v1232
      %v1234 = vshrl.u32 %v1120, 16
      %v1236 = vor.u32 %v1234, %v1232
      %v1238 = vshll.u32 %v1121, 16
      %v1240 = vrot.slane %v1238, 1
      %v1241 = vsel %vm1133, %v1236, %v1240
      %v1242 = vshrl.u32 %v1121, 16
      %v1244 = vor.u32 %v1242, %v1240
      %v1246 = vshll.u32 %v1122, 16
      %v1248 = vrot.slane %v1246, 1
      %v1249 = vsel %vm1133, %v1244, %v1248
      %v1250 = vshrl.u32 %v1122, 16
      %v1252 = vor.u32 %v1250, %v1248
      %v1254 = vshll.u32 %v1123, 16
      %v1256 = vrot.slane %v1254, 1
      %v1257 = vsel %vm1133, %v1252, %v1256
      %v1258 = vshrl.u32 %v1123, 16
      %v1260 = vor.u32 %v1258, %v1256
      %v1262 = vshll.u32 %v1124, 16
      %v1264 = vrot.slane %v1262, 1
      %v1265 = vsel %vm1133, %v1260, %v1264
      %v1266 = vshrl.u32 %v1124, 16
      %v1268 = vor.u32 %v1266, %v1264
      %v1270 = vshll.u32 %v1125, 16
      %v1272 = vrot.slane %v1270, 1
      %v1273 = vsel %vm1133, %v1268, %v1272
      %v1274 = vshrl.u32 %v1125, 16
      %v1276 = vor.u32 %v1274, %v1272
      %v1278 = vshll.u32 %v1126, 16
      %v1280 = vrot.slane %v1278, 1
      %v1281 = vsel %vm1133, %v1276, %v1280
      %v1282 = vshrl.u32 %v1126, 16
      %v1284 = vor.u32 %v1282, %v1280
      %v1286 = vshll.u32 %v1127, 16
      %v1288 = vrot.slane %v1286, 1
      %v1289 = vsel %vm1133, %v1284, %v1288
      %v1290 = vshrl.u32 %v1127, 16
      %v1292 = vor.u32 %v1290, %v1288
      %v1294 = vshll.u32 %v1128, 16
      %v1296 = vrot.slane %v1294, 1
      %v1297 = vsel %vm1133, %v1292, %v1296
      %v1298 = vshrl.u32 %v1128, 16
      %v1300 = vor.u32 %v1298, %v1296
      %v1302 = vshll.u32 %v1129, 16
      %v1304 = vrot.slane %v1302, 1
      %v1305 = vsel %vm1133, %v1300, %v1304
      %v1306 = vshrl.u32 %v1129, 16
      %v1308 = vor.u32 %v1306, %v1304
      %v1310 = vshll.u32 %v1130, 16
      %v1312 = vrot.slane %v1310, 1
      %v1313 = vsel %vm1133, %v1308, %v1312
      %v1314 = vshrl.u32 %v1130, 16
      %v1316 = vor.u32 %v1314, %v1312
      %v1318 = vshll.u32 %v1131, 16
      %v1320 = vrot.slane %v1318, 1
      %v1321 = vsel %vm1133, %v1316, %v1320
      %v1322 = vshrl.u32 %v1131, 16
      %v1324 = vor.u32 %v1322, %v1320
      %v1326 = vshll.u32 %v1132, 16
      %v1328 = vrot.slane %v1326, 1
      %v1329 = vsel %vm1133, %v1324, %v1328
      %1330 = vrot.lane.b32.xlu0 %v1145, 4
      %v1331 = vpop.permute.xlu0 %1330
      %1332 = vrot.lane.b32.xlu0 %v1153, 4
      %v1333 = vpop.permute.xlu0 %1332
      %1334 = vrot.lane.b32.xlu0 %v1161, 4
      %v1335 = vpop.permute.xlu0 %1334
      %1336 = vrot.lane.b32.xlu0 %v1169, 4
      %v1337 = vpop.permute.xlu0 %1336
      %1338 = vrot.lane.b32.xlu0 %v1177, 4
      %v1339 = vpop.permute.xlu0 %1338
      %1340 = vrot.lane.b32.xlu0 %v1185, 4
      %v1341 = vpop.permute.xlu0 %1340
      %1342 = vrot.lane.b32.xlu0 %v1193, 4
      %v1343 = vpop.permute.xlu0 %1342
      %1344 = vrot.lane.b32.xlu0 %v1201, 4
      %v1345 = vpop.permute.xlu0 %1344
      %1346 = vrot.lane.b32.xlu0 %v1209, 4
      %v1347 = vpop.permute.xlu0 %1346
      %1348 = vrot.lane.b32.xlu0 %v1217, 4
      %v1349 = vpop.permute.xlu0 %1348
      %1350 = vrot.lane.b32.xlu0 %v1225, 4
      %v1351 = vpop.permute.xlu0 %1350
      %1352 = vrot.lane.b32.xlu0 %v1233, 4
      %v1353 = vpop.permute.xlu0 %1352
      %1354 = vrot.lane.b32.xlu0 %v1241, 4
      %v1355 = vpop.permute.xlu0 %1354
      %1356 = vrot.lane.b32.xlu0 %v1249, 4
      %v1357 = vpop.permute.xlu0 %1356
      %1358 = vrot.lane.b32.xlu0 %v1257, 4
      %v1359 = vpop.permute.xlu0 %1358
      %1360 = vrot.lane.b32.xlu0 %v1265, 4
      %v1361 = vpop.permute.xlu0 %1360
      %1362 = vrot.lane.b32.xlu0 %v1273, 4
      %v1363 = vpop.permute.xlu0 %1362
      %1364 = vrot.lane.b32.xlu0 %v1281, 4
      %v1365 = vpop.permute.xlu0 %1364
      %1366 = vrot.lane.b32.xlu0 %v1289, 4
      %v1367 = vpop.permute.xlu0 %1366
      %1368 = vrot.lane.b32.xlu0 %v1297, 4
      %v1369 = vpop.permute.xlu0 %1368
      %1370 = vrot.lane.b32.xlu0 %v1305, 4
      %v1371 = vpop.permute.xlu0 %1370
      %1372 = vrot.lane.b32.xlu0 %v1313, 4
      %v1373 = vpop.permute.xlu0 %1372
      %1374 = vrot.lane.b32.xlu0 %v1321, 4
      %v1375 = vpop.permute.xlu0 %1374
      %1376 = vrot.lane.b32.xlu0 %v1329, 4
      %v1377 = vpop.permute.xlu0 %1376
      %vm1402 = vcmask 64544
      %1403 = vst.msk [vmem:[#allocation3] sm:$0xff] %vm1402, %v1331
      %1404 = vst.msk [vmem:[#allocation3 + $0x8] sm:$0xff] %vm1402, %v1333
      %1405 = vst.msk [vmem:[#allocation3 + $0x10] sm:$0xff] %vm1402, %v1335
      %1406 = vst.msk [vmem:[#allocation3 + $0x18] sm:$0xff] %vm1402, %v1337
      %1407 = vst.msk [vmem:[#allocation3 + $0x20] sm:$0xff] %vm1402, %v1339
      %1408 = vst.msk [vmem:[#allocation3 + $0x28] sm:$0xff] %vm1402, %v1341
      %1409 = vst.msk [vmem:[#allocation3 + $0x30] sm:$0xff] %vm1402, %v1343
      %1410 = vst.msk [vmem:[#allocation3 + $0x38] sm:$0xff] %vm1402, %v1345
      %1411 = vst.msk [vmem:[#allocation3 + $0x40] sm:$0xff] %vm1402, %v1347
      %1412 = vst.msk [vmem:[#allocation3 + $0x48] sm:$0xff] %vm1402, %v1349
      %1413 = vst.msk [vmem:[#allocation3 + $0x50] sm:$0xff] %vm1402, %v1351
      %1414 = vst.msk [vmem:[#allocation3 + $0x58] sm:$0xff] %vm1402, %v1353
      %1415 = vst.msk [vmem:[#allocation3 + $0x60] sm:$0xff] %vm1402, %v1355
      %1416 = vst.msk [vmem:[#allocation3 + $0x68] sm:$0xff] %vm1402, %v1357
      %1417 = vst.msk [vmem:[#allocation3 + $0x70] sm:$0xff] %vm1402, %v1359
      %1418 = vst.msk [vmem:[#allocation3 + $0x78] sm:$0xff] %vm1402, %v1361
      %1419 = vst.msk [vmem:[#allocation3 + $0x80] sm:$0xff] %vm1402, %v1363
      %1420 = vst.msk [vmem:[#allocation3 + $0x88] sm:$0xff] %vm1402, %v1365
      %1421 = vst.msk [vmem:[#allocation3 + $0x90] sm:$0xff] %vm1402, %v1367
      %1422 = vst.msk [vmem:[#allocation3 + $0x98] sm:$0xff] %vm1402, %v1369
      %1423 = vst.msk [vmem:[#allocation3 + $0xa0] sm:$0xff] %vm1402, %v1371
      %1424 = vst.msk [vmem:[#allocation3 + $0xa8] sm:$0xff] %vm1402, %v1373
      %1425 = vst.msk [vmem:[#allocation3 + $0xb0] sm:$0xff] %vm1402, %v1375
      %1426 = vst.msk [vmem:[#allocation3 + $0xb8] sm:$0xff] %vm1402, %v1377
      %v1427 = vld [vmem:[#allocation2] sm:$0xe]
      %v1428 = vld [vmem:[#allocation2 + $0x4] sm:$0xf]
      %v1429 = vld [vmem:[#allocation2 + $0x8] sm:$0xf]
      %v1430 = vld [vmem:[#allocation2 + $0xc] sm:$0xf]
      %v1431 = vld [vmem:[#allocation2 + $0x10] sm:$0xf]
      %v1432 = vld [vmem:[#allocation2 + $0x14] sm:$0xf]
      %v1433 = vld [vmem:[#allocation2 + $0x18] sm:$0xf]
      %v1434 = vld [vmem:[#allocation2 + $0x1c] sm:$0xf]
      %v1435 = vld [vmem:[#allocation2 + $0x20] sm:$0xf]
      %v1436 = vld [vmem:[#allocation2 + $0x24] sm:$0xf]
      %v1437 = vld [vmem:[#allocation2 + $0x28] sm:$0xf]
      %v1438 = vld [vmem:[#allocation2 + $0x2c] sm:$0xf]
      %v1439 = vld [vmem:[#allocation2 + $0x30] sm:$0xf]
      %v1440 = vld [vmem:[#allocation2 + $0x34] sm:$0xf]
      %v1441 = vld [vmem:[#allocation2 + $0x38] sm:$0xf]
      %v1442 = vld [vmem:[#allocation2 + $0x3c] sm:$0xf]
      %v1443 = vld [vmem:[#allocation2 + $0x40] sm:$0xf]
      %v1444 = vld [vmem:[#allocation2 + $0x44] sm:$0xf]
      %v1445 = vld [vmem:[#allocation2 + $0x48] sm:$0xf]
      %v1446 = vld [vmem:[#allocation2 + $0x4c] sm:$0xf]
      %v1447 = vld [vmem:[#allocation2 + $0x50] sm:$0xf]
      %v1448 = vld [vmem:[#allocation2 + $0x54] sm:$0xf]
      %v1449 = vld [vmem:[#allocation2 + $0x58] sm:$0xf]
      %v1450 = vld [vmem:[#allocation2 + $0x5c] sm:$0xf]
      %v1451 = vld [vmem:[#allocation2 + $0x60] sm:$0xf]
      %v1452 = vld [vmem:[#allocation2 + $0x64] sm:$0xf]
      %v1453 = vld [vmem:[#allocation2 + $0x68] sm:$0xf]
      %v1454 = vld [vmem:[#allocation2 + $0x6c] sm:$0xf]
      %v1455 = vld [vmem:[#allocation2 + $0x70] sm:$0xf]
      %v1456 = vld [vmem:[#allocation2 + $0x74] sm:$0xf]
      %v1457 = vld [vmem:[#allocation2 + $0x78] sm:$0xf]
      %v1458 = vld [vmem:[#allocation2 + $0x7c] sm:$0xf]
      %v1459 = vld [vmem:[#allocation2 + $0x80] sm:$0xf]
      %v1460 = vld [vmem:[#allocation2 + $0x84] sm:$0xf]
      %v1461 = vld [vmem:[#allocation2 + $0x88] sm:$0xf]
      %v1462 = vld [vmem:[#allocation2 + $0x8c] sm:$0xf]
      %v1463 = vld [vmem:[#allocation2 + $0x90] sm:$0xf]
      %v1464 = vld [vmem:[#allocation2 + $0x94] sm:$0xf]
      %v1465 = vld [vmem:[#allocation2 + $0x98] sm:$0xf]
      %v1466 = vld [vmem:[#allocation2 + $0x9c] sm:$0xf]
      %v1467 = vld [vmem:[#allocation2 + $0xa0] sm:$0xf]
      %v1468 = vld [vmem:[#allocation2 + $0xa4] sm:$0xf]
      %v1469 = vld [vmem:[#allocation2 + $0xa8] sm:$0xf]
      %v1470 = vld [vmem:[#allocation2 + $0xac] sm:$0xf]
      %v1471 = vld [vmem:[#allocation2 + $0xb0] sm:$0xf]
      %v1472 = vld [vmem:[#allocation2 + $0xb4] sm:$0xf]
      %v1473 = vld [vmem:[#allocation2 + $0xb8] sm:$0xf]
      %v1474 = vld [vmem:[#allocation2 + $0xbc] sm:$0xf]
      %v1475 = vld [vmem:[#allocation2 + $0xc0] sm:$0x1]
      %v1525 = vunpack.c.l.b16 %v1427
      %v1526 = vunpack.c.l.b16 %v1428
      %v1527 = vunpack.c.l.b16 %v1429
      %v1528 = vunpack.c.l.b16 %v1430
      %v1529 = vunpack.c.l.b16 %v1431
      %v1530 = vunpack.c.l.b16 %v1432
      %v1531 = vunpack.c.l.b16 %v1433
      %v1532 = vunpack.c.l.b16 %v1434
      %v1533 = vunpack.c.l.b16 %v1435
      %v1534 = vunpack.c.l.b16 %v1436
      %v1535 = vunpack.c.l.b16 %v1437
      %v1536 = vunpack.c.l.b16 %v1438
      %v1537 = vunpack.c.l.b16 %v1439
      %v1538 = vunpack.c.l.b16 %v1440
      %v1539 = vunpack.c.l.b16 %v1441
      %v1540 = vunpack.c.l.b16 %v1442
      %v1541 = vunpack.c.l.b16 %v1443
      %v1542 = vunpack.c.l.b16 %v1444
      %v1543 = vunpack.c.l.b16 %v1445
      %v1544 = vunpack.c.l.b16 %v1446
      %v1545 = vunpack.c.l.b16 %v1447
      %v1546 = vunpack.c.l.b16 %v1448
      %v1547 = vunpack.c.l.b16 %v1449
      %v1548 = vunpack.c.l.b16 %v1450
      %v1549 = vunpack.c.l.b16 %v1451
      %v1550 = vunpack.c.l.b16 %v1452
      %v1551 = vunpack.c.l.b16 %v1453
      %v1552 = vunpack.c.l.b16 %v1454
      %v1553 = vunpack.c.l.b16 %v1455
      %v1554 = vunpack.c.l.b16 %v1456
      %v1555 = vunpack.c.l.b16 %v1457
      %v1556 = vunpack.c.l.b16 %v1458
      %v1557 = vunpack.c.l.b16 %v1459
      %v1558 = vunpack.c.l.b16 %v1460
      %v1559 = vunpack.c.l.b16 %v1461
      %v1560 = vunpack.c.l.b16 %v1462
      %v1561 = vunpack.c.l.b16 %v1463
      %v1562 = vunpack.c.l.b16 %v1464
      %v1563 = vunpack.c.l.b16 %v1465
      %v1564 = vunpack.c.l.b16 %v1466
      %v1565 = vunpack.c.l.b16 %v1467
      %v1566 = vunpack.c.l.b16 %v1468
      %v1567 = vunpack.c.l.b16 %v1469
      %v1568 = vunpack.c.l.b16 %v1470
      %v1569 = vunpack.c.l.b16 %v1471
      %v1570 = vunpack.c.l.b16 %v1472
      %v1571 = vunpack.c.l.b16 %v1473
      %v1572 = vunpack.c.l.b16 %v1474
      %v1573 = vunpack.c.l.b16 %v1475
      %v1574 = vpack.c.b16 %v1526, %v1525
      %v1575 = vpack.c.b16 %v1528, %v1527
      %v1576 = vpack.c.b16 %v1530, %v1529
      %v1577 = vpack.c.b16 %v1532, %v1531
      %v1578 = vpack.c.b16 %v1534, %v1533
      %v1579 = vpack.c.b16 %v1536, %v1535
      %v1580 = vpack.c.b16 %v1538, %v1537
      %v1581 = vpack.c.b16 %v1540, %v1539
      %v1582 = vpack.c.b16 %v1542, %v1541
      %v1583 = vpack.c.b16 %v1544, %v1543
      %v1584 = vpack.c.b16 %v1546, %v1545
      %v1585 = vpack.c.b16 %v1548, %v1547
      %v1586 = vpack.c.b16 %v1550, %v1549
      %v1587 = vpack.c.b16 %v1552, %v1551
      %v1588 = vpack.c.b16 %v1554, %v1553
      %v1589 = vpack.c.b16 %v1556, %v1555
      %v1590 = vpack.c.b16 %v1558, %v1557
      %v1591 = vpack.c.b16 %v1560, %v1559
      %v1592 = vpack.c.b16 %v1562, %v1561
      %v1593 = vpack.c.b16 %v1564, %v1563
      %v1594 = vpack.c.b16 %v1566, %v1565
      %v1595 = vpack.c.b16 %v1568, %v1567
      %v1596 = vpack.c.b16 %v1570, %v1569
      %v1597 = vpack.c.b16 %v1572, %v1571
      %v1598 = vpack.c.b16 %v1573, %v1573
      %vm1599 = vcmask 1046528
      %v1600 = vrot.slane %v1574, 1
      %v1601 = vrot.slane %v1575, 1
      %v1602 = vsel %vm1599, %v1600, %v1601
      %v1603 = vrot.slane %v1576, 1
      %v1604 = vsel %vm1599, %v1601, %v1603
      %v1605 = vrot.slane %v1577, 1
      %v1606 = vsel %vm1599, %v1603, %v1605
      %v1607 = vrot.slane %v1578, 1
      %v1608 = vsel %vm1599, %v1605, %v1607
      %v1609 = vrot.slane %v1579, 1
      %v1610 = vsel %vm1599, %v1607, %v1609
      %v1611 = vrot.slane %v1580, 1
      %v1612 = vsel %vm1599, %v1609, %v1611
      %v1613 = vrot.slane %v1581, 1
      %v1614 = vsel %vm1599, %v1611, %v1613
      %v1615 = vrot.slane %v1582, 1
      %v1616 = vsel %vm1599, %v1613, %v1615
      %v1617 = vrot.slane %v1583, 1
      %v1618 = vsel %vm1599, %v1615, %v1617
      %v1619 = vrot.slane %v1584, 1
      %v1620 = vsel %vm1599, %v1617, %v1619
      %v1621 = vrot.slane %v1585, 1
      %v1622 = vsel %vm1599, %v1619, %v1621
      %v1623 = vrot.slane %v1586, 1
      %v1624 = vsel %vm1599, %v1621, %v1623
      %v1625 = vrot.slane %v1587, 1
      %v1626 = vsel %vm1599, %v1623, %v1625
      %v1627 = vrot.slane %v1588, 1
      %v1628 = vsel %vm1599, %v1625, %v1627
      %v1629 = vrot.slane %v1589, 1
      %v1630 = vsel %vm1599, %v1627, %v1629
      %v1631 = vrot.slane %v1590, 1
      %v1632 = vsel %vm1599, %v1629, %v1631
      %v1633 = vrot.slane %v1591, 1
      %v1634 = vsel %vm1599, %v1631, %v1633
      %v1635 = vrot.slane %v1592, 1
      %v1636 = vsel %vm1599, %v1633, %v1635
      %v1637 = vrot.slane %v1593, 1
      %v1638 = vsel %vm1599, %v1635, %v1637
      %v1639 = vrot.slane %v1594, 1
      %v1640 = vsel %vm1599, %v1637, %v1639
      %v1641 = vrot.slane %v1595, 1
      %v1642 = vsel %vm1599, %v1639, %v1641
      %v1643 = vrot.slane %v1596, 1
      %v1644 = vsel %vm1599, %v1641, %v1643
      %v1645 = vrot.slane %v1597, 1
      %v1646 = vsel %vm1599, %v1643, %v1645
      %v1647 = vrot.slane %v1598, 1
      %v1648 = vsel %vm1599, %v1645, %v1647
      %1649 = vrot.lane.b32.xlu0 %v1602, 8
      %v1650 = vpop.permute.xlu0 %1649
      %1651 = vrot.lane.b32.xlu0 %v1604, 8
      %v1652 = vpop.permute.xlu0 %1651
      %1653 = vrot.lane.b32.xlu0 %v1606, 8
      %v1654 = vpop.permute.xlu0 %1653
      %1655 = vrot.lane.b32.xlu0 %v1608, 8
      %v1656 = vpop.permute.xlu0 %1655
      %1657 = vrot.lane.b32.xlu0 %v1610, 8
      %v1658 = vpop.permute.xlu0 %1657
      %1659 = vrot.lane.b32.xlu0 %v1612, 8
      %v1660 = vpop.permute.xlu0 %1659
      %1661 = vrot.lane.b32.xlu0 %v1614, 8
      %v1662 = vpop.permute.xlu0 %1661
      %1663 = vrot.lane.b32.xlu0 %v1616, 8
      %v1664 = vpop.permute.xlu0 %1663
      %1665 = vrot.lane.b32.xlu0 %v1618, 8
      %v1666 = vpop.permute.xlu0 %1665
      %1667 = vrot.lane.b32.xlu0 %v1620, 8
      %v1668 = vpop.permute.xlu0 %1667
      %1669 = vrot.lane.b32.xlu0 %v1622, 8
      %v1670 = vpop.permute.xlu0 %1669
      %1671 = vrot.lane.b32.xlu0 %v1624, 8
      %v1672 = vpop.permute.xlu0 %1671
      %1673 = vrot.lane.b32.xlu0 %v1626, 8
      %v1674 = vpop.permute.xlu0 %1673
      %1675 = vrot.lane.b32.xlu0 %v1628, 8
      %v1676 = vpop.permute.xlu0 %1675
      %1677 = vrot.lane.b32.xlu0 %v1630, 8
      %v1678 = vpop.permute.xlu0 %1677
      %1679 = vrot.lane.b32.xlu0 %v1632, 8
      %v1680 = vpop.permute.xlu0 %1679
      %1681 = vrot.lane.b32.xlu0 %v1634, 8
      %v1682 = vpop.permute.xlu0 %1681
      %1683 = vrot.lane.b32.xlu0 %v1636, 8
      %v1684 = vpop.permute.xlu0 %1683
      %1685 = vrot.lane.b32.xlu0 %v1638, 8
      %v1686 = vpop.permute.xlu0 %1685
      %1687 = vrot.lane.b32.xlu0 %v1640, 8
      %v1688 = vpop.permute.xlu0 %1687
      %1689 = vrot.lane.b32.xlu0 %v1642, 8
      %v1690 = vpop.permute.xlu0 %1689
      %1691 = vrot.lane.b32.xlu0 %v1644, 8
      %v1692 = vpop.permute.xlu0 %1691
      %1693 = vrot.lane.b32.xlu0 %v1646, 8
      %v1694 = vpop.permute.xlu0 %1693
      %1695 = vrot.lane.b32.xlu0 %v1648, 8
      %v1696 = vpop.permute.xlu0 %1695
      %vm1721 = vcmask 97344
      %1722 = vst.msk [vmem:[#allocation3] sm:$0xff] %vm1721, %v1650
      %1723 = vst.msk [vmem:[#allocation3 + $0x8] sm:$0xff] %vm1721, %v1652
      %1724 = vst.msk [vmem:[#allocation3 + $0x10] sm:$0xff] %vm1721, %v1654
      %1725 = vst.msk [vmem:[#allocation3 + $0x18] sm:$0xff] %vm1721, %v1656
      %1726 = vst.msk [vmem:[#allocation3 + $0x20] sm:$0xff] %vm1721, %v1658
      %1727 = vst.msk [vmem:[#allocation3 + $0x28] sm:$0xff] %vm1721, %v1660
      %1728 = vst.msk [vmem:[#allocation3 + $0x30] sm:$0xff] %vm1721, %v1662
      %1729 = vst.msk [vmem:[#allocation3 + $0x38] sm:$0xff] %vm1721, %v1664
      %1730 = vst.msk [vmem:[#allocation3 + $0x40] sm:$0xff] %vm1721, %v1666
      %1731 = vst.msk [vmem:[#allocation3 + $0x48] sm:$0xff] %vm1721, %v1668
      %1732 = vst.msk [vmem:[#allocation3 + $0x50] sm:$0xff] %vm1721, %v1670
      %1733 = vst.msk [vmem:[#allocation3 + $0x58] sm:$0xff] %vm1721, %v1672
      %1734 = vst.msk [vmem:[#allocation3 + $0x60] sm:$0xff] %vm1721, %v1674
      %1735 = vst.msk [vmem:[#allocation3 + $0x68] sm:$0xff] %vm1721, %v1676
      %1736 = vst.msk [vmem:[#allocation3 + $0x70] sm:$0xff] %vm1721, %v1678
      %1737 = vst.msk [vmem:[#allocation3 + $0x78] sm:$0xff] %vm1721, %v1680
      %1738 = vst.msk [vmem:[#allocation3 + $0x80] sm:$0xff] %vm1721, %v1682
      %1739 = vst.msk [vmem:[#allocation3 + $0x88] sm:$0xff] %vm1721, %v1684
      %1740 = vst.msk [vmem:[#allocation3 + $0x90] sm:$0xff] %vm1721, %v1686
      %1741 = vst.msk [vmem:[#allocation3 + $0x98] sm:$0xff] %vm1721, %v1688
      %1742 = vst.msk [vmem:[#allocation3 + $0xa0] sm:$0xff] %vm1721, %v1690
      %1743 = vst.msk [vmem:[#allocation3 + $0xa8] sm:$0xff] %vm1721, %v1692
      %1744 = vst.msk [vmem:[#allocation3 + $0xb0] sm:$0xff] %vm1721, %v1694
      %1745 = vst.msk [vmem:[#allocation3 + $0xb8] sm:$0xff] %vm1721, %v1696
      %v1746 = vld [vmem:[#allocation2 + $0xc] sm:$0xf]
      %v1747 = vld [vmem:[#allocation2 + $0x10] sm:$0xf]
      %v1748 = vld [vmem:[#allocation2 + $0x14] sm:$0xf]
      %v1749 = vld [vmem:[#allocation2 + $0x18] sm:$0xf]
      %v1750 = vld [vmem:[#allocation2 + $0x1c] sm:$0xf]
      %v1751 = vld [vmem:[#allocation2 + $0x20] sm:$0xf]
      %v1752 = vld [vmem:[#allocation2 + $0x24] sm:$0xf]
      %v1753 = vld [vmem:[#allocation2 + $0x28] sm:$0xf]
      %v1754 = vld [vmem:[#allocation2 + $0x2c] sm:$0xf]
      %v1755 = vld [vmem:[#allocation2 + $0x30] sm:$0xf]
      %v1756 = vld [vmem:[#allocation2 + $0x34] sm:$0xf]
      %v1757 = vld [vmem:[#allocation2 + $0x38] sm:$0xf]
      %v1758 = vld [vmem:[#allocation2 + $0x3c] sm:$0xf]
      %v1759 = vld [vmem:[#allocation2 + $0x40] sm:$0xf]
      %v1760 = vld [vmem:[#allocation2 + $0x44] sm:$0xf]
      %v1761 = vld [vmem:[#allocation2 + $0x48] sm:$0xf]
      %v1762 = vld [vmem:[#allocation2 + $0x4c] sm:$0xf]
      %v1763 = vld [vmem:[#allocation2 + $0x50] sm:$0xf]
      %v1764 = vld [vmem:[#allocation2 + $0x54] sm:$0xf]
      %v1765 = vld [vmem:[#allocation2 + $0x58] sm:$0xf]
      %v1766 = vld [vmem:[#allocation2 + $0x5c] sm:$0xf]
      %v1767 = vld [vmem:[#allocation2 + $0x60] sm:$0xf]
      %v1768 = vld [vmem:[#allocation2 + $0x64] sm:$0xf]
      %v1769 = vld [vmem:[#allocation2 + $0x68] sm:$0xf]
      %v1770 = vld [vmem:[#allocation2 + $0x6c] sm:$0xf]
      %v1771 = vld [vmem:[#allocation2 + $0x70] sm:$0xf]
      %v1772 = vld [vmem:[#allocation2 + $0x74] sm:$0xf]
      %v1773 = vld [vmem:[#allocation2 + $0x78] sm:$0xf]
      %v1774 = vld [vmem:[#allocation2 + $0x7c] sm:$0xf]
      %v1775 = vld [vmem:[#allocation2 + $0x80] sm:$0xf]
      %v1776 = vld [vmem:[#allocation2 + $0x84] sm:$0xf]
      %v1777 = vld [vmem:[#allocation2 + $0x88] sm:$0xf]
      %v1778 = vld [vmem:[#allocation2 + $0x8c] sm:$0xf]
      %v1779 = vld [vmem:[#allocation2 + $0x90] sm:$0xf]
      %v1780 = vld [vmem:[#allocation2 + $0x94] sm:$0xf]
      %v1781 = vld [vmem:[#allocation2 + $0x98] sm:$0xf]
      %v1782 = vld [vmem:[#allocation2 + $0x9c] sm:$0xf]
      %v1783 = vld [vmem:[#allocation2 + $0xa0] sm:$0xf]
      %v1784 = vld [vmem:[#allocation2 + $0xa4] sm:$0xf]
      %v1785 = vld [vmem:[#allocation2 + $0xa8] sm:$0xf]
      %v1786 = vld [vmem:[#allocation2 + $0xac] sm:$0xf]
      %v1787 = vld [vmem:[#allocation2 + $0xb0] sm:$0xf]
      %v1788 = vld [vmem:[#allocation2 + $0xb4] sm:$0xf]
      %v1789 = vld [vmem:[#allocation2 + $0xb8] sm:$0xf]
      %v1790 = vld [vmem:[#allocation2 + $0xbc] sm:$0xf]
      %v1791 = vld [vmem:[#allocation2 + $0xc0] sm:$0xf]
      %v1792 = vld [vmem:[#allocation2 + $0xc4] sm:$0xf]
      %v1793 = vld [vmem:[#allocation2 + $0xc8] sm:$0xf]
      %v1842 = vunpack.c.l.b16 %v1746
      %v1843 = vunpack.c.l.b16 %v1747
      %v1844 = vunpack.c.l.b16 %v1748
      %v1845 = vunpack.c.l.b16 %v1749
      %v1846 = vunpack.c.l.b16 %v1750
      %v1847 = vunpack.c.l.b16 %v1751
      %v1848 = vunpack.c.l.b16 %v1752
      %v1849 = vunpack.c.l.b16 %v1753
      %v1850 = vunpack.c.l.b16 %v1754
      %v1851 = vunpack.c.l.b16 %v1755
      %v1852 = vunpack.c.l.b16 %v1756
      %v1853 = vunpack.c.l.b16 %v1757
      %v1854 = vunpack.c.l.b16 %v1758
      %v1855 = vunpack.c.l.b16 %v1759
      %v1856 = vunpack.c.l.b16 %v1760
      %v1857 = vunpack.c.l.b16 %v1761
      %v1858 = vunpack.c.l.b16 %v1762
      %v1859 = vunpack.c.l.b16 %v1763
      %v1860 = vunpack.c.l.b16 %v1764
      %v1861 = vunpack.c.l.b16 %v1765
      %v1862 = vunpack.c.l.b16 %v1766
      %v1863 = vunpack.c.l.b16 %v1767
      %v1864 = vunpack.c.l.b16 %v1768
      %v1865 = vunpack.c.l.b16 %v1769
      %v1866 = vunpack.c.l.b16 %v1770
      %v1867 = vunpack.c.l.b16 %v1771
      %v1868 = vunpack.c.l.b16 %v1772
      %v1869 = vunpack.c.l.b16 %v1773
      %v1870 = vunpack.c.l.b16 %v1774
      %v1871 = vunpack.c.l.b16 %v1775
      %v1872 = vunpack.c.l.b16 %v1776
      %v1873 = vunpack.c.l.b16 %v1777
      %v1874 = vunpack.c.l.b16 %v1778
      %v1875 = vunpack.c.l.b16 %v1779
      %v1876 = vunpack.c.l.b16 %v1780
      %v1877 = vunpack.c.l.b16 %v1781
      %v1878 = vunpack.c.l.b16 %v1782
      %v1879 = vunpack.c.l.b16 %v1783
      %v1880 = vunpack.c.l.b16 %v1784
      %v1881 = vunpack.c.l.b16 %v1785
      %v1882 = vunpack.c.l.b16 %v1786
      %v1883 = vunpack.c.l.b16 %v1787
      %v1884 = vunpack.c.l.b16 %v1788
      %v1885 = vunpack.c.l.b16 %v1789
      %v1886 = vunpack.c.l.b16 %v1790
      %v1887 = vunpack.c.l.b16 %v1791
      %v1888 = vunpack.c.l.b16 %v1792
      %v1889 = vunpack.c.l.b16 %v1793
      %v1890 = vpack.c.b16 %v1843, %v1842
      %v1891 = vpack.c.b16 %v1845, %v1844
      %v1892 = vpack.c.b16 %v1847, %v1846
      %v1893 = vpack.c.b16 %v1849, %v1848
      %v1894 = vpack.c.b16 %v1851, %v1850
      %v1895 = vpack.c.b16 %v1853, %v1852
      %v1896 = vpack.c.b16 %v1855, %v1854
      %v1897 = vpack.c.b16 %v1857, %v1856
      %v1898 = vpack.c.b16 %v1859, %v1858
      %v1899 = vpack.c.b16 %v1861, %v1860
      %v1900 = vpack.c.b16 %v1863, %v1862
      %v1901 = vpack.c.b16 %v1865, %v1864
      %v1902 = vpack.c.b16 %v1867, %v1866
      %v1903 = vpack.c.b16 %v1869, %v1868
      %v1904 = vpack.c.b16 %v1871, %v1870
      %v1905 = vpack.c.b16 %v1873, %v1872
      %v1906 = vpack.c.b16 %v1875, %v1874
      %v1907 = vpack.c.b16 %v1877, %v1876
      %v1908 = vpack.c.b16 %v1879, %v1878
      %v1909 = vpack.c.b16 %v1881, %v1880
      %v1910 = vpack.c.b16 %v1883, %v1882
      %v1911 = vpack.c.b16 %v1885, %v1884
      %v1912 = vpack.c.b16 %v1887, %v1886
      %v1913 = vpack.c.b16 %v1889, %v1888
      %1914 = vrot.lane.b32.xlu0 %v1890, 12
      %v1915 = vpop.permute.xlu0 %1914
      %1916 = vrot.lane.b32.xlu0 %v1891, 12
      %v1917 = vpop.permute.xlu0 %1916
      %1918 = vrot.lane.b32.xlu0 %v1892, 12
      %v1919 = vpop.permute.xlu0 %1918
      %1920 = vrot.lane.b32.xlu0 %v1893, 12
      %v1921 = vpop.permute.xlu0 %1920
      %1922 = vrot.lane.b32.xlu0 %v1894, 12
      %v1923 = vpop.permute.xlu0 %1922
      %1924 = vrot.lane.b32.xlu0 %v1895, 12
      %v1925 = vpop.permute.xlu0 %1924
      %1926 = vrot.lane.b32.xlu0 %v1896, 12
      %v1927 = vpop.permute.xlu0 %1926
      %1928 = vrot.lane.b32.xlu0 %v1897, 12
      %v1929 = vpop.permute.xlu0 %1928
      %1930 = vrot.lane.b32.xlu0 %v1898, 12
      %v1931 = vpop.permute.xlu0 %1930
      %1932 = vrot.lane.b32.xlu0 %v1899, 12
      %v1933 = vpop.permute.xlu0 %1932
      %1934 = vrot.lane.b32.xlu0 %v1900, 12
      %v1935 = vpop.permute.xlu0 %1934
      %1936 = vrot.lane.b32.xlu0 %v1901, 12
      %v1937 = vpop.permute.xlu0 %1936
      %1938 = vrot.lane.b32.xlu0 %v1902, 12
      %v1939 = vpop.permute.xlu0 %1938
      %1940 = vrot.lane.b32.xlu0 %v1903, 12
      %v1941 = vpop.permute.xlu0 %1940
      %1942 = vrot.lane.b32.xlu0 %v1904, 12
      %v1943 = vpop.permute.xlu0 %1942
      %1944 = vrot.lane.b32.xlu0 %v1905, 12
      %v1945 = vpop.permute.xlu0 %1944
      %1946 = vrot.lane.b32.xlu0 %v1906, 12
      %v1947 = vpop.permute.xlu0 %1946
      %1948 = vrot.lane.b32.xlu0 %v1907, 12
      %v1949 = vpop.permute.xlu0 %1948
      %1950 = vrot.lane.b32.xlu0 %v1908, 12
      %v1951 = vpop.permute.xlu0 %1950
      %1952 = vrot.lane.b32.xlu0 %v1909, 12
      %v1953 = vpop.permute.xlu0 %1952
      %1954 = vrot.lane.b32.xlu0 %v1910, 12
      %v1955 = vpop.permute.xlu0 %1954
      %1956 = vrot.lane.b32.xlu0 %v1911, 12
      %v1957 = vpop.permute.xlu0 %1956
      %1958 = vrot.lane.b32.xlu0 %v1912, 12
      %v1959 = vpop.permute.xlu0 %1958
      %1960 = vrot.lane.b32.xlu0 %v1913, 12
      %v1961 = vpop.permute.xlu0 %1960
      %vm1986 = vcmask 130144
      %1987 = vst.msk [vmem:[#allocation3] sm:$0xff] %vm1986, %v1915
      %1988 = vst.msk [vmem:[#allocation3 + $0x8] sm:$0xff] %vm1986, %v1917
      %1989 = vst.msk [vmem:[#allocation3 + $0x10] sm:$0xff] %vm1986, %v1919
      %1990 = vst.msk [vmem:[#allocation3 + $0x18] sm:$0xff] %vm1986, %v1921
      %1991 = vst.msk [vmem:[#allocation3 + $0x20] sm:$0xff] %vm1986, %v1923
      %1992 = vst.msk [vmem:[#allocation3 + $0x28] sm:$0xff] %vm1986, %v1925
      %1993 = vst.msk [vmem:[#allocation3 + $0x30] sm:$0xff] %vm1986, %v1927
      %1994 = vst.msk [vmem:[#allocation3 + $0x38] sm:$0xff] %vm1986, %v1929
      %1995 = vst.msk [vmem:[#allocation3 + $0x40] sm:$0xff] %vm1986, %v1931
      %1996 = vst.msk [vmem:[#allocation3 + $0x48] sm:$0xff] %vm1986, %v1933
      %1997 = vst.msk [vmem:[#allocation3 + $0x50] sm:$0xff] %vm1986, %v1935
      %1998 = vst.msk [vmem:[#allocation3 + $0x58] sm:$0xff] %vm1986, %v1937
      %1999 = vst.msk [vmem:[#allocation3 + $0x60] sm:$0xff] %vm1986, %v1939
      %2000 = vst.msk [vmem:[#allocation3 + $0x68] sm:$0xff] %vm1986, %v1941
      %2001 = vst.msk [vmem:[#allocation3 + $0x70] sm:$0xff] %vm1986, %v1943
      %2002 = vst.msk [vmem:[#allocation3 + $0x78] sm:$0xff] %vm1986, %v1945
      %2003 = vst.msk [vmem:[#allocation3 + $0x80] sm:$0xff] %vm1986, %v1947
      %2004 = vst.msk [vmem:[#allocation3 + $0x88] sm:$0xff] %vm1986, %v1949
      %2005 = vst.msk [vmem:[#allocation3 + $0x90] sm:$0xff] %vm1986, %v1951
      %2006 = vst.msk [vmem:[#allocation3 + $0x98] sm:$0xff] %vm1986, %v1953
      %2007 = vst.msk [vmem:[#allocation3 + $0xa0] sm:$0xff] %vm1986, %v1955
      %2008 = vst.msk [vmem:[#allocation3 + $0xa8] sm:$0xff] %vm1986, %v1957
      %2009 = vst.msk [vmem:[#allocation3 + $0xb0] sm:$0xff] %vm1986, %v1959
      %2010 = vst.msk [vmem:[#allocation3 + $0xb8] sm:$0xff] %vm1986, %v1961
      %v2011 = vld [vmem:[#allocation2 + $0xc] sm:$0xf]
      %v2012 = vld [vmem:[#allocation2 + $0x10] sm:$0xf]
      %v2013 = vld [vmem:[#allocation2 + $0x14] sm:$0xf]
      %v2014 = vld [vmem:[#allocation2 + $0x18] sm:$0xf]
      %v2015 = vld [vmem:[#allocation2 + $0x1c] sm:$0xf]
      %v2016 = vld [vmem:[#allocation2 + $0x20] sm:$0xf]
      %v2017 = vld [vmem:[#allocation2 + $0x24] sm:$0xf]
      %v2018 = vld [vmem:[#allocation2 + $0x28] sm:$0xf]
      %v2019 = vld [vmem:[#allocation2 + $0x2c] sm:$0xf]
      %v2020 = vld [vmem:[#allocation2 + $0x30] sm:$0xf]
      %v2021 = vld [vmem:[#allocation2 + $0x34] sm:$0xf]
      %v2022 = vld [vmem:[#allocation2 + $0x38] sm:$0xf]
      %v2023 = vld [vmem:[#allocation2 + $0x3c] sm:$0xf]
      %v2024 = vld [vmem:[#allocation2 + $0x40] sm:$0xf]
      %v2025 = vld [vmem:[#allocation2 + $0x44] sm:$0xf]
      %v2026 = vld [vmem:[#allocation2 + $0x48] sm:$0xf]
      %v2027 = vld [vmem:[#allocation2 + $0x4c] sm:$0xf]
      %v2028 = vld [vmem:[#allocation2 + $0x50] sm:$0xf]
      %v2029 = vld [vmem:[#allocation2 + $0x54] sm:$0xf]
      %v2030 = vld [vmem:[#allocation2 + $0x58] sm:$0xf]
      %v2031 = vld [vmem:[#allocation2 + $0x5c] sm:$0xf]
      %v2032 = vld [vmem:[#allocation2 + $0x60] sm:$0xf]
      %v2033 = vld [vmem:[#allocation2 + $0x64] sm:$0xf]
      %v2034 = vld [vmem:[#allocation2 + $0x68] sm:$0xf]
      %v2035 = vld [vmem:[#allocation2 + $0x6c] sm:$0xf]
      %v2036 = vld [vmem:[#allocation2 + $0x70] sm:$0xf]
      %v2037 = vld [vmem:[#allocation2 + $0x74] sm:$0xf]
      %v2038 = vld [vmem:[#allocation2 + $0x78] sm:$0xf]
      %v2039 = vld [vmem:[#allocation2 + $0x7c] sm:$0xf]
      %v2040 = vld [vmem:[#allocation2 + $0x80] sm:$0xf]
      %v2041 = vld [vmem:[#allocation2 + $0x84] sm:$0xf]
      %v2042 = vld [vmem:[#allocation2 + $0x88] sm:$0xf]
      %v2043 = vld [vmem:[#allocation2 + $0x8c] sm:$0xf]
      %v2044 = vld [vmem:[#allocation2 + $0x90] sm:$0xf]
      %v2045 = vld [vmem:[#allocation2 + $0x94] sm:$0xf]
      %v2046 = vld [vmem:[#allocation2 + $0x98] sm:$0xf]
      %v2047 = vld [vmem:[#allocation2 + $0x9c] sm:$0xf]
      %v2048 = vld [vmem:[#allocation2 + $0xa0] sm:$0xf]
      %v2049 = vld [vmem:[#allocation2 + $0xa4] sm:$0xf]
      %v2050 = vld [vmem:[#allocation2 + $0xa8] sm:$0xf]
      %v2051 = vld [vmem:[#allocation2 + $0xac] sm:$0xf]
      %v2052 = vld [vmem:[#allocation2 + $0xb0] sm:$0xf]
      %v2053 = vld [vmem:[#allocation2 + $0xb4] sm:$0xf]
      %v2054 = vld [vmem:[#allocation2 + $0xb8] sm:$0xf]
      %v2055 = vld [vmem:[#allocation2 + $0xbc] sm:$0xf]
      %v2056 = vld [vmem:[#allocation2 + $0xc0] sm:$0xf]
      %v2057 = vld [vmem:[#allocation2 + $0xc4] sm:$0xf]
      %v2058 = vld [vmem:[#allocation2 + $0xc8] sm:$0xf]
      %v2059 = vld [vmem:[#allocation2 + $0xcc] sm:$0x1]
      %v2109 = vunpack.c.l.b16 %v2011
      %v2110 = vunpack.c.l.b16 %v2012
      %v2111 = vunpack.c.l.b16 %v2013
      %v2112 = vunpack.c.l.b16 %v2014
      %v2113 = vunpack.c.l.b16 %v2015
      %v2114 = vunpack.c.l.b16 %v2016
      %v2115 = vunpack.c.l.b16 %v2017
      %v2116 = vunpack.c.l.b16 %v2018
      %v2117 = vunpack.c.l.b16 %v2019
      %v2118 = vunpack.c.l.b16 %v2020
      %v2119 = vunpack.c.l.b16 %v2021
      %v2120 = vunpack.c.l.b16 %v2022
      %v2121 = vunpack.c.l.b16 %v2023
      %v2122 = vunpack.c.l.b16 %v2024
      %v2123 = vunpack.c.l.b16 %v2025
      %v2124 = vunpack.c.l.b16 %v2026
      %v2125 = vunpack.c.l.b16 %v2027
      %v2126 = vunpack.c.l.b16 %v2028
      %v2127 = vunpack.c.l.b16 %v2029
      %v2128 = vunpack.c.l.b16 %v2030
      %v2129 = vunpack.c.l.b16 %v2031
      %v2130 = vunpack.c.l.b16 %v2032
      %v2131 = vunpack.c.l.b16 %v2033
      %v2132 = vunpack.c.l.b16 %v2034
      %v2133 = vunpack.c.l.b16 %v2035
      %v2134 = vunpack.c.l.b16 %v2036
      %v2135 = vunpack.c.l.b16 %v2037
      %v2136 = vunpack.c.l.b16 %v2038
      %v2137 = vunpack.c.l.b16 %v2039
      %v2138 = vunpack.c.l.b16 %v2040
      %v2139 = vunpack.c.l.b16 %v2041
      %v2140 = vunpack.c.l.b16 %v2042
      %v2141 = vunpack.c.l.b16 %v2043
      %v2142 = vunpack.c.l.b16 %v2044
      %v2143 = vunpack.c.l.b16 %v2045
      %v2144 = vunpack.c.l.b16 %v2046
      %v2145 = vunpack.c.l.b16 %v2047
      %v2146 = vunpack.c.l.b16 %v2048
      %v2147 = vunpack.c.l.b16 %v2049
      %v2148 = vunpack.c.l.b16 %v2050
      %v2149 = vunpack.c.l.b16 %v2051
      %v2150 = vunpack.c.l.b16 %v2052
      %v2151 = vunpack.c.l.b16 %v2053
      %v2152 = vunpack.c.l.b16 %v2054
      %v2153 = vunpack.c.l.b16 %v2055
      %v2154 = vunpack.c.l.b16 %v2056
      %v2155 = vunpack.c.l.b16 %v2057
      %v2156 = vunpack.c.l.b16 %v2058
      %v2157 = vunpack.c.l.b16 %v2059
      %v2158 = vpack.c.b16 %v2110, %v2109
      %v2159 = vpack.c.b16 %v2112, %v2111
      %v2160 = vpack.c.b16 %v2114, %v2113
      %v2161 = vpack.c.b16 %v2116, %v2115
      %v2162 = vpack.c.b16 %v2118, %v2117
      %v2163 = vpack.c.b16 %v2120, %v2119
      %v2164 = vpack.c.b16 %v2122, %v2121
      %v2165 = vpack.c.b16 %v2124, %v2123
      %v2166 = vpack.c.b16 %v2126, %v2125
      %v2167 = vpack.c.b16 %v2128, %v2127
      %v2168 = vpack.c.b16 %v2130, %v2129
      %v2169 = vpack.c.b16 %v2132, %v2131
      %v2170 = vpack.c.b16 %v2134, %v2133
      %v2171 = vpack.c.b16 %v2136, %v2135
      %v2172 = vpack.c.b16 %v2138, %v2137
      %v2173 = vpack.c.b16 %v2140, %v2139
      %v2174 = vpack.c.b16 %v2142, %v2141
      %v2175 = vpack.c.b16 %v2144, %v2143
      %v2176 = vpack.c.b16 %v2146, %v2145
      %v2177 = vpack.c.b16 %v2148, %v2147
      %v2178 = vpack.c.b16 %v2150, %v2149
      %v2179 = vpack.c.b16 %v2152, %v2151
      %v2180 = vpack.c.b16 %v2154, %v2153
      %v2181 = vpack.c.b16 %v2156, %v2155
      %v2182 = vpack.c.b16 %v2157, %v2157
      %v2184 = vshrl.u32 %v2158, 16
      %v2186 = vshll.u32 %v2158, 16
      %v2188 = vrot.slane %v2186, 1
      %v2189 = vor.u32 %v2184, %v2188
      %v2191 = vshll.u32 %v2159, 16
      %v2193 = vrot.slane %v2191, 1
      %v2194 = vsel %vm1133, %v2189, %v2193
      %v2195 = vshrl.u32 %v2159, 16
      %v2197 = vor.u32 %v2195, %v2193
      %v2199 = vshll.u32 %v2160, 16
      %v2201 = vrot.slane %v2199, 1
      %v2202 = vsel %vm1133, %v2197, %v2201
      %v2203 = vshrl.u32 %v2160, 16
      %v2205 = vor.u32 %v2203, %v2201
      %v2207 = vshll.u32 %v2161, 16
      %v2209 = vrot.slane %v2207, 1
      %v2210 = vsel %vm1133, %v2205, %v2209
      %v2211 = vshrl.u32 %v2161, 16
      %v2213 = vor.u32 %v2211, %v2209
      %v2215 = vshll.u32 %v2162, 16
      %v2217 = vrot.slane %v2215, 1
      %v2218 = vsel %vm1133, %v2213, %v2217
      %v2219 = vshrl.u32 %v2162, 16
      %v2221 = vor.u32 %v2219, %v2217
      %v2223 = vshll.u32 %v2163, 16
      %v2225 = vrot.slane %v2223, 1
      %v2226 = vsel %vm1133, %v2221, %v2225
      %v2227 = vshrl.u32 %v2163, 16
      %v2229 = vor.u32 %v2227, %v2225
      %v2231 = vshll.u32 %v2164, 16
      %v2233 = vrot.slane %v2231, 1
      %v2234 = vsel %vm1133, %v2229, %v2233
      %v2235 = vshrl.u32 %v2164, 16
      %v2237 = vor.u32 %v2235, %v2233
      %v2239 = vshll.u32 %v2165, 16
      %v2241 = vrot.slane %v2239, 1
      %v2242 = vsel %vm1133, %v2237, %v2241
      %v2243 = vshrl.u32 %v2165, 16
      %v2245 = vor.u32 %v2243, %v2241
      %v2247 = vshll.u32 %v2166, 16
      %v2249 = vrot.slane %v2247, 1
      %v2250 = vsel %vm1133, %v2245, %v2249
      %v2251 = vshrl.u32 %v2166, 16
      %v2253 = vor.u32 %v2251, %v2249
      %v2255 = vshll.u32 %v2167, 16
      %v2257 = vrot.slane %v2255, 1
      %v2258 = vsel %vm1133, %v2253, %v2257
      %v2259 = vshrl.u32 %v2167, 16
      %v2261 = vor.u32 %v2259, %v2257
      %v2263 = vshll.u32 %v2168, 16
      %v2265 = vrot.slane %v2263, 1
      %v2266 = vsel %vm1133, %v2261, %v2265
      %v2267 = vshrl.u32 %v2168, 16
      %v2269 = vor.u32 %v2267, %v2265
      %v2271 = vshll.u32 %v2169, 16
      %v2273 = vrot.slane %v2271, 1
      %v2274 = vsel %vm1133, %v2269, %v2273
      %v2275 = vshrl.u32 %v2169, 16
      %v2277 = vor.u32 %v2275, %v2273
      %v2279 = vshll.u32 %v2170, 16
      %v2281 = vrot.slane %v2279, 1
      %v2282 = vsel %vm1133, %v2277, %v2281
      %v2283 = vshrl.u32 %v2170, 16
      %v2285 = vor.u32 %v2283, %v2281
      %v2287 = vshll.u32 %v2171, 16
      %v2289 = vrot.slane %v2287, 1
      %v2290 = vsel %vm1133, %v2285, %v2289
      %v2291 = vshrl.u32 %v2171, 16
      %v2293 = vor.u32 %v2291, %v2289
      %v2295 = vshll.u32 %v2172, 16
      %v2297 = vrot.slane %v2295, 1
      %v2298 = vsel %vm1133, %v2293, %v2297
      %v2299 = vshrl.u32 %v2172, 16
      %v2301 = vor.u32 %v2299, %v2297
      %v2303 = vshll.u32 %v2173, 16
      %v2305 = vrot.slane %v2303, 1
      %v2306 = vsel %vm1133, %v2301, %v2305
      %v2307 = vshrl.u32 %v2173, 16
      %v2309 = vor.u32 %v2307, %v2305
      %v2311 = vshll.u32 %v2174, 16
      %v2313 = vrot.slane %v2311, 1
      %v2314 = vsel %vm1133, %v2309, %v2313
      %v2315 = vshrl.u32 %v2174, 16
      %v2317 = vor.u32 %v2315, %v2313
      %v2319 = vshll.u32 %v2175, 16
      %v2321 = vrot.slane %v2319, 1
      %v2322 = vsel %vm1133, %v2317, %v2321
      %v2323 = vshrl.u32 %v2175, 16
      %v2325 = vor.u32 %v2323, %v2321
      %v2327 = vshll.u32 %v2176, 16
      %v2329 = vrot.slane %v2327, 1
      %v2330 = vsel %vm1133, %v2325, %v2329
      %v2331 = vshrl.u32 %v2176, 16
      %v2333 = vor.u32 %v2331, %v2329
      %v2335 = vshll.u32 %v2177, 16
      %v2337 = vrot.slane %v2335, 1
      %v2338 = vsel %vm1133, %v2333, %v2337
      %v2339 = vshrl.u32 %v2177, 16
      %v2341 = vor.u32 %v2339, %v2337
      %v2343 = vshll.u32 %v2178, 16
      %v2345 = vrot.slane %v2343, 1
      %v2346 = vsel %vm1133, %v2341, %v2345
      %v2347 = vshrl.u32 %v2178, 16
      %v2349 = vor.u32 %v2347, %v2345
      %v2351 = vshll.u32 %v2179, 16
      %v2353 = vrot.slane %v2351, 1
      %v2354 = vsel %vm1133, %v2349, %v2353
      %v2355 = vshrl.u32 %v2179, 16
      %v2357 = vor.u32 %v2355, %v2353
      %v2359 = vshll.u32 %v2180, 16
      %v2361 = vrot.slane %v2359, 1
      %v2362 = vsel %vm1133, %v2357, %v2361
      %v2363 = vshrl.u32 %v2180, 16
      %v2365 = vor.u32 %v2363, %v2361
      %v2367 = vshll.u32 %v2181, 16
      %v2369 = vrot.slane %v2367, 1
      %v2370 = vsel %vm1133, %v2365, %v2369
      %v2371 = vshrl.u32 %v2181, 16
      %v2373 = vor.u32 %v2371, %v2369
      %v2375 = vshll.u32 %v2182, 16
      %v2377 = vrot.slane %v2375, 1
      %v2378 = vsel %vm1133, %v2373, %v2377
      %2379 = vrot.lane.b32.xlu0 %v2194, 16
      %v2380 = vpop.permute.xlu0 %2379
      %2381 = vrot.lane.b32.xlu0 %v2202, 16
      %v2382 = vpop.permute.xlu0 %2381
      %2383 = vrot.lane.b32.xlu0 %v2210, 16
      %v2384 = vpop.permute.xlu0 %2383
      %2385 = vrot.lane.b32.xlu0 %v2218, 16
      %v2386 = vpop.permute.xlu0 %2385
      %2387 = vrot.lane.b32.xlu0 %v2226, 16
      %v2388 = vpop.permute.xlu0 %2387
      %2389 = vrot.lane.b32.xlu0 %v2234, 16
      %v2390 = vpop.permute.xlu0 %2389
      %2391 = vrot.lane.b32.xlu0 %v2242, 16
      %v2392 = vpop.permute.xlu0 %2391
      %2393 = vrot.lane.b32.xlu0 %v2250, 16
      %v2394 = vpop.permute.xlu0 %2393
      %2395 = vrot.lane.b32.xlu0 %v2258, 16
      %v2396 = vpop.permute.xlu0 %2395
      %2397 = vrot.lane.b32.xlu0 %v2266, 16
      %v2398 = vpop.permute.xlu0 %2397
      %2399 = vrot.lane.b32.xlu0 %v2274, 16
      %v2400 = vpop.permute.xlu0 %2399
      %2401 = vrot.lane.b32.xlu0 %v2282, 16
      %v2402 = vpop.permute.xlu0 %2401
      %2403 = vrot.lane.b32.xlu0 %v2290, 16
      %v2404 = vpop.permute.xlu0 %2403
      %2405 = vrot.lane.b32.xlu0 %v2298, 16
      %v2406 = vpop.permute.xlu0 %2405
      %2407 = vrot.lane.b32.xlu0 %v2306, 16
      %v2408 = vpop.permute.xlu0 %2407
      %2409 = vrot.lane.b32.xlu0 %v2314, 16
      %v2410 = vpop.permute.xlu0 %2409
      %2411 = vrot.lane.b32.xlu0 %v2322, 16
      %v2412 = vpop.permute.xlu0 %2411
      %2413 = vrot.lane.b32.xlu0 %v2330, 16
      %v2414 = vpop.permute.xlu0 %2413
      %2415 = vrot.lane.b32.xlu0 %v2338, 16
      %v2416 = vpop.permute.xlu0 %2415
      %2417 = vrot.lane.b32.xlu0 %v2346, 16
      %v2418 = vpop.permute.xlu0 %2417
      %2419 = vrot.lane.b32.xlu0 %v2354, 16
      %v2420 = vpop.permute.xlu0 %2419
      %2421 = vrot.lane.b32.xlu0 %v2362, 16
      %v2422 = vpop.permute.xlu0 %2421
      %2423 = vrot.lane.b32.xlu0 %v2370, 16
      %v2424 = vpop.permute.xlu0 %2423
      %2425 = vrot.lane.b32.xlu0 %v2378, 16
      %v2426 = vpop.permute.xlu0 %2425
      %vm2451 = vcmask 162944
      %2452 = vst.msk [vmem:[#allocation3] sm:$0xff] %vm2451, %v2380
      %2453 = vst.msk [vmem:[#allocation3 + $0x8] sm:$0xff] %vm2451, %v2382
      %2454 = vst.msk [vmem:[#allocation3 + $0x10] sm:$0xff] %vm2451, %v2384
      %2455 = vst.msk [vmem:[#allocation3 + $0x18] sm:$0xff] %vm2451, %v2386
      %2456 = vst.msk [vmem:[#allocation3 + $0x20] sm:$0xff] %vm2451, %v2388
      %2457 = vst.msk [vmem:[#allocation3 + $0x28] sm:$0xff] %vm2451, %v2390
      %2458 = vst.msk [vmem:[#allocation3 + $0x30] sm:$0xff] %vm2451, %v2392
      %2459 = vst.msk [vmem:[#allocation3 + $0x38] sm:$0xff] %vm2451, %v2394
      %2460 = vst.msk [vmem:[#allocation3 + $0x40] sm:$0xff] %vm2451, %v2396
      %2461 = vst.msk [vmem:[#allocation3 + $0x48] sm:$0xff] %vm2451, %v2398
      %2462 = vst.msk [vmem:[#allocation3 + $0x50] sm:$0xff] %vm2451, %v2400
      %2463 = vst.msk [vmem:[#allocation3 + $0x58] sm:$0xff] %vm2451, %v2402
      %2464 = vst.msk [vmem:[#allocation3 + $0x60] sm:$0xff] %vm2451, %v2404
      %2465 = vst.msk [vmem:[#allocation3 + $0x68] sm:$0xff] %vm2451, %v2406
      %2466 = vst.msk [vmem:[#allocation3 + $0x70] sm:$0xff] %vm2451, %v2408
      %2467 = vst.msk [vmem:[#allocation3 + $0x78] sm:$0xff] %vm2451, %v2410
      %2468 = vst.msk [vmem:[#allocation3 + $0x80] sm:$0xff] %vm2451, %v2412
      %2469 = vst.msk [vmem:[#allocation3 + $0x88] sm:$0xff] %vm2451, %v2414
      %2470 = vst.msk [vmem:[#allocation3 + $0x90] sm:$0xff] %vm2451, %v2416
      %2471 = vst.msk [vmem:[#allocation3 + $0x98] sm:$0xff] %vm2451, %v2418
      %2472 = vst.msk [vmem:[#allocation3 + $0xa0] sm:$0xff] %vm2451, %v2420
      %2473 = vst.msk [vmem:[#allocation3 + $0xa8] sm:$0xff] %vm2451, %v2422
      %2474 = vst.msk [vmem:[#allocation3 + $0xb0] sm:$0xff] %vm2451, %v2424
      %2475 = vst.msk [vmem:[#allocation3 + $0xb8] sm:$0xff] %vm2451, %v2426
      %v2476 = vld [vmem:[#allocation2 + $0xc] sm:$0xe]
      %v2477 = vld [vmem:[#allocation2 + $0x10] sm:$0xf]
      %v2478 = vld [vmem:[#allocation2 + $0x14] sm:$0xf]
      %v2479 = vld [vmem:[#allocation2 + $0x18] sm:$0xf]
      %v2480 = vld [vmem:[#allocation2 + $0x1c] sm:$0xf]
      %v2481 = vld [vmem:[#allocation2 + $0x20] sm:$0xf]
      %v2482 = vld [vmem:[#allocation2 + $0x24] sm:$0xf]
      %v2483 = vld [vmem:[#allocation2 + $0x28] sm:$0xf]
      %v2484 = vld [vmem:[#allocation2 + $0x2c] sm:$0xf]
      %v2485 = vld [vmem:[#allocation2 + $0x30] sm:$0xf]
      %v2486 = vld [vmem:[#allocation2 + $0x34] sm:$0xf]
      %v2487 = vld [vmem:[#allocation2 + $0x38] sm:$0xf]
      %v2488 = vld [vmem:[#allocation2 + $0x3c] sm:$0xf]
      %v2489 = vld [vmem:[#allocation2 + $0x40] sm:$0xf]
      %v2490 = vld [vmem:[#allocation2 + $0x44] sm:$0xf]
      %v2491 = vld [vmem:[#allocation2 + $0x48] sm:$0xf]
      %v2492 = vld [vmem:[#allocation2 + $0x4c] sm:$0xf]
      %v2493 = vld [vmem:[#allocation2 + $0x50] sm:$0xf]
      %v2494 = vld [vmem:[#allocation2 + $0x54] sm:$0xf]
      %v2495 = vld [vmem:[#allocation2 + $0x58] sm:$0xf]
      %v2496 = vld [vmem:[#allocation2 + $0x5c] sm:$0xf]
      %v2497 = vld [vmem:[#allocation2 + $0x60] sm:$0xf]
      %v2498 = vld [vmem:[#allocation2 + $0x64] sm:$0xf]
      %v2499 = vld [vmem:[#allocation2 + $0x68] sm:$0xf]
      %v2500 = vld [vmem:[#allocation2 + $0x6c] sm:$0xf]
      %v2501 = vld [vmem:[#allocation2 + $0x70] sm:$0xf]
      %v2502 = vld [vmem:[#allocation2 + $0x74] sm:$0xf]
      %v2503 = vld [vmem:[#allocation2 + $0x78] sm:$0xf]
      %v2504 = vld [vmem:[#allocation2 + $0x7c] sm:$0xf]
      %v2505 = vld [vmem:[#allocation2 + $0x80] sm:$0xf]
      %v2506 = vld [vmem:[#allocation2 + $0x84] sm:$0xf]
      %v2507 = vld [vmem:[#allocation2 + $0x88] sm:$0xf]
      %v2508 = vld [vmem:[#allocation2 + $0x8c] sm:$0xf]
      %v2509 = vld [vmem:[#allocation2 + $0x90] sm:$0xf]
      %v2510 = vld [vmem:[#allocation2 + $0x94] sm:$0xf]
      %v2511 = vld [vmem:[#allocation2 + $0x98] sm:$0xf]
      %v2512 = vld [vmem:[#allocation2 + $0x9c] sm:$0xf]
      %v2513 = vld [vmem:[#allocation2 + $0xa0] sm:$0xf]
      %v2514 = vld [vmem:[#allocation2 + $0xa4] sm:$0xf]
      %v2515 = vld [vmem:[#allocation2 + $0xa8] sm:$0xf]
      %v2516 = vld [vmem:[#allocation2 + $0xac] sm:$0xf]
      %v2517 = vld [vmem:[#allocation2 + $0xb0] sm:$0xf]
      %v2518 = vld [vmem:[#allocation2 + $0xb4] sm:$0xf]
      %v2519 = vld [vmem:[#allocation2 + $0xb8] sm:$0xf]
      %v2520 = vld [vmem:[#allocation2 + $0xbc] sm:$0xf]
      %v2521 = vld [vmem:[#allocation2 + $0xc0] sm:$0xf]
      %v2522 = vld [vmem:[#allocation2 + $0xc4] sm:$0xf]
      %v2523 = vld [vmem:[#allocation2 + $0xc8] sm:$0xf]
      %v2524 = vld [vmem:[#allocation2 + $0xcc] sm:$0x1]
      %v2574 = vunpack.c.l.b16 %v2476
      %v2575 = vunpack.c.l.b16 %v2477
      %v2576 = vunpack.c.l.b16 %v2478
      %v2577 = vunpack.c.l.b16 %v2479
      %v2578 = vunpack.c.l.b16 %v2480
      %v2579 = vunpack.c.l.b16 %v2481
      %v2580 = vunpack.c.l.b16 %v2482
      %v2581 = vunpack.c.l.b16 %v2483
      %v2582 = vunpack.c.l.b16 %v2484
      %v2583 = vunpack.c.l.b16 %v2485
      %v2584 = vunpack.c.l.b16 %v2486
      %v2585 = vunpack.c.l.b16 %v2487
      %v2586 = vunpack.c.l.b16 %v2488
      %v2587 = vunpack.c.l.b16 %v2489
      %v2588 = vunpack.c.l.b16 %v2490
      %v2589 = vunpack.c.l.b16 %v2491
      %v2590 = vunpack.c.l.b16 %v2492
      %v2591 = vunpack.c.l.b16 %v2493
      %v2592 = vunpack.c.l.b16 %v2494
      %v2593 = vunpack.c.l.b16 %v2495
      %v2594 = vunpack.c.l.b16 %v2496
      %v2595 = vunpack.c.l.b16 %v2497
      %v2596 = vunpack.c.l.b16 %v2498
      %v2597 = vunpack.c.l.b16 %v2499
      %v2598 = vunpack.c.l.b16 %v2500
      %v2599 = vunpack.c.l.b16 %v2501
      %v2600 = vunpack.c.l.b16 %v2502
      %v2601 = vunpack.c.l.b16 %v2503
      %v2602 = vunpack.c.l.b16 %v2504
      %v2603 = vunpack.c.l.b16 %v2505
      %v2604 = vunpack.c.l.b16 %v2506
      %v2605 = vunpack.c.l.b16 %v2507
      %v2606 = vunpack.c.l.b16 %v2508
      %v2607 = vunpack.c.l.b16 %v2509
      %v2608 = vunpack.c.l.b16 %v2510
      %v2609 = vunpack.c.l.b16 %v2511
      %v2610 = vunpack.c.l.b16 %v2512
      %v2611 = vunpack.c.l.b16 %v2513
      %v2612 = vunpack.c.l.b16 %v2514
      %v2613 = vunpack.c.l.b16 %v2515
      %v2614 = vunpack.c.l.b16 %v2516
      %v2615 = vunpack.c.l.b16 %v2517
      %v2616 = vunpack.c.l.b16 %v2518
      %v2617 = vunpack.c.l.b16 %v2519
      %v2618 = vunpack.c.l.b16 %v2520
      %v2619 = vunpack.c.l.b16 %v2521
      %v2620 = vunpack.c.l.b16 %v2522
      %v2621 = vunpack.c.l.b16 %v2523
      %v2622 = vunpack.c.l.b16 %v2524
      %v2623 = vpack.c.b16 %v2575, %v2574
      %v2624 = vpack.c.b16 %v2577, %v2576
      %v2625 = vpack.c.b16 %v2579, %v2578
      %v2626 = vpack.c.b16 %v2581, %v2580
      %v2627 = vpack.c.b16 %v2583, %v2582
      %v2628 = vpack.c.b16 %v2585, %v2584
      %v2629 = vpack.c.b16 %v2587, %v2586
      %v2630 = vpack.c.b16 %v2589, %v2588
      %v2631 = vpack.c.b16 %v2591, %v2590
      %v2632 = vpack.c.b16 %v2593, %v2592
      %v2633 = vpack.c.b16 %v2595, %v2594
      %v2634 = vpack.c.b16 %v2597, %v2596
      %v2635 = vpack.c.b16 %v2599, %v2598
      %v2636 = vpack.c.b16 %v2601, %v2600
      %v2637 = vpack.c.b16 %v2603, %v2602
      %v2638 = vpack.c.b16 %v2605, %v2604
      %v2639 = vpack.c.b16 %v2607, %v2606
      %v2640 = vpack.c.b16 %v2609, %v2608
      %v2641 = vpack.c.b16 %v2611, %v2610
      %v2642 = vpack.c.b16 %v2613, %v2612
      %v2643 = vpack.c.b16 %v2615, %v2614
      %v2644 = vpack.c.b16 %v2617, %v2616
      %v2645 = vpack.c.b16 %v2619, %v2618
      %v2646 = vpack.c.b16 %v2621, %v2620
      %v2647 = vpack.c.b16 %v2622, %v2622
      %v2648 = vrot.slane %v2623, 1
      %v2649 = vrot.slane %v2624, 1
      %v2650 = vsel %vm1599, %v2648, %v2649
      %v2651 = vrot.slane %v2625, 1
      %v2652 = vsel %vm1599, %v2649, %v2651
      %v2653 = vrot.slane %v2626, 1
      %v2654 = vsel %vm1599, %v2651, %v2653
      %v2655 = vrot.slane %v2627, 1
      %v2656 = vsel %vm1599, %v2653, %v2655
      %v2657 = vrot.slane %v2628, 1
      %v2658 = vsel %vm1599, %v2655, %v2657
      %v2659 = vrot.slane %v2629, 1
      %v2660 = vsel %vm1599, %v2657, %v2659
      %v2661 = vrot.slane %v2630, 1
      %v2662 = vsel %vm1599, %v2659, %v2661
      %v2663 = vrot.slane %v2631, 1
      %v2664 = vsel %vm1599, %v2661, %v2663
      %v2665 = vrot.slane %v2632, 1
      %v2666 = vsel %vm1599, %v2663, %v2665
      %v2667 = vrot.slane %v2633, 1
      %v2668 = vsel %vm1599, %v2665, %v2667
      %v2669 = vrot.slane %v2634, 1
      %v2670 = vsel %vm1599, %v2667, %v2669
      %v2671 = vrot.slane %v2635, 1
      %v2672 = vsel %vm1599, %v2669, %v2671
      %v2673 = vrot.slane %v2636, 1
      %v2674 = vsel %vm1599, %v2671, %v2673
      %v2675 = vrot.slane %v2637, 1
      %v2676 = vsel %vm1599, %v2673, %v2675
      %v2677 = vrot.slane %v2638, 1
      %v2678 = vsel %vm1599, %v2675, %v2677
      %v2679 = vrot.slane %v2639, 1
      %v2680 = vsel %vm1599, %v2677, %v2679
      %v2681 = vrot.slane %v2640, 1
      %v2682 = vsel %vm1599, %v2679, %v2681
      %v2683 = vrot.slane %v2641, 1
      %v2684 = vsel %vm1599, %v2681, %v2683
      %v2685 = vrot.slane %v2642, 1
      %v2686 = vsel %vm1599, %v2683, %v2685
      %v2687 = vrot.slane %v2643, 1
      %v2688 = vsel %vm1599, %v2685, %v2687
      %v2689 = vrot.slane %v2644, 1
      %v2690 = vsel %vm1599, %v2687, %v2689
      %v2691 = vrot.slane %v2645, 1
      %v2692 = vsel %vm1599, %v2689, %v2691
      %v2693 = vrot.slane %v2646, 1
      %v2694 = vsel %vm1599, %v2691, %v2693
      %v2695 = vrot.slane %v2647, 1
      %v2696 = vsel %vm1599, %v2693, %v2695
      %2697 = vrot.lane.b32.xlu0 %v2650, 20
      %v2698 = vpop.permute.xlu0 %2697
      %2699 = vrot.lane.b32.xlu0 %v2652, 20
      %v2700 = vpop.permute.xlu0 %2699
      %2701 = vrot.lane.b32.xlu0 %v2654, 20
      %v2702 = vpop.permute.xlu0 %2701
      %2703 = vrot.lane.b32.xlu0 %v2656, 20
      %v2704 = vpop.permute.xlu0 %2703
      %2705 = vrot.lane.b32.xlu0 %v2658, 20
      %v2706 = vpop.permute.xlu0 %2705
      %2707 = vrot.lane.b32.xlu0 %v2660, 20
      %v2708 = vpop.permute.xlu0 %2707
      %2709 = vrot.lane.b32.xlu0 %v2662, 20
      %v2710 = vpop.permute.xlu0 %2709
      %2711 = vrot.lane.b32.xlu0 %v2664, 20
      %v2712 = vpop.permute.xlu0 %2711
      %2713 = vrot.lane.b32.xlu0 %v2666, 20
      %v2714 = vpop.permute.xlu0 %2713
      %2715 = vrot.lane.b32.xlu0 %v2668, 20
      %v2716 = vpop.permute.xlu0 %2715
      %2717 = vrot.lane.b32.xlu0 %v2670, 20
      %v2718 = vpop.permute.xlu0 %2717
      %2719 = vrot.lane.b32.xlu0 %v2672, 20
      %v2720 = vpop.permute.xlu0 %2719
      %2721 = vrot.lane.b32.xlu0 %v2674, 20
      %v2722 = vpop.permute.xlu0 %2721
      %2723 = vrot.lane.b32.xlu0 %v2676, 20
      %v2724 = vpop.permute.xlu0 %2723
      %2725 = vrot.lane.b32.xlu0 %v2678, 20
      %v2726 = vpop.permute.xlu0 %2725
      %2727 = vrot.lane.b32.xlu0 %v2680, 20
      %v2728 = vpop.permute.xlu0 %2727
      %2729 = vrot.lane.b32.xlu0 %v2682, 20
      %v2730 = vpop.permute.xlu0 %2729
      %2731 = vrot.lane.b32.xlu0 %v2684, 20
      %v2732 = vpop.permute.xlu0 %2731
      %2733 = vrot.lane.b32.xlu0 %v2686, 20
      %v2734 = vpop.permute.xlu0 %2733
      %2735 = vrot.lane.b32.xlu0 %v2688, 20
      %v2736 = vpop.permute.xlu0 %2735
      %2737 = vrot.lane.b32.xlu0 %v2690, 20
      %v2738 = vpop.permute.xlu0 %2737
      %2739 = vrot.lane.b32.xlu0 %v2692, 20
      %v2740 = vpop.permute.xlu0 %2739
      %2741 = vrot.lane.b32.xlu0 %v2694, 20
      %v2742 = vpop.permute.xlu0 %2741
      %2743 = vrot.lane.b32.xlu0 %v2696, 20
      %v2744 = vpop.permute.xlu0 %2743
      %vm2769 = vcmask 195744
      %2770 = vst.msk [vmem:[#allocation3] sm:$0xff] %vm2769, %v2698
      %2771 = vst.msk [vmem:[#allocation3 + $0x8] sm:$0xff] %vm2769, %v2700
      %2772 = vst.msk [vmem:[#allocation3 + $0x10] sm:$0xff] %vm2769, %v2702
      %2773 = vst.msk [vmem:[#allocation3 + $0x18] sm:$0xff] %vm2769, %v2704
      %2774 = vst.msk [vmem:[#allocation3 + $0x20] sm:$0xff] %vm2769, %v2706
      %2775 = vst.msk [vmem:[#allocation3 + $0x28] sm:$0xff] %vm2769, %v2708
      %2776 = vst.msk [vmem:[#allocation3 + $0x30] sm:$0xff] %vm2769, %v2710
      %2777 = vst.msk [vmem:[#allocation3 + $0x38] sm:$0xff] %vm2769, %v2712
      %2778 = vst.msk [vmem:[#allocation3 + $0x40] sm:$0xff] %vm2769, %v2714
      %2779 = vst.msk [vmem:[#allocation3 + $0x48] sm:$0xff] %vm2769, %v2716
      %2780 = vst.msk [vmem:[#allocation3 + $0x50] sm:$0xff] %vm2769, %v2718
      %2781 = vst.msk [vmem:[#allocation3 + $0x58] sm:$0xff] %vm2769, %v2720
      %2782 = vst.msk [vmem:[#allocation3 + $0x60] sm:$0xff] %vm2769, %v2722
      %2783 = vst.msk [vmem:[#allocation3 + $0x68] sm:$0xff] %vm2769, %v2724
      %2784 = vst.msk [vmem:[#allocation3 + $0x70] sm:$0xff] %vm2769, %v2726
      %2785 = vst.msk [vmem:[#allocation3 + $0x78] sm:$0xff] %vm2769, %v2728
      %2786 = vst.msk [vmem:[#allocation3 + $0x80] sm:$0xff] %vm2769, %v2730
      %2787 = vst.msk [vmem:[#allocation3 + $0x88] sm:$0xff] %vm2769, %v2732
      %2788 = vst.msk [vmem:[#allocation3 + $0x90] sm:$0xff] %vm2769, %v2734
      %2789 = vst.msk [vmem:[#allocation3 + $0x98] sm:$0xff] %vm2769, %v2736
      %2790 = vst.msk [vmem:[#allocation3 + $0xa0] sm:$0xff] %vm2769, %v2738
      %2791 = vst.msk [vmem:[#allocation3 + $0xa8] sm:$0xff] %vm2769, %v2740
      %2792 = vst.msk [vmem:[#allocation3 + $0xb0] sm:$0xff] %vm2769, %v2742
      %2793 = vst.msk [vmem:[#allocation3 + $0xb8] sm:$0xff] %vm2769, %v2744
      %v2794 = vld [vmem:[#allocation2 + $0x18] sm:$0xf]
      %v2795 = vld [vmem:[#allocation2 + $0x1c] sm:$0xf]
      %v2796 = vld [vmem:[#allocation2 + $0x20] sm:$0xf]
      %v2797 = vld [vmem:[#allocation2 + $0x24] sm:$0xf]
      %v2798 = vld [vmem:[#allocation2 + $0x28] sm:$0xf]
      %v2799 = vld [vmem:[#allocation2 + $0x2c] sm:$0xf]
      %v2800 = vld [vmem:[#allocation2 + $0x30] sm:$0xf]
      %v2801 = vld [vmem:[#allocation2 + $0x34] sm:$0xf]
      %v2802 = vld [vmem:[#allocation2 + $0x38] sm:$0xf]
      %v2803 = vld [vmem:[#allocation2 + $0x3c] sm:$0xf]
      %v2804 = vld [vmem:[#allocation2 + $0x40] sm:$0xf]
      %v2805 = vld [vmem:[#allocation2 + $0x44] sm:$0xf]
      %v2806 = vld [vmem:[#allocation2 + $0x48] sm:$0xf]
      %v2807 = vld [vmem:[#allocation2 + $0x4c] sm:$0xf]
      %v2808 = vld [vmem:[#allocation2 + $0x50] sm:$0xf]
      %v2809 = vld [vmem:[#allocation2 + $0x54] sm:$0xf]
      %v2810 = vld [vmem:[#allocation2 + $0x58] sm:$0xf]
      %v2811 = vld [vmem:[#allocation2 + $0x5c] sm:$0xf]
      %v2812 = vld [vmem:[#allocation2 + $0x60] sm:$0xf]
      %v2813 = vld [vmem:[#allocation2 + $0x64] sm:$0xf]
      %v2814 = vld [vmem:[#allocation2 + $0x68] sm:$0xf]
      %v2815 = vld [vmem:[#allocation2 + $0x6c] sm:$0xf]
      %v2816 = vld [vmem:[#allocation2 + $0x70] sm:$0xf]
      %v2817 = vld [vmem:[#allocation2 + $0x74] sm:$0xf]
      %v2818 = vld [vmem:[#allocation2 + $0x78] sm:$0xf]
      %v2819 = vld [vmem:[#allocation2 + $0x7c] sm:$0xf]
      %v2820 = vld [vmem:[#allocation2 + $0x80] sm:$0xf]
      %v2821 = vld [vmem:[#allocation2 + $0x84] sm:$0xf]
      %v2822 = vld [vmem:[#allocation2 + $0x88] sm:$0xf]
      %v2823 = vld [vmem:[#allocation2 + $0x8c] sm:$0xf]
      %v2824 = vld [vmem:[#allocation2 + $0x90] sm:$0xf]
      %v2825 = vld [vmem:[#allocation2 + $0x94] sm:$0xf]
      %v2826 = vld [vmem:[#allocation2 + $0x98] sm:$0xf]
      %v2827 = vld [vmem:[#allocation2 + $0x9c] sm:$0xf]
      %v2828 = vld [vmem:[#allocation2 + $0xa0] sm:$0xf]
      %v2829 = vld [vmem:[#allocation2 + $0xa4] sm:$0xf]
      %v2830 = vld [vmem:[#allocation2 + $0xa8] sm:$0xf]
      %v2831 = vld [vmem:[#allocation2 + $0xac] sm:$0xf]
      %v2832 = vld [vmem:[#allocation2 + $0xb0] sm:$0xf]
      %v2833 = vld [vmem:[#allocation2 + $0xb4] sm:$0xf]
      %v2834 = vld [vmem:[#allocation2 + $0xb8] sm:$0xf]
      %v2835 = vld [vmem:[#allocation2 + $0xbc] sm:$0xf]
      %v2836 = vld [vmem:[#allocation2 + $0xc0] sm:$0xf]
      %v2837 = vld [vmem:[#allocation2 + $0xc4] sm:$0xf]
      %v2838 = vld [vmem:[#allocation2 + $0xc8] sm:$0xf]
      %v2839 = vld [vmem:[#allocation2 + $0xcc] sm:$0xf]
      %v2840 = vld [vmem:[#allocation2 + $0xd0] sm:$0xf]
      %v2841 = vld [vmem:[#allocation2 + $0xd4] sm:$0xf]
      %v2890 = vunpack.c.l.b16 %v2794
      %v2891 = vunpack.c.l.b16 %v2795
      %v2892 = vunpack.c.l.b16 %v2796
      %v2893 = vunpack.c.l.b16 %v2797
      %v2894 = vunpack.c.l.b16 %v2798
      %v2895 = vunpack.c.l.b16 %v2799
      %v2896 = vunpack.c.l.b16 %v2800
      %v2897 = vunpack.c.l.b16 %v2801
      %v2898 = vunpack.c.l.b16 %v2802
      %v2899 = vunpack.c.l.b16 %v2803
      %v2900 = vunpack.c.l.b16 %v2804
      %v2901 = vunpack.c.l.b16 %v2805
      %v2902 = vunpack.c.l.b16 %v2806
      %v2903 = vunpack.c.l.b16 %v2807
      %v2904 = vunpack.c.l.b16 %v2808
      %v2905 = vunpack.c.l.b16 %v2809
      %v2906 = vunpack.c.l.b16 %v2810
      %v2907 = vunpack.c.l.b16 %v2811
      %v2908 = vunpack.c.l.b16 %v2812
      %v2909 = vunpack.c.l.b16 %v2813
      %v2910 = vunpack.c.l.b16 %v2814
      %v2911 = vunpack.c.l.b16 %v2815
      %v2912 = vunpack.c.l.b16 %v2816
      %v2913 = vunpack.c.l.b16 %v2817
      %v2914 = vunpack.c.l.b16 %v2818
      %v2915 = vunpack.c.l.b16 %v2819
      %v2916 = vunpack.c.l.b16 %v2820
      %v2917 = vunpack.c.l.b16 %v2821
      %v2918 = vunpack.c.l.b16 %v2822
      %v2919 = vunpack.c.l.b16 %v2823
      %v2920 = vunpack.c.l.b16 %v2824
      %v2921 = vunpack.c.l.b16 %v2825
      %v2922 = vunpack.c.l.b16 %v2826
      %v2923 = vunpack.c.l.b16 %v2827
      %v2924 = vunpack.c.l.b16 %v2828
      %v2925 = vunpack.c.l.b16 %v2829
      %v2926 = vunpack.c.l.b16 %v2830
      %v2927 = vunpack.c.l.b16 %v2831
      %v2928 = vunpack.c.l.b16 %v2832
      %v2929 = vunpack.c.l.b16 %v2833
      %v2930 = vunpack.c.l.b16 %v2834
      %v2931 = vunpack.c.l.b16 %v2835
      %v2932 = vunpack.c.l.b16 %v2836
      %v2933 = vunpack.c.l.b16 %v2837
      %v2934 = vunpack.c.l.b16 %v2838
      %v2935 = vunpack.c.l.b16 %v2839
      %v2936 = vunpack.c.l.b16 %v2840
      %v2937 = vunpack.c.l.b16 %v2841
      %v2938 = vpack.c.b16 %v2891, %v2890
      %v2939 = vpack.c.b16 %v2893, %v2892
      %v2940 = vpack.c.b16 %v2895, %v2894
      %v2941 = vpack.c.b16 %v2897, %v2896
      %v2942 = vpack.c.b16 %v2899, %v2898
      %v2943 = vpack.c.b16 %v2901, %v2900
      %v2944 = vpack.c.b16 %v2903, %v2902
      %v2945 = vpack.c.b16 %v2905, %v2904
      %v2946 = vpack.c.b16 %v2907, %v2906
      %v2947 = vpack.c.b16 %v2909, %v2908
      %v2948 = vpack.c.b16 %v2911, %v2910
      %v2949 = vpack.c.b16 %v2913, %v2912
      %v2950 = vpack.c.b16 %v2915, %v2914
      %v2951 = vpack.c.b16 %v2917, %v2916
      %v2952 = vpack.c.b16 %v2919, %v2918
      %v2953 = vpack.c.b16 %v2921, %v2920
      %v2954 = vpack.c.b16 %v2923, %v2922
      %v2955 = vpack.c.b16 %v2925, %v2924
      %v2956 = vpack.c.b16 %v2927, %v2926
      %v2957 = vpack.c.b16 %v2929, %v2928
      %v2958 = vpack.c.b16 %v2931, %v2930
      %v2959 = vpack.c.b16 %v2933, %v2932
      %v2960 = vpack.c.b16 %v2935, %v2934
      %v2961 = vpack.c.b16 %v2937, %v2936
      %2962 = vrot.lane.b32.xlu0 %v2938, 24
      %v2963 = vpop.permute.xlu0 %2962
      %2964 = vrot.lane.b32.xlu0 %v2939, 24
      %v2965 = vpop.permute.xlu0 %2964
      %2966 = vrot.lane.b32.xlu0 %v2940, 24
      %v2967 = vpop.permute.xlu0 %2966
      %2968 = vrot.lane.b32.xlu0 %v2941, 24
      %v2969 = vpop.permute.xlu0 %2968
      %2970 = vrot.lane.b32.xlu0 %v2942, 24
      %v2971 = vpop.permute.xlu0 %2970
      %2972 = vrot.lane.b32.xlu0 %v2943, 24
      %v2973 = vpop.permute.xlu0 %2972
      %2974 = vrot.lane.b32.xlu0 %v2944, 24
      %v2975 = vpop.permute.xlu0 %2974
      %2976 = vrot.lane.b32.xlu0 %v2945, 24
      %v2977 = vpop.permute.xlu0 %2976
      %2978 = vrot.lane.b32.xlu0 %v2946, 24
      %v2979 = vpop.permute.xlu0 %2978
      %2980 = vrot.lane.b32.xlu0 %v2947, 24
      %v2981 = vpop.permute.xlu0 %2980
      %2982 = vrot.lane.b32.xlu0 %v2948, 24
      %v2983 = vpop.permute.xlu0 %2982
      %2984 = vrot.lane.b32.xlu0 %v2949, 24
      %v2985 = vpop.permute.xlu0 %2984
      %2986 = vrot.lane.b32.xlu0 %v2950, 24
      %v2987 = vpop.permute.xlu0 %2986
      %2988 = vrot.lane.b32.xlu0 %v2951, 24
      %v2989 = vpop.permute.xlu0 %2988
      %2990 = vrot.lane.b32.xlu0 %v2952, 24
      %v2991 = vpop.permute.xlu0 %2990
      %2992 = vrot.lane.b32.xlu0 %v2953, 24
      %v2993 = vpop.permute.xlu0 %2992
      %2994 = vrot.lane.b32.xlu0 %v2954, 24
      %v2995 = vpop.permute.xlu0 %2994
      %2996 = vrot.lane.b32.xlu0 %v2955, 24
      %v2997 = vpop.permute.xlu0 %2996
      %2998 = vrot.lane.b32.xlu0 %v2956, 24
      %v2999 = vpop.permute.xlu0 %2998
      %3000 = vrot.lane.b32.xlu0 %v2957, 24
      %v3001 = vpop.permute.xlu0 %3000
      %3002 = vrot.lane.b32.xlu0 %v2958, 24
      %v3003 = vpop.permute.xlu0 %3002
      %3004 = vrot.lane.b32.xlu0 %v2959, 24
      %v3005 = vpop.permute.xlu0 %3004
      %3006 = vrot.lane.b32.xlu0 %v2960, 24
      %v3007 = vpop.permute.xlu0 %3006
      %3008 = vrot.lane.b32.xlu0 %v2961, 24
      %v3009 = vpop.permute.xlu0 %3008
      %vm3034 = vcmask 228544
      %3035 = vst.msk [vmem:[#allocation3] sm:$0xff] %vm3034, %v2963
      %3036 = vst.msk [vmem:[#allocation3 + $0x8] sm:$0xff] %vm3034, %v2965
      %3037 = vst.msk [vmem:[#allocation3 + $0x10] sm:$0xff] %vm3034, %v2967
      %3038 = vst.msk [vmem:[#allocation3 + $0x18] sm:$0xff] %vm3034, %v2969
      %3039 = vst.msk [vmem:[#allocation3 + $0x20] sm:$0xff] %vm3034, %v2971
      %3040 = vst.msk [vmem:[#allocation3 + $0x28] sm:$0xff] %vm3034, %v2973
      %3041 = vst.msk [vmem:[#allocation3 + $0x30] sm:$0xff] %vm3034, %v2975
      %3042 = vst.msk [vmem:[#allocation3 + $0x38] sm:$0xff] %vm3034, %v2977
      %3043 = vst.msk [vmem:[#allocation3 + $0x40] sm:$0xff] %vm3034, %v2979
      %3044 = vst.msk [vmem:[#allocation3 + $0x48] sm:$0xff] %vm3034, %v2981
      %3045 = vst.msk [vmem:[#allocation3 + $0x50] sm:$0xff] %vm3034, %v2983
      %3046 = vst.msk [vmem:[#allocation3 + $0x58] sm:$0xff] %vm3034, %v2985
      %3047 = vst.msk [vmem:[#allocation3 + $0x60] sm:$0xff] %vm3034, %v2987
      %3048 = vst.msk [vmem:[#allocation3 + $0x68] sm:$0xff] %vm3034, %v2989
      %3049 = vst.msk [vmem:[#allocation3 + $0x70] sm:$0xff] %vm3034, %v2991
      %3050 = vst.msk [vmem:[#allocation3 + $0x78] sm:$0xff] %vm3034, %v2993
      %3051 = vst.msk [vmem:[#allocation3 + $0x80] sm:$0xff] %vm3034, %v2995
      %3052 = vst.msk [vmem:[#allocation3 + $0x88] sm:$0xff] %vm3034, %v2997
      %3053 = vst.msk [vmem:[#allocation3 + $0x90] sm:$0xff] %vm3034, %v2999
      %3054 = vst.msk [vmem:[#allocation3 + $0x98] sm:$0xff] %vm3034, %v3001
      %3055 = vst.msk [vmem:[#allocation3 + $0xa0] sm:$0xff] %vm3034, %v3003
      %3056 = vst.msk [vmem:[#allocation3 + $0xa8] sm:$0xff] %vm3034, %v3005
      %3057 = vst.msk [vmem:[#allocation3 + $0xb0] sm:$0xff] %vm3034, %v3007
      %3058 = vst.msk [vmem:[#allocation3 + $0xb8] sm:$0xff] %vm3034, %v3009
      %v3059 = vld [vmem:[#allocation2 + $0x18] sm:$0xf]
      %v3060 = vld [vmem:[#allocation2 + $0x1c] sm:$0xf]
      %v3061 = vld [vmem:[#allocation2 + $0x20] sm:$0xf]
      %v3062 = vld [vmem:[#allocation2 + $0x24] sm:$0xf]
      %v3063 = vld [vmem:[#allocation2 + $0x28] sm:$0xf]
      %v3064 = vld [vmem:[#allocation2 + $0x2c] sm:$0xf]
      %v3065 = vld [vmem:[#allocation2 + $0x30] sm:$0xf]
      %v3066 = vld [vmem:[#allocation2 + $0x34] sm:$0xf]
      %v3067 = vld [vmem:[#allocation2 + $0x38] sm:$0xf]
      %v3068 = vld [vmem:[#allocation2 + $0x3c] sm:$0xf]
      %v3069 = vld [vmem:[#allocation2 + $0x40] sm:$0xf]
      %v3070 = vld [vmem:[#allocation2 + $0x44] sm:$0xf]
      %v3071 = vld [vmem:[#allocation2 + $0x48] sm:$0xf]
      %v3072 = vld [vmem:[#allocation2 + $0x4c] sm:$0xf]
      %v3073 = vld [vmem:[#allocation2 + $0x50] sm:$0xf]
      %v3074 = vld [vmem:[#allocation2 + $0x54] sm:$0xf]
      %v3075 = vld [vmem:[#allocation2 + $0x58] sm:$0xf]
      %v3076 = vld [vmem:[#allocation2 + $0x5c] sm:$0xf]
      %v3077 = vld [vmem:[#allocation2 + $0x60] sm:$0xf]
      %v3078 = vld [vmem:[#allocation2 + $0x64] sm:$0xf]
      %v3079 = vld [vmem:[#allocation2 + $0x68] sm:$0xf]
      %v3080 = vld [vmem:[#allocation2 + $0x6c] sm:$0xf]
      %v3081 = vld [vmem:[#allocation2 + $0x70] sm:$0xf]
      %v3082 = vld [vmem:[#allocation2 + $0x74] sm:$0xf]
      %v3083 = vld [vmem:[#allocation2 + $0x78] sm:$0xf]
      %v3084 = vld [vmem:[#allocation2 + $0x7c] sm:$0xf]
      %v3085 = vld [vmem:[#allocation2 + $0x80] sm:$0xf]
      %v3086 = vld [vmem:[#allocation2 + $0x84] sm:$0xf]
      %v3087 = vld [vmem:[#allocation2 + $0x88] sm:$0xf]
      %v3088 = vld [vmem:[#allocation2 + $0x8c] sm:$0xf]
      %v3089 = vld [vmem:[#allocation2 + $0x90] sm:$0xf]
      %v3090 = vld [vmem:[#allocation2 + $0x94] sm:$0xf]
      %v3091 = vld [vmem:[#allocation2 + $0x98] sm:$0xf]
      %v3092 = vld [vmem:[#allocation2 + $0x9c] sm:$0xf]
      %v3093 = vld [vmem:[#allocation2 + $0xa0] sm:$0xf]
      %v3094 = vld [vmem:[#allocation2 + $0xa4] sm:$0xf]
      %v3095 = vld [vmem:[#allocation2 + $0xa8] sm:$0xf]
      %v3096 = vld [vmem:[#allocation2 + $0xac] sm:$0xf]
      %v3097 = vld [vmem:[#allocation2 + $0xb0] sm:$0xf]
      %v3098 = vld [vmem:[#allocation2 + $0xb4] sm:$0xf]
      %v3099 = vld [vmem:[#allocation2 + $0xb8] sm:$0xf]
      %v3100 = vld [vmem:[#allocation2 + $0xbc] sm:$0xf]
      %v3101 = vld [vmem:[#allocation2 + $0xc0] sm:$0xf]
      %v3102 = vld [vmem:[#allocation2 + $0xc4] sm:$0xf]
      %v3103 = vld [vmem:[#allocation2 + $0xc8] sm:$0xf]
      %v3104 = vld [vmem:[#allocation2 + $0xcc] sm:$0xf]
      %v3105 = vld [vmem:[#allocation2 + $0xd0] sm:$0xf]
      %v3106 = vld [vmem:[#allocation2 + $0xd4] sm:$0xf]
      %v3107 = vld [vmem:[#allocation2 + $0xd8] sm:$0x1]
      %v3157 = vunpack.c.l.b16 %v3059
      %v3158 = vunpack.c.l.b16 %v3060
      %v3159 = vunpack.c.l.b16 %v3061
      %v3160 = vunpack.c.l.b16 %v3062
      %v3161 = vunpack.c.l.b16 %v3063
      %v3162 = vunpack.c.l.b16 %v3064
      %v3163 = vunpack.c.l.b16 %v3065
      %v3164 = vunpack.c.l.b16 %v3066
      %v3165 = vunpack.c.l.b16 %v3067
      %v3166 = vunpack.c.l.b16 %v3068
      %v3167 = vunpack.c.l.b16 %v3069
      %v3168 = vunpack.c.l.b16 %v3070
      %v3169 = vunpack.c.l.b16 %v3071
      %v3170 = vunpack.c.l.b16 %v3072
      %v3171 = vunpack.c.l.b16 %v3073
      %v3172 = vunpack.c.l.b16 %v3074
      %v3173 = vunpack.c.l.b16 %v3075
      %v3174 = vunpack.c.l.b16 %v3076
      %v3175 = vunpack.c.l.b16 %v3077
      %v3176 = vunpack.c.l.b16 %v3078
      %v3177 = vunpack.c.l.b16 %v3079
      %v3178 = vunpack.c.l.b16 %v3080
      %v3179 = vunpack.c.l.b16 %v3081
      %v3180 = vunpack.c.l.b16 %v3082
      %v3181 = vunpack.c.l.b16 %v3083
      %v3182 = vunpack.c.l.b16 %v3084
      %v3183 = vunpack.c.l.b16 %v3085
      %v3184 = vunpack.c.l.b16 %v3086
      %v3185 = vunpack.c.l.b16 %v3087
      %v3186 = vunpack.c.l.b16 %v3088
      %v3187 = vunpack.c.l.b16 %v3089
      %v3188 = vunpack.c.l.b16 %v3090
      %v3189 = vunpack.c.l.b16 %v3091
      %v3190 = vunpack.c.l.b16 %v3092
      %v3191 = vunpack.c.l.b16 %v3093
      %v3192 = vunpack.c.l.b16 %v3094
      %v3193 = vunpack.c.l.b16 %v3095
      %v3194 = vunpack.c.l.b16 %v3096
      %v3195 = vunpack.c.l.b16 %v3097
      %v3196 = vunpack.c.l.b16 %v3098
      %v3197 = vunpack.c.l.b16 %v3099
      %v3198 = vunpack.c.l.b16 %v3100
      %v3199 = vunpack.c.l.b16 %v3101
      %v3200 = vunpack.c.l.b16 %v3102
      %v3201 = vunpack.c.l.b16 %v3103
      %v3202 = vunpack.c.l.b16 %v3104
      %v3203 = vunpack.c.l.b16 %v3105
      %v3204 = vunpack.c.l.b16 %v3106
      %v3205 = vunpack.c.l.b16 %v3107
      %v3206 = vpack.c.b16 %v3158, %v3157
      %v3207 = vpack.c.b16 %v3160, %v3159
      %v3208 = vpack.c.b16 %v3162, %v3161
      %v3209 = vpack.c.b16 %v3164, %v3163
      %v3210 = vpack.c.b16 %v3166, %v3165
      %v3211 = vpack.c.b16 %v3168, %v3167
      %v3212 = vpack.c.b16 %v3170, %v3169
      %v3213 = vpack.c.b16 %v3172, %v3171
      %v3214 = vpack.c.b16 %v3174, %v3173
      %v3215 = vpack.c.b16 %v3176, %v3175
      %v3216 = vpack.c.b16 %v3178, %v3177
      %v3217 = vpack.c.b16 %v3180, %v3179
      %v3218 = vpack.c.b16 %v3182, %v3181
      %v3219 = vpack.c.b16 %v3184, %v3183
      %v3220 = vpack.c.b16 %v3186, %v3185
      %v3221 = vpack.c.b16 %v3188, %v3187
      %v3222 = vpack.c.b16 %v3190, %v3189
      %v3223 = vpack.c.b16 %v3192, %v3191
      %v3224 = vpack.c.b16 %v3194, %v3193
      %v3225 = vpack.c.b16 %v3196, %v3195
      %v3226 = vpack.c.b16 %v3198, %v3197
      %v3227 = vpack.c.b16 %v3200, %v3199
      %v3228 = vpack.c.b16 %v3202, %v3201
      %v3229 = vpack.c.b16 %v3204, %v3203
      %v3230 = vpack.c.b16 %v3205, %v3205
      %v3232 = vshrl.u32 %v3206, 16
      %v3234 = vshll.u32 %v3206, 16
      %v3236 = vrot.slane %v3234, 1
      %v3237 = vor.u32 %v3232, %v3236
      %v3239 = vshll.u32 %v3207, 16
      %v3241 = vrot.slane %v3239, 1
      %v3242 = vsel %vm1133, %v3237, %v3241
      %v3243 = vshrl.u32 %v3207, 16
      %v3245 = vor.u32 %v3243, %v3241
      %v3247 = vshll.u32 %v3208, 16
      %v3249 = vrot.slane %v3247, 1
      %v3250 = vsel %vm1133, %v3245, %v3249
      %v3251 = vshrl.u32 %v3208, 16
      %v3253 = vor.u32 %v3251, %v3249
      %v3255 = vshll.u32 %v3209, 16
      %v3257 = vrot.slane %v3255, 1
      %v3258 = vsel %vm1133, %v3253, %v3257
      %v3259 = vshrl.u32 %v3209, 16
      %v3261 = vor.u32 %v3259, %v3257
      %v3263 = vshll.u32 %v3210, 16
      %v3265 = vrot.slane %v3263, 1
      %v3266 = vsel %vm1133, %v3261, %v3265
      %v3267 = vshrl.u32 %v3210, 16
      %v3269 = vor.u32 %v3267, %v3265
      %v3271 = vshll.u32 %v3211, 16
      %v3273 = vrot.slane %v3271, 1
      %v3274 = vsel %vm1133, %v3269, %v3273
      %v3275 = vshrl.u32 %v3211, 16
      %v3277 = vor.u32 %v3275, %v3273
      %v3279 = vshll.u32 %v3212, 16
      %v3281 = vrot.slane %v3279, 1
      %v3282 = vsel %vm1133, %v3277, %v3281
      %v3283 = vshrl.u32 %v3212, 16
      %v3285 = vor.u32 %v3283, %v3281
      %v3287 = vshll.u32 %v3213, 16
      %v3289 = vrot.slane %v3287, 1
      %v3290 = vsel %vm1133, %v3285, %v3289
      %v3291 = vshrl.u32 %v3213, 16
      %v3293 = vor.u32 %v3291, %v3289
      %v3295 = vshll.u32 %v3214, 16
      %v3297 = vrot.slane %v3295, 1
      %v3298 = vsel %vm1133, %v3293, %v3297
      %v3299 = vshrl.u32 %v3214, 16
      %v3301 = vor.u32 %v3299, %v3297
      %v3303 = vshll.u32 %v3215, 16
      %v3305 = vrot.slane %v3303, 1
      %v3306 = vsel %vm1133, %v3301, %v3305
      %v3307 = vshrl.u32 %v3215, 16
      %v3309 = vor.u32 %v3307, %v3305
      %v3311 = vshll.u32 %v3216, 16
      %v3313 = vrot.slane %v3311, 1
      %v3314 = vsel %vm1133, %v3309, %v3313
      %v3315 = vshrl.u32 %v3216, 16
      %v3317 = vor.u32 %v3315, %v3313
      %v3319 = vshll.u32 %v3217, 16
      %v3321 = vrot.slane %v3319, 1
      %v3322 = vsel %vm1133, %v3317, %v3321
      %v3323 = vshrl.u32 %v3217, 16
      %v3325 = vor.u32 %v3323, %v3321
      %v3327 = vshll.u32 %v3218, 16
      %v3329 = vrot.slane %v3327, 1
      %v3330 = vsel %vm1133, %v3325, %v3329
      %v3331 = vshrl.u32 %v3218, 16
      %v3333 = vor.u32 %v3331, %v3329
      %v3335 = vshll.u32 %v3219, 16
      %v3337 = vrot.slane %v3335, 1
      %v3338 = vsel %vm1133, %v3333, %v3337
      %v3339 = vshrl.u32 %v3219, 16
      %v3341 = vor.u32 %v3339, %v3337
      %v3343 = vshll.u32 %v3220, 16
      %v3345 = vrot.slane %v3343, 1
      %v3346 = vsel %vm1133, %v3341, %v3345
      %v3347 = vshrl.u32 %v3220, 16
      %v3349 = vor.u32 %v3347, %v3345
      %v3351 = vshll.u32 %v3221, 16
      %v3353 = vrot.slane %v3351, 1
      %v3354 = vsel %vm1133, %v3349, %v3353
      %v3355 = vshrl.u32 %v3221, 16
      %v3357 = vor.u32 %v3355, %v3353
      %v3359 = vshll.u32 %v3222, 16
      %v3361 = vrot.slane %v3359, 1
      %v3362 = vsel %vm1133, %v3357, %v3361
      %v3363 = vshrl.u32 %v3222, 16
      %v3365 = vor.u32 %v3363, %v3361
      %v3367 = vshll.u32 %v3223, 16
      %v3369 = vrot.slane %v3367, 1
      %v3370 = vsel %vm1133, %v3365, %v3369
      %v3371 = vshrl.u32 %v3223, 16
      %v3373 = vor.u32 %v3371, %v3369
      %v3375 = vshll.u32 %v3224, 16
      %v3377 = vrot.slane %v3375, 1
      %v3378 = vsel %vm1133, %v3373, %v3377
      %v3379 = vshrl.u32 %v3224, 16
      %v3381 = vor.u32 %v3379, %v3377
      %v3383 = vshll.u32 %v3225, 16
      %v3385 = vrot.slane %v3383, 1
      %v3386 = vsel %vm1133, %v3381, %v3385
      %v3387 = vshrl.u32 %v3225, 16
      %v3389 = vor.u32 %v3387, %v3385
      %v3391 = vshll.u32 %v3226, 16
      %v3393 = vrot.slane %v3391, 1
      %v3394 = vsel %vm1133, %v3389, %v3393
      %v3395 = vshrl.u32 %v3226, 16
      %v3397 = vor.u32 %v3395, %v3393
      %v3399 = vshll.u32 %v3227, 16
      %v3401 = vrot.slane %v3399, 1
      %v3402 = vsel %vm1133, %v3397, %v3401
      %v3403 = vshrl.u32 %v3227, 16
      %v3405 = vor.u32 %v3403, %v3401
      %v3407 = vshll.u32 %v3228, 16
      %v3409 = vrot.slane %v3407, 1
      %v3410 = vsel %vm1133, %v3405, %v3409
      %v3411 = vshrl.u32 %v3228, 16
      %v3413 = vor.u32 %v3411, %v3409
      %v3415 = vshll.u32 %v3229, 16
      %v3417 = vrot.slane %v3415, 1
      %v3418 = vsel %vm1133, %v3413, %v3417
      %v3419 = vshrl.u32 %v3229, 16
      %v3421 = vor.u32 %v3419, %v3417
      %v3423 = vshll.u32 %v3230, 16
      %v3425 = vrot.slane %v3423, 1
      %v3426 = vsel %vm1133, %v3421, %v3425
      %3427 = vrot.lane.b32.xlu0 %v3242, 28
      %v3428 = vpop.permute.xlu0 %3427
      %3429 = vrot.lane.b32.xlu0 %v3250, 28
      %v3430 = vpop.permute.xlu0 %3429
      %3431 = vrot.lane.b32.xlu0 %v3258, 28
      %v3432 = vpop.permute.xlu0 %3431
      %3433 = vrot.lane.b32.xlu0 %v3266, 28
      %v3434 = vpop.permute.xlu0 %3433
      %3435 = vrot.lane.b32.xlu0 %v3274, 28
      %v3436 = vpop.permute.xlu0 %3435
      %3437 = vrot.lane.b32.xlu0 %v3282, 28
      %v3438 = vpop.permute.xlu0 %3437
      %3439 = vrot.lane.b32.xlu0 %v3290, 28
      %v3440 = vpop.permute.xlu0 %3439
      %3441 = vrot.lane.b32.xlu0 %v3298, 28
      %v3442 = vpop.permute.xlu0 %3441
      %3443 = vrot.lane.b32.xlu0 %v3306, 28
      %v3444 = vpop.permute.xlu0 %3443
      %3445 = vrot.lane.b32.xlu0 %v3314, 28
      %v3446 = vpop.permute.xlu0 %3445
      %3447 = vrot.lane.b32.xlu0 %v3322, 28
      %v3448 = vpop.permute.xlu0 %3447
      %3449 = vrot.lane.b32.xlu0 %v3330, 28
      %v3450 = vpop.permute.xlu0 %3449
      %3451 = vrot.lane.b32.xlu0 %v3338, 28
      %v3452 = vpop.permute.xlu0 %3451
      %3453 = vrot.lane.b32.xlu0 %v3346, 28
      %v3454 = vpop.permute.xlu0 %3453
      %3455 = vrot.lane.b32.xlu0 %v3354, 28
      %v3456 = vpop.permute.xlu0 %3455
      %3457 = vrot.lane.b32.xlu0 %v3362, 28
      %v3458 = vpop.permute.xlu0 %3457
      %3459 = vrot.lane.b32.xlu0 %v3370, 28
      %v3460 = vpop.permute.xlu0 %3459
      %3461 = vrot.lane.b32.xlu0 %v3378, 28
      %v3462 = vpop.permute.xlu0 %3461
      %3463 = vrot.lane.b32.xlu0 %v3386, 28
      %v3464 = vpop.permute.xlu0 %3463
      %3465 = vrot.lane.b32.xlu0 %v3394, 28
      %v3466 = vpop.permute.xlu0 %3465
      %3467 = vrot.lane.b32.xlu0 %v3402, 28
      %v3468 = vpop.permute.xlu0 %3467
      %3469 = vrot.lane.b32.xlu0 %v3410, 28
      %v3470 = vpop.permute.xlu0 %3469
      %3471 = vrot.lane.b32.xlu0 %v3418, 28
      %v3472 = vpop.permute.xlu0 %3471
      %3473 = vrot.lane.b32.xlu0 %v3426, 28
      %v3474 = vpop.permute.xlu0 %3473
      %vm3499 = vcmask 261344
      %3500 = vst.msk [vmem:[#allocation3] sm:$0xff] %vm3499, %v3428
      %3501 = vst.msk [vmem:[#allocation3 + $0x8] sm:$0xff] %vm3499, %v3430
      %3502 = vst.msk [vmem:[#allocation3 + $0x10] sm:$0xff] %vm3499, %v3432
      %3503 = vst.msk [vmem:[#allocation3 + $0x18] sm:$0xff] %vm3499, %v3434
      %3504 = vst.msk [vmem:[#allocation3 + $0x20] sm:$0xff] %vm3499, %v3436
      %3505 = vst.msk [vmem:[#allocation3 + $0x28] sm:$0xff] %vm3499, %v3438
      %3506 = vst.msk [vmem:[#allocation3 + $0x30] sm:$0xff] %vm3499, %v3440
      %3507 = vst.msk [vmem:[#allocation3 + $0x38] sm:$0xff] %vm3499, %v3442
      %3508 = vst.msk [vmem:[#allocation3 + $0x40] sm:$0xff] %vm3499, %v3444
      %3509 = vst.msk [vmem:[#allocation3 + $0x48] sm:$0xff] %vm3499, %v3446
      %3510 = vst.msk [vmem:[#allocation3 + $0x50] sm:$0xff] %vm3499, %v3448
      %3511 = vst.msk [vmem:[#allocation3 + $0x58] sm:$0xff] %vm3499, %v3450
      %3512 = vst.msk [vmem:[#allocation3 + $0x60] sm:$0xff] %vm3499, %v3452
      %3513 = vst.msk [vmem:[#allocation3 + $0x68] sm:$0xff] %vm3499, %v3454
      %3514 = vst.msk [vmem:[#allocation3 + $0x70] sm:$0xff] %vm3499, %v3456
      %3515 = vst.msk [vmem:[#allocation3 + $0x78] sm:$0xff] %vm3499, %v3458
      %3516 = vst.msk [vmem:[#allocation3 + $0x80] sm:$0xff] %vm3499, %v3460
      %3517 = vst.msk [vmem:[#allocation3 + $0x88] sm:$0xff] %vm3499, %v3462
      %3518 = vst.msk [vmem:[#allocation3 + $0x90] sm:$0xff] %vm3499, %v3464
      %3519 = vst.msk [vmem:[#allocation3 + $0x98] sm:$0xff] %vm3499, %v3466
      %3520 = vst.msk [vmem:[#allocation3 + $0xa0] sm:$0xff] %vm3499, %v3468
      %3521 = vst.msk [vmem:[#allocation3 + $0xa8] sm:$0xff] %vm3499, %v3470
      %3522 = vst.msk [vmem:[#allocation3 + $0xb0] sm:$0xff] %vm3499, %v3472
      %3523 = vst.msk [vmem:[#allocation3 + $0xb8] sm:$0xff] %vm3499, %v3474
      %v3524 = vld [vmem:[#allocation2 + $0x18] sm:$0xe]
      %v3525 = vld [vmem:[#allocation2 + $0x1c] sm:$0xf]
      %v3526 = vld [vmem:[#allocation2 + $0x20] sm:$0xf]
      %v3527 = vld [vmem:[#allocation2 + $0x24] sm:$0xf]
      %v3528 = vld [vmem:[#allocation2 + $0x28] sm:$0xf]
      %v3529 = vld [vmem:[#allocation2 + $0x2c] sm:$0xf]
      %v3530 = vld [vmem:[#allocation2 + $0x30] sm:$0xf]
      %v3531 = vld [vmem:[#allocation2 + $0x34] sm:$0xf]
      %v3532 = vld [vmem:[#allocation2 + $0x38] sm:$0xf]
      %v3533 = vld [vmem:[#allocation2 + $0x3c] sm:$0xf]
      %v3534 = vld [vmem:[#allocation2 + $0x40] sm:$0xf]
      %v3535 = vld [vmem:[#allocation2 + $0x44] sm:$0xf]
      %v3536 = vld [vmem:[#allocation2 + $0x48] sm:$0xf]
      %v3537 = vld [vmem:[#allocation2 + $0x4c] sm:$0xf]
      %v3538 = vld [vmem:[#allocation2 + $0x50] sm:$0xf]
      %v3539 = vld [vmem:[#allocation2 + $0x54] sm:$0xf]
      %v3540 = vld [vmem:[#allocation2 + $0x58] sm:$0xf]
      %v3541 = vld [vmem:[#allocation2 + $0x5c] sm:$0xf]
      %v3542 = vld [vmem:[#allocation2 + $0x60] sm:$0xf]
      %v3543 = vld [vmem:[#allocation2 + $0x64] sm:$0xf]
      %v3544 = vld [vmem:[#allocation2 + $0x68] sm:$0xf]
      %v3545 = vld [vmem:[#allocation2 + $0x6c] sm:$0xf]
      %v3546 = vld [vmem:[#allocation2 + $0x70] sm:$0xf]
      %v3547 = vld [vmem:[#allocation2 + $0x74] sm:$0xf]
      %v3548 = vld [vmem:[#allocation2 + $0x78] sm:$0xf]
      %v3549 = vld [vmem:[#allocation2 + $0x7c] sm:$0xf]
      %v3550 = vld [vmem:[#allocation2 + $0x80] sm:$0xf]
      %v3551 = vld [vmem:[#allocation2 + $0x84] sm:$0xf]
      %v3552 = vld [vmem:[#allocation2 + $0x88] sm:$0xf]
      %v3553 = vld [vmem:[#allocation2 + $0x8c] sm:$0xf]
      %v3554 = vld [vmem:[#allocation2 + $0x90] sm:$0xf]
      %v3555 = vld [vmem:[#allocation2 + $0x94] sm:$0xf]
      %v3556 = vld [vmem:[#allocation2 + $0x98] sm:$0xf]
      %v3557 = vld [vmem:[#allocation2 + $0x9c] sm:$0xf]
      %v3558 = vld [vmem:[#allocation2 + $0xa0] sm:$0xf]
      %v3559 = vld [vmem:[#allocation2 + $0xa4] sm:$0xf]
      %v3560 = vld [vmem:[#allocation2 + $0xa8] sm:$0xf]
      %v3561 = vld [vmem:[#allocation2 + $0xac] sm:$0xf]
      %v3562 = vld [vmem:[#allocation2 + $0xb0] sm:$0xf]
      %v3563 = vld [vmem:[#allocation2 + $0xb4] sm:$0xf]
      %v3564 = vld [vmem:[#allocation2 + $0xb8] sm:$0xf]
      %v3565 = vld [vmem:[#allocation2 + $0xbc] sm:$0xf]
      %v3566 = vld [vmem:[#allocation2 + $0xc0] sm:$0xf]
      %v3567 = vld [vmem:[#allocation2 + $0xc4] sm:$0xf]
      %v3568 = vld [vmem:[#allocation2 + $0xc8] sm:$0xf]
      %v3569 = vld [vmem:[#allocation2 + $0xcc] sm:$0xf]
      %v3570 = vld [vmem:[#allocation2 + $0xd0] sm:$0xf]
      %v3571 = vld [vmem:[#allocation2 + $0xd4] sm:$0xf]
      %v3572 = vld [vmem:[#allocation2 + $0xd8] sm:$0x1]
      %v3622 = vunpack.c.l.b16 %v3524
      %v3623 = vunpack.c.l.b16 %v3525
      %v3624 = vunpack.c.l.b16 %v3526
      %v3625 = vunpack.c.l.b16 %v3527
      %v3626 = vunpack.c.l.b16 %v3528
      %v3627 = vunpack.c.l.b16 %v3529
      %v3628 = vunpack.c.l.b16 %v3530
      %v3629 = vunpack.c.l.b16 %v3531
      %v3630 = vunpack.c.l.b16 %v3532
      %v3631 = vunpack.c.l.b16 %v3533
      %v3632 = vunpack.c.l.b16 %v3534
      %v3633 = vunpack.c.l.b16 %v3535
      %v3634 = vunpack.c.l.b16 %v3536
      %v3635 = vunpack.c.l.b16 %v3537
      %v3636 = vunpack.c.l.b16 %v3538
      %v3637 = vunpack.c.l.b16 %v3539
      %v3638 = vunpack.c.l.b16 %v3540
      %v3639 = vunpack.c.l.b16 %v3541
      %v3640 = vunpack.c.l.b16 %v3542
      %v3641 = vunpack.c.l.b16 %v3543
      %v3642 = vunpack.c.l.b16 %v3544
      %v3643 = vunpack.c.l.b16 %v3545
      %v3644 = vunpack.c.l.b16 %v3546
      %v3645 = vunpack.c.l.b16 %v3547
      %v3646 = vunpack.c.l.b16 %v3548
      %v3647 = vunpack.c.l.b16 %v3549
      %v3648 = vunpack.c.l.b16 %v3550
      %v3649 = vunpack.c.l.b16 %v3551
      %v3650 = vunpack.c.l.b16 %v3552
      %v3651 = vunpack.c.l.b16 %v3553
      %v3652 = vunpack.c.l.b16 %v3554
      %v3653 = vunpack.c.l.b16 %v3555
      %v3654 = vunpack.c.l.b16 %v3556
      %v3655 = vunpack.c.l.b16 %v3557
      %v3656 = vunpack.c.l.b16 %v3558
      %v3657 = vunpack.c.l.b16 %v3559
      %v3658 = vunpack.c.l.b16 %v3560
      %v3659 = vunpack.c.l.b16 %v3561
      %v3660 = vunpack.c.l.b16 %v3562
      %v3661 = vunpack.c.l.b16 %v3563
      %v3662 = vunpack.c.l.b16 %v3564
      %v3663 = vunpack.c.l.b16 %v3565
      %v3664 = vunpack.c.l.b16 %v3566
      %v3665 = vunpack.c.l.b16 %v3567
      %v3666 = vunpack.c.l.b16 %v3568
      %v3667 = vunpack.c.l.b16 %v3569
      %v3668 = vunpack.c.l.b16 %v3570
      %v3669 = vunpack.c.l.b16 %v3571
      %v3670 = vunpack.c.l.b16 %v3572
      %v3671 = vpack.c.b16 %v3623, %v3622
      %v3672 = vpack.c.b16 %v3625, %v3624
      %v3673 = vpack.c.b16 %v3627, %v3626
      %v3674 = vpack.c.b16 %v3629, %v3628
      %v3675 = vpack.c.b16 %v3631, %v3630
      %v3676 = vpack.c.b16 %v3633, %v3632
      %v3677 = vpack.c.b16 %v3635, %v3634
      %v3678 = vpack.c.b16 %v3637, %v3636
      %v3679 = vpack.c.b16 %v3639, %v3638
      %v3680 = vpack.c.b16 %v3641, %v3640
      %v3681 = vpack.c.b16 %v3643, %v3642
      %v3682 = vpack.c.b16 %v3645, %v3644
      %v3683 = vpack.c.b16 %v3647, %v3646
      %v3684 = vpack.c.b16 %v3649, %v3648
      %v3685 = vpack.c.b16 %v3651, %v3650
      %v3686 = vpack.c.b16 %v3653, %v3652
      %v3687 = vpack.c.b16 %v3655, %v3654
      %v3688 = vpack.c.b16 %v3657, %v3656
      %v3689 = vpack.c.b16 %v3659, %v3658
      %v3690 = vpack.c.b16 %v3661, %v3660
      %v3691 = vpack.c.b16 %v3663, %v3662
      %v3692 = vpack.c.b16 %v3665, %v3664
      %v3693 = vpack.c.b16 %v3667, %v3666
      %v3694 = vpack.c.b16 %v3669, %v3668
      %v3695 = vpack.c.b16 %v3670, %v3670
      %v3696 = vrot.slane %v3671, 1
      %v3697 = vrot.slane %v3672, 1
      %v3698 = vsel %vm1599, %v3696, %v3697
      %v3699 = vrot.slane %v3673, 1
      %v3700 = vsel %vm1599, %v3697, %v3699
      %v3701 = vrot.slane %v3674, 1
      %v3702 = vsel %vm1599, %v3699, %v3701
      %v3703 = vrot.slane %v3675, 1
      %v3704 = vsel %vm1599, %v3701, %v3703
      %v3705 = vrot.slane %v3676, 1
      %v3706 = vsel %vm1599, %v3703, %v3705
      %v3707 = vrot.slane %v3677, 1
      %v3708 = vsel %vm1599, %v3705, %v3707
      %v3709 = vrot.slane %v3678, 1
      %v3710 = vsel %vm1599, %v3707, %v3709
      %v3711 = vrot.slane %v3679, 1
      %v3712 = vsel %vm1599, %v3709, %v3711
      %v3713 = vrot.slane %v3680, 1
      %v3714 = vsel %vm1599, %v3711, %v3713
      %v3715 = vrot.slane %v3681, 1
      %v3716 = vsel %vm1599, %v3713, %v3715
      %v3717 = vrot.slane %v3682, 1
      %v3718 = vsel %vm1599, %v3715, %v3717
      %v3719 = vrot.slane %v3683, 1
      %v3720 = vsel %vm1599, %v3717, %v3719
      %v3721 = vrot.slane %v3684, 1
      %v3722 = vsel %vm1599, %v3719, %v3721
      %v3723 = vrot.slane %v3685, 1
      %v3724 = vsel %vm1599, %v3721, %v3723
      %v3725 = vrot.slane %v3686, 1
      %v3726 = vsel %vm1599, %v3723, %v3725
      %v3727 = vrot.slane %v3687, 1
      %v3728 = vsel %vm1599, %v3725, %v3727
      %v3729 = vrot.slane %v3688, 1
      %v3730 = vsel %vm1599, %v3727, %v3729
      %v3731 = vrot.slane %v3689, 1
      %v3732 = vsel %vm1599, %v3729, %v3731
      %v3733 = vrot.slane %v3690, 1
      %v3734 = vsel %vm1599, %v3731, %v3733
      %v3735 = vrot.slane %v3691, 1
      %v3736 = vsel %vm1599, %v3733, %v3735
      %v3737 = vrot.slane %v3692, 1
      %v3738 = vsel %vm1599, %v3735, %v3737
      %v3739 = vrot.slane %v3693, 1
      %v3740 = vsel %vm1599, %v3737, %v3739
      %v3741 = vrot.slane %v3694, 1
      %v3742 = vsel %vm1599, %v3739, %v3741
      %v3743 = vrot.slane %v3695, 1
      %v3744 = vsel %vm1599, %v3741, %v3743
      %3745 = vrot.lane.b32.xlu0 %v3698, 32
      %v3746 = vpop.permute.xlu0 %3745
      %3747 = vrot.lane.b32.xlu0 %v3700, 32
      %v3748 = vpop.permute.xlu0 %3747
      %3749 = vrot.lane.b32.xlu0 %v3702, 32
      %v3750 = vpop.permute.xlu0 %3749
      %3751 = vrot.lane.b32.xlu0 %v3704, 32
      %v3752 = vpop.permute.xlu0 %3751
      %3753 = vrot.lane.b32.xlu0 %v3706, 32
      %v3754 = vpop.permute.xlu0 %3753
      %3755 = vrot.lane.b32.xlu0 %v3708, 32
      %v3756 = vpop.permute.xlu0 %3755
      %3757 = vrot.lane.b32.xlu0 %v3710, 32
      %v3758 = vpop.permute.xlu0 %3757
      %3759 = vrot.lane.b32.xlu0 %v3712, 32
      %v3760 = vpop.permute.xlu0 %3759
      %3761 = vrot.lane.b32.xlu0 %v3714, 32
      %v3762 = vpop.permute.xlu0 %3761
      %3763 = vrot.lane.b32.xlu0 %v3716, 32
      %v3764 = vpop.permute.xlu0 %3763
      %3765 = vrot.lane.b32.xlu0 %v3718, 32
      %v3766 = vpop.permute.xlu0 %3765
      %3767 = vrot.lane.b32.xlu0 %v3720, 32
      %v3768 = vpop.permute.xlu0 %3767
      %3769 = vrot.lane.b32.xlu0 %v3722, 32
      %v3770 = vpop.permute.xlu0 %3769
      %3771 = vrot.lane.b32.xlu0 %v3724, 32
      %v3772 = vpop.permute.xlu0 %3771
      %3773 = vrot.lane.b32.xlu0 %v3726, 32
      %v3774 = vpop.permute.xlu0 %3773
      %3775 = vrot.lane.b32.xlu0 %v3728, 32
      %v3776 = vpop.permute.xlu0 %3775
      %3777 = vrot.lane.b32.xlu0 %v3730, 32
      %v3778 = vpop.permute.xlu0 %3777
      %3779 = vrot.lane.b32.xlu0 %v3732, 32
      %v3780 = vpop.permute.xlu0 %3779
      %3781 = vrot.lane.b32.xlu0 %v3734, 32
      %v3782 = vpop.permute.xlu0 %3781
      %3783 = vrot.lane.b32.xlu0 %v3736, 32
      %v3784 = vpop.permute.xlu0 %3783
      %3785 = vrot.lane.b32.xlu0 %v3738, 32
      %v3786 = vpop.permute.xlu0 %3785
      %3787 = vrot.lane.b32.xlu0 %v3740, 32
      %v3788 = vpop.permute.xlu0 %3787
      %3789 = vrot.lane.b32.xlu0 %v3742, 32
      %v3790 = vpop.permute.xlu0 %3789
      %3791 = vrot.lane.b32.xlu0 %v3744, 32
      %v3792 = vpop.permute.xlu0 %3791
      %vm3817 = vcmask 294144
      %3818 = vst.msk [vmem:[#allocation3] sm:$0xff] %vm3817, %v3746
      %3819 = vst.msk [vmem:[#allocation3 + $0x8] sm:$0xff] %vm3817, %v3748
      %3820 = vst.msk [vmem:[#allocation3 + $0x10] sm:$0xff] %vm3817, %v3750
      %3821 = vst.msk [vmem:[#allocation3 + $0x18] sm:$0xff] %vm3817, %v3752
      %3822 = vst.msk [vmem:[#allocation3 + $0x20] sm:$0xff] %vm3817, %v3754
      %3823 = vst.msk [vmem:[#allocation3 + $0x28] sm:$0xff] %vm3817, %v3756
      %3824 = vst.msk [vmem:[#allocation3 + $0x30] sm:$0xff] %vm3817, %v3758
      %3825 = vst.msk [vmem:[#allocation3 + $0x38] sm:$0xff] %vm3817, %v3760
      %3826 = vst.msk [vmem:[#allocation3 + $0x40] sm:$0xff] %vm3817, %v3762
      %3827 = vst.msk [vmem:[#allocation3 + $0x48] sm:$0xff] %vm3817, %v3764
      %3828 = vst.msk [vmem:[#allocation3 + $0x50] sm:$0xff] %vm3817, %v3766
      %3829 = vst.msk [vmem:[#allocation3 + $0x58] sm:$0xff] %vm3817, %v3768
      %3830 = vst.msk [vmem:[#allocation3 + $0x60] sm:$0xff] %vm3817, %v3770
      %3831 = vst.msk [vmem:[#allocation3 + $0x68] sm:$0xff] %vm3817, %v3772
      %3832 = vst.msk [vmem:[#allocation3 + $0x70] sm:$0xff] %vm3817, %v3774
      %3833 = vst.msk [vmem:[#allocation3 + $0x78] sm:$0xff] %vm3817, %v3776
      %3834 = vst.msk [vmem:[#allocation3 + $0x80] sm:$0xff] %vm3817, %v3778
      %3835 = vst.msk [vmem:[#allocation3 + $0x88] sm:$0xff] %vm3817, %v3780
      %3836 = vst.msk [vmem:[#allocation3 + $0x90] sm:$0xff] %vm3817, %v3782
      %3837 = vst.msk [vmem:[#allocation3 + $0x98] sm:$0xff] %vm3817, %v3784
      %3838 = vst.msk [vmem:[#allocation3 + $0xa0] sm:$0xff] %vm3817, %v3786
      %3839 = vst.msk [vmem:[#allocation3 + $0xa8] sm:$0xff] %vm3817, %v3788
      %3840 = vst.msk [vmem:[#allocation3 + $0xb0] sm:$0xff] %vm3817, %v3790
      %3841 = vst.msk [vmem:[#allocation3 + $0xb8] sm:$0xff] %vm3817, %v3792
      %v3842 = vld [vmem:[#allocation3] sm:$0xff]
      %v3843 = vld [vmem:[#allocation3 + $0x8] sm:$0xff]
      %v3844 = vld [vmem:[#allocation3 + $0x10] sm:$0xff]
      %v3845 = vld [vmem:[#allocation3 + $0x18] sm:$0xff]
      %v3846 = vld [vmem:[#allocation3 + $0x20] sm:$0xff]
      %v3847 = vld [vmem:[#allocation3 + $0x28] sm:$0xff]
      %v3848 = vld [vmem:[#allocation3 + $0x30] sm:$0xff]
      %v3849 = vld [vmem:[#allocation3 + $0x38] sm:$0xff]
      %v3850 = vld [vmem:[#allocation3 + $0x40] sm:$0xff]
      %v3851 = vld [vmem:[#allocation3 + $0x48] sm:$0xff]
      %v3852 = vld [vmem:[#allocation3 + $0x50] sm:$0xff]
      %v3853 = vld [vmem:[#allocation3 + $0x58] sm:$0xff]
      %v3854 = vld [vmem:[#allocation3 + $0x60] sm:$0xff]
      %v3855 = vld [vmem:[#allocation3 + $0x68] sm:$0xff]
      %v3856 = vld [vmem:[#allocation3 + $0x70] sm:$0xff]
      %v3857 = vld [vmem:[#allocation3 + $0x78] sm:$0xff]
      %v3858 = vld [vmem:[#allocation3 + $0x80] sm:$0xff]
      %v3859 = vld [vmem:[#allocation3 + $0x88] sm:$0xff]
      %v3860 = vld [vmem:[#allocation3 + $0x90] sm:$0xff]
      %v3861 = vld [vmem:[#allocation3 + $0x98] sm:$0xff]
      %v3862 = vld [vmem:[#allocation3 + $0xa0] sm:$0xff]
      %v3863 = vld [vmem:[#allocation3 + $0xa8] sm:$0xff]
      %v3864 = vld [vmem:[#allocation3 + $0xb0] sm:$0xff]
      %v3865 = vld [vmem:[#allocation3 + $0xb8] sm:$0xff]
      %v3866 = vld [vmem:[%s1] sm:$0xf]
      %v3867 = vld [vmem:[%s1 + $0x4] sm:$0xf]
      %v3868 = vld [vmem:[%s1 + $0x8] sm:$0xf]
      %v3869 = vld [vmem:[%s1 + $0xc] sm:$0xf]
      %v3870 = vld [vmem:[%s1 + $0x10] sm:$0x3]
      %v3876 = vunpack.c.l.b16 %v3866
      %v3877 = vunpack.c.l.b16 %v3867
      %v3878 = vunpack.c.l.b16 %v3868
      %v3879 = vunpack.c.l.b16 %v3869
      %v3880 = vunpack.c.l.b16 %v3870
      %v3881 = vpack.c.b16 %v3877, %v3876
      %v3882 = vpack.c.b16 %v3879, %v3878
      %v3883 = vpack.c.b16 %v3880, %v3880
      %vm3886 = vcmask 293888
      %v3888 = vsel %vm3886, %v3842, 0
      %v3891 = vsel %vm3886, %v3843, 0
      %v3894 = vsel %vm3886, %v3844, 0
      %v3897 = vsel %vm3886, %v3845, 0
      %v3900 = vsel %vm3886, %v3846, 0
      %v3903 = vsel %vm3886, %v3847, 0
      %v3906 = vsel %vm3886, %v3848, 0
      %v3909 = vsel %vm3886, %v3849, 0
      %v3912 = vsel %vm3886, %v3850, 0
      %v3915 = vsel %vm3886, %v3851, 0
      %v3918 = vsel %vm3886, %v3852, 0
      %v3921 = vsel %vm3886, %v3853, 0
      %v3924 = vsel %vm3886, %v3854, 0
      %v3927 = vsel %vm3886, %v3855, 0
      %v3930 = vsel %vm3886, %v3856, 0
      %v3933 = vsel %vm3886, %v3857, 0
      %v3936 = vsel %vm3886, %v3858, 0
      %v3939 = vsel %vm3886, %v3859, 0
      %v3942 = vsel %vm3886, %v3860, 0
      %v3945 = vsel %vm3886, %v3861, 0
      %v3948 = vsel %vm3886, %v3862, 0
      %v3951 = vsel %vm3886, %v3863, 0
      %v3954 = vsel %vm3886, %v3864, 0
      %v3957 = vsel %vm3886, %v3865, 0
      %vm3959 = vcmask 1041408
      %v3961 = vsel %vm3959, %v3883, 0
      %3963 = vmatprep.subr.bf16.mxu0 0
      %3964 = vmatpush1.bf16.msra.mxu0 %v3881
      %3965 = vmatprep.subr.bf16.mxu0 0
      %3966 = vmatpush1.bf16.msra.mxu0 %v3882
      %3967 = vmatprep.subr.bf16.mxu0 0
      %3968 = vmatpush1.bf16.msra.mxu0 %v3961
      %3969 = vmatprep.subr.bf16.mxu0 0
      %3970 = vmatpush1.bf16.msra.mxu0 0
      %3971 = vmatprep.subr.bf16.mxu0 0
      %3972 = vmatpush1.bf16.msra.mxu0 0
      %3973 = vmatprep.subr.bf16.mxu0 0
      %3974 = vmatpush1.bf16.msra.mxu0 0
      %3975 = vmatprep.subr.bf16.mxu0 0
      %3976 = vmatpush1.bf16.msra.mxu0 0
      %3977 = vmatprep.subr.bf16.mxu0 0
      %3978 = vmatpush1.bf16.msra.mxu0 0
      %3979 = vmatprep.subr.bf16.mxu0 0
      %3980 = vmatpush1.bf16.msra.mxu0 0
      %3981 = vmatprep.subr.bf16.mxu0 0
      %3982 = vmatpush1.bf16.msra.mxu0 0
      %3983 = vmatprep.subr.bf16.mxu0 0
      %3984 = vmatpush1.bf16.msra.mxu0 0
      %3985 = vmatprep.subr.bf16.mxu0 0
      %3986 = vmatpush1.bf16.msra.mxu0 0
      %3987 = vmatprep.subr.bf16.mxu0 0
      %3988 = vmatpush1.bf16.msra.mxu0 0
      %3989 = vmatprep.subr.bf16.mxu0 0
      %3990 = vmatpush1.bf16.msra.mxu0 0
      %3991 = vmatprep.subr.bf16.mxu0 0
      %3992 = vmatpush1.bf16.msra.mxu0 0
      %3993 = vmatprep.subr.bf16.mxu0 0
      %3994 = vmatpush1.bf16.msra.mxu0 0
      %3995 = vmatprep.mubr.bf16.mxu0 0
      %3996 = vmatmul.mubr.bf16.gmra.mrb[0].mxu0 %v3888
      %v3997 = vpop.f32.mrb[0].mxu0
      %v3998 = vadd.f32 0.0, %v3997
      %v3999 = vpop.f32.mrb[0].mxu0
      %v4000 = vpop.f32.mrb[0].mxu0
      %v4001 = vadd.f32 0.0, %v4000
      %v4002 = vpop.f32.mrb[0].mxu0
      %4003 = vmatprep.mubr.bf16.mxu0 0
      %4004 = vmatmul.mubr.bf16.gmra.mrb[0].mxu0 %v3891
      %v4005 = vpop.f32.mrb[0].mxu0
      %v4006 = vadd.f32 0.0, %v4005
      %v4007 = vpop.f32.mrb[0].mxu0
      %v4008 = vpop.f32.mrb[0].mxu0
      %v4009 = vadd.f32 0.0, %v4008
      %v4010 = vpop.f32.mrb[0].mxu0
      %4011 = vmatprep.mubr.bf16.mxu0 0
      %4012 = vmatmul.mubr.bf16.gmra.mrb[0].mxu0 %v3894
      %v4013 = vpop.f32.mrb[0].mxu0
      %v4014 = vadd.f32 0.0, %v4013
      %v4015 = vpop.f32.mrb[0].mxu0
      %v4016 = vpop.f32.mrb[0].mxu0
      %v4017 = vadd.f32 0.0, %v4016
      %v4018 = vpop.f32.mrb[0].mxu0
      %4019 = vmatprep.mubr.bf16.mxu0 0
      %4020 = vmatmul.mubr.bf16.gmra.mrb[0].mxu0 %v3897
      %v4021 = vpop.f32.mrb[0].mxu0
      %v4022 = vadd.f32 0.0, %v4021
      %v4023 = vpop.f32.mrb[0].mxu0
      %v4024 = vpop.f32.mrb[0].mxu0
      %v4025 = vadd.f32 0.0, %v4024
      %v4026 = vpop.f32.mrb[0].mxu0
      %4027 = vmatprep.mubr.bf16.mxu0 0
      %4028 = vmatmul.mubr.bf16.gmra.mrb[0].mxu0 %v3900
      %v4029 = vpop.f32.mrb[0].mxu0
      %v4030 = vadd.f32 0.0, %v4029
      %v4031 = vpop.f32.mrb[0].mxu0
      %v4032 = vpop.f32.mrb[0].mxu0
      %v4033 = vadd.f32 0.0, %v4032
      %v4034 = vpop.f32.mrb[0].mxu0
      %4035 = vmatprep.mubr.bf16.mxu0 0
      %4036 = vmatmul.mubr.bf16.gmra.mrb[0].mxu0 %v3903
      %v4037 = vpop.f32.mrb[0].mxu0
      %v4038 = vadd.f32 0.0, %v4037
      %v4039 = vpop.f32.mrb[0].mxu0
      %v4040 = vpop.f32.mrb[0].mxu0
      %v4041 = vadd.f32 0.0, %v4040
      %v4042 = vpop.f32.mrb[0].mxu0
      %4043 = vmatprep.mubr.bf16.mxu0 0
      %4044 = vmatmul.mubr.bf16.gmra.mrb[0].mxu0 %v3906
      %v4045 = vpop.f32.mrb[0].mxu0
      %v4046 = vadd.f32 0.0, %v4045
      %v4047 = vpop.f32.mrb[0].mxu0
      %v4048 = vpop.f32.mrb[0].mxu0
      %v4049 = vadd.f32 0.0, %v4048
      %v4050 = vpop.f32.mrb[0].mxu0
      %4051 = vmatprep.mubr.bf16.mxu0 0
      %4052 = vmatmul.mubr.bf16.gmra.mrb[0].mxu0 %v3909
      %v4053 = vpop.f32.mrb[0].mxu0
      %v4054 = vadd.f32 0.0, %v4053
      %v4055 = vpop.f32.mrb[0].mxu0
      %v4056 = vpop.f32.mrb[0].mxu0
      %v4057 = vadd.f32 0.0, %v4056
      %v4058 = vpop.f32.mrb[0].mxu0
      %4059 = vmatprep.mubr.bf16.mxu0 0
      %4060 = vmatmul.mubr.bf16.gmra.mrb[0].mxu0 %v3912
      %v4061 = vpop.f32.mrb[0].mxu0
      %v4062 = vadd.f32 0.0, %v4061
      %v4063 = vpop.f32.mrb[0].mxu0
      %v4064 = vpop.f32.mrb[0].mxu0
      %v4065 = vadd.f32 0.0, %v4064
      %v4066 = vpop.f32.mrb[0].mxu0
      %4067 = vmatprep.mubr.bf16.mxu0 0
      %4068 = vmatmul.mubr.bf16.gmra.mrb[0].mxu0 %v3915
      %v4069 = vpop.f32.mrb[0].mxu0
      %v4070 = vadd.f32 0.0, %v4069
      %v4071 = vpop.f32.mrb[0].mxu0
      %v4072 = vpop.f32.mrb[0].mxu0
      %v4073 = vadd.f32 0.0, %v4072
      %v4074 = vpop.f32.mrb[0].mxu0
      %4075 = vmatprep.mubr.bf16.mxu0 0
      %4076 = vmatmul.mubr.bf16.gmra.mrb[0].mxu0 %v3918
      %v4077 = vpop.f32.mrb[0].mxu0
      %v4078 = vadd.f32 0.0, %v4077
      %v4079 = vpop.f32.mrb[0].mxu0
      %v4080 = vpop.f32.mrb[0].mxu0
      %v4081 = vadd.f32 0.0, %v4080
      %v4082 = vpop.f32.mrb[0].mxu0
      %4083 = vmatprep.mubr.bf16.mxu0 0
      %4084 = vmatmul.mubr.bf16.gmra.mrb[0].mxu0 %v3921
      %v4085 = vpop.f32.mrb[0].mxu0
      %v4086 = vadd.f32 0.0, %v4085
      %v4087 = vpop.f32.mrb[0].mxu0
      %v4088 = vpop.f32.mrb[0].mxu0
      %v4089 = vadd.f32 0.0, %v4088
      %v4090 = vpop.f32.mrb[0].mxu0
      %4091 = vmatprep.mubr.bf16.mxu0 0
      %4092 = vmatmul.mubr.bf16.gmra.mrb[0].mxu0 %v3924
      %v4093 = vpop.f32.mrb[0].mxu0
      %v4094 = vadd.f32 0.0, %v4093
      %v4095 = vpop.f32.mrb[0].mxu0
      %v4096 = vpop.f32.mrb[0].mxu0
      %v4097 = vadd.f32 0.0, %v4096
      %v4098 = vpop.f32.mrb[0].mxu0
      %4099 = vmatprep.mubr.bf16.mxu0 0
      %4100 = vmatmul.mubr.bf16.gmra.mrb[0].mxu0 %v3927
      %v4101 = vpop.f32.mrb[0].mxu0
      %v4102 = vadd.f32 0.0, %v4101
      %v4103 = vpop.f32.mrb[0].mxu0
      %v4104 = vpop.f32.mrb[0].mxu0
      %v4105 = vadd.f32 0.0, %v4104
      %v4106 = vpop.f32.mrb[0].mxu0
      %4107 = vmatprep.mubr.bf16.mxu0 0
      %4108 = vmatmul.mubr.bf16.gmra.mrb[0].mxu0 %v3930
      %v4109 = vpop.f32.mrb[0].mxu0
      %v4110 = vadd.f32 0.0, %v4109
      %v4111 = vpop.f32.mrb[0].mxu0
      %v4112 = vpop.f32.mrb[0].mxu0
      %v4113 = vadd.f32 0.0, %v4112
      %v4114 = vpop.f32.mrb[0].mxu0
      %4115 = vmatprep.mubr.bf16.mxu0 0
      %4116 = vmatmul.mubr.bf16.gmra.mrb[0].mxu0 %v3933
      %v4117 = vpop.f32.mrb[0].mxu0
      %v4118 = vadd.f32 0.0, %v4117
      %v4119 = vpop.f32.mrb[0].mxu0
      %v4120 = vpop.f32.mrb[0].mxu0
      %v4121 = vadd.f32 0.0, %v4120
      %v4122 = vpop.f32.mrb[0].mxu0
      %4123 = vmatprep.mubr.bf16.mxu0 0
      %4124 = vmatmul.mubr.bf16.gmra.mrb[0].mxu0 %v3936
      %v4125 = vpop.f32.mrb[0].mxu0
      %v4126 = vadd.f32 0.0, %v4125
      %v4127 = vpop.f32.mrb[0].mxu0
      %v4128 = vpop.f32.mrb[0].mxu0
      %v4129 = vadd.f32 0.0, %v4128
      %v4130 = vpop.f32.mrb[0].mxu0
      %4131 = vmatprep.mubr.bf16.mxu0 0
      %4132 = vmatmul.mubr.bf16.gmra.mrb[0].mxu0 %v3939
      %v4133 = vpop.f32.mrb[0].mxu0
      %v4134 = vadd.f32 0.0, %v4133
      %v4135 = vpop.f32.mrb[0].mxu0
      %v4136 = vpop.f32.mrb[0].mxu0
      %v4137 = vadd.f32 0.0, %v4136
      %v4138 = vpop.f32.mrb[0].mxu0
      %4139 = vmatprep.mubr.bf16.mxu0 0
      %4140 = vmatmul.mubr.bf16.gmra.mrb[0].mxu0 %v3942
      %v4141 = vpop.f32.mrb[0].mxu0
      %v4142 = vadd.f32 0.0, %v4141
      %v4143 = vpop.f32.mrb[0].mxu0
      %v4144 = vpop.f32.mrb[0].mxu0
      %v4145 = vadd.f32 0.0, %v4144
      %v4146 = vpop.f32.mrb[0].mxu0
      %4147 = vmatprep.mubr.bf16.mxu0 0
      %4148 = vmatmul.mubr.bf16.gmra.mrb[0].mxu0 %v3945
      %v4149 = vpop.f32.mrb[0].mxu0
      %v4150 = vadd.f32 0.0, %v4149
      %v4151 = vpop.f32.mrb[0].mxu0
      %v4152 = vpop.f32.mrb[0].mxu0
      %v4153 = vadd.f32 0.0, %v4152
      %v4154 = vpop.f32.mrb[0].mxu0
      %4155 = vmatprep.mubr.bf16.mxu0 0
      %4156 = vmatmul.mubr.bf16.gmra.mrb[0].mxu0 %v3948
      %v4157 = vpop.f32.mrb[0].mxu0
      %v4158 = vadd.f32 0.0, %v4157
      %v4159 = vpop.f32.mrb[0].mxu0
      %v4160 = vpop.f32.mrb[0].mxu0
      %v4161 = vadd.f32 0.0, %v4160
      %v4162 = vpop.f32.mrb[0].mxu0
      %4163 = vmatprep.mubr.bf16.mxu0 0
      %4164 = vmatmul.mubr.bf16.gmra.mrb[0].mxu0 %v3951
      %v4165 = vpop.f32.mrb[0].mxu0
      %v4166 = vadd.f32 0.0, %v4165
      %v4167 = vpop.f32.mrb[0].mxu0
      %v4168 = vpop.f32.mrb[0].mxu0
      %v4169 = vadd.f32 0.0, %v4168
      %v4170 = vpop.f32.mrb[0].mxu0
      %4171 = vmatprep.mubr.bf16.mxu0 0
      %4172 = vmatmul.mubr.bf16.gmra.mrb[0].mxu0 %v3954
      %v4173 = vpop.f32.mrb[0].mxu0
      %v4174 = vadd.f32 0.0, %v4173
      %v4175 = vpop.f32.mrb[0].mxu0
      %v4176 = vpop.f32.mrb[0].mxu0
      %v4177 = vadd.f32 0.0, %v4176
      %v4178 = vpop.f32.mrb[0].mxu0
      %4179 = vmatprep.mubr.bf16.mxu0 0
      %4180 = vmatmul.mubr.bf16.gmra.mrb[0].mxu0 %v3957
      %v4181 = vpop.f32.mrb[0].mxu0
      %v4182 = vadd.f32 0.0, %v4181
      %v4183 = vpop.f32.mrb[0].mxu0
      %v4184 = vpop.f32.mrb[0].mxu0
      %v4185 = vadd.f32 0.0, %v4184
      %v4186 = vpop.f32.mrb[0].mxu0
      %4187 = vdwg.mxu0
      %v4188 = vld [vmem:[%s2] sm:$0x1]
      %v4190 = vlaneseq
      %v4191 = vshrl.u32 %v4190, 7
      %v4192 = vsub.s32 0, %v4191
      %v4193 = vrot.slane %v4188, %v4192
      %v4195 = vmul.f32 %v3998, %v4193
      %v4196 = vmul.f32 %v4001, %v4193
      %v4197 = vmul.f32 %v4006, %v4193
      %v4198 = vmul.f32 %v4009, %v4193
      %v4199 = vmul.f32 %v4014, %v4193
      %v4200 = vmul.f32 %v4017, %v4193
      %v4201 = vmul.f32 %v4022, %v4193
      %v4202 = vmul.f32 %v4025, %v4193
      %v4203 = vmul.f32 %v4030, %v4193
      %v4204 = vmul.f32 %v4033, %v4193
      %v4205 = vmul.f32 %v4038, %v4193
      %v4206 = vmul.f32 %v4041, %v4193
      %v4207 = vmul.f32 %v4046, %v4193
      %v4208 = vmul.f32 %v4049, %v4193
      %v4209 = vmul.f32 %v4054, %v4193
      %v4210 = vmul.f32 %v4057, %v4193
      %v4211 = vmul.f32 %v4062, %v4193
      %v4212 = vmul.f32 %v4065, %v4193
      %v4213 = vmul.f32 %v4070, %v4193
      %v4214 = vmul.f32 %v4073, %v4193
      %v4215 = vmul.f32 %v4078, %v4193
      %v4216 = vmul.f32 %v4081, %v4193
      %v4217 = vmul.f32 %v4086, %v4193
      %v4218 = vmul.f32 %v4089, %v4193
      %v4219 = vmul.f32 %v4094, %v4193
      %v4220 = vmul.f32 %v4097, %v4193
      %v4221 = vmul.f32 %v4102, %v4193
      %v4222 = vmul.f32 %v4105, %v4193
      %v4223 = vmul.f32 %v4110, %v4193
      %v4224 = vmul.f32 %v4113, %v4193
      %v4225 = vmul.f32 %v4118, %v4193
      %v4226 = vmul.f32 %v4121, %v4193
      %v4227 = vmul.f32 %v4126, %v4193
      %v4228 = vmul.f32 %v4129, %v4193
      %v4229 = vmul.f32 %v4134, %v4193
      %v4230 = vmul.f32 %v4137, %v4193
      %v4231 = vmul.f32 %v4142, %v4193
      %v4232 = vmul.f32 %v4145, %v4193
      %v4233 = vmul.f32 %v4150, %v4193
      %v4234 = vmul.f32 %v4153, %v4193
      %v4235 = vmul.f32 %v4158, %v4193
      %v4236 = vmul.f32 %v4161, %v4193
      %v4237 = vmul.f32 %v4166, %v4193
      %v4238 = vmul.f32 %v4169, %v4193
      %v4239 = vmul.f32 %v4174, %v4193
      %v4240 = vmul.f32 %v4177, %v4193
      %v4241 = vmul.f32 %v4182, %v4193
      %v4242 = vmul.f32 %v4185, %v4193
      %v4243 = vld [vmem:[%s3] sm:$0x1]
      %v4245 = vlaneseq
      %v4246 = vshrl.u32 %v4245, 7
      %v4247 = vsub.s32 0, %v4246
      %v4248 = vrot.slane %v4243, %v4247
      %v4250 = vadd.f32 %v4195, %v4248
      %v4251 = vadd.f32 %v4196, %v4248
      %v4252 = vadd.f32 %v4197, %v4248
      %v4253 = vadd.f32 %v4198, %v4248
      %v4254 = vadd.f32 %v4199, %v4248
      %v4255 = vadd.f32 %v4200, %v4248
      %v4256 = vadd.f32 %v4201, %v4248
      %v4257 = vadd.f32 %v4202, %v4248
      %v4258 = vadd.f32 %v4203, %v4248
      %v4259 = vadd.f32 %v4204, %v4248
      %v4260 = vadd.f32 %v4205, %v4248
      %v4261 = vadd.f32 %v4206, %v4248
      %v4262 = vadd.f32 %v4207, %v4248
      %v4263 = vadd.f32 %v4208, %v4248
      %v4264 = vadd.f32 %v4209, %v4248
      %v4265 = vadd.f32 %v4210, %v4248
      %v4266 = vadd.f32 %v4211, %v4248
      %v4267 = vadd.f32 %v4212, %v4248
      %v4268 = vadd.f32 %v4213, %v4248
      %v4269 = vadd.f32 %v4214, %v4248
      %v4270 = vadd.f32 %v4215, %v4248
      %v4271 = vadd.f32 %v4216, %v4248
      %v4272 = vadd.f32 %v4217, %v4248
      %v4273 = vadd.f32 %v4218, %v4248
      %v4274 = vadd.f32 %v4219, %v4248
      %v4275 = vadd.f32 %v4220, %v4248
      %v4276 = vadd.f32 %v4221, %v4248
      %v4277 = vadd.f32 %v4222, %v4248
      %v4278 = vadd.f32 %v4223, %v4248
      %v4279 = vadd.f32 %v4224, %v4248
      %v4280 = vadd.f32 %v4225, %v4248
      %v4281 = vadd.f32 %v4226, %v4248
      %v4282 = vadd.f32 %v4227, %v4248
      %v4283 = vadd.f32 %v4228, %v4248
      %v4284 = vadd.f32 %v4229, %v4248
      %v4285 = vadd.f32 %v4230, %v4248
      %v4286 = vadd.f32 %v4231, %v4248
      %v4287 = vadd.f32 %v4232, %v4248
      %v4288 = vadd.f32 %v4233, %v4248
      %v4289 = vadd.f32 %v4234, %v4248
      %v4290 = vadd.f32 %v4235, %v4248
      %v4291 = vadd.f32 %v4236, %v4248
      %v4292 = vadd.f32 %v4237, %v4248
      %v4293 = vadd.f32 %v4238, %v4248
      %v4294 = vadd.f32 %v4239, %v4248
      %v4295 = vadd.f32 %v4240, %v4248
      %v4296 = vadd.f32 %v4241, %v4248
      %v4297 = vadd.f32 %v4242, %v4248
      %v4298 = vmax.f32 %v4250, 0.0
      %v4299 = vmax.f32 %v4251, 0.0
      %v4300 = vmax.f32 %v4252, 0.0
      %v4301 = vmax.f32 %v4253, 0.0
      %v4302 = vmax.f32 %v4254, 0.0
      %v4303 = vmax.f32 %v4255, 0.0
      %v4304 = vmax.f32 %v4256, 0.0
      %v4305 = vmax.f32 %v4257, 0.0
      %v4306 = vmax.f32 %v4258, 0.0
      %v4307 = vmax.f32 %v4259, 0.0
      %v4308 = vmax.f32 %v4260, 0.0
      %v4309 = vmax.f32 %v4261, 0.0
      %v4310 = vmax.f32 %v4262, 0.0
      %v4311 = vmax.f32 %v4263, 0.0
      %v4312 = vmax.f32 %v4264, 0.0
      %v4313 = vmax.f32 %v4265, 0.0
      %v4314 = vmax.f32 %v4266, 0.0
      %v4315 = vmax.f32 %v4267, 0.0
      %v4316 = vmax.f32 %v4268, 0.0
      %v4317 = vmax.f32 %v4269, 0.0
      %v4318 = vmax.f32 %v4270, 0.0
      %v4319 = vmax.f32 %v4271, 0.0
      %v4320 = vmax.f32 %v4272, 0.0
      %v4321 = vmax.f32 %v4273, 0.0
      %v4322 = vmax.f32 %v4274, 0.0
      %v4323 = vmax.f32 %v4275, 0.0
      %v4324 = vmax.f32 %v4276, 0.0
      %v4325 = vmax.f32 %v4277, 0.0
      %v4326 = vmax.f32 %v4278, 0.0
      %v4327 = vmax.f32 %v4279, 0.0
      %v4328 = vmax.f32 %v4280, 0.0
      %v4329 = vmax.f32 %v4281, 0.0
      %v4330 = vmax.f32 %v4282, 0.0
      %v4331 = vmax.f32 %v4283, 0.0
      %v4332 = vmax.f32 %v4284, 0.0
      %v4333 = vmax.f32 %v4285, 0.0
      %v4334 = vmax.f32 %v4286, 0.0
      %v4335 = vmax.f32 %v4287, 0.0
      %v4336 = vmax.f32 %v4288, 0.0
      %v4337 = vmax.f32 %v4289, 0.0
      %v4338 = vmax.f32 %v4290, 0.0
      %v4339 = vmax.f32 %v4291, 0.0
      %v4340 = vmax.f32 %v4292, 0.0
      %v4341 = vmax.f32 %v4293, 0.0
      %v4342 = vmax.f32 %v4294, 0.0
      %v4343 = vmax.f32 %v4295, 0.0
      %v4344 = vmax.f32 %v4296, 0.0
      %v4345 = vmax.f32 %v4297, 0.0
      %v4346 = vpack.c.bf16 %v4299, %v4298
      %v4347 = vpack.c.bf16 %v4301, %v4300
      %v4348 = vpack.c.bf16 %v4303, %v4302
      %v4349 = vpack.c.bf16 %v4305, %v4304
      %v4350 = vpack.c.bf16 %v4307, %v4306
      %v4351 = vpack.c.bf16 %v4309, %v4308
      %v4352 = vpack.c.bf16 %v4311, %v4310
      %v4353 = vpack.c.bf16 %v4313, %v4312
      %v4354 = vpack.c.bf16 %v4315, %v4314
      %v4355 = vpack.c.bf16 %v4317, %v4316
      %v4356 = vpack.c.bf16 %v4319, %v4318
      %v4357 = vpack.c.bf16 %v4321, %v4320
      %v4358 = vpack.c.bf16 %v4323, %v4322
      %v4359 = vpack.c.bf16 %v4325, %v4324
      %v4360 = vpack.c.bf16 %v4327, %v4326
      %v4361 = vpack.c.bf16 %v4329, %v4328
      %v4362 = vpack.c.bf16 %v4331, %v4330
      %v4363 = vpack.c.bf16 %v4333, %v4332
      %v4364 = vpack.c.bf16 %v4335, %v4334
      %v4365 = vpack.c.bf16 %v4337, %v4336
      %v4366 = vpack.c.bf16 %v4339, %v4338
      %v4367 = vpack.c.bf16 %v4341, %v4340
      %v4368 = vpack.c.bf16 %v4343, %v4342
      %v4369 = vpack.c.bf16 %v4345, %v4344
      %v4371 = vunpack.c.l.b16 %v4346
      %v4372 = vunpack.c.h.b16 %v4346
      %v4373 = vpack.c.b16 %v4371, %v4371
      %v4374 = vpack.c.b16 %v4372, %v4372
      %vm4377 = vcmask 60416
      %4378 = vst.msk [vmem:[%s197] sm:$0xf] %vm4377, %v4373
      %4379 = vst.msk [vmem:[%s197 + $0x4] sm:$0xf] %vm4377, %v4374
      %v4382 = vunpack.c.h.b16 %v4347
      %v4383 = vunpack.c.l.b16 %v4348
      %v4384 = vpack.c.b16 %v4382, %v4382
      %v4385 = vpack.c.b16 %v4383, %v4383
      %s4388 = scalar_lea.vmem %s197, 8
      %4389 = vst.msk [vmem:[%s4388] sm:$0xf] %vm4377, %v4384
      %4390 = vst.msk [vmem:[%s4388 + $0x4] sm:$0xf] %vm4377, %v4385
      %v4392 = vunpack.c.l.b16 %v4349
      %v4393 = vunpack.c.h.b16 %v4349
      %v4394 = vpack.c.b16 %v4392, %v4392
      %v4395 = vpack.c.b16 %v4393, %v4393
      %s4398 = scalar_lea.vmem %s197, 16
      %4399 = vst.msk [vmem:[%s4398] sm:$0xf] %vm4377, %v4394
      %4400 = vst.msk [vmem:[%s4398 + $0x4] sm:$0xf] %vm4377, %v4395
      %v4403 = vunpack.c.h.b16 %v4350
      %v4404 = vunpack.c.l.b16 %v4351
      %v4405 = vpack.c.b16 %v4403, %v4403
      %v4406 = vpack.c.b16 %v4404, %v4404
      %s4409 = scalar_lea.vmem %s197, 24
      %4410 = vst.msk [vmem:[%s4409] sm:$0xf] %vm4377, %v4405
      %4411 = vst.msk [vmem:[%s4409 + $0x4] sm:$0xf] %vm4377, %v4406
      %v4413 = vunpack.c.l.b16 %v4352
      %v4414 = vunpack.c.h.b16 %v4352
      %v4415 = vpack.c.b16 %v4413, %v4413
      %v4416 = vpack.c.b16 %v4414, %v4414
      %s4419 = scalar_lea.vmem %s197, 32
      %4420 = vst.msk [vmem:[%s4419] sm:$0xf] %vm4377, %v4415
      %4421 = vst.msk [vmem:[%s4419 + $0x4] sm:$0xf] %vm4377, %v4416
      %v4424 = vunpack.c.h.b16 %v4353
      %v4425 = vunpack.c.l.b16 %v4354
      %v4426 = vpack.c.b16 %v4424, %v4424
      %v4427 = vpack.c.b16 %v4425, %v4425
      %s4430 = scalar_lea.vmem %s197, 40
      %4431 = vst.msk [vmem:[%s4430] sm:$0xf] %vm4377, %v4426
      %4432 = vst.msk [vmem:[%s4430 + $0x4] sm:$0xf] %vm4377, %v4427
      %v4434 = vunpack.c.l.b16 %v4355
      %v4435 = vunpack.c.h.b16 %v4355
      %v4436 = vpack.c.b16 %v4434, %v4434
      %v4437 = vpack.c.b16 %v4435, %v4435
      %s4440 = scalar_lea.vmem %s197, 48
      %4441 = vst.msk [vmem:[%s4440] sm:$0xf] %vm4377, %v4436
      %4442 = vst.msk [vmem:[%s4440 + $0x4] sm:$0xf] %vm4377, %v4437
      %v4445 = vunpack.c.h.b16 %v4356
      %v4446 = vunpack.c.l.b16 %v4357
      %v4447 = vpack.c.b16 %v4445, %v4445
      %v4448 = vpack.c.b16 %v4446, %v4446
      %s4451 = scalar_lea.vmem %s197, 56
      %4452 = vst.msk [vmem:[%s4451] sm:$0xf] %vm4377, %v4447
      %4453 = vst.msk [vmem:[%s4451 + $0x4] sm:$0xf] %vm4377, %v4448
      %v4455 = vunpack.c.l.b16 %v4358
      %v4456 = vunpack.c.h.b16 %v4358
      %v4457 = vpack.c.b16 %v4455, %v4455
      %v4458 = vpack.c.b16 %v4456, %v4456
      %s4461 = scalar_lea.vmem %s197, 64
      %4462 = vst.msk [vmem:[%s4461] sm:$0xf] %vm4377, %v4457
      %4463 = vst.msk [vmem:[%s4461 + $0x4] sm:$0xf] %vm4377, %v4458
      %v4466 = vunpack.c.h.b16 %v4359
      %v4467 = vunpack.c.l.b16 %v4360
      %v4468 = vpack.c.b16 %v4466, %v4466
      %v4469 = vpack.c.b16 %v4467, %v4467
      %s4472 = scalar_lea.vmem %s197, 72
      %4473 = vst.msk [vmem:[%s4472] sm:$0xf] %vm4377, %v4468
      %4474 = vst.msk [vmem:[%s4472 + $0x4] sm:$0xf] %vm4377, %v4469
      %v4476 = vunpack.c.l.b16 %v4361
      %v4477 = vunpack.c.h.b16 %v4361
      %v4478 = vpack.c.b16 %v4476, %v4476
      %v4479 = vpack.c.b16 %v4477, %v4477
      %s4482 = scalar_lea.vmem %s197, 80
      %4483 = vst.msk [vmem:[%s4482] sm:$0xf] %vm4377, %v4478
      %4484 = vst.msk [vmem:[%s4482 + $0x4] sm:$0xf] %vm4377, %v4479
      %v4487 = vunpack.c.h.b16 %v4362
      %v4488 = vunpack.c.l.b16 %v4363
      %v4489 = vpack.c.b16 %v4487, %v4487
      %v4490 = vpack.c.b16 %v4488, %v4488
      %s4493 = scalar_lea.vmem %s197, 88
      %4494 = vst.msk [vmem:[%s4493] sm:$0xf] %vm4377, %v4489
      %4495 = vst.msk [vmem:[%s4493 + $0x4] sm:$0xf] %vm4377, %v4490
      %v4497 = vunpack.c.l.b16 %v4364
      %v4498 = vunpack.c.h.b16 %v4364
      %v4499 = vpack.c.b16 %v4497, %v4497
      %v4500 = vpack.c.b16 %v4498, %v4498
      %s4503 = scalar_lea.vmem %s197, 96
      %4504 = vst.msk [vmem:[%s4503] sm:$0xf] %vm4377, %v4499
      %4505 = vst.msk [vmem:[%s4503 + $0x4] sm:$0xf] %vm4377, %v4500
      %v4508 = vunpack.c.h.b16 %v4365
      %v4509 = vunpack.c.l.b16 %v4366
      %v4510 = vpack.c.b16 %v4508, %v4508
      %v4511 = vpack.c.b16 %v4509, %v4509
      %s4514 = scalar_lea.vmem %s197, 104
      %4515 = vst.msk [vmem:[%s4514] sm:$0xf] %vm4377, %v4510
      %4516 = vst.msk [vmem:[%s4514 + $0x4] sm:$0xf] %vm4377, %v4511
      %v4518 = vunpack.c.l.b16 %v4367
      %v4519 = vunpack.c.h.b16 %v4367
      %v4520 = vpack.c.b16 %v4518, %v4518
      %v4521 = vpack.c.b16 %v4519, %v4519
      %s4524 = scalar_lea.vmem %s197, 112
      %4525 = vst.msk [vmem:[%s4524] sm:$0xf] %vm4377, %v4520
      %4526 = vst.msk [vmem:[%s4524 + $0x4] sm:$0xf] %vm4377, %v4521
      %v4529 = vunpack.c.h.b16 %v4368
      %v4530 = vunpack.c.l.b16 %v4369
      %v4531 = vpack.c.b16 %v4529, %v4529
      %v4532 = vpack.c.b16 %v4530, %v4530
      %s4535 = scalar_lea.vmem %s197, 120
      %4536 = vst.msk [vmem:[%s4535] sm:$0xf] %vm4377, %v4531
      %4537 = vst.msk [vmem:[%s4535 + $0x4] sm:$0xf] %vm4377, %v4532
      %p4538 = scmp.lt.s32.totalorder %s15, 1
      %s4539 = scalar_select %p4538, %s15, 1
      %s4540 = smul.addr %s4539, 32
      %s4541 = smul.addr %s4540, 4
      %s4542 = scalar_lea.vmem %s4, %s4541
      // Predicated region
      $region37: #{inception_forward.5} parent=35 // pred_check
        %p4543 = pneg %p122
      $region38: #{inception_forward.5} parent=35 // pred_check_branch
        %4545 = sbr.rel (%p4543) target = $region40
      $region39: #{inception_forward.5} parent=35 // pred_region
        _
      $region40: #{inception_forward.5} parent=35 // pred_fallthru
        _
    $region36: #{inception_forward.5} parent=5 // pred_fallthru
      _
    %p4546 = scmp.le.s32.totalorder 2, %s10
    // Predicated region
    $region41: #{inception_forward.5} parent=5 // pred_check
      %p4547 = pneg %p4546
    $region42: #{inception_forward.5} parent=5 // pred_check_branch
      %4549 = sbr.rel (%p4547) target = $region44
    $region43: #{inception_forward.5} parent=5 // pred_region
      %s4550 = ssub.s32 %s10, 2
      // Predicated region
      $region45: #{inception_forward.5} parent=43 // pred_check
        %p4551 = pneg %p128
      $region46: #{inception_forward.5} parent=43 // pred_check_branch
        %4553 = sbr.rel (%p4551) target = $region48
      $region47: #{inception_forward.5} parent=43 // pred_region
        %p4554 = scmp.lt.s32.totalorder %s16, 1
        %s4555 = scalar_select %p4554, %s16, 1
        %s4556 = smul.addr %s4555, 32
        %s4557 = smul.addr %s4556, 4
        %s4558 = scalar_lea.vmem %s4, %s4557
      $region48: #{inception_forward.5} parent=43 // pred_fallthru
        _
    $region44: #{inception_forward.5} parent=5 // pred_fallthru
      _
  $region6: #{inception_forward.5} parent=0 // loop_footer
    %s14 = sadd.s32 1, %s10
  $region7: #{inception_forward.5} parent=0 // loop_footer_branch
    %9 = sbr.rel target = $region3
  $region8: #{inception_forward.5} parent=0 // loop_exit
    _

</llo_original>
